<compile_context>
chip_gen: v6e
topology: v6e:2x2x1
jax: 0.10.0
libtpu: 0.0.40
codegen_flags: <defaults>
</compile_context>

<pallas_src>
import functools

import jax
import jax.numpy as jnp
from jax import lax
from jax.experimental import pallas as pl
from jax.experimental.pallas import tpu as pltpu

# ----------------------------------------------------------------------------
# KAN / B-spline configuration (BSpline(num_bases, degree, domain=(0, 1)))
# ----------------------------------------------------------------------------
NUM_BASES = 4
DEGREE = 2
DOMAIN = (0.0, 1.0)
N_INTERVALS = NUM_BASES + DEGREE            # number of uniform knot intervals
BN_EPS = 1e-5

LAYER_CFG = [(64, 1), (128, 2), (256, 2), (512, 2)]   # (out_channels, stride)

TK_CAP = 768          # max contracting tile (mult of 128) when K must be split
TN_CAP = 512          # covers the full padded Op of every ResNet18 layer
MIN_PALLAS_M = 128    # below this a 1-2 tile kernel call is overhead-dominated


def _round_up(v, m):
    return ((v + m - 1) // m) * m


def _cdiv(a, b):
    return -(-a // b)


@functools.lru_cache(maxsize=None)
def _tpu_budget():
    """(vmem_limit_bytes, max_row_tile) for the current TPU generation.

    v5e / v6e have 128 MiB physical VMEM -> allow larger row tiles and a
    higher scoped-VMEM limit; v7x has 64 MiB -> keep the conservative budget.
    """
    cap = 64 * 1024 * 1024
    try:
        info = pltpu.get_tpu_info()
        cap = getattr(info, "vmem_capacity_bytes", cap) or cap
    except Exception:                        # emulator / unknown chip: be safe
        pass
    if cap >= 96 * 1024 * 1024:
        return 96 * 1024 * 1024, 1024        # v5e / v6e
    return 48 * 1024 * 1024, 512             # v7x


# ----------------------------------------------------------------------------
# Uniform B-spline: piecewise polynomial coefficients precomputed in Python
# ----------------------------------------------------------------------------
def _uniform_bspline_piece_coeffs(degree):
    """Coeffs (ascending powers of the local coordinate u in [0,1)) of the
    uniform B-spline of `degree` on each of its degree+1 support segments,
    derived by Cox-de Boor on polynomial coefficients at build time."""
    pieces = [[1.0]]
    for d in range(1, degree + 1):
        new = []
        for s in range(d + 1):
            cur = [0.0] * (d + 1)
            if s < len(pieces):                      # (s + u)/d * piece_s^{d-1}
                for k, c in enumerate(pieces[s]):
                    cur[k] += c * s / d
                    cur[k + 1] += c / d
            if 0 <= s - 1 < len(pieces):             # (d+1-s-u)/d * piece_{s-1}^{d-1}
                for k, c in enumerate(pieces[s - 1]):
                    cur[k] += c * (d + 1 - s) / d
                    cur[k + 1] -= c / d
            new.append(cur)
        pieces = new
    return pieces


_PIECES = _uniform_bspline_piece_coeffs(DEGREE)


def _horner(u, coeffs):
    """sum_k coeffs[k] * u**k with Python-float constants (no divides, no
    broadcasted constant tensors)."""
    if len(coeffs) == 1:
        return jnp.full_like(u, coeffs[0])
    v = u * coeffs[-1] + coeffs[-2]
    for k in range(len(coeffs) - 3, -1, -1):
        v = v * u + coeffs[k]
    return v


def _basis_prep(x):
    """Shared prep for evaluating all NUM_BASES quadratic B-spline bases:
    segment index, local coordinate, the DEGREE+1 piece polynomials and the
    N_INTERVALS deduplicated segment masks (6 compares reused by every basis
    instead of 12).

    Equivalent to Cox-de Boor over the uniform knots
    linspace(domain[0], domain[1], NUM_BASES + DEGREE + 1) with half-open
    [knot_i, knot_{i+1}) degree-0 indicators: bases are 0 at the upper domain
    edge and outside the domain.  Kept in f32 (v5e has no bf16 VALU); callers
    cast only at the MXU dot input.

    # TODO(synk): the reference bspline_basis has an off-by-one knot slice that
    # makes it un-broadcastable for degree >= 1; we implement the Cox-de Boor
    # bases it is clearly trying to express.
    """
    d0, d1 = DOMAIN
    scale = float(N_INTERVALS) / (d1 - d0)
    s = x * scale if d0 == 0.0 else (x - d0) * scale
    seg = jnp.floor(s)
    u = s - seg
    piece_vals = [_horner(u, c) for c in _PIECES]           # DEGREE+1 tiles
    masks = [seg == float(c) for c in range(N_INTERVALS)]   # shared compares
    return piece_vals, masks


def _basis_m(piece_vals, masks, m):
    """Basis m from the shared prep (supported on segments m .. m+DEGREE)."""
    b = jnp.zeros_like(piece_vals[0])
    for sdx in range(DEGREE, -1, -1):
        b = jnp.where(masks[m + sdx], piece_vals[sdx], b)
    return b


# ----------------------------------------------------------------------------
# Pallas kernel: in-kernel basis expansion + per-basis accumulated MXU dots
# ----------------------------------------------------------------------------
def _kan_mm_kernel(x_ref, w_ref, o_ref, acc_ref):
    k = pl.program_id(2)

    @pl.when(k == 0)
    def _():
        acc_ref[...] = jnp.zeros_like(acc_ref)

    x = x_ref[...]                                   # (TM, TK) f32
    piece_vals, masks = _basis_prep(x)
    acc = acc_ref[...]
    # Per-basis accumulated dots: same MXU work as one long-K contraction but
    # no lane-axis concat / relayout copy, only one basis tile live at a time,
    # and the VPU eval of basis m+1 overlaps the MXU pushes of basis m.
    for m in range(NUM_BASES):
        b = _basis_m(piece_vals, masks, m)
        acc = acc + jnp.dot(b.astype(jnp.bfloat16), w_ref[m],
                            preferred_element_type=jnp.float32)
    acc_ref[...] = acc

    @pl.when(k == pl.num_programs(2) - 1)
    def _():
        o_ref[...] = acc_ref[...]


# ----------------------------------------------------------------------------
# Weight packing (done ONCE at init: pad, tile, bf16-cast)
# ----------------------------------------------------------------------------
def _choose_tile(padded, cap):
    """Largest multiple-of-128 divisor of `padded` (itself a mult of 128)
    that is <= cap."""
    best = 128
    q = padded // 128
    for d in range(1, q + 1):
        if q % d == 0 and 128 * d <= cap:
            best = 128 * d
    return best


def pack_kan_weights(coef):
    """coef: (NUM_BASES, K, O) f32 spline coefficients (im2col column order).

    Built once at init, returns both layouts:
      "packed": (nkt, NUM_BASES, TK, Op) bf16 for the Pallas kernel.  K is
                split only when K > TK_CAP (then K is a multiple of 128 for
                ResNet18-KAN, so no K padding of the activations is ever
                needed); O is zero-padded to a lane-dense multiple of 128.
      "flat":   (NUM_BASES, K, O) bf16 for the tiny-M XLA fallback (no
                per-call reshape/transpose/astype of the packed layout).
    """
    nb, K, O = coef.shape
    Op = _round_up(O, 128)
    if K <= TK_CAP:
        Kp, TK = K, K                        # single full-K block, no padding
    else:
        Kp = _round_up(K, 128)
        TK = _choose_tile(Kp, TK_CAP)
    nkt = Kp // TK
    w = jnp.pad(coef, ((0, 0), (0, Kp - K), (0, Op - O)))
    packed = w.reshape(nb, nkt, TK, Op).transpose(1, 0, 2, 3)  # (nkt, nb, TK, Op)
    return {"packed": packed.astype(jnp.bfloat16),
            "flat": coef.astype(jnp.bfloat16)}


# ----------------------------------------------------------------------------
# KAN matmul wrappers
# ----------------------------------------------------------------------------
def _kan_matmul_small(x, w_flat):
    # Tiny-M path (deep layers / the final LinearKAN at small batch): a single
    # MXU-sliver matmul where kernel launch + grid-step overhead dominates, so
    # use plain XLA.  Weights are already stored flat in bf16 at init and the
    # einsum contracts bf16 x bf16 with an f32 accumulator, matching the
    # kernel path's numerics.
    piece_vals, masks = _basis_prep(x)
    bases = jnp.stack(
        [_basis_m(piece_vals, masks, m) for m in range(NUM_BASES)], axis=0)
    return jnp.einsum("nmk,nko->mo", bases.astype(jnp.bfloat16), w_flat,
                      preferred_element_type=jnp.float32)


def _pick_tm(M, tm_big):
    # Always >= 2 row tiles: enables megacore sharding on v7x and gives the
    # pipeline something to prefetch behind on every generation (a 1x1x1 grid
    # has neither).  Multiple of 16 keeps the bf16 MXU LHS sublane-packed.
    nmt = max(2, _cdiv(M, tm_big))
    return min(tm_big, max(16, _round_up(_cdiv(M, nmt), 16)))


def kan_matmul(x, w, out_features):
    """x: (M, K) f32;  w: dict from pack_kan_weights."""
    M, K = x.shape
    if M < MIN_PALLAS_M:
        return _kan_matmul_small(x, w["flat"])

    packed = w["packed"]
    nkt, nb, TK, Op = packed.shape
    Kp = nkt * TK
    assert nb == NUM_BASES and Kp >= K, (packed.shape, K)

    vmem_limit, tm_big = _tpu_budget()
    TM = _pick_tm(M, tm_big)
    Mp = _round_up(M, TM)
    TN = _choose_tile(Op, TN_CAP)            # TN == Op for all ResNet18 layers

    if Mp != M or Kp != K:
        # Never triggered for ResNet18-KAN shapes that are multiples of the
        # row tile: K needs no padding by construction, M only when ragged.
        x = jnp.pad(x, ((0, Mp - M), (0, Kp - K)))

    out = pl.pallas_call(
        _kan_mm_kernel,
        out_shape=jax.ShapeDtypeStruct((Mp, Op), jnp.float32),
        grid_spec=pltpu.PrefetchScalarGridSpec(
            num_scalar_prefetch=0,
            grid=(Mp // TM, Op // TN, nkt),          # K innermost (reduction)
            in_specs=[
                pl.BlockSpec((TM, TK), lambda i, j, k: (i, k)),
                pl.BlockSpec((None, NUM_BASES, TK, TN),
                             lambda i, j, k: (k, 0, 0, j)),
            ],
            out_specs=pl.BlockSpec((TM, TN), lambda i, j, k: (i, j)),
            scratch_shapes=[pltpu.VMEM((TM, TN), jnp.float32)],
        ),
        compiler_params=pltpu.CompilerParams(
            dimension_semantics=("parallel", "parallel", "arbitrary"),
            vmem_limit_bytes=vmem_limit,
        ),
    )(x, packed)
    return out[:M, :out_features]


# ----------------------------------------------------------------------------
# Glue: im2col, ConvolutionalKAN, BatchNorm, pools (plain JAX)
# ----------------------------------------------------------------------------
def _im2col(x, ksize, stride, padding):
    # TODO(synk): longer term, fuse this gather into the Pallas kernel's DMA
    # (index over the kh*kw shifted views) instead of materializing the
    # kh*kw-inflated im2col matrix in HBM.
    N, C, H, W = x.shape
    xp = jnp.pad(x, ((0, 0), (0, 0), (padding, padding), (padding, padding)))
    Ho = (H + 2 * padding - ksize) // stride + 1
    Wo = (W + 2 * padding - ksize) // stride + 1
    cols = []
    for kh in range(ksize):
        for kw in range(ksize):
            cols.append(
                xp[:, :, kh:kh + stride * Ho:stride, kw:kw + stride * Wo:stride]
            )
    p = jnp.stack(cols, axis=0).reshape(ksize, ksize, N, C, Ho, Wo)
    p = p.transpose(2, 4, 5, 3, 0, 1)  # (N, Ho, Wo, C, kh, kw)
    return p.reshape(N * Ho * Wo, C * ksize * ksize), (N, Ho, Wo)


def conv_kan(x, w, out_c, ksize, stride, padding):
    # TODO(synk): the reference ConvolutionalKAN.__init__ does not accept the
    # stride/padding kwargs the ResNet passes (and its forward ignores them);
    # we implement the ResNet-intended strided/padded KAN convolution.
    p, (N, Ho, Wo) = _im2col(x, ksize, stride, padding)
    out = kan_matmul(p, w, out_c)
    return out.reshape(N, Ho, Wo, out_c).transpose(0, 3, 1, 2)  # back to NCHW


def batchnorm2d(x, eps=BN_EPS):
    # Freshly-constructed nn.BatchNorm2d in training mode: batch statistics,
    # gamma=1, beta=0 (default init).
    mean = jnp.mean(x, axis=(0, 2, 3), keepdims=True)
    var = jnp.var(x, axis=(0, 2, 3), keepdims=True)
    return (x - mean) * lax.rsqrt(var + eps)


def maxpool2d_3x3_s2_p1(x):
    return lax.reduce_window(
        x,
        jnp.array(-jnp.inf, x.dtype),
        lax.max,
        window_dimensions=(1, 1, 3, 3),
        window_strides=(1, 1, 2, 2),
        padding=((0, 0), (0, 0), (1, 1), (1, 1)),
    )


def basic_block(x, blk, out_c, stride):
    out = conv_kan(x, blk["conv1"], out_c, 3, stride, 1)
    out = batchnorm2d(out)
    out = jnp.maximum(out, 0.0)
    out = conv_kan(out, blk["conv2"], out_c, 3, 1, 1)
    out = batchnorm2d(out)
    if blk["shortcut"] is not None:
        idn = batchnorm2d(conv_kan(x, blk["shortcut"], out_c, 1, stride, 0))
    else:
        idn = x
    return jnp.maximum(out + idn, 0.0)


def resnet18_kan_forward(params, x, num_classes):
    out = conv_kan(x, params["conv1"], 64, 7, 2, 3)
    out = batchnorm2d(out)
    out = jnp.maximum(out, 0.0)
    out = maxpool2d_3x3_s2_p1(out)
    for layer_blocks, (out_c, stride) in zip(params["layers"], LAYER_CFG):
        for blk, s in zip(layer_blocks, [stride, 1]):
            out = basic_block(out, blk, out_c, s)
    out = jnp.mean(out, axis=(2, 3))               # AdaptiveAvgPool2d + flatten
    out = kan_matmul(out, params["fc"], num_classes)   # LinearKAN(512, classes)
    return out


# ----------------------------------------------------------------------------
# Deterministic parameter initialization (per-edge B-spline coefficients)
# ----------------------------------------------------------------------------
class _KeyGen:
    def __init__(self, key):
        self.key = key

    def __call__(self):
        self.key, sub = jax.random.split(self.key)
        return sub


def _make_conv_w(kg, in_c, out_c, ksize):
    # One BSpline (NUM_BASES coefficients) per (out_c, in_c, kh, kw) edge,
    # indexed like the reference's activation_functions list.
    coef = jax.random.normal(
        kg(), (out_c, in_c, ksize, ksize, NUM_BASES), jnp.float32
    )
    # -> (num_bases, in_c*k*k, out_c), matching im2col column order (c, kh, kw)
    coef = coef.transpose(4, 1, 2, 3, 0).reshape(
        NUM_BASES, in_c * ksize * ksize, out_c
    )
    return pack_kan_weights(coef)


def init_params(key, num_classes):
    kg = _KeyGen(key)
    params = {"conv1": _make_conv_w(kg, 3, 64, 7), "layers": [], "fc": None}
    in_c = 64
    for out_c, stride in LAYER_CFG:
        blocks = []
        for s in [stride, 1]:
            blk = {
                "conv1": _make_conv_w(kg, in_c, out_c, 3),
                "conv2": _make_conv_w(kg, out_c, out_c, 3),
                "shortcut": (
                    _make_conv_w(kg, in_c, out_c, 1)
                    if (s != 1 or in_c != out_c)
                    else None
                ),
            }
            blocks.append(blk)
            in_c = out_c
        params["layers"].append(blocks)
    # LinearKAN(512, num_classes): one BSpline per (out, in) edge
    fc_coef = jax.random.normal(kg(), (num_classes, 512, NUM_BASES), jnp.float32)
    params["fc"] = pack_kan_weights(fc_coef.transpose(2, 1, 0))
    return params


# ----------------------------------------------------------------------------
if __name__ == "__main__":
    key = jax.random.PRNGKey(0)
    pkey, xkey = jax.random.split(key)

    num_classes = 10
    params = init_params(pkey, num_classes)

    # NCHW input like the PyTorch module; values in [0, 1) so they fall inside
    # the B-spline domain.
    x = jax.random.uniform(xkey, (2, 3, 32, 32), dtype=jnp.float32)

    fwd = jax.jit(functools.partial(resnet18_kan_forward, num_classes=num_classes))
    out = jax.block_until_ready(fwd(params, x))

    assert out.shape == (2, num_classes), out.shape
    assert jnp.all(jnp.isfinite(out))
    print("KERNEL_OK")
</pallas_src>

<mosaic_0001>
module attributes {stable_mosaic.version = 11 : i64} {
  func.func @_kan_mm_kernel(%arg0: i32, %arg1: i32, %arg2: i32, %arg3: memref<256x147xf32, #tpu.memory_space<vmem>>, %arg4: memref<1x4x147x128xbf16, #tpu.memory_space<vmem>>, %arg5: memref<256x128xf32, #tpu.memory_space<vmem>>, %arg6: memref<256x128xf32, #tpu.memory_space<vmem>>) attributes {dimension_semantics = [#tpu.dimension_semantics<parallel>, #tpu.dimension_semantics<parallel>, #tpu.dimension_semantics<arbitrary>], iteration_bounds = array<i64: 2, 1, 1>, scalar_prefetch = 0 : i64, scratch_operands = 1 : i64, tpu.core_type = #tpu.core_type<tc>, window_params = [{transform_indices = @transform_0, window_bounds = array<i64: 256, 147>}, {transform_indices = @transform_1, window_bounds = array<i64: 1, 4, 147, 128>}, {transform_indices = @transform_2, window_bounds = array<i64: 256, 128>}]} {
    %c0_i32 = arith.constant 0 : i32
    %0 = arith.cmpi eq, %arg2, %c0_i32 : i32
    %1 = arith.extui %0 : i1 to i32
    %c0_i32_0 = arith.constant 0 : i32
    %2 = arith.cmpi ne, %1, %c0_i32_0 : i32
    scf.if %2 {
      %cst_44 = arith.constant 0.000000e+00 : f32
      %82 = vector.broadcast %cst_44 : f32 to vector<256x128xf32>
      %c0_45 = arith.constant 0 : index
      %c0_46 = arith.constant 0 : index
      %83 = vector.load %arg6[%c0_45, %c0_46] : memref<256x128xf32, #tpu.memory_space<vmem>>, vector<256x128xf32>
      tpu.vector_store %arg6[%c0_45, %c0_46], %82 {strides = array<i32>} : memref<256x128xf32, #tpu.memory_space<vmem>>, vector<256x128xf32>,
    } else {
    }
    %c0 = arith.constant 0 : index
    %c0_1 = arith.constant 0 : index
    %3 = vector.load %arg3[%c0, %c0_1] : memref<256x147xf32, #tpu.memory_space<vmem>>, vector<256x147xf32>
    %cst = arith.constant 6.000000e+00 : f32
    %4 = vector.broadcast %cst : f32 to vector<256x147xf32>
    %5 = arith.mulf %3, %4 : vector<256x147xf32>
    %6 = math.floor %5 : vector<256x147xf32>
    %7 = arith.subf %5, %6 : vector<256x147xf32>
    %cst_2 = arith.constant 5.000000e-01 : f32
    %8 = vector.broadcast %cst_2 : f32 to vector<256x147xf32>
    %9 = arith.mulf %7, %8 : vector<256x147xf32>
    %cst_3 = arith.constant 0.000000e+00 : f32
    %10 = vector.broadcast %cst_3 : f32 to vector<256x147xf32>
    %11 = arith.addf %9, %10 : vector<256x147xf32>
    %12 = arith.mulf %11, %7 : vector<256x147xf32>
    %cst_4 = arith.constant 0.000000e+00 : f32
    %13 = vector.broadcast %cst_4 : f32 to vector<256x147xf32>
    %14 = arith.addf %12, %13 : vector<256x147xf32>
    %cst_5 = arith.constant -1.000000e+00 : f32
    %15 = vector.broadcast %cst_5 : f32 to vector<256x147xf32>
    %16 = arith.mulf %7, %15 : vector<256x147xf32>
    %cst_6 = arith.constant 1.000000e+00 : f32
    %17 = vector.broadcast %cst_6 : f32 to vector<256x147xf32>
    %18 = arith.addf %16, %17 : vector<256x147xf32>
    %19 = arith.mulf %18, %7 : vector<256x147xf32>
    %cst_7 = arith.constant 5.000000e-01 : f32
    %20 = vector.broadcast %cst_7 : f32 to vector<256x147xf32>
    %21 = arith.addf %19, %20 : vector<256x147xf32>
    %cst_8 = arith.constant 5.000000e-01 : f32
    %22 = vector.broadcast %cst_8 : f32 to vector<256x147xf32>
    %23 = arith.mulf %7, %22 : vector<256x147xf32>
    %cst_9 = arith.constant -1.000000e+00 : f32
    %24 = vector.broadcast %cst_9 : f32 to vector<256x147xf32>
    %25 = arith.addf %23, %24 : vector<256x147xf32>
    %26 = arith.mulf %25, %7 : vector<256x147xf32>
    %cst_10 = arith.constant 5.000000e-01 : f32
    %27 = vector.broadcast %cst_10 : f32 to vector<256x147xf32>
    %28 = arith.addf %26, %27 : vector<256x147xf32>
    %cst_11 = arith.constant 0.000000e+00 : f32
    %29 = vector.broadcast %cst_11 : f32 to vector<256x147xf32>
    %30 = arith.cmpf oeq, %6, %29 : vector<256x147xf32>
    %cst_12 = arith.constant 1.000000e+00 : f32
    %31 = vector.broadcast %cst_12 : f32 to vector<256x147xf32>
    %32 = arith.cmpf oeq, %6, %31 : vector<256x147xf32>
    %cst_13 = arith.constant 2.000000e+00 : f32
    %33 = vector.broadcast %cst_13 : f32 to vector<256x147xf32>
    %34 = arith.cmpf oeq, %6, %33 : vector<256x147xf32>
    %cst_14 = arith.constant 3.000000e+00 : f32
    %35 = vector.broadcast %cst_14 : f32 to vector<256x147xf32>
    %36 = arith.cmpf oeq, %6, %35 : vector<256x147xf32>
    %cst_15 = arith.constant 4.000000e+00 : f32
    %37 = vector.broadcast %cst_15 : f32 to vector<256x147xf32>
    %38 = arith.cmpf oeq, %6, %37 : vector<256x147xf32>
    %cst_16 = arith.constant 5.000000e+00 : f32
    %39 = vector.broadcast %cst_16 : f32 to vector<256x147xf32>
    %40 = arith.cmpf oeq, %6, %39 : vector<256x147xf32>
    %c0_17 = arith.constant 0 : index
    %c0_18 = arith.constant 0 : index
    %41 = vector.load %arg6[%c0_17, %c0_18] : memref<256x128xf32, #tpu.memory_space<vmem>>, vector<256x128xf32>
    %cst_19 = arith.constant 0.000000e+00 : f32
    %42 = vector.broadcast %cst_19 : f32 to vector<256x147xf32>
    %43 = arith.select %34, %28, %42 : vector<256x147xi1>, vector<256x147xf32>
    %44 = arith.select %32, %21, %43 : vector<256x147xi1>, vector<256x147xf32>
    %45 = arith.select %30, %14, %44 : vector<256x147xi1>, vector<256x147xf32>
    %46 = arith.truncf %45 : vector<256x147xf32> to vector<256x147xbf16>
    %c0_20 = arith.constant 0 : index
    %c0_21 = arith.constant 0 : index
    %c0_22 = arith.constant 0 : index
    %c0_23 = arith.constant 0 : index
    %47 = vector.load %arg4[%c0_20, %c0_21, %c0_22, %c0_23] : memref<1x4x147x128xbf16, #tpu.memory_space<vmem>>, vector<1x1x147x128xbf16>
    %48 = vector.shape_cast %47 : vector<1x1x147x128xbf16> to vector<147x128xbf16>
    %cst_24 = arith.constant dense<0.000000e+00> : vector<256x128xf32>
    %49 = tpu.matmul %46, %48, %cst_24 {dimension_numbers = #tpu.dot_dimension_numbers<[1], [0], [0], [1], [0, 0, 1, 1], [], []>} : vector<256x147xbf16>, vector<147x128xbf16>, vector<256x128xf32> -> vector<256x128xf32>
    %50 = arith.addf %41, %49 : vector<256x128xf32>
    %cst_25 = arith.constant 0.000000e+00 : f32
    %51 = vector.broadcast %cst_25 : f32 to vector<256x147xf32>
    %52 = arith.select %36, %28, %51 : vector<256x147xi1>, vector<256x147xf32>
    %53 = arith.select %34, %21, %52 : vector<256x147xi1>, vector<256x147xf32>
    %54 = arith.select %32, %14, %53 : vector<256x147xi1>, vector<256x147xf32>
    %55 = arith.truncf %54 : vector<256x147xf32> to vector<256x147xbf16>
    %c0_26 = arith.constant 0 : index
    %c1 = arith.constant 1 : index
    %c0_27 = arith.constant 0 : index
    %c0_28 = arith.constant 0 : index
    %56 = vector.load %arg4[%c0_26, %c1, %c0_27, %c0_28] : memref<1x4x147x128xbf16, #tpu.memory_space<vmem>>, vector<1x1x147x128xbf16>
    %57 = vector.shape_cast %56 : vector<1x1x147x128xbf16> to vector<147x128xbf16>
    %cst_29 = arith.constant dense<0.000000e+00> : vector<256x128xf32>
    %58 = tpu.matmul %55, %57, %cst_29 {dimension_numbers = #tpu.dot_dimension_numbers<[1], [0], [0], [1], [0, 0, 1, 1], [], []>} : vector<256x147xbf16>, vector<147x128xbf16>, vector<256x128xf32> -> vector<256x128xf32>
    %59 = arith.addf %50, %58 : vector<256x128xf32>
    %cst_30 = arith.constant 0.000000e+00 : f32
    %60 = vector.broadcast %cst_30 : f32 to vector<256x147xf32>
    %61 = arith.select %38, %28, %60 : vector<256x147xi1>, vector<256x147xf32>
    %62 = arith.select %36, %21, %61 : vector<256x147xi1>, vector<256x147xf32>
    %63 = arith.select %34, %14, %62 : vector<256x147xi1>, vector<256x147xf32>
    %64 = arith.truncf %63 : vector<256x147xf32> to vector<256x147xbf16>
    %c0_31 = arith.constant 0 : index
    %c2 = arith.constant 2 : index
    %c0_32 = arith.constant 0 : index
    %c0_33 = arith.constant 0 : index
    %65 = vector.load %arg4[%c0_31, %c2, %c0_32, %c0_33] : memref<1x4x147x128xbf16, #tpu.memory_space<vmem>>, vector<1x1x147x128xbf16>
    %66 = vector.shape_cast %65 : vector<1x1x147x128xbf16> to vector<147x128xbf16>
    %cst_34 = arith.constant dense<0.000000e+00> : vector<256x128xf32>
    %67 = tpu.matmul %64, %66, %cst_34 {dimension_numbers = #tpu.dot_dimension_numbers<[1], [0], [0], [1], [0, 0, 1, 1], [], []>} : vector<256x147xbf16>, vector<147x128xbf16>, vector<256x128xf32> -> vector<256x128xf32>
    %68 = arith.addf %59, %67 : vector<256x128xf32>
    %cst_35 = arith.constant 0.000000e+00 : f32
    %69 = vector.broadcast %cst_35 : f32 to vector<256x147xf32>
    %70 = arith.select %40, %28, %69 : vector<256x147xi1>, vector<256x147xf32>
    %71 = arith.select %38, %21, %70 : vector<256x147xi1>, vector<256x147xf32>
    %72 = arith.select %36, %14, %71 : vector<256x147xi1>, vector<256x147xf32>
    %73 = arith.truncf %72 : vector<256x147xf32> to vector<256x147xbf16>
    %c0_36 = arith.constant 0 : index
    %c3 = arith.constant 3 : index
    %c0_37 = arith.constant 0 : index
    %c0_38 = arith.constant 0 : index
    %74 = vector.load %arg4[%c0_36, %c3, %c0_37, %c0_38] : memref<1x4x147x128xbf16, #tpu.memory_space<vmem>>, vector<1x1x147x128xbf16>
    %75 = vector.shape_cast %74 : vector<1x1x147x128xbf16> to vector<147x128xbf16>
    %cst_39 = arith.constant dense<0.000000e+00> : vector<256x128xf32>
    %76 = tpu.matmul %73, %75, %cst_39 {dimension_numbers = #tpu.dot_dimension_numbers<[1], [0], [0], [1], [0, 0, 1, 1], [], []>} : vector<256x147xbf16>, vector<147x128xbf16>, vector<256x128xf32> -> vector<256x128xf32>
    %77 = arith.addf %68, %76 : vector<256x128xf32>
    %c0_40 = arith.constant 0 : index
    %c0_41 = arith.constant 0 : index
    %78 = vector.load %arg6[%c0_40, %c0_41] : memref<256x128xf32, #tpu.memory_space<vmem>>, vector<256x128xf32>
    tpu.vector_store %arg6[%c0_40, %c0_41], %77 {strides = array<i32>} : memref<256x128xf32, #tpu.memory_space<vmem>>, vector<256x128xf32>,
    %c0_i32_42 = arith.constant 0 : i32
    %79 = arith.cmpi eq, %arg2, %c0_i32_42 : i32
    %80 = arith.extui %79 : i1 to i32
    %c0_i32_43 = arith.constant 0 : i32
    %81 = arith.cmpi ne, %80, %c0_i32_43 : i32
    scf.if %81 {
      %c0_44 = arith.constant 0 : index
      %c0_45 = arith.constant 0 : index
      %82 = vector.load %arg6[%c0_44, %c0_45] : memref<256x128xf32, #tpu.memory_space<vmem>>, vector<256x128xf32>
      %c0_46 = arith.constant 0 : index
      %c0_47 = arith.constant 0 : index
      %83 = vector.load %arg5[%c0_46, %c0_47] : memref<256x128xf32, #tpu.memory_space<vmem>>, vector<256x128xf32>
      tpu.vector_store %arg5[%c0_46, %c0_47], %82 {strides = array<i32>} : memref<256x128xf32, #tpu.memory_space<vmem>>, vector<256x128xf32>,
    } else {
    }
    return
  }
  func.func @transform_0(%arg0: i32, %arg1: i32, %arg2: i32) -> (i32, i32) {
    %c0_i32 = arith.constant 0 : i32
    return %arg0, %arg2 : i32, i32
  }
  func.func @transform_1(%arg0: i32, %arg1: i32, %arg2: i32) -> (i32, i32, i32, i32) {
    %c0_i32 = arith.constant 0 : i32
    %c0_i32_0 = arith.constant 0 : i32
    %c0_i32_1 = arith.constant 0 : i32
    return %arg2, %c0_i32, %c0_i32_0, %arg1 : i32, i32, i32, i32
  }
  func.func @transform_2(%arg0: i32, %arg1: i32, %arg2: i32) -> (i32, i32) {
    %c0_i32 = arith.constant 0 : i32
    return %arg0, %arg1 : i32, i32
  }
}

module attributes {stable_mosaic.version = 11 : i64} {
  func.func @_kan_mm_kernel(%arg0: i32, %arg1: i32, %arg2: i32, %arg3: memref<64x576xf32, #tpu.memory_space<vmem>>, %arg4: memref<1x4x576x128xbf16, #tpu.memory_space<vmem>>, %arg5: memref<64x128xf32, #tpu.memory_space<vmem>>, %arg6: memref<64x128xf32, #tpu.memory_space<vmem>>) attributes {dimension_semantics = [#tpu.dimension_semantics<parallel>, #tpu.dimension_semantics<parallel>, #tpu.dimension_semantics<arbitrary>], iteration_bounds = array<i64: 2, 1, 1>, scalar_prefetch = 0 : i64, scratch_operands = 1 : i64, tpu.core_type = #tpu.core_type<tc>, window_params = [{transform_indices = @transform_0, window_bounds = array<i64: 64, 576>}, {transform_indices = @transform_1, window_bounds = array<i64: 1, 4, 576, 128>}, {transform_indices = @transform_2, window_bounds = array<i64: 64, 128>}]} {
    %c0_i32 = arith.constant 0 : i32
    %0 = arith.cmpi eq, %arg2, %c0_i32 : i32
    %1 = arith.extui %0 : i1 to i32
    %c0_i32_0 = arith.constant 0 : i32
    %2 = arith.cmpi ne, %1, %c0_i32_0 : i32
    scf.if %2 {
      %cst_44 = arith.constant 0.000000e+00 : f32
      %82 = vector.broadcast %cst_44 : f32 to vector<64x128xf32>
      %c0_45 = arith.constant 0 : index
      %c0_46 = arith.constant 0 : index
      %83 = vector.load %arg6[%c0_45, %c0_46] : memref<64x128xf32, #tpu.memory_space<vmem>>, vector<64x128xf32>
      tpu.vector_store %arg6[%c0_45, %c0_46], %82 {strides = array<i32>} : memref<64x128xf32, #tpu.memory_space<vmem>>, vector<64x128xf32>,
    } else {
    }
    %c0 = arith.constant 0 : index
    %c0_1 = arith.constant 0 : index
    %3 = vector.load %arg3[%c0, %c0_1] : memref<64x576xf32, #tpu.memory_space<vmem>>, vector<64x576xf32>
    %cst = arith.constant 6.000000e+00 : f32
    %4 = vector.broadcast %cst : f32 to vector<64x576xf32>
    %5 = arith.mulf %3, %4 : vector<64x576xf32>
    %6 = math.floor %5 : vector<64x576xf32>
    %7 = arith.subf %5, %6 : vector<64x576xf32>
    %cst_2 = arith.constant 5.000000e-01 : f32
    %8 = vector.broadcast %cst_2 : f32 to vector<64x576xf32>
    %9 = arith.mulf %7, %8 : vector<64x576xf32>
    %cst_3 = arith.constant 0.000000e+00 : f32
    %10 = vector.broadcast %cst_3 : f32 to vector<64x576xf32>
    %11 = arith.addf %9, %10 : vector<64x576xf32>
    %12 = arith.mulf %11, %7 : vector<64x576xf32>
    %cst_4 = arith.constant 0.000000e+00 : f32
    %13 = vector.broadcast %cst_4 : f32 to vector<64x576xf32>
    %14 = arith.addf %12, %13 : vector<64x576xf32>
    %cst_5 = arith.constant -1.000000e+00 : f32
    %15 = vector.broadcast %cst_5 : f32 to vector<64x576xf32>
    %16 = arith.mulf %7, %15 : vector<64x576xf32>
    %cst_6 = arith.constant 1.000000e+00 : f32
    %17 = vector.broadcast %cst_6 : f32 to vector<64x576xf32>
    %18 = arith.addf %16, %17 : vector<64x576xf32>
    %19 = arith.mulf %18, %7 : vector<64x576xf32>
    %cst_7 = arith.constant 5.000000e-01 : f32
    %20 = vector.broadcast %cst_7 : f32 to vector<64x576xf32>
    %21 = arith.addf %19, %20 : vector<64x576xf32>
    %cst_8 = arith.constant 5.000000e-01 : f32
    %22 = vector.broadcast %cst_8 : f32 to vector<64x576xf32>
    %23 = arith.mulf %7, %22 : vector<64x576xf32>
    %cst_9 = arith.constant -1.000000e+00 : f32
    %24 = vector.broadcast %cst_9 : f32 to vector<64x576xf32>
    %25 = arith.addf %23, %24 : vector<64x576xf32>
    %26 = arith.mulf %25, %7 : vector<64x576xf32>
    %cst_10 = arith.constant 5.000000e-01 : f32
    %27 = vector.broadcast %cst_10 : f32 to vector<64x576xf32>
    %28 = arith.addf %26, %27 : vector<64x576xf32>
    %cst_11 = arith.constant 0.000000e+00 : f32
    %29 = vector.broadcast %cst_11 : f32 to vector<64x576xf32>
    %30 = arith.cmpf oeq, %6, %29 : vector<64x576xf32>
    %cst_12 = arith.constant 1.000000e+00 : f32
    %31 = vector.broadcast %cst_12 : f32 to vector<64x576xf32>
    %32 = arith.cmpf oeq, %6, %31 : vector<64x576xf32>
    %cst_13 = arith.constant 2.000000e+00 : f32
    %33 = vector.broadcast %cst_13 : f32 to vector<64x576xf32>
    %34 = arith.cmpf oeq, %6, %33 : vector<64x576xf32>
    %cst_14 = arith.constant 3.000000e+00 : f32
    %35 = vector.broadcast %cst_14 : f32 to vector<64x576xf32>
    %36 = arith.cmpf oeq, %6, %35 : vector<64x576xf32>
    %cst_15 = arith.constant 4.000000e+00 : f32
    %37 = vector.broadcast %cst_15 : f32 to vector<64x576xf32>
    %38 = arith.cmpf oeq, %6, %37 : vector<64x576xf32>
    %cst_16 = arith.constant 5.000000e+00 : f32
    %39 = vector.broadcast %cst_16 : f32 to vector<64x576xf32>
    %40 = arith.cmpf oeq, %6, %39 : vector<64x576xf32>
    %c0_17 = arith.constant 0 : index
    %c0_18 = arith.constant 0 : index
    %41 = vector.load %arg6[%c0_17, %c0_18] : memref<64x128xf32, #tpu.memory_space<vmem>>, vector<64x128xf32>
    %cst_19 = arith.constant 0.000000e+00 : f32
    %42 = vector.broadcast %cst_19 : f32 to vector<64x576xf32>
    %43 = arith.select %34, %28, %42 : vector<64x576xi1>, vector<64x576xf32>
    %44 = arith.select %32, %21, %43 : vector<64x576xi1>, vector<64x576xf32>
    %45 = arith.select %30, %14, %44 : vector<64x576xi1>, vector<64x576xf32>
    %46 = arith.truncf %45 : vector<64x576xf32> to vector<64x576xbf16>
    %c0_20 = arith.constant 0 : index
    %c0_21 = arith.constant 0 : index
    %c0_22 = arith.constant 0 : index
    %c0_23 = arith.constant 0 : index
    %47 = vector.load %arg4[%c0_20, %c0_21, %c0_22, %c0_23] : memref<1x4x576x128xbf16, #tpu.memory_space<vmem>>, vector<1x1x576x128xbf16>
    %48 = vector.shape_cast %47 : vector<1x1x576x128xbf16> to vector<576x128xbf16>
    %cst_24 = arith.constant dense<0.000000e+00> : vector<64x128xf32>
    %49 = tpu.matmul %46, %48, %cst_24 {dimension_numbers = #tpu.dot_dimension_numbers<[1], [0], [0], [1], [0, 0, 1, 1], [], []>} : vector<64x576xbf16>, vector<576x128xbf16>, vector<64x128xf32> -> vector<64x128xf32>
    %50 = arith.addf %41, %49 : vector<64x128xf32>
    %cst_25 = arith.constant 0.000000e+00 : f32
    %51 = vector.broadcast %cst_25 : f32 to vector<64x576xf32>
    %52 = arith.select %36, %28, %51 : vector<64x576xi1>, vector<64x576xf32>
    %53 = arith.select %34, %21, %52 : vector<64x576xi1>, vector<64x576xf32>
    %54 = arith.select %32, %14, %53 : vector<64x576xi1>, vector<64x576xf32>
    %55 = arith.truncf %54 : vector<64x576xf32> to vector<64x576xbf16>
    %c0_26 = arith.constant 0 : index
    %c1 = arith.constant 1 : index
    %c0_27 = arith.constant 0 : index
    %c0_28 = arith.constant 0 : index
    %56 = vector.load %arg4[%c0_26, %c1, %c0_27, %c0_28] : memref<1x4x576x128xbf16, #tpu.memory_space<vmem>>, vector<1x1x576x128xbf16>
    %57 = vector.shape_cast %56 : vector<1x1x576x128xbf16> to vector<576x128xbf16>
    %cst_29 = arith.constant dense<0.000000e+00> : vector<64x128xf32>
    %58 = tpu.matmul %55, %57, %cst_29 {dimension_numbers = #tpu.dot_dimension_numbers<[1], [0], [0], [1], [0, 0, 1, 1], [], []>} : vector<64x576xbf16>, vector<576x128xbf16>, vector<64x128xf32> -> vector<64x128xf32>
    %59 = arith.addf %50, %58 : vector<64x128xf32>
    %cst_30 = arith.constant 0.000000e+00 : f32
    %60 = vector.broadcast %cst_30 : f32 to vector<64x576xf32>
    %61 = arith.select %38, %28, %60 : vector<64x576xi1>, vector<64x576xf32>
    %62 = arith.select %36, %21, %61 : vector<64x576xi1>, vector<64x576xf32>
    %63 = arith.select %34, %14, %62 : vector<64x576xi1>, vector<64x576xf32>
    %64 = arith.truncf %63 : vector<64x576xf32> to vector<64x576xbf16>
    %c0_31 = arith.constant 0 : index
    %c2 = arith.constant 2 : index
    %c0_32 = arith.constant 0 : index
    %c0_33 = arith.constant 0 : index
    %65 = vector.load %arg4[%c0_31, %c2, %c0_32, %c0_33] : memref<1x4x576x128xbf16, #tpu.memory_space<vmem>>, vector<1x1x576x128xbf16>
    %66 = vector.shape_cast %65 : vector<1x1x576x128xbf16> to vector<576x128xbf16>
    %cst_34 = arith.constant dense<0.000000e+00> : vector<64x128xf32>
    %67 = tpu.matmul %64, %66, %cst_34 {dimension_numbers = #tpu.dot_dimension_numbers<[1], [0], [0], [1], [0, 0, 1, 1], [], []>} : vector<64x576xbf16>, vector<576x128xbf16>, vector<64x128xf32> -> vector<64x128xf32>
    %68 = arith.addf %59, %67 : vector<64x128xf32>
    %cst_35 = arith.constant 0.000000e+00 : f32
    %69 = vector.broadcast %cst_35 : f32 to vector<64x576xf32>
    %70 = arith.select %40, %28, %69 : vector<64x576xi1>, vector<64x576xf32>
    %71 = arith.select %38, %21, %70 : vector<64x576xi1>, vector<64x576xf32>
    %72 = arith.select %36, %14, %71 : vector<64x576xi1>, vector<64x576xf32>
    %73 = arith.truncf %72 : vector<64x576xf32> to vector<64x576xbf16>
    %c0_36 = arith.constant 0 : index
    %c3 = arith.constant 3 : index
    %c0_37 = arith.constant 0 : index
    %c0_38 = arith.constant 0 : index
    %74 = vector.load %arg4[%c0_36, %c3, %c0_37, %c0_38] : memref<1x4x576x128xbf16, #tpu.memory_space<vmem>>, vector<1x1x576x128xbf16>
    %75 = vector.shape_cast %74 : vector<1x1x576x128xbf16> to vector<576x128xbf16>
    %cst_39 = arith.constant dense<0.000000e+00> : vector<64x128xf32>
    %76 = tpu.matmul %73, %75, %cst_39 {dimension_numbers = #tpu.dot_dimension_numbers<[1], [0], [0], [1], [0, 0, 1, 1], [], []>} : vector<64x576xbf16>, vector<576x128xbf16>, vector<64x128xf32> -> vector<64x128xf32>
    %77 = arith.addf %68, %76 : vector<64x128xf32>
    %c0_40 = arith.constant 0 : index
    %c0_41 = arith.constant 0 : index
    %78 = vector.load %arg6[%c0_40, %c0_41] : memref<64x128xf32, #tpu.memory_space<vmem>>, vector<64x128xf32>
    tpu.vector_store %arg6[%c0_40, %c0_41], %77 {strides = array<i32>} : memref<64x128xf32, #tpu.memory_space<vmem>>, vector<64x128xf32>,
    %c0_i32_42 = arith.constant 0 : i32
    %79 = arith.cmpi eq, %arg2, %c0_i32_42 : i32
    %80 = arith.extui %79 : i1 to i32
    %c0_i32_43 = arith.constant 0 : i32
    %81 = arith.cmpi ne, %80, %c0_i32_43 : i32
    scf.if %81 {
      %c0_44 = arith.constant 0 : index
      %c0_45 = arith.constant 0 : index
      %82 = vector.load %arg6[%c0_44, %c0_45] : memref<64x128xf32, #tpu.memory_space<vmem>>, vector<64x128xf32>
      %c0_46 = arith.constant 0 : index
      %c0_47 = arith.constant 0 : index
      %83 = vector.load %arg5[%c0_46, %c0_47] : memref<64x128xf32, #tpu.memory_space<vmem>>, vector<64x128xf32>
      tpu.vector_store %arg5[%c0_46, %c0_47], %82 {strides = array<i32>} : memref<64x128xf32, #tpu.memory_space<vmem>>, vector<64x128xf32>,
    } else {
    }
    return
  }
  func.func @transform_0(%arg0: i32, %arg1: i32, %arg2: i32) -> (i32, i32) {
    %c0_i32 = arith.constant 0 : i32
    return %arg0, %arg2 : i32, i32
  }
  func.func @transform_1(%arg0: i32, %arg1: i32, %arg2: i32) -> (i32, i32, i32, i32) {
    %c0_i32 = arith.constant 0 : i32
    %c0_i32_0 = arith.constant 0 : i32
    %c0_i32_1 = arith.constant 0 : i32
    return %arg2, %c0_i32, %c0_i32_0, %arg1 : i32, i32, i32, i32
  }
  func.func @transform_2(%arg0: i32, %arg1: i32, %arg2: i32) -> (i32, i32) {
    %c0_i32 = arith.constant 0 : i32
    return %arg0, %arg1 : i32, i32
  }
}

</mosaic_0001>

<llo_original>
// kernel: resnet18_kan_forward.5
$region0: #{resnet18_kan_forward.5}
  #allocation0 [shape = 'u32[]', space=smem, size = 0x4, offset = 0x4, fixed_abs, tag = 'smem constant byte address 0x4 - core index']
  #allocation1 [shape = 'u32[144,128]{1,0:T(1,128)}', space=vmem, size = 0x12000, scoped, tag = 'internal scratch']
  #allocation2 [shape = 'f32[256,128]{1,0:T(8,128)}', space=vmem, size = 0x20000, scoped, tag = 'scratch operand']
  %s0 = inlined_call_operand.vmem [shape: f32[512,147], index: 0, kind: input, shape index: {}]
  %s1 = inlined_call_operand.vmem [shape: bf16[1,4,147,128], index: 1, kind: input, shape index: {}]
  %s2 = inlined_call_operand.vmem [shape: f32[512,128], index: 2, kind: output, shape index: {}]
  %s3 = sld [smem:[#allocation0]]
  $region49: #{resnet18_kan_forward.5} parent=0
    _
  %s5 = ssub.s32 1, %s3
  %s6 = scalar_select 0, %s5, %s3
  loop: start=0, step=1, limit=4
  $region2: #{resnet18_kan_forward.5} parent=0 // loop_pre_header
    _
  $region3: #{resnet18_kan_forward.5} parent=0 // loop_header
    %s8 = sphi 0, %s12
    %p9 = scmp.ge.s32.totalorder %s8, 4
    %s15 = sphi 0, %s34
    %s16 = sphi 0, %s30
    %s17 = sphi 0, %s26
    %s18 = sphi 0, %s15
    %s19 = sphi 0, %s16
    %s20 = sphi 0, %s17
    %s21 = sphi 0, %s18
    %s22 = sphi 0, %s19
    %s23 = sphi 0, %s20
    %s39 = sphi 0, %s41
    %s42 = sphi 0, %s39
    %s43 = sphi 0, %s42
    %s59 = sphi 0, %s43
    %s67 = sphi 0, %s69
    %s70 = sphi 0, %s67
    %s71 = sphi 0, %s70
    %s87 = sphi 0, %s71
    %s95 = sphi 0, %s97
    %s98 = sphi 0, %s95
    %s99 = sphi 0, %s98
    %s115 = sphi 0, %s99
  $region4: #{resnet18_kan_forward.5} parent=0 // loop_header_branch
    %11 = sbr.rel (%p9) target = $region8
  $region5: #{resnet18_kan_forward.5} parent=0 // loop_body
    %s13 = ssub.s32 %s8, 1
    %s14 = ssub.s32 %s8, 2
    %s24 = sadd.s32 1, %s17
    %p25 = scmp.ge.s32.totalorder %s24, 1
    %s26 = scalar_select %p25, 0, %s24
    %s27 = sadd.s32 1, %s16
    %s28 = scalar_select %p25, %s27, %s16
    %p29 = scmp.ge.s32.totalorder %s28, 1
    %s30 = scalar_select %p29, 0, %s28
    %s31 = sadd.s32 1, %s15
    %s32 = scalar_select %p29, %s31, %s15
    %p33 = scmp.ge.s32.totalorder %s32, 2
    %s34 = scalar_select %p33, 0, %s32
    %s35 = ssub.s32 %s15, %s34
    %s36 = ssub.s32 %s17, %s26
    %s37 = sor.u32 %s35, %s36
    %p38 = scmp.eq.s32.totalorder %s37, 0
    %s40 = sadd.s32 %s39, 1
    %s41 = scalar_select %p38, %s39, %s40
    %p44 = pneg %p38
    %p45 = scmp.eq.s32.totalorder %s8, 1
    %p46 = por %p44, %p45
    %p47 = scmp.ne.s32.totalorder %s39, %s42
    %p48 = scmp.eq.s32.totalorder %s8, 0
    %p49 = por %p47, %p48
    %p50 = scmp.ne.s32.totalorder %s39, %s42
    %p51 = scmp.eq.s32.totalorder %s13, 1
    %p52 = por %p50, %p51
    %p53 = scmp.ne.s32.totalorder %s42, %s43
    %p54 = scmp.eq.s32.totalorder %s13, 0
    %p55 = por %p53, %p54
    %p56 = scmp.ne.s32.totalorder %s42, %s43
    %p57 = scmp.eq.s32.totalorder %s14, 1
    %p58 = por %p56, %p57
    %p60 = scmp.ne.s32.totalorder %s43, %s59
    %p61 = scmp.eq.s32.totalorder %s14, 0
    %p62 = por %p60, %p61
    %s63 = ssub.s32 %s17, %s26
    %s64 = ssub.s32 %s16, %s30
    %s65 = sor.u32 %s63, %s64
    %p66 = scmp.eq.s32.totalorder %s65, 0
    %s68 = sadd.s32 %s67, 1
    %s69 = scalar_select %p66, %s67, %s68
    %p72 = pneg %p66
    %p73 = scmp.eq.s32.totalorder %s8, 1
    %p74 = por %p72, %p73
    %p75 = scmp.ne.s32.totalorder %s67, %s70
    %p76 = scmp.eq.s32.totalorder %s8, 0
    %p77 = por %p75, %p76
    %p78 = scmp.ne.s32.totalorder %s67, %s70
    %p79 = scmp.eq.s32.totalorder %s13, 1
    %p80 = por %p78, %p79
    %p81 = scmp.ne.s32.totalorder %s70, %s71
    %p82 = scmp.eq.s32.totalorder %s13, 0
    %p83 = por %p81, %p82
    %p84 = scmp.ne.s32.totalorder %s70, %s71
    %p85 = scmp.eq.s32.totalorder %s14, 1
    %p86 = por %p84, %p85
    %p88 = scmp.ne.s32.totalorder %s71, %s87
    %p89 = scmp.eq.s32.totalorder %s14, 0
    %p90 = por %p88, %p89
    %s91 = ssub.s32 %s15, %s34
    %s92 = ssub.s32 %s16, %s30
    %s93 = sor.u32 %s91, %s92
    %p94 = scmp.eq.s32.totalorder %s93, 0
    %s96 = sadd.s32 %s95, 1
    %s97 = scalar_select %p94, %s95, %s96
    %p100 = pneg %p94
    %p101 = scmp.eq.s32.totalorder %s8, 1
    %p102 = por %p100, %p101
    %p103 = scmp.ne.s32.totalorder %s95, %s98
    %p104 = scmp.eq.s32.totalorder %s8, 0
    %p105 = por %p103, %p104
    %p106 = scmp.ne.s32.totalorder %s95, %s98
    %p107 = scmp.eq.s32.totalorder %s13, 1
    %p108 = por %p106, %p107
    %p109 = scmp.ne.s32.totalorder %s98, %s99
    %p110 = scmp.eq.s32.totalorder %s13, 0
    %p111 = por %p109, %p110
    %p112 = scmp.ne.s32.totalorder %s98, %s99
    %p113 = scmp.eq.s32.totalorder %s14, 1
    %p114 = por %p112, %p113
    %p116 = scmp.ne.s32.totalorder %s99, %s115
    %p117 = scmp.eq.s32.totalorder %s14, 0
    %p118 = por %p116, %p117
    %p119 = scmp.le.s32.totalorder 1, %s8
    %p120 = scmp.lt.s32.totalorder %s8, 3
    %p121 = pnand %p119, %p120
    %p122 = pneg %p121
    // Predicated region
    $region9: #{resnet18_kan_forward.5} parent=5 // pred_check
      _
    $region10: #{resnet18_kan_forward.5} parent=5 // pred_check_branch
      %124 = sbr.rel (%p121) target = $region12
    $region11: #{resnet18_kan_forward.5} parent=5 // pred_region
      %s125 = ssub.s32 %s8, 1
      // Predicated region
      $region13: #{resnet18_kan_forward.5} parent=11 // pred_check
        %p126 = pneg %p83
      $region14: #{resnet18_kan_forward.5} parent=11 // pred_check_branch
        %128 = sbr.rel (%p126) target = $region16
      $region15: #{resnet18_kan_forward.5} parent=11 // pred_region
        %p129 = scmp.lt.s32.totalorder %s20, 0
        %s130 = scalar_select %p129, %s20, 0
        %p131 = scmp.lt.s32.totalorder %s19, 0
        %s132 = scalar_select %p131, %s19, 0
        %s133 = smul.addr %s130, 76
        %s134 = sadd.s32 %s132, %s133
        %s135 = smul.addr %s134, 4
        %s136 = scalar_lea.vmem %s1, %s135
      $region16: #{resnet18_kan_forward.5} parent=11 // pred_fallthru
        _
    $region12: #{resnet18_kan_forward.5} parent=5 // pred_fallthru
      _
    %p137 = scmp.lt.s32.totalorder %s8, 2
    // Predicated region
    $region17: #{resnet18_kan_forward.5} parent=5 // pred_check
      %p138 = pneg %p137
    $region18: #{resnet18_kan_forward.5} parent=5 // pred_check_branch
      %140 = sbr.rel (%p138) target = $region20
    $region19: #{resnet18_kan_forward.5} parent=5 // pred_region
      // Predicated region
      $region21: #{resnet18_kan_forward.5} parent=19 // pred_check
        %p141 = pneg %p49
      $region22: #{resnet18_kan_forward.5} parent=19 // pred_check_branch
        %143 = sbr.rel (%p141) target = $region24
      $region23: #{resnet18_kan_forward.5} parent=19 // pred_region
        %s144 = smul.u32 32, %s15
        %s145 = smul.u32 2, %s17
        %p146 = scmp.lt.s32.totalorder %s144, 63
        %s147 = scalar_select %p146, %s144, 63
        %p148 = scmp.lt.s32.totalorder %s145, 1
        %s149 = scalar_select %p148, %s145, 1
        %s150 = smul.addr %s147, 2
        %s151 = sadd.s32 %s149, %s150
        %s152 = smul.addr %s151, 8
        %s153 = scalar_lea.vmem %s0, %s152
        %s154 = smul.u32 32, %s15
        %s155 = smul.u32 2, %s17
      $region24: #{resnet18_kan_forward.5} parent=19 // pred_fallthru
        _
    $region20: #{resnet18_kan_forward.5} parent=5 // pred_fallthru
      _
    %p156 = scmp.le.s32.totalorder 1, %s8
    %p157 = scmp.lt.s32.totalorder %s8, 3
    %p158 = pnand %p156, %p157
    %p159 = pneg %p158
    // Predicated region
    $region25: #{resnet18_kan_forward.5} parent=5 // pred_check
      _
    $region26: #{resnet18_kan_forward.5} parent=5 // pred_check_branch
      %161 = sbr.rel (%p158) target = $region28
    $region27: #{resnet18_kan_forward.5} parent=5 // pred_region
      %s162 = ssub.s32 %s8, 1
      %s163 = smul.u32 32, %s18
      %s164 = smul.u32 2, %s20
      %p165 = scmp.lt.s32.totalorder %s163, 63
      %s166 = scalar_select %p165, %s163, 63
      %p167 = scmp.lt.s32.totalorder %s164, 1
      %s168 = scalar_select %p167, %s164, 1
      %s169 = smul.addr %s166, 2
      %s170 = sadd.s32 %s168, %s169
      %s171 = smul.addr %s170, 8
      %s172 = scalar_lea.vmem %s0, %s171
      %p173 = pneg %p55
      %p174 = pneg %p52
      %p175 = scmp.lt.s32.totalorder %s20, 0
      %s176 = scalar_select %p175, %s20, 0
      %p177 = scmp.lt.s32.totalorder %s19, 0
      %s178 = scalar_select %p177, %s19, 0
      %s179 = smul.addr %s176, 76
      %s180 = sadd.s32 %s178, %s179
      %s181 = smul.addr %s180, 4
      %s182 = scalar_lea.vmem %s1, %s181
      %p183 = pneg %p83
      %p184 = pneg %p80
      %p185 = pneg %p111
      %p186 = pneg %p108
      %s187 = smul.u32 32, %s18
      %p188 = scmp.lt.s32.totalorder %s187, 63
      %s189 = scalar_select %p188, %s187, 63
      %p190 = scmp.lt.s32.totalorder %s19, 0
      %s191 = scalar_select %p190, %s19, 0
      %s192 = sadd.s32 %s191, %s189
      %s193 = smul.addr %s192, 8
      %s194 = scalar_lea.vmem %s2, %s193
      %s195 = smul.u32 32, %s18
      %s196 = smul.u32 2, %s20
      %p197 = scmp.lt.s32.totalorder %s195, 63
      %s198 = scalar_select %p197, %s195, 63
      %p199 = scmp.lt.s32.totalorder %s196, 1
      %s200 = scalar_select %p199, %s196, 1
      %s201 = smul.addr %s198, 2
      %s202 = sadd.s32 %s200, %s201
      %s203 = smul.addr %s202, 8
      %s204 = scalar_lea.vmem %s0, %s203
      %s205 = smul.u32 32, %s18
      %s206 = smul.u32 2, %s20
      %p207 = scmp.lt.s32.totalorder %s20, 0
      %s208 = scalar_select %p207, %s20, 0
      %p209 = scmp.lt.s32.totalorder %s19, 0
      %s210 = scalar_select %p209, %s19, 0
      %s211 = smul.addr %s208, 76
      %s212 = sadd.s32 %s210, %s211
      %s213 = smul.addr %s212, 4
      %s214 = scalar_lea.vmem %s1, %s213
      %s215 = smul.u32 32, %s18
      %p216 = scmp.lt.s32.totalorder %s215, 63
      %s217 = scalar_select %p216, %s215, 63
      %p218 = scmp.lt.s32.totalorder %s19, 0
      %s219 = scalar_select %p218, %s19, 0
      %s220 = sadd.s32 %s219, %s217
      %s221 = smul.addr %s220, 8
      %s222 = scalar_lea.vmem %s2, %s221
      %s223 = smul.u32 32, %s18
      %p225 = scmp.eq.s32.totalorder %s20, 0
      // Predicated region
      $region29: #{resnet18_kan_forward.5} parent=27 // pred_check
        %p226 = pneg %p225
      $region30: #{resnet18_kan_forward.5} parent=27 // pred_check_branch
        %228 = sbr.rel (%p226) target = $region32
      $region31: #{resnet18_kan_forward.5} parent=27 // pred_region
        %229 = vst [vmem:[#allocation2] sm:$0xff] 0.0
        %230 = vst [vmem:[#allocation2 + $0x8] sm:$0xff] 0.0
        %231 = vst [vmem:[#allocation2 + $0x10] sm:$0xff] 0.0
        %232 = vst [vmem:[#allocation2 + $0x18] sm:$0xff] 0.0
        %233 = vst [vmem:[#allocation2 + $0x20] sm:$0xff] 0.0
        %234 = vst [vmem:[#allocation2 + $0x28] sm:$0xff] 0.0
        %235 = vst [vmem:[#allocation2 + $0x30] sm:$0xff] 0.0
        %236 = vst [vmem:[#allocation2 + $0x38] sm:$0xff] 0.0
        %237 = vst [vmem:[#allocation2 + $0x40] sm:$0xff] 0.0
        %238 = vst [vmem:[#allocation2 + $0x48] sm:$0xff] 0.0
        %239 = vst [vmem:[#allocation2 + $0x50] sm:$0xff] 0.0
        %240 = vst [vmem:[#allocation2 + $0x58] sm:$0xff] 0.0
        %241 = vst [vmem:[#allocation2 + $0x60] sm:$0xff] 0.0
        %242 = vst [vmem:[#allocation2 + $0x68] sm:$0xff] 0.0
        %243 = vst [vmem:[#allocation2 + $0x70] sm:$0xff] 0.0
        %244 = vst [vmem:[#allocation2 + $0x78] sm:$0xff] 0.0
        %245 = vst [vmem:[#allocation2 + $0x80] sm:$0xff] 0.0
        %246 = vst [vmem:[#allocation2 + $0x88] sm:$0xff] 0.0
        %247 = vst [vmem:[#allocation2 + $0x90] sm:$0xff] 0.0
        %248 = vst [vmem:[#allocation2 + $0x98] sm:$0xff] 0.0
        %249 = vst [vmem:[#allocation2 + $0xa0] sm:$0xff] 0.0
        %250 = vst [vmem:[#allocation2 + $0xa8] sm:$0xff] 0.0
        %251 = vst [vmem:[#allocation2 + $0xb0] sm:$0xff] 0.0
        %252 = vst [vmem:[#allocation2 + $0xb8] sm:$0xff] 0.0
        %253 = vst [vmem:[#allocation2 + $0xc0] sm:$0xff] 0.0
        %254 = vst [vmem:[#allocation2 + $0xc8] sm:$0xff] 0.0
        %255 = vst [vmem:[#allocation2 + $0xd0] sm:$0xff] 0.0
        %256 = vst [vmem:[#allocation2 + $0xd8] sm:$0xff] 0.0
        %257 = vst [vmem:[#allocation2 + $0xe0] sm:$0xff] 0.0
        %258 = vst [vmem:[#allocation2 + $0xe8] sm:$0xff] 0.0
        %259 = vst [vmem:[#allocation2 + $0xf0] sm:$0xff] 0.0
        %260 = vst [vmem:[#allocation2 + $0xf8] sm:$0xff] 0.0
      $region32: #{resnet18_kan_forward.5} parent=27 // pred_fallthru
        _
      %v261 = vld [vmem:[%s204] sm:$0xff]
      %v262 = vld [vmem:[%s204 + $0x8] sm:$0xff]
      %v263 = vld [vmem:[%s204 + $0x10] sm:$0xff]
      %v264 = vld [vmem:[%s204 + $0x18] sm:$0xff]
      %v265 = vld [vmem:[%s204 + $0x20] sm:$0xff]
      %v266 = vld [vmem:[%s204 + $0x28] sm:$0xff]
      %v267 = vld [vmem:[%s204 + $0x30] sm:$0xff]
      %v268 = vld [vmem:[%s204 + $0x38] sm:$0xff]
      %v269 = vld [vmem:[%s204 + $0x40] sm:$0xff]
      %v270 = vld [vmem:[%s204 + $0x48] sm:$0xff]
      %v271 = vld [vmem:[%s204 + $0x50] sm:$0xff]
      %v272 = vld [vmem:[%s204 + $0x58] sm:$0xff]
      %v273 = vld [vmem:[%s204 + $0x60] sm:$0xff]
      %v274 = vld [vmem:[%s204 + $0x68] sm:$0xff]
      %v275 = vld [vmem:[%s204 + $0x70] sm:$0xff]
      %v276 = vld [vmem:[%s204 + $0x78] sm:$0xff]
      %v277 = vld [vmem:[%s204 + $0x80] sm:$0xff]
      %v278 = vld [vmem:[%s204 + $0x88] sm:$0xff]
      %v279 = vld [vmem:[%s204 + $0x90] sm:$0xff]
      %v280 = vld [vmem:[%s204 + $0x98] sm:$0xff]
      %v281 = vld [vmem:[%s204 + $0xa0] sm:$0xff]
      %v282 = vld [vmem:[%s204 + $0xa8] sm:$0xff]
      %v283 = vld [vmem:[%s204 + $0xb0] sm:$0xff]
      %v284 = vld [vmem:[%s204 + $0xb8] sm:$0xff]
      %v285 = vld [vmem:[%s204 + $0xc0] sm:$0xff]
      %v286 = vld [vmem:[%s204 + $0xc8] sm:$0xff]
      %v287 = vld [vmem:[%s204 + $0xd0] sm:$0xff]
      %v288 = vld [vmem:[%s204 + $0xd8] sm:$0xff]
      %v289 = vld [vmem:[%s204 + $0xe0] sm:$0xff]
      %v290 = vld [vmem:[%s204 + $0xe8] sm:$0xff]
      %v291 = vld [vmem:[%s204 + $0xf0] sm:$0xff]
      %v292 = vld [vmem:[%s204 + $0xf8] sm:$0xff]
      %v293 = vld [vmem:[%s204 + $0x100] sm:$0xff]
      %v294 = vld [vmem:[%s204 + $0x108] sm:$0xff]
      %v295 = vld [vmem:[%s204 + $0x110] sm:$0xff]
      %v296 = vld [vmem:[%s204 + $0x118] sm:$0xff]
      %v297 = vld [vmem:[%s204 + $0x120] sm:$0xff]
      %v298 = vld [vmem:[%s204 + $0x128] sm:$0xff]
      %v299 = vld [vmem:[%s204 + $0x130] sm:$0xff]
      %v300 = vld [vmem:[%s204 + $0x138] sm:$0xff]
      %v301 = vld [vmem:[%s204 + $0x140] sm:$0xff]
      %v302 = vld [vmem:[%s204 + $0x148] sm:$0xff]
      %v303 = vld [vmem:[%s204 + $0x150] sm:$0xff]
      %v304 = vld [vmem:[%s204 + $0x158] sm:$0xff]
      %v305 = vld [vmem:[%s204 + $0x160] sm:$0xff]
      %v306 = vld [vmem:[%s204 + $0x168] sm:$0xff]
      %v307 = vld [vmem:[%s204 + $0x170] sm:$0xff]
      %v308 = vld [vmem:[%s204 + $0x178] sm:$0xff]
      %v309 = vld [vmem:[%s204 + $0x180] sm:$0xff]
      %v310 = vld [vmem:[%s204 + $0x188] sm:$0xff]
      %v311 = vld [vmem:[%s204 + $0x190] sm:$0xff]
      %v312 = vld [vmem:[%s204 + $0x198] sm:$0xff]
      %v313 = vld [vmem:[%s204 + $0x1a0] sm:$0xff]
      %v314 = vld [vmem:[%s204 + $0x1a8] sm:$0xff]
      %v315 = vld [vmem:[%s204 + $0x1b0] sm:$0xff]
      %v316 = vld [vmem:[%s204 + $0x1b8] sm:$0xff]
      %v317 = vld [vmem:[%s204 + $0x1c0] sm:$0xff]
      %v318 = vld [vmem:[%s204 + $0x1c8] sm:$0xff]
      %v319 = vld [vmem:[%s204 + $0x1d0] sm:$0xff]
      %v320 = vld [vmem:[%s204 + $0x1d8] sm:$0xff]
      %v321 = vld [vmem:[%s204 + $0x1e0] sm:$0xff]
      %v322 = vld [vmem:[%s204 + $0x1e8] sm:$0xff]
      %v323 = vld [vmem:[%s204 + $0x1f0] sm:$0xff]
      %v324 = vld [vmem:[%s204 + $0x1f8] sm:$0xff]
      %v325 = vmul.f32 %v261, 6.0
      %v326 = vmul.f32 %v262, 6.0
      %v327 = vmul.f32 %v263, 6.0
      %v328 = vmul.f32 %v264, 6.0
      %v329 = vmul.f32 %v265, 6.0
      %v330 = vmul.f32 %v266, 6.0
      %v331 = vmul.f32 %v267, 6.0
      %v332 = vmul.f32 %v268, 6.0
      %v333 = vmul.f32 %v269, 6.0
      %v334 = vmul.f32 %v270, 6.0
      %v335 = vmul.f32 %v271, 6.0
      %v336 = vmul.f32 %v272, 6.0
      %v337 = vmul.f32 %v273, 6.0
      %v338 = vmul.f32 %v274, 6.0
      %v339 = vmul.f32 %v275, 6.0
      %v340 = vmul.f32 %v276, 6.0
      %v341 = vmul.f32 %v277, 6.0
      %v342 = vmul.f32 %v278, 6.0
      %v343 = vmul.f32 %v279, 6.0
      %v344 = vmul.f32 %v280, 6.0
      %v345 = vmul.f32 %v281, 6.0
      %v346 = vmul.f32 %v282, 6.0
      %v347 = vmul.f32 %v283, 6.0
      %v348 = vmul.f32 %v284, 6.0
      %v349 = vmul.f32 %v285, 6.0
      %v350 = vmul.f32 %v286, 6.0
      %v351 = vmul.f32 %v287, 6.0
      %v352 = vmul.f32 %v288, 6.0
      %v353 = vmul.f32 %v289, 6.0
      %v354 = vmul.f32 %v290, 6.0
      %v355 = vmul.f32 %v291, 6.0
      %v356 = vmul.f32 %v292, 6.0
      %v357 = vmul.f32 %v293, 6.0
      %v358 = vmul.f32 %v294, 6.0
      %v359 = vmul.f32 %v295, 6.0
      %v360 = vmul.f32 %v296, 6.0
      %v361 = vmul.f32 %v297, 6.0
      %v362 = vmul.f32 %v298, 6.0
      %v363 = vmul.f32 %v299, 6.0
      %v364 = vmul.f32 %v300, 6.0
      %v365 = vmul.f32 %v301, 6.0
      %v366 = vmul.f32 %v302, 6.0
      %v367 = vmul.f32 %v303, 6.0
      %v368 = vmul.f32 %v304, 6.0
      %v369 = vmul.f32 %v305, 6.0
      %v370 = vmul.f32 %v306, 6.0
      %v371 = vmul.f32 %v307, 6.0
      %v372 = vmul.f32 %v308, 6.0
      %v373 = vmul.f32 %v309, 6.0
      %v374 = vmul.f32 %v310, 6.0
      %v375 = vmul.f32 %v311, 6.0
      %v376 = vmul.f32 %v312, 6.0
      %v377 = vmul.f32 %v313, 6.0
      %v378 = vmul.f32 %v314, 6.0
      %v379 = vmul.f32 %v315, 6.0
      %v380 = vmul.f32 %v316, 6.0
      %v381 = vmul.f32 %v317, 6.0
      %v382 = vmul.f32 %v318, 6.0
      %v383 = vmul.f32 %v319, 6.0
      %v384 = vmul.f32 %v320, 6.0
      %v385 = vmul.f32 %v321, 6.0
      %v386 = vmul.f32 %v322, 6.0
      %v387 = vmul.f32 %v323, 6.0
      %v388 = vmul.f32 %v324, 6.0
      %v389 = vfloor.f32 %v325
      %v390 = vfloor.f32 %v326
      %v391 = vfloor.f32 %v327
      %v392 = vfloor.f32 %v328
      %v393 = vfloor.f32 %v329
      %v394 = vfloor.f32 %v330
      %v395 = vfloor.f32 %v331
      %v396 = vfloor.f32 %v332
      %v397 = vfloor.f32 %v333
      %v398 = vfloor.f32 %v334
      %v399 = vfloor.f32 %v335
      %v400 = vfloor.f32 %v336
      %v401 = vfloor.f32 %v337
      %v402 = vfloor.f32 %v338
      %v403 = vfloor.f32 %v339
      %v404 = vfloor.f32 %v340
      %v405 = vfloor.f32 %v341
      %v406 = vfloor.f32 %v342
      %v407 = vfloor.f32 %v343
      %v408 = vfloor.f32 %v344
      %v409 = vfloor.f32 %v345
      %v410 = vfloor.f32 %v346
      %v411 = vfloor.f32 %v347
      %v412 = vfloor.f32 %v348
      %v413 = vfloor.f32 %v349
      %v414 = vfloor.f32 %v350
      %v415 = vfloor.f32 %v351
      %v416 = vfloor.f32 %v352
      %v417 = vfloor.f32 %v353
      %v418 = vfloor.f32 %v354
      %v419 = vfloor.f32 %v355
      %v420 = vfloor.f32 %v356
      %v421 = vfloor.f32 %v357
      %v422 = vfloor.f32 %v358
      %v423 = vfloor.f32 %v359
      %v424 = vfloor.f32 %v360
      %v425 = vfloor.f32 %v361
      %v426 = vfloor.f32 %v362
      %v427 = vfloor.f32 %v363
      %v428 = vfloor.f32 %v364
      %v429 = vfloor.f32 %v365
      %v430 = vfloor.f32 %v366
      %v431 = vfloor.f32 %v367
      %v432 = vfloor.f32 %v368
      %v433 = vfloor.f32 %v369
      %v434 = vfloor.f32 %v370
      %v435 = vfloor.f32 %v371
      %v436 = vfloor.f32 %v372
      %v437 = vfloor.f32 %v373
      %v438 = vfloor.f32 %v374
      %v439 = vfloor.f32 %v375
      %v440 = vfloor.f32 %v376
      %v441 = vfloor.f32 %v377
      %v442 = vfloor.f32 %v378
      %v443 = vfloor.f32 %v379
      %v444 = vfloor.f32 %v380
      %v445 = vfloor.f32 %v381
      %v446 = vfloor.f32 %v382
      %v447 = vfloor.f32 %v383
      %v448 = vfloor.f32 %v384
      %v449 = vfloor.f32 %v385
      %v450 = vfloor.f32 %v386
      %v451 = vfloor.f32 %v387
      %v452 = vfloor.f32 %v388
      %v453 = vsub.f32 %v325, %v389
      %v454 = vsub.f32 %v326, %v390
      %v455 = vsub.f32 %v327, %v391
      %v456 = vsub.f32 %v328, %v392
      %v457 = vsub.f32 %v329, %v393
      %v458 = vsub.f32 %v330, %v394
      %v459 = vsub.f32 %v331, %v395
      %v460 = vsub.f32 %v332, %v396
      %v461 = vsub.f32 %v333, %v397
      %v462 = vsub.f32 %v334, %v398
      %v463 = vsub.f32 %v335, %v399
      %v464 = vsub.f32 %v336, %v400
      %v465 = vsub.f32 %v337, %v401
      %v466 = vsub.f32 %v338, %v402
      %v467 = vsub.f32 %v339, %v403
      %v468 = vsub.f32 %v340, %v404
      %v469 = vsub.f32 %v341, %v405
      %v470 = vsub.f32 %v342, %v406
      %v471 = vsub.f32 %v343, %v407
      %v472 = vsub.f32 %v344, %v408
      %v473 = vsub.f32 %v345, %v409
      %v474 = vsub.f32 %v346, %v410
      %v475 = vsub.f32 %v347, %v411
      %v476 = vsub.f32 %v348, %v412
      %v477 = vsub.f32 %v349, %v413
      %v478 = vsub.f32 %v350, %v414
      %v479 = vsub.f32 %v351, %v415
      %v480 = vsub.f32 %v352, %v416
      %v481 = vsub.f32 %v353, %v417
      %v482 = vsub.f32 %v354, %v418
      %v483 = vsub.f32 %v355, %v419
      %v484 = vsub.f32 %v356, %v420
      %v485 = vsub.f32 %v357, %v421
      %v486 = vsub.f32 %v358, %v422
      %v487 = vsub.f32 %v359, %v423
      %v488 = vsub.f32 %v360, %v424
      %v489 = vsub.f32 %v361, %v425
      %v490 = vsub.f32 %v362, %v426
      %v491 = vsub.f32 %v363, %v427
      %v492 = vsub.f32 %v364, %v428
      %v493 = vsub.f32 %v365, %v429
      %v494 = vsub.f32 %v366, %v430
      %v495 = vsub.f32 %v367, %v431
      %v496 = vsub.f32 %v368, %v432
      %v497 = vsub.f32 %v369, %v433
      %v498 = vsub.f32 %v370, %v434
      %v499 = vsub.f32 %v371, %v435
      %v500 = vsub.f32 %v372, %v436
      %v501 = vsub.f32 %v373, %v437
      %v502 = vsub.f32 %v374, %v438
      %v503 = vsub.f32 %v375, %v439
      %v504 = vsub.f32 %v376, %v440
      %v505 = vsub.f32 %v377, %v441
      %v506 = vsub.f32 %v378, %v442
      %v507 = vsub.f32 %v379, %v443
      %v508 = vsub.f32 %v380, %v444
      %v509 = vsub.f32 %v381, %v445
      %v510 = vsub.f32 %v382, %v446
      %v511 = vsub.f32 %v383, %v447
      %v512 = vsub.f32 %v384, %v448
      %v513 = vsub.f32 %v385, %v449
      %v514 = vsub.f32 %v386, %v450
      %v515 = vsub.f32 %v387, %v451
      %v516 = vsub.f32 %v388, %v452
      %v517 = vmul.f32 %v453, 0.5
      %v518 = vmul.f32 %v454, 0.5
      %v519 = vmul.f32 %v455, 0.5
      %v520 = vmul.f32 %v456, 0.5
      %v521 = vmul.f32 %v457, 0.5
      %v522 = vmul.f32 %v458, 0.5
      %v523 = vmul.f32 %v459, 0.5
      %v524 = vmul.f32 %v460, 0.5
      %v525 = vmul.f32 %v461, 0.5
      %v526 = vmul.f32 %v462, 0.5
      %v527 = vmul.f32 %v463, 0.5
      %v528 = vmul.f32 %v464, 0.5
      %v529 = vmul.f32 %v465, 0.5
      %v530 = vmul.f32 %v466, 0.5
      %v531 = vmul.f32 %v467, 0.5
      %v532 = vmul.f32 %v468, 0.5
      %v533 = vmul.f32 %v469, 0.5
      %v534 = vmul.f32 %v470, 0.5
      %v535 = vmul.f32 %v471, 0.5
      %v536 = vmul.f32 %v472, 0.5
      %v537 = vmul.f32 %v473, 0.5
      %v538 = vmul.f32 %v474, 0.5
      %v539 = vmul.f32 %v475, 0.5
      %v540 = vmul.f32 %v476, 0.5
      %v541 = vmul.f32 %v477, 0.5
      %v542 = vmul.f32 %v478, 0.5
      %v543 = vmul.f32 %v479, 0.5
      %v544 = vmul.f32 %v480, 0.5
      %v545 = vmul.f32 %v481, 0.5
      %v546 = vmul.f32 %v482, 0.5
      %v547 = vmul.f32 %v483, 0.5
      %v548 = vmul.f32 %v484, 0.5
      %v549 = vmul.f32 %v485, 0.5
      %v550 = vmul.f32 %v486, 0.5
      %v551 = vmul.f32 %v487, 0.5
      %v552 = vmul.f32 %v488, 0.5
      %v553 = vmul.f32 %v489, 0.5
      %v554 = vmul.f32 %v490, 0.5
      %v555 = vmul.f32 %v491, 0.5
      %v556 = vmul.f32 %v492, 0.5
      %v557 = vmul.f32 %v493, 0.5
      %v558 = vmul.f32 %v494, 0.5
      %v559 = vmul.f32 %v495, 0.5
      %v560 = vmul.f32 %v496, 0.5
      %v561 = vmul.f32 %v497, 0.5
      %v562 = vmul.f32 %v498, 0.5
      %v563 = vmul.f32 %v499, 0.5
      %v564 = vmul.f32 %v500, 0.5
      %v565 = vmul.f32 %v501, 0.5
      %v566 = vmul.f32 %v502, 0.5
      %v567 = vmul.f32 %v503, 0.5
      %v568 = vmul.f32 %v504, 0.5
      %v569 = vmul.f32 %v505, 0.5
      %v570 = vmul.f32 %v506, 0.5
      %v571 = vmul.f32 %v507, 0.5
      %v572 = vmul.f32 %v508, 0.5
      %v573 = vmul.f32 %v509, 0.5
      %v574 = vmul.f32 %v510, 0.5
      %v575 = vmul.f32 %v511, 0.5
      %v576 = vmul.f32 %v512, 0.5
      %v577 = vmul.f32 %v513, 0.5
      %v578 = vmul.f32 %v514, 0.5
      %v579 = vmul.f32 %v515, 0.5
      %v580 = vmul.f32 %v516, 0.5
      %v581 = vadd.f32 %v517, 0.0
      %v582 = vadd.f32 %v518, 0.0
      %v583 = vadd.f32 %v519, 0.0
      %v584 = vadd.f32 %v520, 0.0
      %v585 = vadd.f32 %v521, 0.0
      %v586 = vadd.f32 %v522, 0.0
      %v587 = vadd.f32 %v523, 0.0
      %v588 = vadd.f32 %v524, 0.0
      %v589 = vadd.f32 %v525, 0.0
      %v590 = vadd.f32 %v526, 0.0
      %v591 = vadd.f32 %v527, 0.0
      %v592 = vadd.f32 %v528, 0.0
      %v593 = vadd.f32 %v529, 0.0
      %v594 = vadd.f32 %v530, 0.0
      %v595 = vadd.f32 %v531, 0.0
      %v596 = vadd.f32 %v532, 0.0
      %v597 = vadd.f32 %v533, 0.0
      %v598 = vadd.f32 %v534, 0.0
      %v599 = vadd.f32 %v535, 0.0
      %v600 = vadd.f32 %v536, 0.0
      %v601 = vadd.f32 %v537, 0.0
      %v602 = vadd.f32 %v538, 0.0
      %v603 = vadd.f32 %v539, 0.0
      %v604 = vadd.f32 %v540, 0.0
      %v605 = vadd.f32 %v541, 0.0
      %v606 = vadd.f32 %v542, 0.0
      %v607 = vadd.f32 %v543, 0.0
      %v608 = vadd.f32 %v544, 0.0
      %v609 = vadd.f32 %v545, 0.0
      %v610 = vadd.f32 %v546, 0.0
      %v611 = vadd.f32 %v547, 0.0
      %v612 = vadd.f32 %v548, 0.0
      %v613 = vadd.f32 %v549, 0.0
      %v614 = vadd.f32 %v550, 0.0
      %v615 = vadd.f32 %v551, 0.0
      %v616 = vadd.f32 %v552, 0.0
      %v617 = vadd.f32 %v553, 0.0
      %v618 = vadd.f32 %v554, 0.0
      %v619 = vadd.f32 %v555, 0.0
      %v620 = vadd.f32 %v556, 0.0
      %v621 = vadd.f32 %v557, 0.0
      %v622 = vadd.f32 %v558, 0.0
      %v623 = vadd.f32 %v559, 0.0
      %v624 = vadd.f32 %v560, 0.0
      %v625 = vadd.f32 %v561, 0.0
      %v626 = vadd.f32 %v562, 0.0
      %v627 = vadd.f32 %v563, 0.0
      %v628 = vadd.f32 %v564, 0.0
      %v629 = vadd.f32 %v565, 0.0
      %v630 = vadd.f32 %v566, 0.0
      %v631 = vadd.f32 %v567, 0.0
      %v632 = vadd.f32 %v568, 0.0
      %v633 = vadd.f32 %v569, 0.0
      %v634 = vadd.f32 %v570, 0.0
      %v635 = vadd.f32 %v571, 0.0
      %v636 = vadd.f32 %v572, 0.0
      %v637 = vadd.f32 %v573, 0.0
      %v638 = vadd.f32 %v574, 0.0
      %v639 = vadd.f32 %v575, 0.0
      %v640 = vadd.f32 %v576, 0.0
      %v641 = vadd.f32 %v577, 0.0
      %v642 = vadd.f32 %v578, 0.0
      %v643 = vadd.f32 %v579, 0.0
      %v644 = vadd.f32 %v580, 0.0
      %v645 = vmul.f32 %v581, %v453
      %v646 = vmul.f32 %v582, %v454
      %v647 = vmul.f32 %v583, %v455
      %v648 = vmul.f32 %v584, %v456
      %v649 = vmul.f32 %v585, %v457
      %v650 = vmul.f32 %v586, %v458
      %v651 = vmul.f32 %v587, %v459
      %v652 = vmul.f32 %v588, %v460
      %v653 = vmul.f32 %v589, %v461
      %v654 = vmul.f32 %v590, %v462
      %v655 = vmul.f32 %v591, %v463
      %v656 = vmul.f32 %v592, %v464
      %v657 = vmul.f32 %v593, %v465
      %v658 = vmul.f32 %v594, %v466
      %v659 = vmul.f32 %v595, %v467
      %v660 = vmul.f32 %v596, %v468
      %v661 = vmul.f32 %v597, %v469
      %v662 = vmul.f32 %v598, %v470
      %v663 = vmul.f32 %v599, %v471
      %v664 = vmul.f32 %v600, %v472
      %v665 = vmul.f32 %v601, %v473
      %v666 = vmul.f32 %v602, %v474
      %v667 = vmul.f32 %v603, %v475
      %v668 = vmul.f32 %v604, %v476
      %v669 = vmul.f32 %v605, %v477
      %v670 = vmul.f32 %v606, %v478
      %v671 = vmul.f32 %v607, %v479
      %v672 = vmul.f32 %v608, %v480
      %v673 = vmul.f32 %v609, %v481
      %v674 = vmul.f32 %v610, %v482
      %v675 = vmul.f32 %v611, %v483
      %v676 = vmul.f32 %v612, %v484
      %v677 = vmul.f32 %v613, %v485
      %v678 = vmul.f32 %v614, %v486
      %v679 = vmul.f32 %v615, %v487
      %v680 = vmul.f32 %v616, %v488
      %v681 = vmul.f32 %v617, %v489
      %v682 = vmul.f32 %v618, %v490
      %v683 = vmul.f32 %v619, %v491
      %v684 = vmul.f32 %v620, %v492
      %v685 = vmul.f32 %v621, %v493
      %v686 = vmul.f32 %v622, %v494
      %v687 = vmul.f32 %v623, %v495
      %v688 = vmul.f32 %v624, %v496
      %v689 = vmul.f32 %v625, %v497
      %v690 = vmul.f32 %v626, %v498
      %v691 = vmul.f32 %v627, %v499
      %v692 = vmul.f32 %v628, %v500
      %v693 = vmul.f32 %v629, %v501
      %v694 = vmul.f32 %v630, %v502
      %v695 = vmul.f32 %v631, %v503
      %v696 = vmul.f32 %v632, %v504
      %v697 = vmul.f32 %v633, %v505
      %v698 = vmul.f32 %v634, %v506
      %v699 = vmul.f32 %v635, %v507
      %v700 = vmul.f32 %v636, %v508
      %v701 = vmul.f32 %v637, %v509
      %v702 = vmul.f32 %v638, %v510
      %v703 = vmul.f32 %v639, %v511
      %v704 = vmul.f32 %v640, %v512
      %v705 = vmul.f32 %v641, %v513
      %v706 = vmul.f32 %v642, %v514
      %v707 = vmul.f32 %v643, %v515
      %v708 = vmul.f32 %v644, %v516
      %v709 = vadd.f32 %v645, 0.0
      %v710 = vadd.f32 %v646, 0.0
      %v711 = vadd.f32 %v647, 0.0
      %v712 = vadd.f32 %v648, 0.0
      %v713 = vadd.f32 %v649, 0.0
      %v714 = vadd.f32 %v650, 0.0
      %v715 = vadd.f32 %v651, 0.0
      %v716 = vadd.f32 %v652, 0.0
      %v717 = vadd.f32 %v653, 0.0
      %v718 = vadd.f32 %v654, 0.0
      %v719 = vadd.f32 %v655, 0.0
      %v720 = vadd.f32 %v656, 0.0
      %v721 = vadd.f32 %v657, 0.0
      %v722 = vadd.f32 %v658, 0.0
      %v723 = vadd.f32 %v659, 0.0
      %v724 = vadd.f32 %v660, 0.0
      %v725 = vadd.f32 %v661, 0.0
      %v726 = vadd.f32 %v662, 0.0
      %v727 = vadd.f32 %v663, 0.0
      %v728 = vadd.f32 %v664, 0.0
      %v729 = vadd.f32 %v665, 0.0
      %v730 = vadd.f32 %v666, 0.0
      %v731 = vadd.f32 %v667, 0.0
      %v732 = vadd.f32 %v668, 0.0
      %v733 = vadd.f32 %v669, 0.0
      %v734 = vadd.f32 %v670, 0.0
      %v735 = vadd.f32 %v671, 0.0
      %v736 = vadd.f32 %v672, 0.0
      %v737 = vadd.f32 %v673, 0.0
      %v738 = vadd.f32 %v674, 0.0
      %v739 = vadd.f32 %v675, 0.0
      %v740 = vadd.f32 %v676, 0.0
      %v741 = vadd.f32 %v677, 0.0
      %v742 = vadd.f32 %v678, 0.0
      %v743 = vadd.f32 %v679, 0.0
      %v744 = vadd.f32 %v680, 0.0
      %v745 = vadd.f32 %v681, 0.0
      %v746 = vadd.f32 %v682, 0.0
      %v747 = vadd.f32 %v683, 0.0
      %v748 = vadd.f32 %v684, 0.0
      %v749 = vadd.f32 %v685, 0.0
      %v750 = vadd.f32 %v686, 0.0
      %v751 = vadd.f32 %v687, 0.0
      %v752 = vadd.f32 %v688, 0.0
      %v753 = vadd.f32 %v689, 0.0
      %v754 = vadd.f32 %v690, 0.0
      %v755 = vadd.f32 %v691, 0.0
      %v756 = vadd.f32 %v692, 0.0
      %v757 = vadd.f32 %v693, 0.0
      %v758 = vadd.f32 %v694, 0.0
      %v759 = vadd.f32 %v695, 0.0
      %v760 = vadd.f32 %v696, 0.0
      %v761 = vadd.f32 %v697, 0.0
      %v762 = vadd.f32 %v698, 0.0
      %v763 = vadd.f32 %v699, 0.0
      %v764 = vadd.f32 %v700, 0.0
      %v765 = vadd.f32 %v701, 0.0
      %v766 = vadd.f32 %v702, 0.0
      %v767 = vadd.f32 %v703, 0.0
      %v768 = vadd.f32 %v704, 0.0
      %v769 = vadd.f32 %v705, 0.0
      %v770 = vadd.f32 %v706, 0.0
      %v771 = vadd.f32 %v707, 0.0
      %v772 = vadd.f32 %v708, 0.0
      %v773 = vmul.f32 %v453, -1.0
      %v774 = vmul.f32 %v454, -1.0
      %v775 = vmul.f32 %v455, -1.0
      %v776 = vmul.f32 %v456, -1.0
      %v777 = vmul.f32 %v457, -1.0
      %v778 = vmul.f32 %v458, -1.0
      %v779 = vmul.f32 %v459, -1.0
      %v780 = vmul.f32 %v460, -1.0
      %v781 = vmul.f32 %v461, -1.0
      %v782 = vmul.f32 %v462, -1.0
      %v783 = vmul.f32 %v463, -1.0
      %v784 = vmul.f32 %v464, -1.0
      %v785 = vmul.f32 %v465, -1.0
      %v786 = vmul.f32 %v466, -1.0
      %v787 = vmul.f32 %v467, -1.0
      %v788 = vmul.f32 %v468, -1.0
      %v789 = vmul.f32 %v469, -1.0
      %v790 = vmul.f32 %v470, -1.0
      %v791 = vmul.f32 %v471, -1.0
      %v792 = vmul.f32 %v472, -1.0
      %v793 = vmul.f32 %v473, -1.0
      %v794 = vmul.f32 %v474, -1.0
      %v795 = vmul.f32 %v475, -1.0
      %v796 = vmul.f32 %v476, -1.0
      %v797 = vmul.f32 %v477, -1.0
      %v798 = vmul.f32 %v478, -1.0
      %v799 = vmul.f32 %v479, -1.0
      %v800 = vmul.f32 %v480, -1.0
      %v801 = vmul.f32 %v481, -1.0
      %v802 = vmul.f32 %v482, -1.0
      %v803 = vmul.f32 %v483, -1.0
      %v804 = vmul.f32 %v484, -1.0
      %v805 = vmul.f32 %v485, -1.0
      %v806 = vmul.f32 %v486, -1.0
      %v807 = vmul.f32 %v487, -1.0
      %v808 = vmul.f32 %v488, -1.0
      %v809 = vmul.f32 %v489, -1.0
      %v810 = vmul.f32 %v490, -1.0
      %v811 = vmul.f32 %v491, -1.0
      %v812 = vmul.f32 %v492, -1.0
      %v813 = vmul.f32 %v493, -1.0
      %v814 = vmul.f32 %v494, -1.0
      %v815 = vmul.f32 %v495, -1.0
      %v816 = vmul.f32 %v496, -1.0
      %v817 = vmul.f32 %v497, -1.0
      %v818 = vmul.f32 %v498, -1.0
      %v819 = vmul.f32 %v499, -1.0
      %v820 = vmul.f32 %v500, -1.0
      %v821 = vmul.f32 %v501, -1.0
      %v822 = vmul.f32 %v502, -1.0
      %v823 = vmul.f32 %v503, -1.0
      %v824 = vmul.f32 %v504, -1.0
      %v825 = vmul.f32 %v505, -1.0
      %v826 = vmul.f32 %v506, -1.0
      %v827 = vmul.f32 %v507, -1.0
      %v828 = vmul.f32 %v508, -1.0
      %v829 = vmul.f32 %v509, -1.0
      %v830 = vmul.f32 %v510, -1.0
      %v831 = vmul.f32 %v511, -1.0
      %v832 = vmul.f32 %v512, -1.0
      %v833 = vmul.f32 %v513, -1.0
      %v834 = vmul.f32 %v514, -1.0
      %v835 = vmul.f32 %v515, -1.0
      %v836 = vmul.f32 %v516, -1.0
      %v837 = vadd.f32 %v773, 1.0
      %v838 = vadd.f32 %v774, 1.0
      %v839 = vadd.f32 %v775, 1.0
      %v840 = vadd.f32 %v776, 1.0
      %v841 = vadd.f32 %v777, 1.0
      %v842 = vadd.f32 %v778, 1.0
      %v843 = vadd.f32 %v779, 1.0
      %v844 = vadd.f32 %v780, 1.0
      %v845 = vadd.f32 %v781, 1.0
      %v846 = vadd.f32 %v782, 1.0
      %v847 = vadd.f32 %v783, 1.0
      %v848 = vadd.f32 %v784, 1.0
      %v849 = vadd.f32 %v785, 1.0
      %v850 = vadd.f32 %v786, 1.0
      %v851 = vadd.f32 %v787, 1.0
      %v852 = vadd.f32 %v788, 1.0
      %v853 = vadd.f32 %v789, 1.0
      %v854 = vadd.f32 %v790, 1.0
      %v855 = vadd.f32 %v791, 1.0
      %v856 = vadd.f32 %v792, 1.0
      %v857 = vadd.f32 %v793, 1.0
      %v858 = vadd.f32 %v794, 1.0
      %v859 = vadd.f32 %v795, 1.0
      %v860 = vadd.f32 %v796, 1.0
      %v861 = vadd.f32 %v797, 1.0
      %v862 = vadd.f32 %v798, 1.0
      %v863 = vadd.f32 %v799, 1.0
      %v864 = vadd.f32 %v800, 1.0
      %v865 = vadd.f32 %v801, 1.0
      %v866 = vadd.f32 %v802, 1.0
      %v867 = vadd.f32 %v803, 1.0
      %v868 = vadd.f32 %v804, 1.0
      %v869 = vadd.f32 %v805, 1.0
      %v870 = vadd.f32 %v806, 1.0
      %v871 = vadd.f32 %v807, 1.0
      %v872 = vadd.f32 %v808, 1.0
      %v873 = vadd.f32 %v809, 1.0
      %v874 = vadd.f32 %v810, 1.0
      %v875 = vadd.f32 %v811, 1.0
      %v876 = vadd.f32 %v812, 1.0
      %v877 = vadd.f32 %v813, 1.0
      %v878 = vadd.f32 %v814, 1.0
      %v879 = vadd.f32 %v815, 1.0
      %v880 = vadd.f32 %v816, 1.0
      %v881 = vadd.f32 %v817, 1.0
      %v882 = vadd.f32 %v818, 1.0
      %v883 = vadd.f32 %v819, 1.0
      %v884 = vadd.f32 %v820, 1.0
      %v885 = vadd.f32 %v821, 1.0
      %v886 = vadd.f32 %v822, 1.0
      %v887 = vadd.f32 %v823, 1.0
      %v888 = vadd.f32 %v824, 1.0
      %v889 = vadd.f32 %v825, 1.0
      %v890 = vadd.f32 %v826, 1.0
      %v891 = vadd.f32 %v827, 1.0
      %v892 = vadd.f32 %v828, 1.0
      %v893 = vadd.f32 %v829, 1.0
      %v894 = vadd.f32 %v830, 1.0
      %v895 = vadd.f32 %v831, 1.0
      %v896 = vadd.f32 %v832, 1.0
      %v897 = vadd.f32 %v833, 1.0
      %v898 = vadd.f32 %v834, 1.0
      %v899 = vadd.f32 %v835, 1.0
      %v900 = vadd.f32 %v836, 1.0
      %v901 = vmul.f32 %v837, %v453
      %v902 = vmul.f32 %v838, %v454
      %v903 = vmul.f32 %v839, %v455
      %v904 = vmul.f32 %v840, %v456
      %v905 = vmul.f32 %v841, %v457
      %v906 = vmul.f32 %v842, %v458
      %v907 = vmul.f32 %v843, %v459
      %v908 = vmul.f32 %v844, %v460
      %v909 = vmul.f32 %v845, %v461
      %v910 = vmul.f32 %v846, %v462
      %v911 = vmul.f32 %v847, %v463
      %v912 = vmul.f32 %v848, %v464
      %v913 = vmul.f32 %v849, %v465
      %v914 = vmul.f32 %v850, %v466
      %v915 = vmul.f32 %v851, %v467
      %v916 = vmul.f32 %v852, %v468
      %v917 = vmul.f32 %v853, %v469
      %v918 = vmul.f32 %v854, %v470
      %v919 = vmul.f32 %v855, %v471
      %v920 = vmul.f32 %v856, %v472
      %v921 = vmul.f32 %v857, %v473
      %v922 = vmul.f32 %v858, %v474
      %v923 = vmul.f32 %v859, %v475
      %v924 = vmul.f32 %v860, %v476
      %v925 = vmul.f32 %v861, %v477
      %v926 = vmul.f32 %v862, %v478
      %v927 = vmul.f32 %v863, %v479
      %v928 = vmul.f32 %v864, %v480
      %v929 = vmul.f32 %v865, %v481
      %v930 = vmul.f32 %v866, %v482
      %v931 = vmul.f32 %v867, %v483
      %v932 = vmul.f32 %v868, %v484
      %v933 = vmul.f32 %v869, %v485
      %v934 = vmul.f32 %v870, %v486
      %v935 = vmul.f32 %v871, %v487
      %v936 = vmul.f32 %v872, %v488
      %v937 = vmul.f32 %v873, %v489
      %v938 = vmul.f32 %v874, %v490
      %v939 = vmul.f32 %v875, %v491
      %v940 = vmul.f32 %v876, %v492
      %v941 = vmul.f32 %v877, %v493
      %v942 = vmul.f32 %v878, %v494
      %v943 = vmul.f32 %v879, %v495
      %v944 = vmul.f32 %v880, %v496
      %v945 = vmul.f32 %v881, %v497
      %v946 = vmul.f32 %v882, %v498
      %v947 = vmul.f32 %v883, %v499
      %v948 = vmul.f32 %v884, %v500
      %v949 = vmul.f32 %v885, %v501
      %v950 = vmul.f32 %v886, %v502
      %v951 = vmul.f32 %v887, %v503
      %v952 = vmul.f32 %v888, %v504
      %v953 = vmul.f32 %v889, %v505
      %v954 = vmul.f32 %v890, %v506
      %v955 = vmul.f32 %v891, %v507
      %v956 = vmul.f32 %v892, %v508
      %v957 = vmul.f32 %v893, %v509
      %v958 = vmul.f32 %v894, %v510
      %v959 = vmul.f32 %v895, %v511
      %v960 = vmul.f32 %v896, %v512
      %v961 = vmul.f32 %v897, %v513
      %v962 = vmul.f32 %v898, %v514
      %v963 = vmul.f32 %v899, %v515
      %v964 = vmul.f32 %v900, %v516
      %v965 = vadd.f32 %v901, 0.5
      %v966 = vadd.f32 %v902, 0.5
      %v967 = vadd.f32 %v903, 0.5
      %v968 = vadd.f32 %v904, 0.5
      %v969 = vadd.f32 %v905, 0.5
      %v970 = vadd.f32 %v906, 0.5
      %v971 = vadd.f32 %v907, 0.5
      %v972 = vadd.f32 %v908, 0.5
      %v973 = vadd.f32 %v909, 0.5
      %v974 = vadd.f32 %v910, 0.5
      %v975 = vadd.f32 %v911, 0.5
      %v976 = vadd.f32 %v912, 0.5
      %v977 = vadd.f32 %v913, 0.5
      %v978 = vadd.f32 %v914, 0.5
      %v979 = vadd.f32 %v915, 0.5
      %v980 = vadd.f32 %v916, 0.5
      %v981 = vadd.f32 %v917, 0.5
      %v982 = vadd.f32 %v918, 0.5
      %v983 = vadd.f32 %v919, 0.5
      %v984 = vadd.f32 %v920, 0.5
      %v985 = vadd.f32 %v921, 0.5
      %v986 = vadd.f32 %v922, 0.5
      %v987 = vadd.f32 %v923, 0.5
      %v988 = vadd.f32 %v924, 0.5
      %v989 = vadd.f32 %v925, 0.5
      %v990 = vadd.f32 %v926, 0.5
      %v991 = vadd.f32 %v927, 0.5
      %v992 = vadd.f32 %v928, 0.5
      %v993 = vadd.f32 %v929, 0.5
      %v994 = vadd.f32 %v930, 0.5
      %v995 = vadd.f32 %v931, 0.5
      %v996 = vadd.f32 %v932, 0.5
      %v997 = vadd.f32 %v933, 0.5
      %v998 = vadd.f32 %v934, 0.5
      %v999 = vadd.f32 %v935, 0.5
      %v1000 = vadd.f32 %v936, 0.5
      %v1001 = vadd.f32 %v937, 0.5
      %v1002 = vadd.f32 %v938, 0.5
      %v1003 = vadd.f32 %v939, 0.5
      %v1004 = vadd.f32 %v940, 0.5
      %v1005 = vadd.f32 %v941, 0.5
      %v1006 = vadd.f32 %v942, 0.5
      %v1007 = vadd.f32 %v943, 0.5
      %v1008 = vadd.f32 %v944, 0.5
      %v1009 = vadd.f32 %v945, 0.5
      %v1010 = vadd.f32 %v946, 0.5
      %v1011 = vadd.f32 %v947, 0.5
      %v1012 = vadd.f32 %v948, 0.5
      %v1013 = vadd.f32 %v949, 0.5
      %v1014 = vadd.f32 %v950, 0.5
      %v1015 = vadd.f32 %v951, 0.5
      %v1016 = vadd.f32 %v952, 0.5
      %v1017 = vadd.f32 %v953, 0.5
      %v1018 = vadd.f32 %v954, 0.5
      %v1019 = vadd.f32 %v955, 0.5
      %v1020 = vadd.f32 %v956, 0.5
      %v1021 = vadd.f32 %v957, 0.5
      %v1022 = vadd.f32 %v958, 0.5
      %v1023 = vadd.f32 %v959, 0.5
      %v1024 = vadd.f32 %v960, 0.5
      %v1025 = vadd.f32 %v961, 0.5
      %v1026 = vadd.f32 %v962, 0.5
      %v1027 = vadd.f32 %v963, 0.5
      %v1028 = vadd.f32 %v964, 0.5
      %v1029 = vadd.f32 %v517, -1.0
      %v1030 = vadd.f32 %v518, -1.0
      %v1031 = vadd.f32 %v519, -1.0
      %v1032 = vadd.f32 %v520, -1.0
      %v1033 = vadd.f32 %v521, -1.0
      %v1034 = vadd.f32 %v522, -1.0
      %v1035 = vadd.f32 %v523, -1.0
      %v1036 = vadd.f32 %v524, -1.0
      %v1037 = vadd.f32 %v525, -1.0
      %v1038 = vadd.f32 %v526, -1.0
      %v1039 = vadd.f32 %v527, -1.0
      %v1040 = vadd.f32 %v528, -1.0
      %v1041 = vadd.f32 %v529, -1.0
      %v1042 = vadd.f32 %v530, -1.0
      %v1043 = vadd.f32 %v531, -1.0
      %v1044 = vadd.f32 %v532, -1.0
      %v1045 = vadd.f32 %v533, -1.0
      %v1046 = vadd.f32 %v534, -1.0
      %v1047 = vadd.f32 %v535, -1.0
      %v1048 = vadd.f32 %v536, -1.0
      %v1049 = vadd.f32 %v537, -1.0
      %v1050 = vadd.f32 %v538, -1.0
      %v1051 = vadd.f32 %v539, -1.0
      %v1052 = vadd.f32 %v540, -1.0
      %v1053 = vadd.f32 %v541, -1.0
      %v1054 = vadd.f32 %v542, -1.0
      %v1055 = vadd.f32 %v543, -1.0
      %v1056 = vadd.f32 %v544, -1.0
      %v1057 = vadd.f32 %v545, -1.0
      %v1058 = vadd.f32 %v546, -1.0
      %v1059 = vadd.f32 %v547, -1.0
      %v1060 = vadd.f32 %v548, -1.0
      %v1061 = vadd.f32 %v549, -1.0
      %v1062 = vadd.f32 %v550, -1.0
      %v1063 = vadd.f32 %v551, -1.0
      %v1064 = vadd.f32 %v552, -1.0
      %v1065 = vadd.f32 %v553, -1.0
      %v1066 = vadd.f32 %v554, -1.0
      %v1067 = vadd.f32 %v555, -1.0
      %v1068 = vadd.f32 %v556, -1.0
      %v1069 = vadd.f32 %v557, -1.0
      %v1070 = vadd.f32 %v558, -1.0
      %v1071 = vadd.f32 %v559, -1.0
      %v1072 = vadd.f32 %v560, -1.0
      %v1073 = vadd.f32 %v561, -1.0
      %v1074 = vadd.f32 %v562, -1.0
      %v1075 = vadd.f32 %v563, -1.0
      %v1076 = vadd.f32 %v564, -1.0
      %v1077 = vadd.f32 %v565, -1.0
      %v1078 = vadd.f32 %v566, -1.0
      %v1079 = vadd.f32 %v567, -1.0
      %v1080 = vadd.f32 %v568, -1.0
      %v1081 = vadd.f32 %v569, -1.0
      %v1082 = vadd.f32 %v570, -1.0
      %v1083 = vadd.f32 %v571, -1.0
      %v1084 = vadd.f32 %v572, -1.0
      %v1085 = vadd.f32 %v573, -1.0
      %v1086 = vadd.f32 %v574, -1.0
      %v1087 = vadd.f32 %v575, -1.0
      %v1088 = vadd.f32 %v576, -1.0
      %v1089 = vadd.f32 %v577, -1.0
      %v1090 = vadd.f32 %v578, -1.0
      %v1091 = vadd.f32 %v579, -1.0
      %v1092 = vadd.f32 %v580, -1.0
      %v1093 = vmul.f32 %v1029, %v453
      %v1094 = vmul.f32 %v1030, %v454
      %v1095 = vmul.f32 %v1031, %v455
      %v1096 = vmul.f32 %v1032, %v456
      %v1097 = vmul.f32 %v1033, %v457
      %v1098 = vmul.f32 %v1034, %v458
      %v1099 = vmul.f32 %v1035, %v459
      %v1100 = vmul.f32 %v1036, %v460
      %v1101 = vmul.f32 %v1037, %v461
      %v1102 = vmul.f32 %v1038, %v462
      %v1103 = vmul.f32 %v1039, %v463
      %v1104 = vmul.f32 %v1040, %v464
      %v1105 = vmul.f32 %v1041, %v465
      %v1106 = vmul.f32 %v1042, %v466
      %v1107 = vmul.f32 %v1043, %v467
      %v1108 = vmul.f32 %v1044, %v468
      %v1109 = vmul.f32 %v1045, %v469
      %v1110 = vmul.f32 %v1046, %v470
      %v1111 = vmul.f32 %v1047, %v471
      %v1112 = vmul.f32 %v1048, %v472
      %v1113 = vmul.f32 %v1049, %v473
      %v1114 = vmul.f32 %v1050, %v474
      %v1115 = vmul.f32 %v1051, %v475
      %v1116 = vmul.f32 %v1052, %v476
      %v1117 = vmul.f32 %v1053, %v477
      %v1118 = vmul.f32 %v1054, %v478
      %v1119 = vmul.f32 %v1055, %v479
      %v1120 = vmul.f32 %v1056, %v480
      %v1121 = vmul.f32 %v1057, %v481
      %v1122 = vmul.f32 %v1058, %v482
      %v1123 = vmul.f32 %v1059, %v483
      %v1124 = vmul.f32 %v1060, %v484
      %v1125 = vmul.f32 %v1061, %v485
      %v1126 = vmul.f32 %v1062, %v486
      %v1127 = vmul.f32 %v1063, %v487
      %v1128 = vmul.f32 %v1064, %v488
      %v1129 = vmul.f32 %v1065, %v489
      %v1130 = vmul.f32 %v1066, %v490
      %v1131 = vmul.f32 %v1067, %v491
      %v1132 = vmul.f32 %v1068, %v492
      %v1133 = vmul.f32 %v1069, %v493
      %v1134 = vmul.f32 %v1070, %v494
      %v1135 = vmul.f32 %v1071, %v495
      %v1136 = vmul.f32 %v1072, %v496
      %v1137 = vmul.f32 %v1073, %v497
      %v1138 = vmul.f32 %v1074, %v498
      %v1139 = vmul.f32 %v1075, %v499
      %v1140 = vmul.f32 %v1076, %v500
      %v1141 = vmul.f32 %v1077, %v501
      %v1142 = vmul.f32 %v1078, %v502
      %v1143 = vmul.f32 %v1079, %v503
      %v1144 = vmul.f32 %v1080, %v504
      %v1145 = vmul.f32 %v1081, %v505
      %v1146 = vmul.f32 %v1082, %v506
      %v1147 = vmul.f32 %v1083, %v507
      %v1148 = vmul.f32 %v1084, %v508
      %v1149 = vmul.f32 %v1085, %v509
      %v1150 = vmul.f32 %v1086, %v510
      %v1151 = vmul.f32 %v1087, %v511
      %v1152 = vmul.f32 %v1088, %v512
      %v1153 = vmul.f32 %v1089, %v513
      %v1154 = vmul.f32 %v1090, %v514
      %v1155 = vmul.f32 %v1091, %v515
      %v1156 = vmul.f32 %v1092, %v516
      %v1157 = vadd.f32 %v1093, 0.5
      %v1158 = vadd.f32 %v1094, 0.5
      %v1159 = vadd.f32 %v1095, 0.5
      %v1160 = vadd.f32 %v1096, 0.5
      %v1161 = vadd.f32 %v1097, 0.5
      %v1162 = vadd.f32 %v1098, 0.5
      %v1163 = vadd.f32 %v1099, 0.5
      %v1164 = vadd.f32 %v1100, 0.5
      %v1165 = vadd.f32 %v1101, 0.5
      %v1166 = vadd.f32 %v1102, 0.5
      %v1167 = vadd.f32 %v1103, 0.5
      %v1168 = vadd.f32 %v1104, 0.5
      %v1169 = vadd.f32 %v1105, 0.5
      %v1170 = vadd.f32 %v1106, 0.5
      %v1171 = vadd.f32 %v1107, 0.5
      %v1172 = vadd.f32 %v1108, 0.5
      %v1173 = vadd.f32 %v1109, 0.5
      %v1174 = vadd.f32 %v1110, 0.5
      %v1175 = vadd.f32 %v1111, 0.5
      %v1176 = vadd.f32 %v1112, 0.5
      %v1177 = vadd.f32 %v1113, 0.5
      %v1178 = vadd.f32 %v1114, 0.5
      %v1179 = vadd.f32 %v1115, 0.5
      %v1180 = vadd.f32 %v1116, 0.5
      %v1181 = vadd.f32 %v1117, 0.5
      %v1182 = vadd.f32 %v1118, 0.5
      %v1183 = vadd.f32 %v1119, 0.5
      %v1184 = vadd.f32 %v1120, 0.5
      %v1185 = vadd.f32 %v1121, 0.5
      %v1186 = vadd.f32 %v1122, 0.5
      %v1187 = vadd.f32 %v1123, 0.5
      %v1188 = vadd.f32 %v1124, 0.5
      %v1189 = vadd.f32 %v1125, 0.5
      %v1190 = vadd.f32 %v1126, 0.5
      %v1191 = vadd.f32 %v1127, 0.5
      %v1192 = vadd.f32 %v1128, 0.5
      %v1193 = vadd.f32 %v1129, 0.5
      %v1194 = vadd.f32 %v1130, 0.5
      %v1195 = vadd.f32 %v1131, 0.5
      %v1196 = vadd.f32 %v1132, 0.5
      %v1197 = vadd.f32 %v1133, 0.5
      %v1198 = vadd.f32 %v1134, 0.5
      %v1199 = vadd.f32 %v1135, 0.5
      %v1200 = vadd.f32 %v1136, 0.5
      %v1201 = vadd.f32 %v1137, 0.5
      %v1202 = vadd.f32 %v1138, 0.5
      %v1203 = vadd.f32 %v1139, 0.5
      %v1204 = vadd.f32 %v1140, 0.5
      %v1205 = vadd.f32 %v1141, 0.5
      %v1206 = vadd.f32 %v1142, 0.5
      %v1207 = vadd.f32 %v1143, 0.5
      %v1208 = vadd.f32 %v1144, 0.5
      %v1209 = vadd.f32 %v1145, 0.5
      %v1210 = vadd.f32 %v1146, 0.5
      %v1211 = vadd.f32 %v1147, 0.5
      %v1212 = vadd.f32 %v1148, 0.5
      %v1213 = vadd.f32 %v1149, 0.5
      %v1214 = vadd.f32 %v1150, 0.5
      %v1215 = vadd.f32 %v1151, 0.5
      %v1216 = vadd.f32 %v1152, 0.5
      %v1217 = vadd.f32 %v1153, 0.5
      %v1218 = vadd.f32 %v1154, 0.5
      %v1219 = vadd.f32 %v1155, 0.5
      %v1220 = vadd.f32 %v1156, 0.5
      %vm1221 = vcmp.eq.f32.partialorder %v389, 0.0
      %vm1222 = vcmp.eq.f32.partialorder %v390, 0.0
      %vm1223 = vcmp.eq.f32.partialorder %v391, 0.0
      %vm1224 = vcmp.eq.f32.partialorder %v392, 0.0
      %vm1225 = vcmp.eq.f32.partialorder %v393, 0.0
      %vm1226 = vcmp.eq.f32.partialorder %v394, 0.0
      %vm1227 = vcmp.eq.f32.partialorder %v395, 0.0
      %vm1228 = vcmp.eq.f32.partialorder %v396, 0.0
      %vm1229 = vcmp.eq.f32.partialorder %v397, 0.0
      %vm1230 = vcmp.eq.f32.partialorder %v398, 0.0
      %vm1231 = vcmp.eq.f32.partialorder %v399, 0.0
      %vm1232 = vcmp.eq.f32.partialorder %v400, 0.0
      %vm1233 = vcmp.eq.f32.partialorder %v401, 0.0
      %vm1234 = vcmp.eq.f32.partialorder %v402, 0.0
      %vm1235 = vcmp.eq.f32.partialorder %v403, 0.0
      %vm1236 = vcmp.eq.f32.partialorder %v404, 0.0
      %vm1237 = vcmp.eq.f32.partialorder %v405, 0.0
      %vm1238 = vcmp.eq.f32.partialorder %v406, 0.0
      %vm1239 = vcmp.eq.f32.partialorder %v407, 0.0
      %vm1240 = vcmp.eq.f32.partialorder %v408, 0.0
      %vm1241 = vcmp.eq.f32.partialorder %v409, 0.0
      %vm1242 = vcmp.eq.f32.partialorder %v410, 0.0
      %vm1243 = vcmp.eq.f32.partialorder %v411, 0.0
      %vm1244 = vcmp.eq.f32.partialorder %v412, 0.0
      %vm1245 = vcmp.eq.f32.partialorder %v413, 0.0
      %vm1246 = vcmp.eq.f32.partialorder %v414, 0.0
      %vm1247 = vcmp.eq.f32.partialorder %v415, 0.0
      %vm1248 = vcmp.eq.f32.partialorder %v416, 0.0
      %vm1249 = vcmp.eq.f32.partialorder %v417, 0.0
      %vm1250 = vcmp.eq.f32.partialorder %v418, 0.0
      %vm1251 = vcmp.eq.f32.partialorder %v419, 0.0
      %vm1252 = vcmp.eq.f32.partialorder %v420, 0.0
      %vm1253 = vcmp.eq.f32.partialorder %v421, 0.0
      %vm1254 = vcmp.eq.f32.partialorder %v422, 0.0
      %vm1255 = vcmp.eq.f32.partialorder %v423, 0.0
      %vm1256 = vcmp.eq.f32.partialorder %v424, 0.0
      %vm1257 = vcmp.eq.f32.partialorder %v425, 0.0
      %vm1258 = vcmp.eq.f32.partialorder %v426, 0.0
      %vm1259 = vcmp.eq.f32.partialorder %v427, 0.0
      %vm1260 = vcmp.eq.f32.partialorder %v428, 0.0
      %vm1261 = vcmp.eq.f32.partialorder %v429, 0.0
      %vm1262 = vcmp.eq.f32.partialorder %v430, 0.0
      %vm1263 = vcmp.eq.f32.partialorder %v431, 0.0
      %vm1264 = vcmp.eq.f32.partialorder %v432, 0.0
      %vm1265 = vcmp.eq.f32.partialorder %v433, 0.0
      %vm1266 = vcmp.eq.f32.partialorder %v434, 0.0
      %vm1267 = vcmp.eq.f32.partialorder %v435, 0.0
      %vm1268 = vcmp.eq.f32.partialorder %v436, 0.0
      %vm1269 = vcmp.eq.f32.partialorder %v437, 0.0
      %vm1270 = vcmp.eq.f32.partialorder %v438, 0.0
      %vm1271 = vcmp.eq.f32.partialorder %v439, 0.0
      %vm1272 = vcmp.eq.f32.partialorder %v440, 0.0
      %vm1273 = vcmp.eq.f32.partialorder %v441, 0.0
      %vm1274 = vcmp.eq.f32.partialorder %v442, 0.0
      %vm1275 = vcmp.eq.f32.partialorder %v443, 0.0
      %vm1276 = vcmp.eq.f32.partialorder %v444, 0.0
      %vm1277 = vcmp.eq.f32.partialorder %v445, 0.0
      %vm1278 = vcmp.eq.f32.partialorder %v446, 0.0
      %vm1279 = vcmp.eq.f32.partialorder %v447, 0.0
      %vm1280 = vcmp.eq.f32.partialorder %v448, 0.0
      %vm1281 = vcmp.eq.f32.partialorder %v449, 0.0
      %vm1282 = vcmp.eq.f32.partialorder %v450, 0.0
      %vm1283 = vcmp.eq.f32.partialorder %v451, 0.0
      %vm1284 = vcmp.eq.f32.partialorder %v452, 0.0
      %vm1285 = vcmp.eq.f32.partialorder %v389, 1.0
      %vm1286 = vcmp.eq.f32.partialorder %v390, 1.0
      %vm1287 = vcmp.eq.f32.partialorder %v391, 1.0
      %vm1288 = vcmp.eq.f32.partialorder %v392, 1.0
      %vm1289 = vcmp.eq.f32.partialorder %v393, 1.0
      %vm1290 = vcmp.eq.f32.partialorder %v394, 1.0
      %vm1291 = vcmp.eq.f32.partialorder %v395, 1.0
      %vm1292 = vcmp.eq.f32.partialorder %v396, 1.0
      %vm1293 = vcmp.eq.f32.partialorder %v397, 1.0
      %vm1294 = vcmp.eq.f32.partialorder %v398, 1.0
      %vm1295 = vcmp.eq.f32.partialorder %v399, 1.0
      %vm1296 = vcmp.eq.f32.partialorder %v400, 1.0
      %vm1297 = vcmp.eq.f32.partialorder %v401, 1.0
      %vm1298 = vcmp.eq.f32.partialorder %v402, 1.0
      %vm1299 = vcmp.eq.f32.partialorder %v403, 1.0
      %vm1300 = vcmp.eq.f32.partialorder %v404, 1.0
      %vm1301 = vcmp.eq.f32.partialorder %v405, 1.0
      %vm1302 = vcmp.eq.f32.partialorder %v406, 1.0
      %vm1303 = vcmp.eq.f32.partialorder %v407, 1.0
      %vm1304 = vcmp.eq.f32.partialorder %v408, 1.0
      %vm1305 = vcmp.eq.f32.partialorder %v409, 1.0
      %vm1306 = vcmp.eq.f32.partialorder %v410, 1.0
      %vm1307 = vcmp.eq.f32.partialorder %v411, 1.0
      %vm1308 = vcmp.eq.f32.partialorder %v412, 1.0
      %vm1309 = vcmp.eq.f32.partialorder %v413, 1.0
      %vm1310 = vcmp.eq.f32.partialorder %v414, 1.0
      %vm1311 = vcmp.eq.f32.partialorder %v415, 1.0
      %vm1312 = vcmp.eq.f32.partialorder %v416, 1.0
      %vm1313 = vcmp.eq.f32.partialorder %v417, 1.0
      %vm1314 = vcmp.eq.f32.partialorder %v418, 1.0
      %vm1315 = vcmp.eq.f32.partialorder %v419, 1.0
      %vm1316 = vcmp.eq.f32.partialorder %v420, 1.0
      %vm1317 = vcmp.eq.f32.partialorder %v421, 1.0
      %vm1318 = vcmp.eq.f32.partialorder %v422, 1.0
      %vm1319 = vcmp.eq.f32.partialorder %v423, 1.0
      %vm1320 = vcmp.eq.f32.partialorder %v424, 1.0
      %vm1321 = vcmp.eq.f32.partialorder %v425, 1.0
      %vm1322 = vcmp.eq.f32.partialorder %v426, 1.0
      %vm1323 = vcmp.eq.f32.partialorder %v427, 1.0
      %vm1324 = vcmp.eq.f32.partialorder %v428, 1.0
      %vm1325 = vcmp.eq.f32.partialorder %v429, 1.0
      %vm1326 = vcmp.eq.f32.partialorder %v430, 1.0
      %vm1327 = vcmp.eq.f32.partialorder %v431, 1.0
      %vm1328 = vcmp.eq.f32.partialorder %v432, 1.0
      %vm1329 = vcmp.eq.f32.partialorder %v433, 1.0
      %vm1330 = vcmp.eq.f32.partialorder %v434, 1.0
      %vm1331 = vcmp.eq.f32.partialorder %v435, 1.0
      %vm1332 = vcmp.eq.f32.partialorder %v436, 1.0
      %vm1333 = vcmp.eq.f32.partialorder %v437, 1.0
      %vm1334 = vcmp.eq.f32.partialorder %v438, 1.0
      %vm1335 = vcmp.eq.f32.partialorder %v439, 1.0
      %vm1336 = vcmp.eq.f32.partialorder %v440, 1.0
      %vm1337 = vcmp.eq.f32.partialorder %v441, 1.0
      %vm1338 = vcmp.eq.f32.partialorder %v442, 1.0
      %vm1339 = vcmp.eq.f32.partialorder %v443, 1.0
      %vm1340 = vcmp.eq.f32.partialorder %v444, 1.0
      %vm1341 = vcmp.eq.f32.partialorder %v445, 1.0
      %vm1342 = vcmp.eq.f32.partialorder %v446, 1.0
      %vm1343 = vcmp.eq.f32.partialorder %v447, 1.0
      %vm1344 = vcmp.eq.f32.partialorder %v448, 1.0
      %vm1345 = vcmp.eq.f32.partialorder %v449, 1.0
      %vm1346 = vcmp.eq.f32.partialorder %v450, 1.0
      %vm1347 = vcmp.eq.f32.partialorder %v451, 1.0
      %vm1348 = vcmp.eq.f32.partialorder %v452, 1.0
      %vm1349 = vcmp.eq.f32.partialorder %v389, 2.0
      %vm1350 = vcmp.eq.f32.partialorder %v390, 2.0
      %vm1351 = vcmp.eq.f32.partialorder %v391, 2.0
      %vm1352 = vcmp.eq.f32.partialorder %v392, 2.0
      %vm1353 = vcmp.eq.f32.partialorder %v393, 2.0
      %vm1354 = vcmp.eq.f32.partialorder %v394, 2.0
      %vm1355 = vcmp.eq.f32.partialorder %v395, 2.0
      %vm1356 = vcmp.eq.f32.partialorder %v396, 2.0
      %vm1357 = vcmp.eq.f32.partialorder %v397, 2.0
      %vm1358 = vcmp.eq.f32.partialorder %v398, 2.0
      %vm1359 = vcmp.eq.f32.partialorder %v399, 2.0
      %vm1360 = vcmp.eq.f32.partialorder %v400, 2.0
      %vm1361 = vcmp.eq.f32.partialorder %v401, 2.0
      %vm1362 = vcmp.eq.f32.partialorder %v402, 2.0
      %vm1363 = vcmp.eq.f32.partialorder %v403, 2.0
      %vm1364 = vcmp.eq.f32.partialorder %v404, 2.0
      %vm1365 = vcmp.eq.f32.partialorder %v405, 2.0
      %vm1366 = vcmp.eq.f32.partialorder %v406, 2.0
      %vm1367 = vcmp.eq.f32.partialorder %v407, 2.0
      %vm1368 = vcmp.eq.f32.partialorder %v408, 2.0
      %vm1369 = vcmp.eq.f32.partialorder %v409, 2.0
      %vm1370 = vcmp.eq.f32.partialorder %v410, 2.0
      %vm1371 = vcmp.eq.f32.partialorder %v411, 2.0
      %vm1372 = vcmp.eq.f32.partialorder %v412, 2.0
      %vm1373 = vcmp.eq.f32.partialorder %v413, 2.0
      %vm1374 = vcmp.eq.f32.partialorder %v414, 2.0
      %vm1375 = vcmp.eq.f32.partialorder %v415, 2.0
      %vm1376 = vcmp.eq.f32.partialorder %v416, 2.0
      %vm1377 = vcmp.eq.f32.partialorder %v417, 2.0
      %vm1378 = vcmp.eq.f32.partialorder %v418, 2.0
      %vm1379 = vcmp.eq.f32.partialorder %v419, 2.0
      %vm1380 = vcmp.eq.f32.partialorder %v420, 2.0
      %vm1381 = vcmp.eq.f32.partialorder %v421, 2.0
      %vm1382 = vcmp.eq.f32.partialorder %v422, 2.0
      %vm1383 = vcmp.eq.f32.partialorder %v423, 2.0
      %vm1384 = vcmp.eq.f32.partialorder %v424, 2.0
      %vm1385 = vcmp.eq.f32.partialorder %v425, 2.0
      %vm1386 = vcmp.eq.f32.partialorder %v426, 2.0
      %vm1387 = vcmp.eq.f32.partialorder %v427, 2.0
      %vm1388 = vcmp.eq.f32.partialorder %v428, 2.0
      %vm1389 = vcmp.eq.f32.partialorder %v429, 2.0
      %vm1390 = vcmp.eq.f32.partialorder %v430, 2.0
      %vm1391 = vcmp.eq.f32.partialorder %v431, 2.0
      %vm1392 = vcmp.eq.f32.partialorder %v432, 2.0
      %vm1393 = vcmp.eq.f32.partialorder %v433, 2.0
      %vm1394 = vcmp.eq.f32.partialorder %v434, 2.0
      %vm1395 = vcmp.eq.f32.partialorder %v435, 2.0
      %vm1396 = vcmp.eq.f32.partialorder %v436, 2.0
      %vm1397 = vcmp.eq.f32.partialorder %v437, 2.0
      %vm1398 = vcmp.eq.f32.partialorder %v438, 2.0
      %vm1399 = vcmp.eq.f32.partialorder %v439, 2.0
      %vm1400 = vcmp.eq.f32.partialorder %v440, 2.0
      %vm1401 = vcmp.eq.f32.partialorder %v441, 2.0
      %vm1402 = vcmp.eq.f32.partialorder %v442, 2.0
      %vm1403 = vcmp.eq.f32.partialorder %v443, 2.0
      %vm1404 = vcmp.eq.f32.partialorder %v444, 2.0
      %vm1405 = vcmp.eq.f32.partialorder %v445, 2.0
      %vm1406 = vcmp.eq.f32.partialorder %v446, 2.0
      %vm1407 = vcmp.eq.f32.partialorder %v447, 2.0
      %vm1408 = vcmp.eq.f32.partialorder %v448, 2.0
      %vm1409 = vcmp.eq.f32.partialorder %v449, 2.0
      %vm1410 = vcmp.eq.f32.partialorder %v450, 2.0
      %vm1411 = vcmp.eq.f32.partialorder %v451, 2.0
      %vm1412 = vcmp.eq.f32.partialorder %v452, 2.0
      %vm1413 = vcmp.eq.f32.partialorder %v389, 3.0
      %vm1414 = vcmp.eq.f32.partialorder %v390, 3.0
      %vm1415 = vcmp.eq.f32.partialorder %v391, 3.0
      %vm1416 = vcmp.eq.f32.partialorder %v392, 3.0
      %vm1417 = vcmp.eq.f32.partialorder %v393, 3.0
      %vm1418 = vcmp.eq.f32.partialorder %v394, 3.0
      %vm1419 = vcmp.eq.f32.partialorder %v395, 3.0
      %vm1420 = vcmp.eq.f32.partialorder %v396, 3.0
      %vm1421 = vcmp.eq.f32.partialorder %v397, 3.0
      %vm1422 = vcmp.eq.f32.partialorder %v398, 3.0
      %vm1423 = vcmp.eq.f32.partialorder %v399, 3.0
      %vm1424 = vcmp.eq.f32.partialorder %v400, 3.0
      %vm1425 = vcmp.eq.f32.partialorder %v401, 3.0
      %vm1426 = vcmp.eq.f32.partialorder %v402, 3.0
      %vm1427 = vcmp.eq.f32.partialorder %v403, 3.0
      %vm1428 = vcmp.eq.f32.partialorder %v404, 3.0
      %vm1429 = vcmp.eq.f32.partialorder %v405, 3.0
      %vm1430 = vcmp.eq.f32.partialorder %v406, 3.0
      %vm1431 = vcmp.eq.f32.partialorder %v407, 3.0
      %vm1432 = vcmp.eq.f32.partialorder %v408, 3.0
      %vm1433 = vcmp.eq.f32.partialorder %v409, 3.0
      %vm1434 = vcmp.eq.f32.partialorder %v410, 3.0
      %vm1435 = vcmp.eq.f32.partialorder %v411, 3.0
      %vm1436 = vcmp.eq.f32.partialorder %v412, 3.0
      %vm1437 = vcmp.eq.f32.partialorder %v413, 3.0
      %vm1438 = vcmp.eq.f32.partialorder %v414, 3.0
      %vm1439 = vcmp.eq.f32.partialorder %v415, 3.0
      %vm1440 = vcmp.eq.f32.partialorder %v416, 3.0
      %vm1441 = vcmp.eq.f32.partialorder %v417, 3.0
      %vm1442 = vcmp.eq.f32.partialorder %v418, 3.0
      %vm1443 = vcmp.eq.f32.partialorder %v419, 3.0
      %vm1444 = vcmp.eq.f32.partialorder %v420, 3.0
      %vm1445 = vcmp.eq.f32.partialorder %v421, 3.0
      %vm1446 = vcmp.eq.f32.partialorder %v422, 3.0
      %vm1447 = vcmp.eq.f32.partialorder %v423, 3.0
      %vm1448 = vcmp.eq.f32.partialorder %v424, 3.0
      %vm1449 = vcmp.eq.f32.partialorder %v425, 3.0
      %vm1450 = vcmp.eq.f32.partialorder %v426, 3.0
      %vm1451 = vcmp.eq.f32.partialorder %v427, 3.0
      %vm1452 = vcmp.eq.f32.partialorder %v428, 3.0
      %vm1453 = vcmp.eq.f32.partialorder %v429, 3.0
      %vm1454 = vcmp.eq.f32.partialorder %v430, 3.0
      %vm1455 = vcmp.eq.f32.partialorder %v431, 3.0
      %vm1456 = vcmp.eq.f32.partialorder %v432, 3.0
      %vm1457 = vcmp.eq.f32.partialorder %v433, 3.0
      %vm1458 = vcmp.eq.f32.partialorder %v434, 3.0
      %vm1459 = vcmp.eq.f32.partialorder %v435, 3.0
      %vm1460 = vcmp.eq.f32.partialorder %v436, 3.0
      %vm1461 = vcmp.eq.f32.partialorder %v437, 3.0
      %vm1462 = vcmp.eq.f32.partialorder %v438, 3.0
      %vm1463 = vcmp.eq.f32.partialorder %v439, 3.0
      %vm1464 = vcmp.eq.f32.partialorder %v440, 3.0
      %vm1465 = vcmp.eq.f32.partialorder %v441, 3.0
      %vm1466 = vcmp.eq.f32.partialorder %v442, 3.0
      %vm1467 = vcmp.eq.f32.partialorder %v443, 3.0
      %vm1468 = vcmp.eq.f32.partialorder %v444, 3.0
      %vm1469 = vcmp.eq.f32.partialorder %v445, 3.0
      %vm1470 = vcmp.eq.f32.partialorder %v446, 3.0
      %vm1471 = vcmp.eq.f32.partialorder %v447, 3.0
      %vm1472 = vcmp.eq.f32.partialorder %v448, 3.0
      %vm1473 = vcmp.eq.f32.partialorder %v449, 3.0
      %vm1474 = vcmp.eq.f32.partialorder %v450, 3.0
      %vm1475 = vcmp.eq.f32.partialorder %v451, 3.0
      %vm1476 = vcmp.eq.f32.partialorder %v452, 3.0
      %vm1477 = vcmp.eq.f32.partialorder %v389, 4.0
      %vm1478 = vcmp.eq.f32.partialorder %v390, 4.0
      %vm1479 = vcmp.eq.f32.partialorder %v391, 4.0
      %vm1480 = vcmp.eq.f32.partialorder %v392, 4.0
      %vm1481 = vcmp.eq.f32.partialorder %v393, 4.0
      %vm1482 = vcmp.eq.f32.partialorder %v394, 4.0
      %vm1483 = vcmp.eq.f32.partialorder %v395, 4.0
      %vm1484 = vcmp.eq.f32.partialorder %v396, 4.0
      %vm1485 = vcmp.eq.f32.partialorder %v397, 4.0
      %vm1486 = vcmp.eq.f32.partialorder %v398, 4.0
      %vm1487 = vcmp.eq.f32.partialorder %v399, 4.0
      %vm1488 = vcmp.eq.f32.partialorder %v400, 4.0
      %vm1489 = vcmp.eq.f32.partialorder %v401, 4.0
      %vm1490 = vcmp.eq.f32.partialorder %v402, 4.0
      %vm1491 = vcmp.eq.f32.partialorder %v403, 4.0
      %vm1492 = vcmp.eq.f32.partialorder %v404, 4.0
      %vm1493 = vcmp.eq.f32.partialorder %v405, 4.0
      %vm1494 = vcmp.eq.f32.partialorder %v406, 4.0
      %vm1495 = vcmp.eq.f32.partialorder %v407, 4.0
      %vm1496 = vcmp.eq.f32.partialorder %v408, 4.0
      %vm1497 = vcmp.eq.f32.partialorder %v409, 4.0
      %vm1498 = vcmp.eq.f32.partialorder %v410, 4.0
      %vm1499 = vcmp.eq.f32.partialorder %v411, 4.0
      %vm1500 = vcmp.eq.f32.partialorder %v412, 4.0
      %vm1501 = vcmp.eq.f32.partialorder %v413, 4.0
      %vm1502 = vcmp.eq.f32.partialorder %v414, 4.0
      %vm1503 = vcmp.eq.f32.partialorder %v415, 4.0
      %vm1504 = vcmp.eq.f32.partialorder %v416, 4.0
      %vm1505 = vcmp.eq.f32.partialorder %v417, 4.0
      %vm1506 = vcmp.eq.f32.partialorder %v418, 4.0
      %vm1507 = vcmp.eq.f32.partialorder %v419, 4.0
      %vm1508 = vcmp.eq.f32.partialorder %v420, 4.0
      %vm1509 = vcmp.eq.f32.partialorder %v421, 4.0
      %vm1510 = vcmp.eq.f32.partialorder %v422, 4.0
      %vm1511 = vcmp.eq.f32.partialorder %v423, 4.0
      %vm1512 = vcmp.eq.f32.partialorder %v424, 4.0
      %vm1513 = vcmp.eq.f32.partialorder %v425, 4.0
      %vm1514 = vcmp.eq.f32.partialorder %v426, 4.0
      %vm1515 = vcmp.eq.f32.partialorder %v427, 4.0
      %vm1516 = vcmp.eq.f32.partialorder %v428, 4.0
      %vm1517 = vcmp.eq.f32.partialorder %v429, 4.0
      %vm1518 = vcmp.eq.f32.partialorder %v430, 4.0
      %vm1519 = vcmp.eq.f32.partialorder %v431, 4.0
      %vm1520 = vcmp.eq.f32.partialorder %v432, 4.0
      %vm1521 = vcmp.eq.f32.partialorder %v433, 4.0
      %vm1522 = vcmp.eq.f32.partialorder %v434, 4.0
      %vm1523 = vcmp.eq.f32.partialorder %v435, 4.0
      %vm1524 = vcmp.eq.f32.partialorder %v436, 4.0
      %vm1525 = vcmp.eq.f32.partialorder %v437, 4.0
      %vm1526 = vcmp.eq.f32.partialorder %v438, 4.0
      %vm1527 = vcmp.eq.f32.partialorder %v439, 4.0
      %vm1528 = vcmp.eq.f32.partialorder %v440, 4.0
      %vm1529 = vcmp.eq.f32.partialorder %v441, 4.0
      %vm1530 = vcmp.eq.f32.partialorder %v442, 4.0
      %vm1531 = vcmp.eq.f32.partialorder %v443, 4.0
      %vm1532 = vcmp.eq.f32.partialorder %v444, 4.0
      %vm1533 = vcmp.eq.f32.partialorder %v445, 4.0
      %vm1534 = vcmp.eq.f32.partialorder %v446, 4.0
      %vm1535 = vcmp.eq.f32.partialorder %v447, 4.0
      %vm1536 = vcmp.eq.f32.partialorder %v448, 4.0
      %vm1537 = vcmp.eq.f32.partialorder %v449, 4.0
      %vm1538 = vcmp.eq.f32.partialorder %v450, 4.0
      %vm1539 = vcmp.eq.f32.partialorder %v451, 4.0
      %vm1540 = vcmp.eq.f32.partialorder %v452, 4.0
      %vm1541 = vcmp.eq.f32.partialorder %v389, 5.0
      %vm1542 = vcmp.eq.f32.partialorder %v390, 5.0
      %vm1543 = vcmp.eq.f32.partialorder %v391, 5.0
      %vm1544 = vcmp.eq.f32.partialorder %v392, 5.0
      %vm1545 = vcmp.eq.f32.partialorder %v393, 5.0
      %vm1546 = vcmp.eq.f32.partialorder %v394, 5.0
      %vm1547 = vcmp.eq.f32.partialorder %v395, 5.0
      %vm1548 = vcmp.eq.f32.partialorder %v396, 5.0
      %vm1549 = vcmp.eq.f32.partialorder %v397, 5.0
      %vm1550 = vcmp.eq.f32.partialorder %v398, 5.0
      %vm1551 = vcmp.eq.f32.partialorder %v399, 5.0
      %vm1552 = vcmp.eq.f32.partialorder %v400, 5.0
      %vm1553 = vcmp.eq.f32.partialorder %v401, 5.0
      %vm1554 = vcmp.eq.f32.partialorder %v402, 5.0
      %vm1555 = vcmp.eq.f32.partialorder %v403, 5.0
      %vm1556 = vcmp.eq.f32.partialorder %v404, 5.0
      %vm1557 = vcmp.eq.f32.partialorder %v405, 5.0
      %vm1558 = vcmp.eq.f32.partialorder %v406, 5.0
      %vm1559 = vcmp.eq.f32.partialorder %v407, 5.0
      %vm1560 = vcmp.eq.f32.partialorder %v408, 5.0
      %vm1561 = vcmp.eq.f32.partialorder %v409, 5.0
      %vm1562 = vcmp.eq.f32.partialorder %v410, 5.0
      %vm1563 = vcmp.eq.f32.partialorder %v411, 5.0
      %vm1564 = vcmp.eq.f32.partialorder %v412, 5.0
      %vm1565 = vcmp.eq.f32.partialorder %v413, 5.0
      %vm1566 = vcmp.eq.f32.partialorder %v414, 5.0
      %vm1567 = vcmp.eq.f32.partialorder %v415, 5.0
      %vm1568 = vcmp.eq.f32.partialorder %v416, 5.0
      %vm1569 = vcmp.eq.f32.partialorder %v417, 5.0
      %vm1570 = vcmp.eq.f32.partialorder %v418, 5.0
      %vm1571 = vcmp.eq.f32.partialorder %v419, 5.0
      %vm1572 = vcmp.eq.f32.partialorder %v420, 5.0
      %vm1573 = vcmp.eq.f32.partialorder %v421, 5.0
      %vm1574 = vcmp.eq.f32.partialorder %v422, 5.0
      %vm1575 = vcmp.eq.f32.partialorder %v423, 5.0
      %vm1576 = vcmp.eq.f32.partialorder %v424, 5.0
      %vm1577 = vcmp.eq.f32.partialorder %v425, 5.0
      %vm1578 = vcmp.eq.f32.partialorder %v426, 5.0
      %vm1579 = vcmp.eq.f32.partialorder %v427, 5.0
      %vm1580 = vcmp.eq.f32.partialorder %v428, 5.0
      %vm1581 = vcmp.eq.f32.partialorder %v429, 5.0
      %vm1582 = vcmp.eq.f32.partialorder %v430, 5.0
      %vm1583 = vcmp.eq.f32.partialorder %v431, 5.0
      %vm1584 = vcmp.eq.f32.partialorder %v432, 5.0
      %vm1585 = vcmp.eq.f32.partialorder %v433, 5.0
      %vm1586 = vcmp.eq.f32.partialorder %v434, 5.0
      %vm1587 = vcmp.eq.f32.partialorder %v435, 5.0
      %vm1588 = vcmp.eq.f32.partialorder %v436, 5.0
      %vm1589 = vcmp.eq.f32.partialorder %v437, 5.0
      %vm1590 = vcmp.eq.f32.partialorder %v438, 5.0
      %vm1591 = vcmp.eq.f32.partialorder %v439, 5.0
      %vm1592 = vcmp.eq.f32.partialorder %v440, 5.0
      %vm1593 = vcmp.eq.f32.partialorder %v441, 5.0
      %vm1594 = vcmp.eq.f32.partialorder %v442, 5.0
      %vm1595 = vcmp.eq.f32.partialorder %v443, 5.0
      %vm1596 = vcmp.eq.f32.partialorder %v444, 5.0
      %vm1597 = vcmp.eq.f32.partialorder %v445, 5.0
      %vm1598 = vcmp.eq.f32.partialorder %v446, 5.0
      %vm1599 = vcmp.eq.f32.partialorder %v447, 5.0
      %vm1600 = vcmp.eq.f32.partialorder %v448, 5.0
      %vm1601 = vcmp.eq.f32.partialorder %v449, 5.0
      %vm1602 = vcmp.eq.f32.partialorder %v450, 5.0
      %vm1603 = vcmp.eq.f32.partialorder %v451, 5.0
      %vm1604 = vcmp.eq.f32.partialorder %v452, 5.0
      %v1605 = vld [vmem:[#allocation2] sm:$0xff]
      %v1606 = vld [vmem:[#allocation2 + $0x8] sm:$0xff]
      %v1607 = vld [vmem:[#allocation2 + $0x10] sm:$0xff]
      %v1608 = vld [vmem:[#allocation2 + $0x18] sm:$0xff]
      %v1609 = vld [vmem:[#allocation2 + $0x20] sm:$0xff]
      %v1610 = vld [vmem:[#allocation2 + $0x28] sm:$0xff]
      %v1611 = vld [vmem:[#allocation2 + $0x30] sm:$0xff]
      %v1612 = vld [vmem:[#allocation2 + $0x38] sm:$0xff]
      %v1613 = vld [vmem:[#allocation2 + $0x40] sm:$0xff]
      %v1614 = vld [vmem:[#allocation2 + $0x48] sm:$0xff]
      %v1615 = vld [vmem:[#allocation2 + $0x50] sm:$0xff]
      %v1616 = vld [vmem:[#allocation2 + $0x58] sm:$0xff]
      %v1617 = vld [vmem:[#allocation2 + $0x60] sm:$0xff]
      %v1618 = vld [vmem:[#allocation2 + $0x68] sm:$0xff]
      %v1619 = vld [vmem:[#allocation2 + $0x70] sm:$0xff]
      %v1620 = vld [vmem:[#allocation2 + $0x78] sm:$0xff]
      %v1621 = vld [vmem:[#allocation2 + $0x80] sm:$0xff]
      %v1622 = vld [vmem:[#allocation2 + $0x88] sm:$0xff]
      %v1623 = vld [vmem:[#allocation2 + $0x90] sm:$0xff]
      %v1624 = vld [vmem:[#allocation2 + $0x98] sm:$0xff]
      %v1625 = vld [vmem:[#allocation2 + $0xa0] sm:$0xff]
      %v1626 = vld [vmem:[#allocation2 + $0xa8] sm:$0xff]
      %v1627 = vld [vmem:[#allocation2 + $0xb0] sm:$0xff]
      %v1628 = vld [vmem:[#allocation2 + $0xb8] sm:$0xff]
      %v1629 = vld [vmem:[#allocation2 + $0xc0] sm:$0xff]
      %v1630 = vld [vmem:[#allocation2 + $0xc8] sm:$0xff]
      %v1631 = vld [vmem:[#allocation2 + $0xd0] sm:$0xff]
      %v1632 = vld [vmem:[#allocation2 + $0xd8] sm:$0xff]
      %v1633 = vld [vmem:[#allocation2 + $0xe0] sm:$0xff]
      %v1634 = vld [vmem:[#allocation2 + $0xe8] sm:$0xff]
      %v1635 = vld [vmem:[#allocation2 + $0xf0] sm:$0xff]
      %v1636 = vld [vmem:[#allocation2 + $0xf8] sm:$0xff]
      %v1637 = vsel %vm1349, %v1157, 0.0
      %v1638 = vsel %vm1350, %v1158, 0.0
      %v1639 = vsel %vm1351, %v1159, 0.0
      %v1640 = vsel %vm1352, %v1160, 0.0
      %v1641 = vsel %vm1353, %v1161, 0.0
      %v1642 = vsel %vm1354, %v1162, 0.0
      %v1643 = vsel %vm1355, %v1163, 0.0
      %v1644 = vsel %vm1356, %v1164, 0.0
      %v1645 = vsel %vm1357, %v1165, 0.0
      %v1646 = vsel %vm1358, %v1166, 0.0
      %v1647 = vsel %vm1359, %v1167, 0.0
      %v1648 = vsel %vm1360, %v1168, 0.0
      %v1649 = vsel %vm1361, %v1169, 0.0
      %v1650 = vsel %vm1362, %v1170, 0.0
      %v1651 = vsel %vm1363, %v1171, 0.0
      %v1652 = vsel %vm1364, %v1172, 0.0
      %v1653 = vsel %vm1365, %v1173, 0.0
      %v1654 = vsel %vm1366, %v1174, 0.0
      %v1655 = vsel %vm1367, %v1175, 0.0
      %v1656 = vsel %vm1368, %v1176, 0.0
      %v1657 = vsel %vm1369, %v1177, 0.0
      %v1658 = vsel %vm1370, %v1178, 0.0
      %v1659 = vsel %vm1371, %v1179, 0.0
      %v1660 = vsel %vm1372, %v1180, 0.0
      %v1661 = vsel %vm1373, %v1181, 0.0
      %v1662 = vsel %vm1374, %v1182, 0.0
      %v1663 = vsel %vm1375, %v1183, 0.0
      %v1664 = vsel %vm1376, %v1184, 0.0
      %v1665 = vsel %vm1377, %v1185, 0.0
      %v1666 = vsel %vm1378, %v1186, 0.0
      %v1667 = vsel %vm1379, %v1187, 0.0
      %v1668 = vsel %vm1380, %v1188, 0.0
      %v1669 = vsel %vm1381, %v1189, 0.0
      %v1670 = vsel %vm1382, %v1190, 0.0
      %v1671 = vsel %vm1383, %v1191, 0.0
      %v1672 = vsel %vm1384, %v1192, 0.0
      %v1673 = vsel %vm1385, %v1193, 0.0
      %v1674 = vsel %vm1386, %v1194, 0.0
      %v1675 = vsel %vm1387, %v1195, 0.0
      %v1676 = vsel %vm1388, %v1196, 0.0
      %v1677 = vsel %vm1389, %v1197, 0.0
      %v1678 = vsel %vm1390, %v1198, 0.0
      %v1679 = vsel %vm1391, %v1199, 0.0
      %v1680 = vsel %vm1392, %v1200, 0.0
      %v1681 = vsel %vm1393, %v1201, 0.0
      %v1682 = vsel %vm1394, %v1202, 0.0
      %v1683 = vsel %vm1395, %v1203, 0.0
      %v1684 = vsel %vm1396, %v1204, 0.0
      %v1685 = vsel %vm1397, %v1205, 0.0
      %v1686 = vsel %vm1398, %v1206, 0.0
      %v1687 = vsel %vm1399, %v1207, 0.0
      %v1688 = vsel %vm1400, %v1208, 0.0
      %v1689 = vsel %vm1401, %v1209, 0.0
      %v1690 = vsel %vm1402, %v1210, 0.0
      %v1691 = vsel %vm1403, %v1211, 0.0
      %v1692 = vsel %vm1404, %v1212, 0.0
      %v1693 = vsel %vm1405, %v1213, 0.0
      %v1694 = vsel %vm1406, %v1214, 0.0
      %v1695 = vsel %vm1407, %v1215, 0.0
      %v1696 = vsel %vm1408, %v1216, 0.0
      %v1697 = vsel %vm1409, %v1217, 0.0
      %v1698 = vsel %vm1410, %v1218, 0.0
      %v1699 = vsel %vm1411, %v1219, 0.0
      %v1700 = vsel %vm1412, %v1220, 0.0
      %v1701 = vsel %vm1285, %v965, %v1637
      %v1702 = vsel %vm1286, %v966, %v1638
      %v1703 = vsel %vm1287, %v967, %v1639
      %v1704 = vsel %vm1288, %v968, %v1640
      %v1705 = vsel %vm1289, %v969, %v1641
      %v1706 = vsel %vm1290, %v970, %v1642
      %v1707 = vsel %vm1291, %v971, %v1643
      %v1708 = vsel %vm1292, %v972, %v1644
      %v1709 = vsel %vm1293, %v973, %v1645
      %v1710 = vsel %vm1294, %v974, %v1646
      %v1711 = vsel %vm1295, %v975, %v1647
      %v1712 = vsel %vm1296, %v976, %v1648
      %v1713 = vsel %vm1297, %v977, %v1649
      %v1714 = vsel %vm1298, %v978, %v1650
      %v1715 = vsel %vm1299, %v979, %v1651
      %v1716 = vsel %vm1300, %v980, %v1652
      %v1717 = vsel %vm1301, %v981, %v1653
      %v1718 = vsel %vm1302, %v982, %v1654
      %v1719 = vsel %vm1303, %v983, %v1655
      %v1720 = vsel %vm1304, %v984, %v1656
      %v1721 = vsel %vm1305, %v985, %v1657
      %v1722 = vsel %vm1306, %v986, %v1658
      %v1723 = vsel %vm1307, %v987, %v1659
      %v1724 = vsel %vm1308, %v988, %v1660
      %v1725 = vsel %vm1309, %v989, %v1661
      %v1726 = vsel %vm1310, %v990, %v1662
      %v1727 = vsel %vm1311, %v991, %v1663
      %v1728 = vsel %vm1312, %v992, %v1664
      %v1729 = vsel %vm1313, %v993, %v1665
      %v1730 = vsel %vm1314, %v994, %v1666
      %v1731 = vsel %vm1315, %v995, %v1667
      %v1732 = vsel %vm1316, %v996, %v1668
      %v1733 = vsel %vm1317, %v997, %v1669
      %v1734 = vsel %vm1318, %v998, %v1670
      %v1735 = vsel %vm1319, %v999, %v1671
      %v1736 = vsel %vm1320, %v1000, %v1672
      %v1737 = vsel %vm1321, %v1001, %v1673
      %v1738 = vsel %vm1322, %v1002, %v1674
      %v1739 = vsel %vm1323, %v1003, %v1675
      %v1740 = vsel %vm1324, %v1004, %v1676
      %v1741 = vsel %vm1325, %v1005, %v1677
      %v1742 = vsel %vm1326, %v1006, %v1678
      %v1743 = vsel %vm1327, %v1007, %v1679
      %v1744 = vsel %vm1328, %v1008, %v1680
      %v1745 = vsel %vm1329, %v1009, %v1681
      %v1746 = vsel %vm1330, %v1010, %v1682
      %v1747 = vsel %vm1331, %v1011, %v1683
      %v1748 = vsel %vm1332, %v1012, %v1684
      %v1749 = vsel %vm1333, %v1013, %v1685
      %v1750 = vsel %vm1334, %v1014, %v1686
      %v1751 = vsel %vm1335, %v1015, %v1687
      %v1752 = vsel %vm1336, %v1016, %v1688
      %v1753 = vsel %vm1337, %v1017, %v1689
      %v1754 = vsel %vm1338, %v1018, %v1690
      %v1755 = vsel %vm1339, %v1019, %v1691
      %v1756 = vsel %vm1340, %v1020, %v1692
      %v1757 = vsel %vm1341, %v1021, %v1693
      %v1758 = vsel %vm1342, %v1022, %v1694
      %v1759 = vsel %vm1343, %v1023, %v1695
      %v1760 = vsel %vm1344, %v1024, %v1696
      %v1761 = vsel %vm1345, %v1025, %v1697
      %v1762 = vsel %vm1346, %v1026, %v1698
      %v1763 = vsel %vm1347, %v1027, %v1699
      %v1764 = vsel %vm1348, %v1028, %v1700
      %v1765 = vsel %vm1221, %v709, %v1701
      %v1766 = vsel %vm1222, %v710, %v1702
      %v1767 = vsel %vm1223, %v711, %v1703
      %v1768 = vsel %vm1224, %v712, %v1704
      %v1769 = vsel %vm1225, %v713, %v1705
      %v1770 = vsel %vm1226, %v714, %v1706
      %v1771 = vsel %vm1227, %v715, %v1707
      %v1772 = vsel %vm1228, %v716, %v1708
      %v1773 = vsel %vm1229, %v717, %v1709
      %v1774 = vsel %vm1230, %v718, %v1710
      %v1775 = vsel %vm1231, %v719, %v1711
      %v1776 = vsel %vm1232, %v720, %v1712
      %v1777 = vsel %vm1233, %v721, %v1713
      %v1778 = vsel %vm1234, %v722, %v1714
      %v1779 = vsel %vm1235, %v723, %v1715
      %v1780 = vsel %vm1236, %v724, %v1716
      %v1781 = vsel %vm1237, %v725, %v1717
      %v1782 = vsel %vm1238, %v726, %v1718
      %v1783 = vsel %vm1239, %v727, %v1719
      %v1784 = vsel %vm1240, %v728, %v1720
      %v1785 = vsel %vm1241, %v729, %v1721
      %v1786 = vsel %vm1242, %v730, %v1722
      %v1787 = vsel %vm1243, %v731, %v1723
      %v1788 = vsel %vm1244, %v732, %v1724
      %v1789 = vsel %vm1245, %v733, %v1725
      %v1790 = vsel %vm1246, %v734, %v1726
      %v1791 = vsel %vm1247, %v735, %v1727
      %v1792 = vsel %vm1248, %v736, %v1728
      %v1793 = vsel %vm1249, %v737, %v1729
      %v1794 = vsel %vm1250, %v738, %v1730
      %v1795 = vsel %vm1251, %v739, %v1731
      %v1796 = vsel %vm1252, %v740, %v1732
      %v1797 = vsel %vm1253, %v741, %v1733
      %v1798 = vsel %vm1254, %v742, %v1734
      %v1799 = vsel %vm1255, %v743, %v1735
      %v1800 = vsel %vm1256, %v744, %v1736
      %v1801 = vsel %vm1257, %v745, %v1737
      %v1802 = vsel %vm1258, %v746, %v1738
      %v1803 = vsel %vm1259, %v747, %v1739
      %v1804 = vsel %vm1260, %v748, %v1740
      %v1805 = vsel %vm1261, %v749, %v1741
      %v1806 = vsel %vm1262, %v750, %v1742
      %v1807 = vsel %vm1263, %v751, %v1743
      %v1808 = vsel %vm1264, %v752, %v1744
      %v1809 = vsel %vm1265, %v753, %v1745
      %v1810 = vsel %vm1266, %v754, %v1746
      %v1811 = vsel %vm1267, %v755, %v1747
      %v1812 = vsel %vm1268, %v756, %v1748
      %v1813 = vsel %vm1269, %v757, %v1749
      %v1814 = vsel %vm1270, %v758, %v1750
      %v1815 = vsel %vm1271, %v759, %v1751
      %v1816 = vsel %vm1272, %v760, %v1752
      %v1817 = vsel %vm1273, %v761, %v1753
      %v1818 = vsel %vm1274, %v762, %v1754
      %v1819 = vsel %vm1275, %v763, %v1755
      %v1820 = vsel %vm1276, %v764, %v1756
      %v1821 = vsel %vm1277, %v765, %v1757
      %v1822 = vsel %vm1278, %v766, %v1758
      %v1823 = vsel %vm1279, %v767, %v1759
      %v1824 = vsel %vm1280, %v768, %v1760
      %v1825 = vsel %vm1281, %v769, %v1761
      %v1826 = vsel %vm1282, %v770, %v1762
      %v1827 = vsel %vm1283, %v771, %v1763
      %v1828 = vsel %vm1284, %v772, %v1764
      %v1829 = vpack.c.bf16 %v1767, %v1765
      %v1830 = vpack.c.bf16 %v1768, %v1766
      %v1831 = vpack.c.bf16 %v1771, %v1769
      %v1832 = vpack.c.bf16 %v1772, %v1770
      %v1833 = vpack.c.bf16 %v1775, %v1773
      %v1834 = vpack.c.bf16 %v1776, %v1774
      %v1835 = vpack.c.bf16 %v1779, %v1777
      %v1836 = vpack.c.bf16 %v1780, %v1778
      %v1837 = vpack.c.bf16 %v1783, %v1781
      %v1838 = vpack.c.bf16 %v1784, %v1782
      %v1839 = vpack.c.bf16 %v1787, %v1785
      %v1840 = vpack.c.bf16 %v1788, %v1786
      %v1841 = vpack.c.bf16 %v1791, %v1789
      %v1842 = vpack.c.bf16 %v1792, %v1790
      %v1843 = vpack.c.bf16 %v1795, %v1793
      %v1844 = vpack.c.bf16 %v1796, %v1794
      %v1845 = vpack.c.bf16 %v1799, %v1797
      %v1846 = vpack.c.bf16 %v1800, %v1798
      %v1847 = vpack.c.bf16 %v1803, %v1801
      %v1848 = vpack.c.bf16 %v1804, %v1802
      %v1849 = vpack.c.bf16 %v1807, %v1805
      %v1850 = vpack.c.bf16 %v1808, %v1806
      %v1851 = vpack.c.bf16 %v1811, %v1809
      %v1852 = vpack.c.bf16 %v1812, %v1810
      %v1853 = vpack.c.bf16 %v1815, %v1813
      %v1854 = vpack.c.bf16 %v1816, %v1814
      %v1855 = vpack.c.bf16 %v1819, %v1817
      %v1856 = vpack.c.bf16 %v1820, %v1818
      %v1857 = vpack.c.bf16 %v1823, %v1821
      %v1858 = vpack.c.bf16 %v1824, %v1822
      %v1859 = vpack.c.bf16 %v1827, %v1825
      %v1860 = vpack.c.bf16 %v1828, %v1826
      %v1861 = vld [vmem:[%s214] sm:$0xf]
      %v1862 = vld [vmem:[%s214 + $0x4] sm:$0xf]
      %v1863 = vld [vmem:[%s214 + $0x8] sm:$0xf]
      %v1864 = vld [vmem:[%s214 + $0xc] sm:$0xf]
      %v1865 = vld [vmem:[%s214 + $0x10] sm:$0xf]
      %v1866 = vld [vmem:[%s214 + $0x14] sm:$0xf]
      %v1867 = vld [vmem:[%s214 + $0x18] sm:$0xf]
      %v1868 = vld [vmem:[%s214 + $0x1c] sm:$0xf]
      %v1869 = vld [vmem:[%s214 + $0x20] sm:$0xf]
      %v1870 = vld [vmem:[%s214 + $0x24] sm:$0xf]
      %v1871 = vld [vmem:[%s214 + $0x28] sm:$0xf]
      %v1872 = vld [vmem:[%s214 + $0x2c] sm:$0xf]
      %v1873 = vld [vmem:[%s214 + $0x30] sm:$0xf]
      %v1874 = vld [vmem:[%s214 + $0x34] sm:$0xf]
      %v1875 = vld [vmem:[%s214 + $0x38] sm:$0xf]
      %v1876 = vld [vmem:[%s214 + $0x3c] sm:$0xf]
      %v1877 = vld [vmem:[%s214 + $0x40] sm:$0xf]
      %v1878 = vld [vmem:[%s214 + $0x44] sm:$0xf]
      %v1879 = vld [vmem:[%s214 + $0x48] sm:$0x3]
      %v1899 = vunpack.c.l.b16 %v1861
      %v1900 = vunpack.c.l.b16 %v1862
      %v1901 = vunpack.c.l.b16 %v1863
      %v1902 = vunpack.c.l.b16 %v1864
      %v1903 = vunpack.c.l.b16 %v1865
      %v1904 = vunpack.c.l.b16 %v1866
      %v1905 = vunpack.c.l.b16 %v1867
      %v1906 = vunpack.c.l.b16 %v1868
      %v1907 = vunpack.c.l.b16 %v1869
      %v1908 = vunpack.c.l.b16 %v1870
      %v1909 = vunpack.c.l.b16 %v1871
      %v1910 = vunpack.c.l.b16 %v1872
      %v1911 = vunpack.c.l.b16 %v1873
      %v1912 = vunpack.c.l.b16 %v1874
      %v1913 = vunpack.c.l.b16 %v1875
      %v1914 = vunpack.c.l.b16 %v1876
      %v1915 = vunpack.c.l.b16 %v1877
      %v1916 = vunpack.c.l.b16 %v1878
      %v1917 = vunpack.c.l.b16 %v1879
      %v1918 = vpack.c.b16 %v1900, %v1899
      %v1919 = vpack.c.b16 %v1902, %v1901
      %v1920 = vpack.c.b16 %v1904, %v1903
      %v1921 = vpack.c.b16 %v1906, %v1905
      %v1922 = vpack.c.b16 %v1908, %v1907
      %v1923 = vpack.c.b16 %v1910, %v1909
      %v1924 = vpack.c.b16 %v1912, %v1911
      %v1925 = vpack.c.b16 %v1914, %v1913
      %v1926 = vpack.c.b16 %v1916, %v1915
      %v1927 = vpack.c.b16 %v1917, %v1917
      %vm1937 = vcmask 154624
      %v1939 = vsel %vm1937, %v1830, 0
      %v1942 = vsel %vm1937, %v1832, 0
      %v1945 = vsel %vm1937, %v1834, 0
      %v1948 = vsel %vm1937, %v1836, 0
      %v1951 = vsel %vm1937, %v1838, 0
      %v1954 = vsel %vm1937, %v1840, 0
      %v1957 = vsel %vm1937, %v1842, 0
      %v1960 = vsel %vm1937, %v1844, 0
      %v1963 = vsel %vm1937, %v1846, 0
      %v1966 = vsel %vm1937, %v1848, 0
      %v1969 = vsel %vm1937, %v1850, 0
      %v1972 = vsel %vm1937, %v1852, 0
      %v1975 = vsel %vm1937, %v1854, 0
      %v1978 = vsel %vm1937, %v1856, 0
      %v1981 = vsel %vm1937, %v1858, 0
      %v1984 = vsel %vm1937, %v1860, 0
      %vm1986 = vcmask 1040384
      %vm1987 = vcmask 1041408
      %v1988 = vsel %vm1986, 4294967295, 65535
      %v1989 = vsel %vm1987, %v1988, 0
      %v1991 = vand.u32 %v1927, %v1989
      %1993 = vmatprep.subr.bf16.mxu0 0
      %1994 = vmatpush1.bf16.msra.mxu0 %v1925
      %1995 = vmatprep.subr.bf16.mxu0 0
      %1996 = vmatpush1.bf16.msra.mxu0 %v1924
      %1997 = vmatprep.subr.bf16.mxu0 0
      %1998 = vmatpush1.bf16.msra.mxu0 %v1923
      %1999 = vmatprep.subr.bf16.mxu0 0
      %2000 = vmatpush1.bf16.msra.mxu0 %v1922
      %2001 = vmatprep.subr.bf16.mxu0 0
      %2002 = vmatpush1.bf16.msra.mxu0 %v1921
      %2003 = vmatprep.subr.bf16.mxu0 0
      %2004 = vmatpush1.bf16.msra.mxu0 %v1920
      %2005 = vmatprep.subr.bf16.mxu0 0
      %2006 = vmatpush1.bf16.msra.mxu0 %v1919
      %2007 = vmatprep.subr.bf16.mxu0 0
      %2008 = vmatpush1.bf16.msra.mxu0 %v1918
      %2009 = vmatprep.subr.bf16.mxu0 0
      %2010 = vmatpush2.bf16.msra.mxu0 0
      %2011 = vmatprep.subr.bf16.mxu0 0
      %2012 = vmatpush2.bf16.msra.mxu0 0
      %2013 = vmatprep.subr.bf16.mxu0 0
      %2014 = vmatpush2.bf16.msra.mxu0 0
      %2015 = vmatprep.subr.bf16.mxu0 0
      %2016 = vmatpush2.bf16.msra.mxu0 0
      %2017 = vmatprep.subr.bf16.mxu0 0
      %2018 = vmatpush2.bf16.msra.mxu0 0
      %2019 = vmatprep.subr.bf16.mxu0 0
      %2020 = vmatpush2.bf16.msra.mxu0 0
      %2021 = vmatprep.subr.bf16.mxu0 0
      %2022 = vmatpush2.bf16.msra.mxu0 %v1991
      %2023 = vmatprep.subr.bf16.mxu0 0
      %2024 = vmatpush2.bf16.msra.mxu0 %v1926
      %2025 = vmatprep.mubr.bf16.mxu0 %v1939
      %2026 = vmatmul.mubr.bf16.gmra.mxu0 %v1829
      %v2027 = vpop.f32.mrf.mxu0
      %v2028 = vadd.f32 0.0, %v2027
      %v2029 = vpop.f32.mrf.mxu0
      %v2030 = vpop.f32.mrf.mxu0
      %v2031 = vadd.f32 0.0, %v2030
      %v2032 = vpop.f32.mrf.mxu0
      %2033 = vmatprep.mubr.bf16.mxu0 %v1942
      %2034 = vmatmul.mubr.bf16.gmra.mxu0 %v1831
      %v2035 = vpop.f32.mrf.mxu0
      %v2036 = vadd.f32 0.0, %v2035
      %v2037 = vpop.f32.mrf.mxu0
      %v2038 = vpop.f32.mrf.mxu0
      %v2039 = vadd.f32 0.0, %v2038
      %v2040 = vpop.f32.mrf.mxu0
      %2041 = vmatprep.mubr.bf16.mxu0 %v1945
      %2042 = vmatmul.mubr.bf16.gmra.mxu0 %v1833
      %v2043 = vpop.f32.mrf.mxu0
      %v2044 = vadd.f32 0.0, %v2043
      %v2045 = vpop.f32.mrf.mxu0
      %v2046 = vpop.f32.mrf.mxu0
      %v2047 = vadd.f32 0.0, %v2046
      %v2048 = vpop.f32.mrf.mxu0
      %2049 = vmatprep.mubr.bf16.mxu0 %v1948
      %2050 = vmatmul.mubr.bf16.gmra.mxu0 %v1835
      %v2051 = vpop.f32.mrf.mxu0
      %v2052 = vadd.f32 0.0, %v2051
      %v2053 = vpop.f32.mrf.mxu0
      %v2054 = vpop.f32.mrf.mxu0
      %v2055 = vadd.f32 0.0, %v2054
      %v2056 = vpop.f32.mrf.mxu0
      %2057 = vmatprep.mubr.bf16.mxu0 %v1951
      %2058 = vmatmul.mubr.bf16.gmra.mxu0 %v1837
      %v2059 = vpop.f32.mrf.mxu0
      %v2060 = vadd.f32 0.0, %v2059
      %v2061 = vpop.f32.mrf.mxu0
      %v2062 = vpop.f32.mrf.mxu0
      %v2063 = vadd.f32 0.0, %v2062
      %v2064 = vpop.f32.mrf.mxu0
      %2065 = vmatprep.mubr.bf16.mxu0 %v1954
      %2066 = vmatmul.mubr.bf16.gmra.mxu0 %v1839
      %v2067 = vpop.f32.mrf.mxu0
      %v2068 = vadd.f32 0.0, %v2067
      %v2069 = vpop.f32.mrf.mxu0
      %v2070 = vpop.f32.mrf.mxu0
      %v2071 = vadd.f32 0.0, %v2070
      %v2072 = vpop.f32.mrf.mxu0
      %2073 = vmatprep.mubr.bf16.mxu0 %v1957
      %2074 = vmatmul.mubr.bf16.gmra.mxu0 %v1841
      %v2075 = vpop.f32.mrf.mxu0
      %v2076 = vadd.f32 0.0, %v2075
      %v2077 = vpop.f32.mrf.mxu0
      %v2078 = vpop.f32.mrf.mxu0
      %v2079 = vadd.f32 0.0, %v2078
      %v2080 = vpop.f32.mrf.mxu0
      %2081 = vmatprep.mubr.bf16.mxu0 %v1960
      %2082 = vmatmul.mubr.bf16.gmra.mxu0 %v1843
      %v2083 = vpop.f32.mrf.mxu0
      %v2084 = vadd.f32 0.0, %v2083
      %v2085 = vpop.f32.mrf.mxu0
      %v2086 = vpop.f32.mrf.mxu0
      %v2087 = vadd.f32 0.0, %v2086
      %v2088 = vpop.f32.mrf.mxu0
      %2089 = vmatprep.mubr.bf16.mxu0 %v1963
      %2090 = vmatmul.mubr.bf16.gmra.mxu0 %v1845
      %v2091 = vpop.f32.mrf.mxu0
      %v2092 = vadd.f32 0.0, %v2091
      %v2093 = vpop.f32.mrf.mxu0
      %v2094 = vpop.f32.mrf.mxu0
      %v2095 = vadd.f32 0.0, %v2094
      %v2096 = vpop.f32.mrf.mxu0
      %2097 = vmatprep.mubr.bf16.mxu0 %v1966
      %2098 = vmatmul.mubr.bf16.gmra.mxu0 %v1847
      %v2099 = vpop.f32.mrf.mxu0
      %v2100 = vadd.f32 0.0, %v2099
      %v2101 = vpop.f32.mrf.mxu0
      %v2102 = vpop.f32.mrf.mxu0
      %v2103 = vadd.f32 0.0, %v2102
      %v2104 = vpop.f32.mrf.mxu0
      %2105 = vmatprep.mubr.bf16.mxu0 %v1969
      %2106 = vmatmul.mubr.bf16.gmra.mxu0 %v1849
      %v2107 = vpop.f32.mrf.mxu0
      %v2108 = vadd.f32 0.0, %v2107
      %v2109 = vpop.f32.mrf.mxu0
      %v2110 = vpop.f32.mrf.mxu0
      %v2111 = vadd.f32 0.0, %v2110
      %v2112 = vpop.f32.mrf.mxu0
      %2113 = vmatprep.mubr.bf16.mxu0 %v1972
      %2114 = vmatmul.mubr.bf16.gmra.mxu0 %v1851
      %v2115 = vpop.f32.mrf.mxu0
      %v2116 = vadd.f32 0.0, %v2115
      %v2117 = vpop.f32.mrf.mxu0
      %v2118 = vpop.f32.mrf.mxu0
      %v2119 = vadd.f32 0.0, %v2118
      %v2120 = vpop.f32.mrf.mxu0
      %2121 = vmatprep.mubr.bf16.mxu0 %v1975
      %2122 = vmatmul.mubr.bf16.gmra.mxu0 %v1853
      %v2123 = vpop.f32.mrf.mxu0
      %v2124 = vadd.f32 0.0, %v2123
      %v2125 = vpop.f32.mrf.mxu0
      %v2126 = vpop.f32.mrf.mxu0
      %v2127 = vadd.f32 0.0, %v2126
      %v2128 = vpop.f32.mrf.mxu0
      %2129 = vmatprep.mubr.bf16.mxu0 %v1978
      %2130 = vmatmul.mubr.bf16.gmra.mxu0 %v1855
      %v2131 = vpop.f32.mrf.mxu0
      %v2132 = vadd.f32 0.0, %v2131
      %v2133 = vpop.f32.mrf.mxu0
      %v2134 = vpop.f32.mrf.mxu0
      %v2135 = vadd.f32 0.0, %v2134
      %v2136 = vpop.f32.mrf.mxu0
      %2137 = vmatprep.mubr.bf16.mxu0 %v1981
      %2138 = vmatmul.mubr.bf16.gmra.mxu0 %v1857
      %v2139 = vpop.f32.mrf.mxu0
      %v2140 = vadd.f32 0.0, %v2139
      %v2141 = vpop.f32.mrf.mxu0
      %v2142 = vpop.f32.mrf.mxu0
      %v2143 = vadd.f32 0.0, %v2142
      %v2144 = vpop.f32.mrf.mxu0
      %2145 = vmatprep.mubr.bf16.mxu0 %v1984
      %2146 = vmatmul.mubr.bf16.gmra.mxu0 %v1859
      %v2147 = vpop.f32.mrf.mxu0
      %v2148 = vadd.f32 0.0, %v2147
      %v2149 = vpop.f32.mrf.mxu0
      %v2150 = vpop.f32.mrf.mxu0
      %v2151 = vadd.f32 0.0, %v2150
      %v2152 = vpop.f32.mrf.mxu0
      %2153 = vdwg.mxu0
      %v2154 = vadd.f32 %v1605, %v2028
      %v2155 = vadd.f32 %v1606, %v2031
      %v2156 = vadd.f32 %v1607, %v2036
      %v2157 = vadd.f32 %v1608, %v2039
      %v2158 = vadd.f32 %v1609, %v2044
      %v2159 = vadd.f32 %v1610, %v2047
      %v2160 = vadd.f32 %v1611, %v2052
      %v2161 = vadd.f32 %v1612, %v2055
      %v2162 = vadd.f32 %v1613, %v2060
      %v2163 = vadd.f32 %v1614, %v2063
      %v2164 = vadd.f32 %v1615, %v2068
      %v2165 = vadd.f32 %v1616, %v2071
      %v2166 = vadd.f32 %v1617, %v2076
      %v2167 = vadd.f32 %v1618, %v2079
      %v2168 = vadd.f32 %v1619, %v2084
      %v2169 = vadd.f32 %v1620, %v2087
      %v2170 = vadd.f32 %v1621, %v2092
      %v2171 = vadd.f32 %v1622, %v2095
      %v2172 = vadd.f32 %v1623, %v2100
      %v2173 = vadd.f32 %v1624, %v2103
      %v2174 = vadd.f32 %v1625, %v2108
      %v2175 = vadd.f32 %v1626, %v2111
      %v2176 = vadd.f32 %v1627, %v2116
      %v2177 = vadd.f32 %v1628, %v2119
      %v2178 = vadd.f32 %v1629, %v2124
      %v2179 = vadd.f32 %v1630, %v2127
      %v2180 = vadd.f32 %v1631, %v2132
      %v2181 = vadd.f32 %v1632, %v2135
      %v2182 = vadd.f32 %v1633, %v2140
      %v2183 = vadd.f32 %v1634, %v2143
      %v2184 = vadd.f32 %v1635, %v2148
      %v2185 = vadd.f32 %v1636, %v2151
      %v2186 = vsel %vm1413, %v1157, 0.0
      %v2187 = vsel %vm1414, %v1158, 0.0
      %v2188 = vsel %vm1415, %v1159, 0.0
      %v2189 = vsel %vm1416, %v1160, 0.0
      %v2190 = vsel %vm1417, %v1161, 0.0
      %v2191 = vsel %vm1418, %v1162, 0.0
      %v2192 = vsel %vm1419, %v1163, 0.0
      %v2193 = vsel %vm1420, %v1164, 0.0
      %v2194 = vsel %vm1421, %v1165, 0.0
      %v2195 = vsel %vm1422, %v1166, 0.0
      %v2196 = vsel %vm1423, %v1167, 0.0
      %v2197 = vsel %vm1424, %v1168, 0.0
      %v2198 = vsel %vm1425, %v1169, 0.0
      %v2199 = vsel %vm1426, %v1170, 0.0
      %v2200 = vsel %vm1427, %v1171, 0.0
      %v2201 = vsel %vm1428, %v1172, 0.0
      %v2202 = vsel %vm1429, %v1173, 0.0
      %v2203 = vsel %vm1430, %v1174, 0.0
      %v2204 = vsel %vm1431, %v1175, 0.0
      %v2205 = vsel %vm1432, %v1176, 0.0
      %v2206 = vsel %vm1433, %v1177, 0.0
      %v2207 = vsel %vm1434, %v1178, 0.0
      %v2208 = vsel %vm1435, %v1179, 0.0
      %v2209 = vsel %vm1436, %v1180, 0.0
      %v2210 = vsel %vm1437, %v1181, 0.0
      %v2211 = vsel %vm1438, %v1182, 0.0
      %v2212 = vsel %vm1439, %v1183, 0.0
      %v2213 = vsel %vm1440, %v1184, 0.0
      %v2214 = vsel %vm1441, %v1185, 0.0
      %v2215 = vsel %vm1442, %v1186, 0.0
      %v2216 = vsel %vm1443, %v1187, 0.0
      %v2217 = vsel %vm1444, %v1188, 0.0
      %v2218 = vsel %vm1445, %v1189, 0.0
      %v2219 = vsel %vm1446, %v1190, 0.0
      %v2220 = vsel %vm1447, %v1191, 0.0
      %v2221 = vsel %vm1448, %v1192, 0.0
      %v2222 = vsel %vm1449, %v1193, 0.0
      %v2223 = vsel %vm1450, %v1194, 0.0
      %v2224 = vsel %vm1451, %v1195, 0.0
      %v2225 = vsel %vm1452, %v1196, 0.0
      %v2226 = vsel %vm1453, %v1197, 0.0
      %v2227 = vsel %vm1454, %v1198, 0.0
      %v2228 = vsel %vm1455, %v1199, 0.0
      %v2229 = vsel %vm1456, %v1200, 0.0
      %v2230 = vsel %vm1457, %v1201, 0.0
      %v2231 = vsel %vm1458, %v1202, 0.0
      %v2232 = vsel %vm1459, %v1203, 0.0
      %v2233 = vsel %vm1460, %v1204, 0.0
      %v2234 = vsel %vm1461, %v1205, 0.0
      %v2235 = vsel %vm1462, %v1206, 0.0
      %v2236 = vsel %vm1463, %v1207, 0.0
      %v2237 = vsel %vm1464, %v1208, 0.0
      %v2238 = vsel %vm1465, %v1209, 0.0
      %v2239 = vsel %vm1466, %v1210, 0.0
      %v2240 = vsel %vm1467, %v1211, 0.0
      %v2241 = vsel %vm1468, %v1212, 0.0
      %v2242 = vsel %vm1469, %v1213, 0.0
      %v2243 = vsel %vm1470, %v1214, 0.0
      %v2244 = vsel %vm1471, %v1215, 0.0
      %v2245 = vsel %vm1472, %v1216, 0.0
      %v2246 = vsel %vm1473, %v1217, 0.0
      %v2247 = vsel %vm1474, %v1218, 0.0
      %v2248 = vsel %vm1475, %v1219, 0.0
      %v2249 = vsel %vm1476, %v1220, 0.0
      %v2250 = vsel %vm1349, %v965, %v2186
      %v2251 = vsel %vm1350, %v966, %v2187
      %v2252 = vsel %vm1351, %v967, %v2188
      %v2253 = vsel %vm1352, %v968, %v2189
      %v2254 = vsel %vm1353, %v969, %v2190
      %v2255 = vsel %vm1354, %v970, %v2191
      %v2256 = vsel %vm1355, %v971, %v2192
      %v2257 = vsel %vm1356, %v972, %v2193
      %v2258 = vsel %vm1357, %v973, %v2194
      %v2259 = vsel %vm1358, %v974, %v2195
      %v2260 = vsel %vm1359, %v975, %v2196
      %v2261 = vsel %vm1360, %v976, %v2197
      %v2262 = vsel %vm1361, %v977, %v2198
      %v2263 = vsel %vm1362, %v978, %v2199
      %v2264 = vsel %vm1363, %v979, %v2200
      %v2265 = vsel %vm1364, %v980, %v2201
      %v2266 = vsel %vm1365, %v981, %v2202
      %v2267 = vsel %vm1366, %v982, %v2203
      %v2268 = vsel %vm1367, %v983, %v2204
      %v2269 = vsel %vm1368, %v984, %v2205
      %v2270 = vsel %vm1369, %v985, %v2206
      %v2271 = vsel %vm1370, %v986, %v2207
      %v2272 = vsel %vm1371, %v987, %v2208
      %v2273 = vsel %vm1372, %v988, %v2209
      %v2274 = vsel %vm1373, %v989, %v2210
      %v2275 = vsel %vm1374, %v990, %v2211
      %v2276 = vsel %vm1375, %v991, %v2212
      %v2277 = vsel %vm1376, %v992, %v2213
      %v2278 = vsel %vm1377, %v993, %v2214
      %v2279 = vsel %vm1378, %v994, %v2215
      %v2280 = vsel %vm1379, %v995, %v2216
      %v2281 = vsel %vm1380, %v996, %v2217
      %v2282 = vsel %vm1381, %v997, %v2218
      %v2283 = vsel %vm1382, %v998, %v2219
      %v2284 = vsel %vm1383, %v999, %v2220
      %v2285 = vsel %vm1384, %v1000, %v2221
      %v2286 = vsel %vm1385, %v1001, %v2222
      %v2287 = vsel %vm1386, %v1002, %v2223
      %v2288 = vsel %vm1387, %v1003, %v2224
      %v2289 = vsel %vm1388, %v1004, %v2225
      %v2290 = vsel %vm1389, %v1005, %v2226
      %v2291 = vsel %vm1390, %v1006, %v2227
      %v2292 = vsel %vm1391, %v1007, %v2228
      %v2293 = vsel %vm1392, %v1008, %v2229
      %v2294 = vsel %vm1393, %v1009, %v2230
      %v2295 = vsel %vm1394, %v1010, %v2231
      %v2296 = vsel %vm1395, %v1011, %v2232
      %v2297 = vsel %vm1396, %v1012, %v2233
      %v2298 = vsel %vm1397, %v1013, %v2234
      %v2299 = vsel %vm1398, %v1014, %v2235
      %v2300 = vsel %vm1399, %v1015, %v2236
      %v2301 = vsel %vm1400, %v1016, %v2237
      %v2302 = vsel %vm1401, %v1017, %v2238
      %v2303 = vsel %vm1402, %v1018, %v2239
      %v2304 = vsel %vm1403, %v1019, %v2240
      %v2305 = vsel %vm1404, %v1020, %v2241
      %v2306 = vsel %vm1405, %v1021, %v2242
      %v2307 = vsel %vm1406, %v1022, %v2243
      %v2308 = vsel %vm1407, %v1023, %v2244
      %v2309 = vsel %vm1408, %v1024, %v2245
      %v2310 = vsel %vm1409, %v1025, %v2246
      %v2311 = vsel %vm1410, %v1026, %v2247
      %v2312 = vsel %vm1411, %v1027, %v2248
      %v2313 = vsel %vm1412, %v1028, %v2249
      %v2314 = vsel %vm1285, %v709, %v2250
      %v2315 = vsel %vm1286, %v710, %v2251
      %v2316 = vsel %vm1287, %v711, %v2252
      %v2317 = vsel %vm1288, %v712, %v2253
      %v2318 = vsel %vm1289, %v713, %v2254
      %v2319 = vsel %vm1290, %v714, %v2255
      %v2320 = vsel %vm1291, %v715, %v2256
      %v2321 = vsel %vm1292, %v716, %v2257
      %v2322 = vsel %vm1293, %v717, %v2258
      %v2323 = vsel %vm1294, %v718, %v2259
      %v2324 = vsel %vm1295, %v719, %v2260
      %v2325 = vsel %vm1296, %v720, %v2261
      %v2326 = vsel %vm1297, %v721, %v2262
      %v2327 = vsel %vm1298, %v722, %v2263
      %v2328 = vsel %vm1299, %v723, %v2264
      %v2329 = vsel %vm1300, %v724, %v2265
      %v2330 = vsel %vm1301, %v725, %v2266
      %v2331 = vsel %vm1302, %v726, %v2267
      %v2332 = vsel %vm1303, %v727, %v2268
      %v2333 = vsel %vm1304, %v728, %v2269
      %v2334 = vsel %vm1305, %v729, %v2270
      %v2335 = vsel %vm1306, %v730, %v2271
      %v2336 = vsel %vm1307, %v731, %v2272
      %v2337 = vsel %vm1308, %v732, %v2273
      %v2338 = vsel %vm1309, %v733, %v2274
      %v2339 = vsel %vm1310, %v734, %v2275
      %v2340 = vsel %vm1311, %v735, %v2276
      %v2341 = vsel %vm1312, %v736, %v2277
      %v2342 = vsel %vm1313, %v737, %v2278
      %v2343 = vsel %vm1314, %v738, %v2279
      %v2344 = vsel %vm1315, %v739, %v2280
      %v2345 = vsel %vm1316, %v740, %v2281
      %v2346 = vsel %vm1317, %v741, %v2282
      %v2347 = vsel %vm1318, %v742, %v2283
      %v2348 = vsel %vm1319, %v743, %v2284
      %v2349 = vsel %vm1320, %v744, %v2285
      %v2350 = vsel %vm1321, %v745, %v2286
      %v2351 = vsel %vm1322, %v746, %v2287
      %v2352 = vsel %vm1323, %v747, %v2288
      %v2353 = vsel %vm1324, %v748, %v2289
      %v2354 = vsel %vm1325, %v749, %v2290
      %v2355 = vsel %vm1326, %v750, %v2291
      %v2356 = vsel %vm1327, %v751, %v2292
      %v2357 = vsel %vm1328, %v752, %v2293
      %v2358 = vsel %vm1329, %v753, %v2294
      %v2359 = vsel %vm1330, %v754, %v2295
      %v2360 = vsel %vm1331, %v755, %v2296
      %v2361 = vsel %vm1332, %v756, %v2297
      %v2362 = vsel %vm1333, %v757, %v2298
      %v2363 = vsel %vm1334, %v758, %v2299
      %v2364 = vsel %vm1335, %v759, %v2300
      %v2365 = vsel %vm1336, %v760, %v2301
      %v2366 = vsel %vm1337, %v761, %v2302
      %v2367 = vsel %vm1338, %v762, %v2303
      %v2368 = vsel %vm1339, %v763, %v2304
      %v2369 = vsel %vm1340, %v764, %v2305
      %v2370 = vsel %vm1341, %v765, %v2306
      %v2371 = vsel %vm1342, %v766, %v2307
      %v2372 = vsel %vm1343, %v767, %v2308
      %v2373 = vsel %vm1344, %v768, %v2309
      %v2374 = vsel %vm1345, %v769, %v2310
      %v2375 = vsel %vm1346, %v770, %v2311
      %v2376 = vsel %vm1347, %v771, %v2312
      %v2377 = vsel %vm1348, %v772, %v2313
      %v2378 = vpack.c.bf16 %v2316, %v2314
      %v2379 = vpack.c.bf16 %v2317, %v2315
      %v2380 = vpack.c.bf16 %v2320, %v2318
      %v2381 = vpack.c.bf16 %v2321, %v2319
      %v2382 = vpack.c.bf16 %v2324, %v2322
      %v2383 = vpack.c.bf16 %v2325, %v2323
      %v2384 = vpack.c.bf16 %v2328, %v2326
      %v2385 = vpack.c.bf16 %v2329, %v2327
      %v2386 = vpack.c.bf16 %v2332, %v2330
      %v2387 = vpack.c.bf16 %v2333, %v2331
      %v2388 = vpack.c.bf16 %v2336, %v2334
      %v2389 = vpack.c.bf16 %v2337, %v2335
      %v2390 = vpack.c.bf16 %v2340, %v2338
      %v2391 = vpack.c.bf16 %v2341, %v2339
      %v2392 = vpack.c.bf16 %v2344, %v2342
      %v2393 = vpack.c.bf16 %v2345, %v2343
      %v2394 = vpack.c.bf16 %v2348, %v2346
      %v2395 = vpack.c.bf16 %v2349, %v2347
      %v2396 = vpack.c.bf16 %v2352, %v2350
      %v2397 = vpack.c.bf16 %v2353, %v2351
      %v2398 = vpack.c.bf16 %v2356, %v2354
      %v2399 = vpack.c.bf16 %v2357, %v2355
      %v2400 = vpack.c.bf16 %v2360, %v2358
      %v2401 = vpack.c.bf16 %v2361, %v2359
      %v2402 = vpack.c.bf16 %v2364, %v2362
      %v2403 = vpack.c.bf16 %v2365, %v2363
      %v2404 = vpack.c.bf16 %v2368, %v2366
      %v2405 = vpack.c.bf16 %v2369, %v2367
      %v2406 = vpack.c.bf16 %v2372, %v2370
      %v2407 = vpack.c.bf16 %v2373, %v2371
      %v2408 = vpack.c.bf16 %v2376, %v2374
      %v2409 = vpack.c.bf16 %v2377, %v2375
      %s2410 = scalar_lea.vmem %s214, 76
      %v2411 = vld [vmem:[%s2410] sm:$0xf]
      %v2412 = vld [vmem:[%s2410 + $0x4] sm:$0xf]
      %v2413 = vld [vmem:[%s2410 + $0x8] sm:$0xf]
      %v2414 = vld [vmem:[%s2410 + $0xc] sm:$0xf]
      %v2415 = vld [vmem:[%s2410 + $0x10] sm:$0xf]
      %v2416 = vld [vmem:[%s2410 + $0x14] sm:$0xf]
      %v2417 = vld [vmem:[%s2410 + $0x18] sm:$0xf]
      %v2418 = vld [vmem:[%s2410 + $0x1c] sm:$0xf]
      %v2419 = vld [vmem:[%s2410 + $0x20] sm:$0xf]
      %v2420 = vld [vmem:[%s2410 + $0x24] sm:$0xf]
      %v2421 = vld [vmem:[%s2410 + $0x28] sm:$0xf]
      %v2422 = vld [vmem:[%s2410 + $0x2c] sm:$0xf]
      %v2423 = vld [vmem:[%s2410 + $0x30] sm:$0xf]
      %v2424 = vld [vmem:[%s2410 + $0x34] sm:$0xf]
      %v2425 = vld [vmem:[%s2410 + $0x38] sm:$0xf]
      %v2426 = vld [vmem:[%s2410 + $0x3c] sm:$0xf]
      %v2427 = vld [vmem:[%s2410 + $0x40] sm:$0xf]
      %v2428 = vld [vmem:[%s2410 + $0x44] sm:$0xf]
      %v2429 = vld [vmem:[%s2410 + $0x48] sm:$0x3]
      %v2449 = vunpack.c.l.b16 %v2411
      %v2450 = vunpack.c.l.b16 %v2412
      %v2451 = vunpack.c.l.b16 %v2413
      %v2452 = vunpack.c.l.b16 %v2414
      %v2453 = vunpack.c.l.b16 %v2415
      %v2454 = vunpack.c.l.b16 %v2416
      %v2455 = vunpack.c.l.b16 %v2417
      %v2456 = vunpack.c.l.b16 %v2418
      %v2457 = vunpack.c.l.b16 %v2419
      %v2458 = vunpack.c.l.b16 %v2420
      %v2459 = vunpack.c.l.b16 %v2421
      %v2460 = vunpack.c.l.b16 %v2422
      %v2461 = vunpack.c.l.b16 %v2423
      %v2462 = vunpack.c.l.b16 %v2424
      %v2463 = vunpack.c.l.b16 %v2425
      %v2464 = vunpack.c.l.b16 %v2426
      %v2465 = vunpack.c.l.b16 %v2427
      %v2466 = vunpack.c.l.b16 %v2428
      %v2467 = vunpack.c.l.b16 %v2429
      %v2468 = vpack.c.b16 %v2450, %v2449
      %v2469 = vpack.c.b16 %v2452, %v2451
      %v2470 = vpack.c.b16 %v2454, %v2453
      %v2471 = vpack.c.b16 %v2456, %v2455
      %v2472 = vpack.c.b16 %v2458, %v2457
      %v2473 = vpack.c.b16 %v2460, %v2459
      %v2474 = vpack.c.b16 %v2462, %v2461
      %v2475 = vpack.c.b16 %v2464, %v2463
      %v2476 = vpack.c.b16 %v2466, %v2465
      %v2477 = vpack.c.b16 %v2467, %v2467
      %v2488 = vsel %vm1937, %v2379, 0
      %v2491 = vsel %vm1937, %v2381, 0
      %v2494 = vsel %vm1937, %v2383, 0
      %v2497 = vsel %vm1937, %v2385, 0
      %v2500 = vsel %vm1937, %v2387, 0
      %v2503 = vsel %vm1937, %v2389, 0
      %v2506 = vsel %vm1937, %v2391, 0
      %v2509 = vsel %vm1937, %v2393, 0
      %v2512 = vsel %vm1937, %v2395, 0
      %v2515 = vsel %vm1937, %v2397, 0
      %v2518 = vsel %vm1937, %v2399, 0
      %v2521 = vsel %vm1937, %v2401, 0
      %v2524 = vsel %vm1937, %v2403, 0
      %v2527 = vsel %vm1937, %v2405, 0
      %v2530 = vsel %vm1937, %v2407, 0
      %v2533 = vsel %vm1937, %v2409, 0
      %v2536 = vand.u32 %v2477, %v1989
      %2538 = vmatprep.subr.bf16.mxu0 0
      %2539 = vmatpush1.bf16.msra.mxu0 %v2475
      %2540 = vmatprep.subr.bf16.mxu0 0
      %2541 = vmatpush1.bf16.msra.mxu0 %v2474
      %2542 = vmatprep.subr.bf16.mxu0 0
      %2543 = vmatpush1.bf16.msra.mxu0 %v2473
      %2544 = vmatprep.subr.bf16.mxu0 0
      %2545 = vmatpush1.bf16.msra.mxu0 %v2472
      %2546 = vmatprep.subr.bf16.mxu0 0
      %2547 = vmatpush1.bf16.msra.mxu0 %v2471
      %2548 = vmatprep.subr.bf16.mxu0 0
      %2549 = vmatpush1.bf16.msra.mxu0 %v2470
      %2550 = vmatprep.subr.bf16.mxu0 0
      %2551 = vmatpush1.bf16.msra.mxu0 %v2469
      %2552 = vmatprep.subr.bf16.mxu0 0
      %2553 = vmatpush1.bf16.msra.mxu0 %v2468
      %2554 = vmatprep.subr.bf16.mxu0 0
      %2555 = vmatpush2.bf16.msra.mxu0 0
      %2556 = vmatprep.subr.bf16.mxu0 0
      %2557 = vmatpush2.bf16.msra.mxu0 0
      %2558 = vmatprep.subr.bf16.mxu0 0
      %2559 = vmatpush2.bf16.msra.mxu0 0
      %2560 = vmatprep.subr.bf16.mxu0 0
      %2561 = vmatpush2.bf16.msra.mxu0 0
      %2562 = vmatprep.subr.bf16.mxu0 0
      %2563 = vmatpush2.bf16.msra.mxu0 0
      %2564 = vmatprep.subr.bf16.mxu0 0
      %2565 = vmatpush2.bf16.msra.mxu0 0
      %2566 = vmatprep.subr.bf16.mxu0 0
      %2567 = vmatpush2.bf16.msra.mxu0 %v2536
      %2568 = vmatprep.subr.bf16.mxu0 0
      %2569 = vmatpush2.bf16.msra.mxu0 %v2476
      %2570 = vmatprep.mubr.bf16.mxu0 %v2488
      %2571 = vmatmul.mubr.bf16.gmra.mxu0 %v2378
      %v2572 = vpop.f32.mrf.mxu0
      %v2573 = vadd.f32 0.0, %v2572
      %v2574 = vpop.f32.mrf.mxu0
      %v2575 = vpop.f32.mrf.mxu0
      %v2576 = vadd.f32 0.0, %v2575
      %v2577 = vpop.f32.mrf.mxu0
      %2578 = vmatprep.mubr.bf16.mxu0 %v2491
      %2579 = vmatmul.mubr.bf16.gmra.mxu0 %v2380
      %v2580 = vpop.f32.mrf.mxu0
      %v2581 = vadd.f32 0.0, %v2580
      %v2582 = vpop.f32.mrf.mxu0
      %v2583 = vpop.f32.mrf.mxu0
      %v2584 = vadd.f32 0.0, %v2583
      %v2585 = vpop.f32.mrf.mxu0
      %2586 = vmatprep.mubr.bf16.mxu0 %v2494
      %2587 = vmatmul.mubr.bf16.gmra.mxu0 %v2382
      %v2588 = vpop.f32.mrf.mxu0
      %v2589 = vadd.f32 0.0, %v2588
      %v2590 = vpop.f32.mrf.mxu0
      %v2591 = vpop.f32.mrf.mxu0
      %v2592 = vadd.f32 0.0, %v2591
      %v2593 = vpop.f32.mrf.mxu0
      %2594 = vmatprep.mubr.bf16.mxu0 %v2497
      %2595 = vmatmul.mubr.bf16.gmra.mxu0 %v2384
      %v2596 = vpop.f32.mrf.mxu0
      %v2597 = vadd.f32 0.0, %v2596
      %v2598 = vpop.f32.mrf.mxu0
      %v2599 = vpop.f32.mrf.mxu0
      %v2600 = vadd.f32 0.0, %v2599
      %v2601 = vpop.f32.mrf.mxu0
      %2602 = vmatprep.mubr.bf16.mxu0 %v2500
      %2603 = vmatmul.mubr.bf16.gmra.mxu0 %v2386
      %v2604 = vpop.f32.mrf.mxu0
      %v2605 = vadd.f32 0.0, %v2604
      %v2606 = vpop.f32.mrf.mxu0
      %v2607 = vpop.f32.mrf.mxu0
      %v2608 = vadd.f32 0.0, %v2607
      %v2609 = vpop.f32.mrf.mxu0
      %2610 = vmatprep.mubr.bf16.mxu0 %v2503
      %2611 = vmatmul.mubr.bf16.gmra.mxu0 %v2388
      %v2612 = vpop.f32.mrf.mxu0
      %v2613 = vadd.f32 0.0, %v2612
      %v2614 = vpop.f32.mrf.mxu0
      %v2615 = vpop.f32.mrf.mxu0
      %v2616 = vadd.f32 0.0, %v2615
      %v2617 = vpop.f32.mrf.mxu0
      %2618 = vmatprep.mubr.bf16.mxu0 %v2506
      %2619 = vmatmul.mubr.bf16.gmra.mxu0 %v2390
      %v2620 = vpop.f32.mrf.mxu0
      %v2621 = vadd.f32 0.0, %v2620
      %v2622 = vpop.f32.mrf.mxu0
      %v2623 = vpop.f32.mrf.mxu0
      %v2624 = vadd.f32 0.0, %v2623
      %v2625 = vpop.f32.mrf.mxu0
      %2626 = vmatprep.mubr.bf16.mxu0 %v2509
      %2627 = vmatmul.mubr.bf16.gmra.mxu0 %v2392
      %v2628 = vpop.f32.mrf.mxu0
      %v2629 = vadd.f32 0.0, %v2628
      %v2630 = vpop.f32.mrf.mxu0
      %v2631 = vpop.f32.mrf.mxu0
      %v2632 = vadd.f32 0.0, %v2631
      %v2633 = vpop.f32.mrf.mxu0
      %2634 = vmatprep.mubr.bf16.mxu0 %v2512
      %2635 = vmatmul.mubr.bf16.gmra.mxu0 %v2394
      %v2636 = vpop.f32.mrf.mxu0
      %v2637 = vadd.f32 0.0, %v2636
      %v2638 = vpop.f32.mrf.mxu0
      %v2639 = vpop.f32.mrf.mxu0
      %v2640 = vadd.f32 0.0, %v2639
      %v2641 = vpop.f32.mrf.mxu0
      %2642 = vmatprep.mubr.bf16.mxu0 %v2515
      %2643 = vmatmul.mubr.bf16.gmra.mxu0 %v2396
      %v2644 = vpop.f32.mrf.mxu0
      %v2645 = vadd.f32 0.0, %v2644
      %v2646 = vpop.f32.mrf.mxu0
      %v2647 = vpop.f32.mrf.mxu0
      %v2648 = vadd.f32 0.0, %v2647
      %v2649 = vpop.f32.mrf.mxu0
      %2650 = vmatprep.mubr.bf16.mxu0 %v2518
      %2651 = vmatmul.mubr.bf16.gmra.mxu0 %v2398
      %v2652 = vpop.f32.mrf.mxu0
      %v2653 = vadd.f32 0.0, %v2652
      %v2654 = vpop.f32.mrf.mxu0
      %v2655 = vpop.f32.mrf.mxu0
      %v2656 = vadd.f32 0.0, %v2655
      %v2657 = vpop.f32.mrf.mxu0
      %2658 = vmatprep.mubr.bf16.mxu0 %v2521
      %2659 = vmatmul.mubr.bf16.gmra.mxu0 %v2400
      %v2660 = vpop.f32.mrf.mxu0
      %v2661 = vadd.f32 0.0, %v2660
      %v2662 = vpop.f32.mrf.mxu0
      %v2663 = vpop.f32.mrf.mxu0
      %v2664 = vadd.f32 0.0, %v2663
      %v2665 = vpop.f32.mrf.mxu0
      %2666 = vmatprep.mubr.bf16.mxu0 %v2524
      %2667 = vmatmul.mubr.bf16.gmra.mxu0 %v2402
      %v2668 = vpop.f32.mrf.mxu0
      %v2669 = vadd.f32 0.0, %v2668
      %v2670 = vpop.f32.mrf.mxu0
      %v2671 = vpop.f32.mrf.mxu0
      %v2672 = vadd.f32 0.0, %v2671
      %v2673 = vpop.f32.mrf.mxu0
      %2674 = vmatprep.mubr.bf16.mxu0 %v2527
      %2675 = vmatmul.mubr.bf16.gmra.mxu0 %v2404
      %v2676 = vpop.f32.mrf.mxu0
      %v2677 = vadd.f32 0.0, %v2676
      %v2678 = vpop.f32.mrf.mxu0
      %v2679 = vpop.f32.mrf.mxu0
      %v2680 = vadd.f32 0.0, %v2679
      %v2681 = vpop.f32.mrf.mxu0
      %2682 = vmatprep.mubr.bf16.mxu0 %v2530
      %2683 = vmatmul.mubr.bf16.gmra.mxu0 %v2406
      %v2684 = vpop.f32.mrf.mxu0
      %v2685 = vadd.f32 0.0, %v2684
      %v2686 = vpop.f32.mrf.mxu0
      %v2687 = vpop.f32.mrf.mxu0
      %v2688 = vadd.f32 0.0, %v2687
      %v2689 = vpop.f32.mrf.mxu0
      %2690 = vmatprep.mubr.bf16.mxu0 %v2533
      %2691 = vmatmul.mubr.bf16.gmra.mxu0 %v2408
      %v2692 = vpop.f32.mrf.mxu0
      %v2693 = vadd.f32 0.0, %v2692
      %v2694 = vpop.f32.mrf.mxu0
      %v2695 = vpop.f32.mrf.mxu0
      %v2696 = vadd.f32 0.0, %v2695
      %v2697 = vpop.f32.mrf.mxu0
      %2698 = vdwg.mxu0
      %v2699 = vadd.f32 %v2154, %v2573
      %v2700 = vadd.f32 %v2155, %v2576
      %v2701 = vadd.f32 %v2156, %v2581
      %v2702 = vadd.f32 %v2157, %v2584
      %v2703 = vadd.f32 %v2158, %v2589
      %v2704 = vadd.f32 %v2159, %v2592
      %v2705 = vadd.f32 %v2160, %v2597
      %v2706 = vadd.f32 %v2161, %v2600
      %v2707 = vadd.f32 %v2162, %v2605
      %v2708 = vadd.f32 %v2163, %v2608
      %v2709 = vadd.f32 %v2164, %v2613
      %v2710 = vadd.f32 %v2165, %v2616
      %v2711 = vadd.f32 %v2166, %v2621
      %v2712 = vadd.f32 %v2167, %v2624
      %v2713 = vadd.f32 %v2168, %v2629
      %v2714 = vadd.f32 %v2169, %v2632
      %v2715 = vadd.f32 %v2170, %v2637
      %v2716 = vadd.f32 %v2171, %v2640
      %v2717 = vadd.f32 %v2172, %v2645
      %v2718 = vadd.f32 %v2173, %v2648
      %v2719 = vadd.f32 %v2174, %v2653
      %v2720 = vadd.f32 %v2175, %v2656
      %v2721 = vadd.f32 %v2176, %v2661
      %v2722 = vadd.f32 %v2177, %v2664
      %v2723 = vadd.f32 %v2178, %v2669
      %v2724 = vadd.f32 %v2179, %v2672
      %v2725 = vadd.f32 %v2180, %v2677
      %v2726 = vadd.f32 %v2181, %v2680
      %v2727 = vadd.f32 %v2182, %v2685
      %v2728 = vadd.f32 %v2183, %v2688
      %v2729 = vadd.f32 %v2184, %v2693
      %v2730 = vadd.f32 %v2185, %v2696
      %v2731 = vsel %vm1477, %v1157, 0.0
      %v2732 = vsel %vm1478, %v1158, 0.0
      %v2733 = vsel %vm1479, %v1159, 0.0
      %v2734 = vsel %vm1480, %v1160, 0.0
      %v2735 = vsel %vm1481, %v1161, 0.0
      %v2736 = vsel %vm1482, %v1162, 0.0
      %v2737 = vsel %vm1483, %v1163, 0.0
      %v2738 = vsel %vm1484, %v1164, 0.0
      %v2739 = vsel %vm1485, %v1165, 0.0
      %v2740 = vsel %vm1486, %v1166, 0.0
      %v2741 = vsel %vm1487, %v1167, 0.0
      %v2742 = vsel %vm1488, %v1168, 0.0
      %v2743 = vsel %vm1489, %v1169, 0.0
      %v2744 = vsel %vm1490, %v1170, 0.0
      %v2745 = vsel %vm1491, %v1171, 0.0
      %v2746 = vsel %vm1492, %v1172, 0.0
      %v2747 = vsel %vm1493, %v1173, 0.0
      %v2748 = vsel %vm1494, %v1174, 0.0
      %v2749 = vsel %vm1495, %v1175, 0.0
      %v2750 = vsel %vm1496, %v1176, 0.0
      %v2751 = vsel %vm1497, %v1177, 0.0
      %v2752 = vsel %vm1498, %v1178, 0.0
      %v2753 = vsel %vm1499, %v1179, 0.0
      %v2754 = vsel %vm1500, %v1180, 0.0
      %v2755 = vsel %vm1501, %v1181, 0.0
      %v2756 = vsel %vm1502, %v1182, 0.0
      %v2757 = vsel %vm1503, %v1183, 0.0
      %v2758 = vsel %vm1504, %v1184, 0.0
      %v2759 = vsel %vm1505, %v1185, 0.0
      %v2760 = vsel %vm1506, %v1186, 0.0
      %v2761 = vsel %vm1507, %v1187, 0.0
      %v2762 = vsel %vm1508, %v1188, 0.0
      %v2763 = vsel %vm1509, %v1189, 0.0
      %v2764 = vsel %vm1510, %v1190, 0.0
      %v2765 = vsel %vm1511, %v1191, 0.0
      %v2766 = vsel %vm1512, %v1192, 0.0
      %v2767 = vsel %vm1513, %v1193, 0.0
      %v2768 = vsel %vm1514, %v1194, 0.0
      %v2769 = vsel %vm1515, %v1195, 0.0
      %v2770 = vsel %vm1516, %v1196, 0.0
      %v2771 = vsel %vm1517, %v1197, 0.0
      %v2772 = vsel %vm1518, %v1198, 0.0
      %v2773 = vsel %vm1519, %v1199, 0.0
      %v2774 = vsel %vm1520, %v1200, 0.0
      %v2775 = vsel %vm1521, %v1201, 0.0
      %v2776 = vsel %vm1522, %v1202, 0.0
      %v2777 = vsel %vm1523, %v1203, 0.0
      %v2778 = vsel %vm1524, %v1204, 0.0
      %v2779 = vsel %vm1525, %v1205, 0.0
      %v2780 = vsel %vm1526, %v1206, 0.0
      %v2781 = vsel %vm1527, %v1207, 0.0
      %v2782 = vsel %vm1528, %v1208, 0.0
      %v2783 = vsel %vm1529, %v1209, 0.0
      %v2784 = vsel %vm1530, %v1210, 0.0
      %v2785 = vsel %vm1531, %v1211, 0.0
      %v2786 = vsel %vm1532, %v1212, 0.0
      %v2787 = vsel %vm1533, %v1213, 0.0
      %v2788 = vsel %vm1534, %v1214, 0.0
      %v2789 = vsel %vm1535, %v1215, 0.0
      %v2790 = vsel %vm1536, %v1216, 0.0
      %v2791 = vsel %vm1537, %v1217, 0.0
      %v2792 = vsel %vm1538, %v1218, 0.0
      %v2793 = vsel %vm1539, %v1219, 0.0
      %v2794 = vsel %vm1540, %v1220, 0.0
      %v2795 = vsel %vm1413, %v965, %v2731
      %v2796 = vsel %vm1414, %v966, %v2732
      %v2797 = vsel %vm1415, %v967, %v2733
      %v2798 = vsel %vm1416, %v968, %v2734
      %v2799 = vsel %vm1417, %v969, %v2735
      %v2800 = vsel %vm1418, %v970, %v2736
      %v2801 = vsel %vm1419, %v971, %v2737
      %v2802 = vsel %vm1420, %v972, %v2738
      %v2803 = vsel %vm1421, %v973, %v2739
      %v2804 = vsel %vm1422, %v974, %v2740
      %v2805 = vsel %vm1423, %v975, %v2741
      %v2806 = vsel %vm1424, %v976, %v2742
      %v2807 = vsel %vm1425, %v977, %v2743
      %v2808 = vsel %vm1426, %v978, %v2744
      %v2809 = vsel %vm1427, %v979, %v2745
      %v2810 = vsel %vm1428, %v980, %v2746
      %v2811 = vsel %vm1429, %v981, %v2747
      %v2812 = vsel %vm1430, %v982, %v2748
      %v2813 = vsel %vm1431, %v983, %v2749
      %v2814 = vsel %vm1432, %v984, %v2750
      %v2815 = vsel %vm1433, %v985, %v2751
      %v2816 = vsel %vm1434, %v986, %v2752
      %v2817 = vsel %vm1435, %v987, %v2753
      %v2818 = vsel %vm1436, %v988, %v2754
      %v2819 = vsel %vm1437, %v989, %v2755
      %v2820 = vsel %vm1438, %v990, %v2756
      %v2821 = vsel %vm1439, %v991, %v2757
      %v2822 = vsel %vm1440, %v992, %v2758
      %v2823 = vsel %vm1441, %v993, %v2759
      %v2824 = vsel %vm1442, %v994, %v2760
      %v2825 = vsel %vm1443, %v995, %v2761
      %v2826 = vsel %vm1444, %v996, %v2762
      %v2827 = vsel %vm1445, %v997, %v2763
      %v2828 = vsel %vm1446, %v998, %v2764
      %v2829 = vsel %vm1447, %v999, %v2765
      %v2830 = vsel %vm1448, %v1000, %v2766
      %v2831 = vsel %vm1449, %v1001, %v2767
      %v2832 = vsel %vm1450, %v1002, %v2768
      %v2833 = vsel %vm1451, %v1003, %v2769
      %v2834 = vsel %vm1452, %v1004, %v2770
      %v2835 = vsel %vm1453, %v1005, %v2771
      %v2836 = vsel %vm1454, %v1006, %v2772
      %v2837 = vsel %vm1455, %v1007, %v2773
      %v2838 = vsel %vm1456, %v1008, %v2774
      %v2839 = vsel %vm1457, %v1009, %v2775
      %v2840 = vsel %vm1458, %v1010, %v2776
      %v2841 = vsel %vm1459, %v1011, %v2777
      %v2842 = vsel %vm1460, %v1012, %v2778
      %v2843 = vsel %vm1461, %v1013, %v2779
      %v2844 = vsel %vm1462, %v1014, %v2780
      %v2845 = vsel %vm1463, %v1015, %v2781
      %v2846 = vsel %vm1464, %v1016, %v2782
      %v2847 = vsel %vm1465, %v1017, %v2783
      %v2848 = vsel %vm1466, %v1018, %v2784
      %v2849 = vsel %vm1467, %v1019, %v2785
      %v2850 = vsel %vm1468, %v1020, %v2786
      %v2851 = vsel %vm1469, %v1021, %v2787
      %v2852 = vsel %vm1470, %v1022, %v2788
      %v2853 = vsel %vm1471, %v1023, %v2789
      %v2854 = vsel %vm1472, %v1024, %v2790
      %v2855 = vsel %vm1473, %v1025, %v2791
      %v2856 = vsel %vm1474, %v1026, %v2792
      %v2857 = vsel %vm1475, %v1027, %v2793
      %v2858 = vsel %vm1476, %v1028, %v2794
      %v2859 = vsel %vm1349, %v709, %v2795
      %v2860 = vsel %vm1350, %v710, %v2796
      %v2861 = vsel %vm1351, %v711, %v2797
      %v2862 = vsel %vm1352, %v712, %v2798
      %v2863 = vsel %vm1353, %v713, %v2799
      %v2864 = vsel %vm1354, %v714, %v2800
      %v2865 = vsel %vm1355, %v715, %v2801
      %v2866 = vsel %vm1356, %v716, %v2802
      %v2867 = vsel %vm1357, %v717, %v2803
      %v2868 = vsel %vm1358, %v718, %v2804
      %v2869 = vsel %vm1359, %v719, %v2805
      %v2870 = vsel %vm1360, %v720, %v2806
      %v2871 = vsel %vm1361, %v721, %v2807
      %v2872 = vsel %vm1362, %v722, %v2808
      %v2873 = vsel %vm1363, %v723, %v2809
      %v2874 = vsel %vm1364, %v724, %v2810
      %v2875 = vsel %vm1365, %v725, %v2811
      %v2876 = vsel %vm1366, %v726, %v2812
      %v2877 = vsel %vm1367, %v727, %v2813
      %v2878 = vsel %vm1368, %v728, %v2814
      %v2879 = vsel %vm1369, %v729, %v2815
      %v2880 = vsel %vm1370, %v730, %v2816
      %v2881 = vsel %vm1371, %v731, %v2817
      %v2882 = vsel %vm1372, %v732, %v2818
      %v2883 = vsel %vm1373, %v733, %v2819
      %v2884 = vsel %vm1374, %v734, %v2820
      %v2885 = vsel %vm1375, %v735, %v2821
      %v2886 = vsel %vm1376, %v736, %v2822
      %v2887 = vsel %vm1377, %v737, %v2823
      %v2888 = vsel %vm1378, %v738, %v2824
      %v2889 = vsel %vm1379, %v739, %v2825
      %v2890 = vsel %vm1380, %v740, %v2826
      %v2891 = vsel %vm1381, %v741, %v2827
      %v2892 = vsel %vm1382, %v742, %v2828
      %v2893 = vsel %vm1383, %v743, %v2829
      %v2894 = vsel %vm1384, %v744, %v2830
      %v2895 = vsel %vm1385, %v745, %v2831
      %v2896 = vsel %vm1386, %v746, %v2832
      %v2897 = vsel %vm1387, %v747, %v2833
      %v2898 = vsel %vm1388, %v748, %v2834
      %v2899 = vsel %vm1389, %v749, %v2835
      %v2900 = vsel %vm1390, %v750, %v2836
      %v2901 = vsel %vm1391, %v751, %v2837
      %v2902 = vsel %vm1392, %v752, %v2838
      %v2903 = vsel %vm1393, %v753, %v2839
      %v2904 = vsel %vm1394, %v754, %v2840
      %v2905 = vsel %vm1395, %v755, %v2841
      %v2906 = vsel %vm1396, %v756, %v2842
      %v2907 = vsel %vm1397, %v757, %v2843
      %v2908 = vsel %vm1398, %v758, %v2844
      %v2909 = vsel %vm1399, %v759, %v2845
      %v2910 = vsel %vm1400, %v760, %v2846
      %v2911 = vsel %vm1401, %v761, %v2847
      %v2912 = vsel %vm1402, %v762, %v2848
      %v2913 = vsel %vm1403, %v763, %v2849
      %v2914 = vsel %vm1404, %v764, %v2850
      %v2915 = vsel %vm1405, %v765, %v2851
      %v2916 = vsel %vm1406, %v766, %v2852
      %v2917 = vsel %vm1407, %v767, %v2853
      %v2918 = vsel %vm1408, %v768, %v2854
      %v2919 = vsel %vm1409, %v769, %v2855
      %v2920 = vsel %vm1410, %v770, %v2856
      %v2921 = vsel %vm1411, %v771, %v2857
      %v2922 = vsel %vm1412, %v772, %v2858
      %v2923 = vpack.c.bf16 %v2861, %v2859
      %v2924 = vpack.c.bf16 %v2862, %v2860
      %v2925 = vpack.c.bf16 %v2865, %v2863
      %v2926 = vpack.c.bf16 %v2866, %v2864
      %v2927 = vpack.c.bf16 %v2869, %v2867
      %v2928 = vpack.c.bf16 %v2870, %v2868
      %v2929 = vpack.c.bf16 %v2873, %v2871
      %v2930 = vpack.c.bf16 %v2874, %v2872
      %v2931 = vpack.c.bf16 %v2877, %v2875
      %v2932 = vpack.c.bf16 %v2878, %v2876
      %v2933 = vpack.c.bf16 %v2881, %v2879
      %v2934 = vpack.c.bf16 %v2882, %v2880
      %v2935 = vpack.c.bf16 %v2885, %v2883
      %v2936 = vpack.c.bf16 %v2886, %v2884
      %v2937 = vpack.c.bf16 %v2889, %v2887
      %v2938 = vpack.c.bf16 %v2890, %v2888
      %v2939 = vpack.c.bf16 %v2893, %v2891
      %v2940 = vpack.c.bf16 %v2894, %v2892
      %v2941 = vpack.c.bf16 %v2897, %v2895
      %v2942 = vpack.c.bf16 %v2898, %v2896
      %v2943 = vpack.c.bf16 %v2901, %v2899
      %v2944 = vpack.c.bf16 %v2902, %v2900
      %v2945 = vpack.c.bf16 %v2905, %v2903
      %v2946 = vpack.c.bf16 %v2906, %v2904
      %v2947 = vpack.c.bf16 %v2909, %v2907
      %v2948 = vpack.c.bf16 %v2910, %v2908
      %v2949 = vpack.c.bf16 %v2913, %v2911
      %v2950 = vpack.c.bf16 %v2914, %v2912
      %v2951 = vpack.c.bf16 %v2917, %v2915
      %v2952 = vpack.c.bf16 %v2918, %v2916
      %v2953 = vpack.c.bf16 %v2921, %v2919
      %v2954 = vpack.c.bf16 %v2922, %v2920
      %s2955 = scalar_lea.vmem %s214, 152
      %v2956 = vld [vmem:[%s2955] sm:$0xf]
      %v2957 = vld [vmem:[%s2955 + $0x4] sm:$0xf]
      %v2958 = vld [vmem:[%s2955 + $0x8] sm:$0xf]
      %v2959 = vld [vmem:[%s2955 + $0xc] sm:$0xf]
      %v2960 = vld [vmem:[%s2955 + $0x10] sm:$0xf]
      %v2961 = vld [vmem:[%s2955 + $0x14] sm:$0xf]
      %v2962 = vld [vmem:[%s2955 + $0x18] sm:$0xf]
      %v2963 = vld [vmem:[%s2955 + $0x1c] sm:$0xf]
      %v2964 = vld [vmem:[%s2955 + $0x20] sm:$0xf]
      %v2965 = vld [vmem:[%s2955 + $0x24] sm:$0xf]
      %v2966 = vld [vmem:[%s2955 + $0x28] sm:$0xf]
      %v2967 = vld [vmem:[%s2955 + $0x2c] sm:$0xf]
      %v2968 = vld [vmem:[%s2955 + $0x30] sm:$0xf]
      %v2969 = vld [vmem:[%s2955 + $0x34] sm:$0xf]
      %v2970 = vld [vmem:[%s2955 + $0x38] sm:$0xf]
      %v2971 = vld [vmem:[%s2955 + $0x3c] sm:$0xf]
      %v2972 = vld [vmem:[%s2955 + $0x40] sm:$0xf]
      %v2973 = vld [vmem:[%s2955 + $0x44] sm:$0xf]
      %v2974 = vld [vmem:[%s2955 + $0x48] sm:$0x3]
      %v2994 = vunpack.c.l.b16 %v2956
      %v2995 = vunpack.c.l.b16 %v2957
      %v2996 = vunpack.c.l.b16 %v2958
      %v2997 = vunpack.c.l.b16 %v2959
      %v2998 = vunpack.c.l.b16 %v2960
      %v2999 = vunpack.c.l.b16 %v2961
      %v3000 = vunpack.c.l.b16 %v2962
      %v3001 = vunpack.c.l.b16 %v2963
      %v3002 = vunpack.c.l.b16 %v2964
      %v3003 = vunpack.c.l.b16 %v2965
      %v3004 = vunpack.c.l.b16 %v2966
      %v3005 = vunpack.c.l.b16 %v2967
      %v3006 = vunpack.c.l.b16 %v2968
      %v3007 = vunpack.c.l.b16 %v2969
      %v3008 = vunpack.c.l.b16 %v2970
      %v3009 = vunpack.c.l.b16 %v2971
      %v3010 = vunpack.c.l.b16 %v2972
      %v3011 = vunpack.c.l.b16 %v2973
      %v3012 = vunpack.c.l.b16 %v2974
      %v3013 = vpack.c.b16 %v2995, %v2994
      %v3014 = vpack.c.b16 %v2997, %v2996
      %v3015 = vpack.c.b16 %v2999, %v2998
      %v3016 = vpack.c.b16 %v3001, %v3000
      %v3017 = vpack.c.b16 %v3003, %v3002
      %v3018 = vpack.c.b16 %v3005, %v3004
      %v3019 = vpack.c.b16 %v3007, %v3006
      %v3020 = vpack.c.b16 %v3009, %v3008
      %v3021 = vpack.c.b16 %v3011, %v3010
      %v3022 = vpack.c.b16 %v3012, %v3012
      %v3033 = vsel %vm1937, %v2924, 0
      %v3036 = vsel %vm1937, %v2926, 0
      %v3039 = vsel %vm1937, %v2928, 0
      %v3042 = vsel %vm1937, %v2930, 0
      %v3045 = vsel %vm1937, %v2932, 0
      %v3048 = vsel %vm1937, %v2934, 0
      %v3051 = vsel %vm1937, %v2936, 0
      %v3054 = vsel %vm1937, %v2938, 0
      %v3057 = vsel %vm1937, %v2940, 0
      %v3060 = vsel %vm1937, %v2942, 0
      %v3063 = vsel %vm1937, %v2944, 0
      %v3066 = vsel %vm1937, %v2946, 0
      %v3069 = vsel %vm1937, %v2948, 0
      %v3072 = vsel %vm1937, %v2950, 0
      %v3075 = vsel %vm1937, %v2952, 0
      %v3078 = vsel %vm1937, %v2954, 0
      %v3081 = vand.u32 %v3022, %v1989
      %3083 = vmatprep.subr.bf16.mxu0 0
      %3084 = vmatpush1.bf16.msra.mxu0 %v3020
      %3085 = vmatprep.subr.bf16.mxu0 0
      %3086 = vmatpush1.bf16.msra.mxu0 %v3019
      %3087 = vmatprep.subr.bf16.mxu0 0
      %3088 = vmatpush1.bf16.msra.mxu0 %v3018
      %3089 = vmatprep.subr.bf16.mxu0 0
      %3090 = vmatpush1.bf16.msra.mxu0 %v3017
      %3091 = vmatprep.subr.bf16.mxu0 0
      %3092 = vmatpush1.bf16.msra.mxu0 %v3016
      %3093 = vmatprep.subr.bf16.mxu0 0
      %3094 = vmatpush1.bf16.msra.mxu0 %v3015
      %3095 = vmatprep.subr.bf16.mxu0 0
      %3096 = vmatpush1.bf16.msra.mxu0 %v3014
      %3097 = vmatprep.subr.bf16.mxu0 0
      %3098 = vmatpush1.bf16.msra.mxu0 %v3013
      %3099 = vmatprep.subr.bf16.mxu0 0
      %3100 = vmatpush2.bf16.msra.mxu0 0
      %3101 = vmatprep.subr.bf16.mxu0 0
      %3102 = vmatpush2.bf16.msra.mxu0 0
      %3103 = vmatprep.subr.bf16.mxu0 0
      %3104 = vmatpush2.bf16.msra.mxu0 0
      %3105 = vmatprep.subr.bf16.mxu0 0
      %3106 = vmatpush2.bf16.msra.mxu0 0
      %3107 = vmatprep.subr.bf16.mxu0 0
      %3108 = vmatpush2.bf16.msra.mxu0 0
      %3109 = vmatprep.subr.bf16.mxu0 0
      %3110 = vmatpush2.bf16.msra.mxu0 0
      %3111 = vmatprep.subr.bf16.mxu0 0
      %3112 = vmatpush2.bf16.msra.mxu0 %v3081
      %3113 = vmatprep.subr.bf16.mxu0 0
      %3114 = vmatpush2.bf16.msra.mxu0 %v3021
      %3115 = vmatprep.mubr.bf16.mxu0 %v3033
      %3116 = vmatmul.mubr.bf16.gmra.mxu0 %v2923
      %v3117 = vpop.f32.mrf.mxu0
      %v3118 = vadd.f32 0.0, %v3117
      %v3119 = vpop.f32.mrf.mxu0
      %v3120 = vpop.f32.mrf.mxu0
      %v3121 = vadd.f32 0.0, %v3120
      %v3122 = vpop.f32.mrf.mxu0
      %3123 = vmatprep.mubr.bf16.mxu0 %v3036
      %3124 = vmatmul.mubr.bf16.gmra.mxu0 %v2925
      %v3125 = vpop.f32.mrf.mxu0
      %v3126 = vadd.f32 0.0, %v3125
      %v3127 = vpop.f32.mrf.mxu0
      %v3128 = vpop.f32.mrf.mxu0
      %v3129 = vadd.f32 0.0, %v3128
      %v3130 = vpop.f32.mrf.mxu0
      %3131 = vmatprep.mubr.bf16.mxu0 %v3039
      %3132 = vmatmul.mubr.bf16.gmra.mxu0 %v2927
      %v3133 = vpop.f32.mrf.mxu0
      %v3134 = vadd.f32 0.0, %v3133
      %v3135 = vpop.f32.mrf.mxu0
      %v3136 = vpop.f32.mrf.mxu0
      %v3137 = vadd.f32 0.0, %v3136
      %v3138 = vpop.f32.mrf.mxu0
      %3139 = vmatprep.mubr.bf16.mxu0 %v3042
      %3140 = vmatmul.mubr.bf16.gmra.mxu0 %v2929
      %v3141 = vpop.f32.mrf.mxu0
      %v3142 = vadd.f32 0.0, %v3141
      %v3143 = vpop.f32.mrf.mxu0
      %v3144 = vpop.f32.mrf.mxu0
      %v3145 = vadd.f32 0.0, %v3144
      %v3146 = vpop.f32.mrf.mxu0
      %3147 = vmatprep.mubr.bf16.mxu0 %v3045
      %3148 = vmatmul.mubr.bf16.gmra.mxu0 %v2931
      %v3149 = vpop.f32.mrf.mxu0
      %v3150 = vadd.f32 0.0, %v3149
      %v3151 = vpop.f32.mrf.mxu0
      %v3152 = vpop.f32.mrf.mxu0
      %v3153 = vadd.f32 0.0, %v3152
      %v3154 = vpop.f32.mrf.mxu0
      %3155 = vmatprep.mubr.bf16.mxu0 %v3048
      %3156 = vmatmul.mubr.bf16.gmra.mxu0 %v2933
      %v3157 = vpop.f32.mrf.mxu0
      %v3158 = vadd.f32 0.0, %v3157
      %v3159 = vpop.f32.mrf.mxu0
      %v3160 = vpop.f32.mrf.mxu0
      %v3161 = vadd.f32 0.0, %v3160
      %v3162 = vpop.f32.mrf.mxu0
      %3163 = vmatprep.mubr.bf16.mxu0 %v3051
      %3164 = vmatmul.mubr.bf16.gmra.mxu0 %v2935
      %v3165 = vpop.f32.mrf.mxu0
      %v3166 = vadd.f32 0.0, %v3165
      %v3167 = vpop.f32.mrf.mxu0
      %v3168 = vpop.f32.mrf.mxu0
      %v3169 = vadd.f32 0.0, %v3168
      %v3170 = vpop.f32.mrf.mxu0
      %3171 = vmatprep.mubr.bf16.mxu0 %v3054
      %3172 = vmatmul.mubr.bf16.gmra.mxu0 %v2937
      %v3173 = vpop.f32.mrf.mxu0
      %v3174 = vadd.f32 0.0, %v3173
      %v3175 = vpop.f32.mrf.mxu0
      %v3176 = vpop.f32.mrf.mxu0
      %v3177 = vadd.f32 0.0, %v3176
      %v3178 = vpop.f32.mrf.mxu0
      %3179 = vmatprep.mubr.bf16.mxu0 %v3057
      %3180 = vmatmul.mubr.bf16.gmra.mxu0 %v2939
      %v3181 = vpop.f32.mrf.mxu0
      %v3182 = vadd.f32 0.0, %v3181
      %v3183 = vpop.f32.mrf.mxu0
      %v3184 = vpop.f32.mrf.mxu0
      %v3185 = vadd.f32 0.0, %v3184
      %v3186 = vpop.f32.mrf.mxu0
      %3187 = vmatprep.mubr.bf16.mxu0 %v3060
      %3188 = vmatmul.mubr.bf16.gmra.mxu0 %v2941
      %v3189 = vpop.f32.mrf.mxu0
      %v3190 = vadd.f32 0.0, %v3189
      %v3191 = vpop.f32.mrf.mxu0
      %v3192 = vpop.f32.mrf.mxu0
      %v3193 = vadd.f32 0.0, %v3192
      %v3194 = vpop.f32.mrf.mxu0
      %3195 = vmatprep.mubr.bf16.mxu0 %v3063
      %3196 = vmatmul.mubr.bf16.gmra.mxu0 %v2943
      %v3197 = vpop.f32.mrf.mxu0
      %v3198 = vadd.f32 0.0, %v3197
      %v3199 = vpop.f32.mrf.mxu0
      %v3200 = vpop.f32.mrf.mxu0
      %v3201 = vadd.f32 0.0, %v3200
      %v3202 = vpop.f32.mrf.mxu0
      %3203 = vmatprep.mubr.bf16.mxu0 %v3066
      %3204 = vmatmul.mubr.bf16.gmra.mxu0 %v2945
      %v3205 = vpop.f32.mrf.mxu0
      %v3206 = vadd.f32 0.0, %v3205
      %v3207 = vpop.f32.mrf.mxu0
      %v3208 = vpop.f32.mrf.mxu0
      %v3209 = vadd.f32 0.0, %v3208
      %v3210 = vpop.f32.mrf.mxu0
      %3211 = vmatprep.mubr.bf16.mxu0 %v3069
      %3212 = vmatmul.mubr.bf16.gmra.mxu0 %v2947
      %v3213 = vpop.f32.mrf.mxu0
      %v3214 = vadd.f32 0.0, %v3213
      %v3215 = vpop.f32.mrf.mxu0
      %v3216 = vpop.f32.mrf.mxu0
      %v3217 = vadd.f32 0.0, %v3216
      %v3218 = vpop.f32.mrf.mxu0
      %3219 = vmatprep.mubr.bf16.mxu0 %v3072
      %3220 = vmatmul.mubr.bf16.gmra.mxu0 %v2949
      %v3221 = vpop.f32.mrf.mxu0
      %v3222 = vadd.f32 0.0, %v3221
      %v3223 = vpop.f32.mrf.mxu0
      %v3224 = vpop.f32.mrf.mxu0
      %v3225 = vadd.f32 0.0, %v3224
      %v3226 = vpop.f32.mrf.mxu0
      %3227 = vmatprep.mubr.bf16.mxu0 %v3075
      %3228 = vmatmul.mubr.bf16.gmra.mxu0 %v2951
      %v3229 = vpop.f32.mrf.mxu0
      %v3230 = vadd.f32 0.0, %v3229
      %v3231 = vpop.f32.mrf.mxu0
      %v3232 = vpop.f32.mrf.mxu0
      %v3233 = vadd.f32 0.0, %v3232
      %v3234 = vpop.f32.mrf.mxu0
      %3235 = vmatprep.mubr.bf16.mxu0 %v3078
      %3236 = vmatmul.mubr.bf16.gmra.mxu0 %v2953
      %v3237 = vpop.f32.mrf.mxu0
      %v3238 = vadd.f32 0.0, %v3237
      %v3239 = vpop.f32.mrf.mxu0
      %v3240 = vpop.f32.mrf.mxu0
      %v3241 = vadd.f32 0.0, %v3240
      %v3242 = vpop.f32.mrf.mxu0
      %3243 = vdwg.mxu0
      %v3244 = vadd.f32 %v2699, %v3118
      %v3245 = vadd.f32 %v2700, %v3121
      %v3246 = vadd.f32 %v2701, %v3126
      %v3247 = vadd.f32 %v2702, %v3129
      %v3248 = vadd.f32 %v2703, %v3134
      %v3249 = vadd.f32 %v2704, %v3137
      %v3250 = vadd.f32 %v2705, %v3142
      %v3251 = vadd.f32 %v2706, %v3145
      %v3252 = vadd.f32 %v2707, %v3150
      %v3253 = vadd.f32 %v2708, %v3153
      %v3254 = vadd.f32 %v2709, %v3158
      %v3255 = vadd.f32 %v2710, %v3161
      %v3256 = vadd.f32 %v2711, %v3166
      %v3257 = vadd.f32 %v2712, %v3169
      %v3258 = vadd.f32 %v2713, %v3174
      %v3259 = vadd.f32 %v2714, %v3177
      %v3260 = vadd.f32 %v2715, %v3182
      %v3261 = vadd.f32 %v2716, %v3185
      %v3262 = vadd.f32 %v2717, %v3190
      %v3263 = vadd.f32 %v2718, %v3193
      %v3264 = vadd.f32 %v2719, %v3198
      %v3265 = vadd.f32 %v2720, %v3201
      %v3266 = vadd.f32 %v2721, %v3206
      %v3267 = vadd.f32 %v2722, %v3209
      %v3268 = vadd.f32 %v2723, %v3214
      %v3269 = vadd.f32 %v2724, %v3217
      %v3270 = vadd.f32 %v2725, %v3222
      %v3271 = vadd.f32 %v2726, %v3225
      %v3272 = vadd.f32 %v2727, %v3230
      %v3273 = vadd.f32 %v2728, %v3233
      %v3274 = vadd.f32 %v2729, %v3238
      %v3275 = vadd.f32 %v2730, %v3241
      %v3276 = vsel %vm1541, %v1157, 0.0
      %v3277 = vsel %vm1542, %v1158, 0.0
      %v3278 = vsel %vm1543, %v1159, 0.0
      %v3279 = vsel %vm1544, %v1160, 0.0
      %v3280 = vsel %vm1545, %v1161, 0.0
      %v3281 = vsel %vm1546, %v1162, 0.0
      %v3282 = vsel %vm1547, %v1163, 0.0
      %v3283 = vsel %vm1548, %v1164, 0.0
      %v3284 = vsel %vm1549, %v1165, 0.0
      %v3285 = vsel %vm1550, %v1166, 0.0
      %v3286 = vsel %vm1551, %v1167, 0.0
      %v3287 = vsel %vm1552, %v1168, 0.0
      %v3288 = vsel %vm1553, %v1169, 0.0
      %v3289 = vsel %vm1554, %v1170, 0.0
      %v3290 = vsel %vm1555, %v1171, 0.0
      %v3291 = vsel %vm1556, %v1172, 0.0
      %v3292 = vsel %vm1557, %v1173, 0.0
      %v3293 = vsel %vm1558, %v1174, 0.0
      %v3294 = vsel %vm1559, %v1175, 0.0
      %v3295 = vsel %vm1560, %v1176, 0.0
      %v3296 = vsel %vm1561, %v1177, 0.0
      %v3297 = vsel %vm1562, %v1178, 0.0
      %v3298 = vsel %vm1563, %v1179, 0.0
      %v3299 = vsel %vm1564, %v1180, 0.0
      %v3300 = vsel %vm1565, %v1181, 0.0
      %v3301 = vsel %vm1566, %v1182, 0.0
      %v3302 = vsel %vm1567, %v1183, 0.0
      %v3303 = vsel %vm1568, %v1184, 0.0
      %v3304 = vsel %vm1569, %v1185, 0.0
      %v3305 = vsel %vm1570, %v1186, 0.0
      %v3306 = vsel %vm1571, %v1187, 0.0
      %v3307 = vsel %vm1572, %v1188, 0.0
      %v3308 = vsel %vm1573, %v1189, 0.0
      %v3309 = vsel %vm1574, %v1190, 0.0
      %v3310 = vsel %vm1575, %v1191, 0.0
      %v3311 = vsel %vm1576, %v1192, 0.0
      %v3312 = vsel %vm1577, %v1193, 0.0
      %v3313 = vsel %vm1578, %v1194, 0.0
      %v3314 = vsel %vm1579, %v1195, 0.0
      %v3315 = vsel %vm1580, %v1196, 0.0
      %v3316 = vsel %vm1581, %v1197, 0.0
      %v3317 = vsel %vm1582, %v1198, 0.0
      %v3318 = vsel %vm1583, %v1199, 0.0
      %v3319 = vsel %vm1584, %v1200, 0.0
      %v3320 = vsel %vm1585, %v1201, 0.0
      %v3321 = vsel %vm1586, %v1202, 0.0
      %v3322 = vsel %vm1587, %v1203, 0.0
      %v3323 = vsel %vm1588, %v1204, 0.0
      %v3324 = vsel %vm1589, %v1205, 0.0
      %v3325 = vsel %vm1590, %v1206, 0.0
      %v3326 = vsel %vm1591, %v1207, 0.0
      %v3327 = vsel %vm1592, %v1208, 0.0
      %v3328 = vsel %vm1593, %v1209, 0.0
      %v3329 = vsel %vm1594, %v1210, 0.0
      %v3330 = vsel %vm1595, %v1211, 0.0
      %v3331 = vsel %vm1596, %v1212, 0.0
      %v3332 = vsel %vm1597, %v1213, 0.0
      %v3333 = vsel %vm1598, %v1214, 0.0
      %v3334 = vsel %vm1599, %v1215, 0.0
      %v3335 = vsel %vm1600, %v1216, 0.0
      %v3336 = vsel %vm1601, %v1217, 0.0
      %v3337 = vsel %vm1602, %v1218, 0.0
      %v3338 = vsel %vm1603, %v1219, 0.0
      %v3339 = vsel %vm1604, %v1220, 0.0
      %v3340 = vsel %vm1477, %v965, %v3276
      %v3341 = vsel %vm1478, %v966, %v3277
      %v3342 = vsel %vm1479, %v967, %v3278
      %v3343 = vsel %vm1480, %v968, %v3279
      %v3344 = vsel %vm1481, %v969, %v3280
      %v3345 = vsel %vm1482, %v970, %v3281
      %v3346 = vsel %vm1483, %v971, %v3282
      %v3347 = vsel %vm1484, %v972, %v3283
      %v3348 = vsel %vm1485, %v973, %v3284
      %v3349 = vsel %vm1486, %v974, %v3285
      %v3350 = vsel %vm1487, %v975, %v3286
      %v3351 = vsel %vm1488, %v976, %v3287
      %v3352 = vsel %vm1489, %v977, %v3288
      %v3353 = vsel %vm1490, %v978, %v3289
      %v3354 = vsel %vm1491, %v979, %v3290
      %v3355 = vsel %vm1492, %v980, %v3291
      %v3356 = vsel %vm1493, %v981, %v3292
      %v3357 = vsel %vm1494, %v982, %v3293
      %v3358 = vsel %vm1495, %v983, %v3294
      %v3359 = vsel %vm1496, %v984, %v3295
      %v3360 = vsel %vm1497, %v985, %v3296
      %v3361 = vsel %vm1498, %v986, %v3297
      %v3362 = vsel %vm1499, %v987, %v3298
      %v3363 = vsel %vm1500, %v988, %v3299
      %v3364 = vsel %vm1501, %v989, %v3300
      %v3365 = vsel %vm1502, %v990, %v3301
      %v3366 = vsel %vm1503, %v991, %v3302
      %v3367 = vsel %vm1504, %v992, %v3303
      %v3368 = vsel %vm1505, %v993, %v3304
      %v3369 = vsel %vm1506, %v994, %v3305
      %v3370 = vsel %vm1507, %v995, %v3306
      %v3371 = vsel %vm1508, %v996, %v3307
      %v3372 = vsel %vm1509, %v997, %v3308
      %v3373 = vsel %vm1510, %v998, %v3309
      %v3374 = vsel %vm1511, %v999, %v3310
      %v3375 = vsel %vm1512, %v1000, %v3311
      %v3376 = vsel %vm1513, %v1001, %v3312
      %v3377 = vsel %vm1514, %v1002, %v3313
      %v3378 = vsel %vm1515, %v1003, %v3314
      %v3379 = vsel %vm1516, %v1004, %v3315
      %v3380 = vsel %vm1517, %v1005, %v3316
      %v3381 = vsel %vm1518, %v1006, %v3317
      %v3382 = vsel %vm1519, %v1007, %v3318
      %v3383 = vsel %vm1520, %v1008, %v3319
      %v3384 = vsel %vm1521, %v1009, %v3320
      %v3385 = vsel %vm1522, %v1010, %v3321
      %v3386 = vsel %vm1523, %v1011, %v3322
      %v3387 = vsel %vm1524, %v1012, %v3323
      %v3388 = vsel %vm1525, %v1013, %v3324
      %v3389 = vsel %vm1526, %v1014, %v3325
      %v3390 = vsel %vm1527, %v1015, %v3326
      %v3391 = vsel %vm1528, %v1016, %v3327
      %v3392 = vsel %vm1529, %v1017, %v3328
      %v3393 = vsel %vm1530, %v1018, %v3329
      %v3394 = vsel %vm1531, %v1019, %v3330
      %v3395 = vsel %vm1532, %v1020, %v3331
      %v3396 = vsel %vm1533, %v1021, %v3332
      %v3397 = vsel %vm1534, %v1022, %v3333
      %v3398 = vsel %vm1535, %v1023, %v3334
      %v3399 = vsel %vm1536, %v1024, %v3335
      %v3400 = vsel %vm1537, %v1025, %v3336
      %v3401 = vsel %vm1538, %v1026, %v3337
      %v3402 = vsel %vm1539, %v1027, %v3338
      %v3403 = vsel %vm1540, %v1028, %v3339
      %v3404 = vsel %vm1413, %v709, %v3340
      %v3405 = vsel %vm1414, %v710, %v3341
      %v3406 = vsel %vm1415, %v711, %v3342
      %v3407 = vsel %vm1416, %v712, %v3343
      %v3408 = vsel %vm1417, %v713, %v3344
      %v3409 = vsel %vm1418, %v714, %v3345
      %v3410 = vsel %vm1419, %v715, %v3346
      %v3411 = vsel %vm1420, %v716, %v3347
      %v3412 = vsel %vm1421, %v717, %v3348
      %v3413 = vsel %vm1422, %v718, %v3349
      %v3414 = vsel %vm1423, %v719, %v3350
      %v3415 = vsel %vm1424, %v720, %v3351
      %v3416 = vsel %vm1425, %v721, %v3352
      %v3417 = vsel %vm1426, %v722, %v3353
      %v3418 = vsel %vm1427, %v723, %v3354
      %v3419 = vsel %vm1428, %v724, %v3355
      %v3420 = vsel %vm1429, %v725, %v3356
      %v3421 = vsel %vm1430, %v726, %v3357
      %v3422 = vsel %vm1431, %v727, %v3358
      %v3423 = vsel %vm1432, %v728, %v3359
      %v3424 = vsel %vm1433, %v729, %v3360
      %v3425 = vsel %vm1434, %v730, %v3361
      %v3426 = vsel %vm1435, %v731, %v3362
      %v3427 = vsel %vm1436, %v732, %v3363
      %v3428 = vsel %vm1437, %v733, %v3364
      %v3429 = vsel %vm1438, %v734, %v3365
      %v3430 = vsel %vm1439, %v735, %v3366
      %v3431 = vsel %vm1440, %v736, %v3367
      %v3432 = vsel %vm1441, %v737, %v3368
      %v3433 = vsel %vm1442, %v738, %v3369
      %v3434 = vsel %vm1443, %v739, %v3370
      %v3435 = vsel %vm1444, %v740, %v3371
      %v3436 = vsel %vm1445, %v741, %v3372
      %v3437 = vsel %vm1446, %v742, %v3373
      %v3438 = vsel %vm1447, %v743, %v3374
      %v3439 = vsel %vm1448, %v744, %v3375
      %v3440 = vsel %vm1449, %v745, %v3376
      %v3441 = vsel %vm1450, %v746, %v3377
      %v3442 = vsel %vm1451, %v747, %v3378
      %v3443 = vsel %vm1452, %v748, %v3379
      %v3444 = vsel %vm1453, %v749, %v3380
      %v3445 = vsel %vm1454, %v750, %v3381
      %v3446 = vsel %vm1455, %v751, %v3382
      %v3447 = vsel %vm1456, %v752, %v3383
      %v3448 = vsel %vm1457, %v753, %v3384
      %v3449 = vsel %vm1458, %v754, %v3385
      %v3450 = vsel %vm1459, %v755, %v3386
      %v3451 = vsel %vm1460, %v756, %v3387
      %v3452 = vsel %vm1461, %v757, %v3388
      %v3453 = vsel %vm1462, %v758, %v3389
      %v3454 = vsel %vm1463, %v759, %v3390
      %v3455 = vsel %vm1464, %v760, %v3391
      %v3456 = vsel %vm1465, %v761, %v3392
      %v3457 = vsel %vm1466, %v762, %v3393
      %v3458 = vsel %vm1467, %v763, %v3394
      %v3459 = vsel %vm1468, %v764, %v3395
      %v3460 = vsel %vm1469, %v765, %v3396
      %v3461 = vsel %vm1470, %v766, %v3397
      %v3462 = vsel %vm1471, %v767, %v3398
      %v3463 = vsel %vm1472, %v768, %v3399
      %v3464 = vsel %vm1473, %v769, %v3400
      %v3465 = vsel %vm1474, %v770, %v3401
      %v3466 = vsel %vm1475, %v771, %v3402
      %v3467 = vsel %vm1476, %v772, %v3403
      %v3468 = vpack.c.bf16 %v3406, %v3404
      %v3469 = vpack.c.bf16 %v3407, %v3405
      %v3470 = vpack.c.bf16 %v3410, %v3408
      %v3471 = vpack.c.bf16 %v3411, %v3409
      %v3472 = vpack.c.bf16 %v3414, %v3412
      %v3473 = vpack.c.bf16 %v3415, %v3413
      %v3474 = vpack.c.bf16 %v3418, %v3416
      %v3475 = vpack.c.bf16 %v3419, %v3417
      %v3476 = vpack.c.bf16 %v3422, %v3420
      %v3477 = vpack.c.bf16 %v3423, %v3421
      %v3478 = vpack.c.bf16 %v3426, %v3424
      %v3479 = vpack.c.bf16 %v3427, %v3425
      %v3480 = vpack.c.bf16 %v3430, %v3428
      %v3481 = vpack.c.bf16 %v3431, %v3429
      %v3482 = vpack.c.bf16 %v3434, %v3432
      %v3483 = vpack.c.bf16 %v3435, %v3433
      %v3484 = vpack.c.bf16 %v3438, %v3436
      %v3485 = vpack.c.bf16 %v3439, %v3437
      %v3486 = vpack.c.bf16 %v3442, %v3440
      %v3487 = vpack.c.bf16 %v3443, %v3441
      %v3488 = vpack.c.bf16 %v3446, %v3444
      %v3489 = vpack.c.bf16 %v3447, %v3445
      %v3490 = vpack.c.bf16 %v3450, %v3448
      %v3491 = vpack.c.bf16 %v3451, %v3449
      %v3492 = vpack.c.bf16 %v3454, %v3452
      %v3493 = vpack.c.bf16 %v3455, %v3453
      %v3494 = vpack.c.bf16 %v3458, %v3456
      %v3495 = vpack.c.bf16 %v3459, %v3457
      %v3496 = vpack.c.bf16 %v3462, %v3460
      %v3497 = vpack.c.bf16 %v3463, %v3461
      %v3498 = vpack.c.bf16 %v3466, %v3464
      %v3499 = vpack.c.bf16 %v3467, %v3465
      %s3500 = scalar_lea.vmem %s214, 228
      %v3501 = vld [vmem:[%s3500] sm:$0xf]
      %v3502 = vld [vmem:[%s3500 + $0x4] sm:$0xf]
      %v3503 = vld [vmem:[%s3500 + $0x8] sm:$0xf]
      %v3504 = vld [vmem:[%s3500 + $0xc] sm:$0xf]
      %v3505 = vld [vmem:[%s3500 + $0x10] sm:$0xf]
      %v3506 = vld [vmem:[%s3500 + $0x14] sm:$0xf]
      %v3507 = vld [vmem:[%s3500 + $0x18] sm:$0xf]
      %v3508 = vld [vmem:[%s3500 + $0x1c] sm:$0xf]
      %v3509 = vld [vmem:[%s3500 + $0x20] sm:$0xf]
      %v3510 = vld [vmem:[%s3500 + $0x24] sm:$0xf]
      %v3511 = vld [vmem:[%s3500 + $0x28] sm:$0xf]
      %v3512 = vld [vmem:[%s3500 + $0x2c] sm:$0xf]
      %v3513 = vld [vmem:[%s3500 + $0x30] sm:$0xf]
      %v3514 = vld [vmem:[%s3500 + $0x34] sm:$0xf]
      %v3515 = vld [vmem:[%s3500 + $0x38] sm:$0xf]
      %v3516 = vld [vmem:[%s3500 + $0x3c] sm:$0xf]
      %v3517 = vld [vmem:[%s3500 + $0x40] sm:$0xf]
      %v3518 = vld [vmem:[%s3500 + $0x44] sm:$0xf]
      %v3519 = vld [vmem:[%s3500 + $0x48] sm:$0x3]
      %v3539 = vunpack.c.l.b16 %v3501
      %v3540 = vunpack.c.l.b16 %v3502
      %v3541 = vunpack.c.l.b16 %v3503
      %v3542 = vunpack.c.l.b16 %v3504
      %v3543 = vunpack.c.l.b16 %v3505
      %v3544 = vunpack.c.l.b16 %v3506
      %v3545 = vunpack.c.l.b16 %v3507
      %v3546 = vunpack.c.l.b16 %v3508
      %v3547 = vunpack.c.l.b16 %v3509
      %v3548 = vunpack.c.l.b16 %v3510
      %v3549 = vunpack.c.l.b16 %v3511
      %v3550 = vunpack.c.l.b16 %v3512
      %v3551 = vunpack.c.l.b16 %v3513
      %v3552 = vunpack.c.l.b16 %v3514
      %v3553 = vunpack.c.l.b16 %v3515
      %v3554 = vunpack.c.l.b16 %v3516
      %v3555 = vunpack.c.l.b16 %v3517
      %v3556 = vunpack.c.l.b16 %v3518
      %v3557 = vunpack.c.l.b16 %v3519
      %v3558 = vpack.c.b16 %v3540, %v3539
      %v3559 = vpack.c.b16 %v3542, %v3541
      %v3560 = vpack.c.b16 %v3544, %v3543
      %v3561 = vpack.c.b16 %v3546, %v3545
      %v3562 = vpack.c.b16 %v3548, %v3547
      %v3563 = vpack.c.b16 %v3550, %v3549
      %v3564 = vpack.c.b16 %v3552, %v3551
      %v3565 = vpack.c.b16 %v3554, %v3553
      %v3566 = vpack.c.b16 %v3556, %v3555
      %v3567 = vpack.c.b16 %v3557, %v3557
      %v3578 = vsel %vm1937, %v3469, 0
      %v3581 = vsel %vm1937, %v3471, 0
      %v3584 = vsel %vm1937, %v3473, 0
      %v3587 = vsel %vm1937, %v3475, 0
      %v3590 = vsel %vm1937, %v3477, 0
      %v3593 = vsel %vm1937, %v3479, 0
      %v3596 = vsel %vm1937, %v3481, 0
      %v3599 = vsel %vm1937, %v3483, 0
      %v3602 = vsel %vm1937, %v3485, 0
      %v3605 = vsel %vm1937, %v3487, 0
      %v3608 = vsel %vm1937, %v3489, 0
      %v3611 = vsel %vm1937, %v3491, 0
      %v3614 = vsel %vm1937, %v3493, 0
      %v3617 = vsel %vm1937, %v3495, 0
      %v3620 = vsel %vm1937, %v3497, 0
      %v3623 = vsel %vm1937, %v3499, 0
      %v3626 = vand.u32 %v3567, %v1989
      %3628 = vmatprep.subr.bf16.mxu0 0
      %3629 = vmatpush1.bf16.msra.mxu0 %v3565
      %3630 = vmatprep.subr.bf16.mxu0 0
      %3631 = vmatpush1.bf16.msra.mxu0 %v3564
      %3632 = vmatprep.subr.bf16.mxu0 0
      %3633 = vmatpush1.bf16.msra.mxu0 %v3563
      %3634 = vmatprep.subr.bf16.mxu0 0
      %3635 = vmatpush1.bf16.msra.mxu0 %v3562
      %3636 = vmatprep.subr.bf16.mxu0 0
      %3637 = vmatpush1.bf16.msra.mxu0 %v3561
      %3638 = vmatprep.subr.bf16.mxu0 0
      %3639 = vmatpush1.bf16.msra.mxu0 %v3560
      %3640 = vmatprep.subr.bf16.mxu0 0
      %3641 = vmatpush1.bf16.msra.mxu0 %v3559
      %3642 = vmatprep.subr.bf16.mxu0 0
      %3643 = vmatpush1.bf16.msra.mxu0 %v3558
      %3644 = vmatprep.subr.bf16.mxu0 0
      %3645 = vmatpush2.bf16.msra.mxu0 0
      %3646 = vmatprep.subr.bf16.mxu0 0
      %3647 = vmatpush2.bf16.msra.mxu0 0
      %3648 = vmatprep.subr.bf16.mxu0 0
      %3649 = vmatpush2.bf16.msra.mxu0 0
      %3650 = vmatprep.subr.bf16.mxu0 0
      %3651 = vmatpush2.bf16.msra.mxu0 0
      %3652 = vmatprep.subr.bf16.mxu0 0
      %3653 = vmatpush2.bf16.msra.mxu0 0
      %3654 = vmatprep.subr.bf16.mxu0 0
      %3655 = vmatpush2.bf16.msra.mxu0 0
      %3656 = vmatprep.subr.bf16.mxu0 0
      %3657 = vmatpush2.bf16.msra.mxu0 %v3626
      %3658 = vmatprep.subr.bf16.mxu0 0
      %3659 = vmatpush2.bf16.msra.mxu0 %v3566
      %3660 = vmatprep.mubr.bf16.mxu0 %v3578
      %3661 = vmatmul.mubr.bf16.gmra.mxu0 %v3468
      %v3662 = vpop.f32.mrf.mxu0
      %v3663 = vadd.f32 0.0, %v3662
      %v3664 = vpop.f32.mrf.mxu0
      %v3665 = vpop.f32.mrf.mxu0
      %v3666 = vadd.f32 0.0, %v3665
      %v3667 = vpop.f32.mrf.mxu0
      %3668 = vmatprep.mubr.bf16.mxu0 %v3581
      %3669 = vmatmul.mubr.bf16.gmra.mxu0 %v3470
      %v3670 = vpop.f32.mrf.mxu0
      %v3671 = vadd.f32 0.0, %v3670
      %v3672 = vpop.f32.mrf.mxu0
      %v3673 = vpop.f32.mrf.mxu0
      %v3674 = vadd.f32 0.0, %v3673
      %v3675 = vpop.f32.mrf.mxu0
      %3676 = vmatprep.mubr.bf16.mxu0 %v3584
      %3677 = vmatmul.mubr.bf16.gmra.mxu0 %v3472
      %v3678 = vpop.f32.mrf.mxu0
      %v3679 = vadd.f32 0.0, %v3678
      %v3680 = vpop.f32.mrf.mxu0
      %v3681 = vpop.f32.mrf.mxu0
      %v3682 = vadd.f32 0.0, %v3681
      %v3683 = vpop.f32.mrf.mxu0
      %3684 = vmatprep.mubr.bf16.mxu0 %v3587
      %3685 = vmatmul.mubr.bf16.gmra.mxu0 %v3474
      %v3686 = vpop.f32.mrf.mxu0
      %v3687 = vadd.f32 0.0, %v3686
      %v3688 = vpop.f32.mrf.mxu0
      %v3689 = vpop.f32.mrf.mxu0
      %v3690 = vadd.f32 0.0, %v3689
      %v3691 = vpop.f32.mrf.mxu0
      %3692 = vmatprep.mubr.bf16.mxu0 %v3590
      %3693 = vmatmul.mubr.bf16.gmra.mxu0 %v3476
      %v3694 = vpop.f32.mrf.mxu0
      %v3695 = vadd.f32 0.0, %v3694
      %v3696 = vpop.f32.mrf.mxu0
      %v3697 = vpop.f32.mrf.mxu0
      %v3698 = vadd.f32 0.0, %v3697
      %v3699 = vpop.f32.mrf.mxu0
      %3700 = vmatprep.mubr.bf16.mxu0 %v3593
      %3701 = vmatmul.mubr.bf16.gmra.mxu0 %v3478
      %v3702 = vpop.f32.mrf.mxu0
      %v3703 = vadd.f32 0.0, %v3702
      %v3704 = vpop.f32.mrf.mxu0
      %v3705 = vpop.f32.mrf.mxu0
      %v3706 = vadd.f32 0.0, %v3705
      %v3707 = vpop.f32.mrf.mxu0
      %3708 = vmatprep.mubr.bf16.mxu0 %v3596
      %3709 = vmatmul.mubr.bf16.gmra.mxu0 %v3480
      %v3710 = vpop.f32.mrf.mxu0
      %v3711 = vadd.f32 0.0, %v3710
      %v3712 = vpop.f32.mrf.mxu0
      %v3713 = vpop.f32.mrf.mxu0
      %v3714 = vadd.f32 0.0, %v3713
      %v3715 = vpop.f32.mrf.mxu0
      %3716 = vmatprep.mubr.bf16.mxu0 %v3599
      %3717 = vmatmul.mubr.bf16.gmra.mxu0 %v3482
      %v3718 = vpop.f32.mrf.mxu0
      %v3719 = vadd.f32 0.0, %v3718
      %v3720 = vpop.f32.mrf.mxu0
      %v3721 = vpop.f32.mrf.mxu0
      %v3722 = vadd.f32 0.0, %v3721
      %v3723 = vpop.f32.mrf.mxu0
      %3724 = vmatprep.mubr.bf16.mxu0 %v3602
      %3725 = vmatmul.mubr.bf16.gmra.mxu0 %v3484
      %v3726 = vpop.f32.mrf.mxu0
      %v3727 = vadd.f32 0.0, %v3726
      %v3728 = vpop.f32.mrf.mxu0
      %v3729 = vpop.f32.mrf.mxu0
      %v3730 = vadd.f32 0.0, %v3729
      %v3731 = vpop.f32.mrf.mxu0
      %3732 = vmatprep.mubr.bf16.mxu0 %v3605
      %3733 = vmatmul.mubr.bf16.gmra.mxu0 %v3486
      %v3734 = vpop.f32.mrf.mxu0
      %v3735 = vadd.f32 0.0, %v3734
      %v3736 = vpop.f32.mrf.mxu0
      %v3737 = vpop.f32.mrf.mxu0
      %v3738 = vadd.f32 0.0, %v3737
      %v3739 = vpop.f32.mrf.mxu0
      %3740 = vmatprep.mubr.bf16.mxu0 %v3608
      %3741 = vmatmul.mubr.bf16.gmra.mxu0 %v3488
      %v3742 = vpop.f32.mrf.mxu0
      %v3743 = vadd.f32 0.0, %v3742
      %v3744 = vpop.f32.mrf.mxu0
      %v3745 = vpop.f32.mrf.mxu0
      %v3746 = vadd.f32 0.0, %v3745
      %v3747 = vpop.f32.mrf.mxu0
      %3748 = vmatprep.mubr.bf16.mxu0 %v3611
      %3749 = vmatmul.mubr.bf16.gmra.mxu0 %v3490
      %v3750 = vpop.f32.mrf.mxu0
      %v3751 = vadd.f32 0.0, %v3750
      %v3752 = vpop.f32.mrf.mxu0
      %v3753 = vpop.f32.mrf.mxu0
      %v3754 = vadd.f32 0.0, %v3753
      %v3755 = vpop.f32.mrf.mxu0
      %3756 = vmatprep.mubr.bf16.mxu0 %v3614
      %3757 = vmatmul.mubr.bf16.gmra.mxu0 %v3492
      %v3758 = vpop.f32.mrf.mxu0
      %v3759 = vadd.f32 0.0, %v3758
      %v3760 = vpop.f32.mrf.mxu0
      %v3761 = vpop.f32.mrf.mxu0
      %v3762 = vadd.f32 0.0, %v3761
      %v3763 = vpop.f32.mrf.mxu0
      %3764 = vmatprep.mubr.bf16.mxu0 %v3617
      %3765 = vmatmul.mubr.bf16.gmra.mxu0 %v3494
      %v3766 = vpop.f32.mrf.mxu0
      %v3767 = vadd.f32 0.0, %v3766
      %v3768 = vpop.f32.mrf.mxu0
      %v3769 = vpop.f32.mrf.mxu0
      %v3770 = vadd.f32 0.0, %v3769
      %v3771 = vpop.f32.mrf.mxu0
      %3772 = vmatprep.mubr.bf16.mxu0 %v3620
      %3773 = vmatmul.mubr.bf16.gmra.mxu0 %v3496
      %v3774 = vpop.f32.mrf.mxu0
      %v3775 = vadd.f32 0.0, %v3774
      %v3776 = vpop.f32.mrf.mxu0
      %v3777 = vpop.f32.mrf.mxu0
      %v3778 = vadd.f32 0.0, %v3777
      %v3779 = vpop.f32.mrf.mxu0
      %3780 = vmatprep.mubr.bf16.mxu0 %v3623
      %3781 = vmatmul.mubr.bf16.gmra.mxu0 %v3498
      %v3782 = vpop.f32.mrf.mxu0
      %v3783 = vadd.f32 0.0, %v3782
      %v3784 = vpop.f32.mrf.mxu0
      %v3785 = vpop.f32.mrf.mxu0
      %v3786 = vadd.f32 0.0, %v3785
      %v3787 = vpop.f32.mrf.mxu0
      %3788 = vdwg.mxu0
      %v3789 = vadd.f32 %v3244, %v3663
      %v3790 = vadd.f32 %v3245, %v3666
      %v3791 = vadd.f32 %v3246, %v3671
      %v3792 = vadd.f32 %v3247, %v3674
      %v3793 = vadd.f32 %v3248, %v3679
      %v3794 = vadd.f32 %v3249, %v3682
      %v3795 = vadd.f32 %v3250, %v3687
      %v3796 = vadd.f32 %v3251, %v3690
      %v3797 = vadd.f32 %v3252, %v3695
      %v3798 = vadd.f32 %v3253, %v3698
      %v3799 = vadd.f32 %v3254, %v3703
      %v3800 = vadd.f32 %v3255, %v3706
      %v3801 = vadd.f32 %v3256, %v3711
      %v3802 = vadd.f32 %v3257, %v3714
      %v3803 = vadd.f32 %v3258, %v3719
      %v3804 = vadd.f32 %v3259, %v3722
      %v3805 = vadd.f32 %v3260, %v3727
      %v3806 = vadd.f32 %v3261, %v3730
      %v3807 = vadd.f32 %v3262, %v3735
      %v3808 = vadd.f32 %v3263, %v3738
      %v3809 = vadd.f32 %v3264, %v3743
      %v3810 = vadd.f32 %v3265, %v3746
      %v3811 = vadd.f32 %v3266, %v3751
      %v3812 = vadd.f32 %v3267, %v3754
      %v3813 = vadd.f32 %v3268, %v3759
      %v3814 = vadd.f32 %v3269, %v3762
      %v3815 = vadd.f32 %v3270, %v3767
      %v3816 = vadd.f32 %v3271, %v3770
      %v3817 = vadd.f32 %v3272, %v3775
      %v3818 = vadd.f32 %v3273, %v3778
      %v3819 = vadd.f32 %v3274, %v3783
      %v3820 = vadd.f32 %v3275, %v3786
      %3821 = vst [vmem:[#allocation2] sm:$0xff] %v3789
      %3822 = vst [vmem:[#allocation2 + $0x8] sm:$0xff] %v3790
      %3823 = vst [vmem:[#allocation2 + $0x10] sm:$0xff] %v3791
      %3824 = vst [vmem:[#allocation2 + $0x18] sm:$0xff] %v3792
      %3825 = vst [vmem:[#allocation2 + $0x20] sm:$0xff] %v3793
      %3826 = vst [vmem:[#allocation2 + $0x28] sm:$0xff] %v3794
      %3827 = vst [vmem:[#allocation2 + $0x30] sm:$0xff] %v3795
      %3828 = vst [vmem:[#allocation2 + $0x38] sm:$0xff] %v3796
      %3829 = vst [vmem:[#allocation2 + $0x40] sm:$0xff] %v3797
      %3830 = vst [vmem:[#allocation2 + $0x48] sm:$0xff] %v3798
      %3831 = vst [vmem:[#allocation2 + $0x50] sm:$0xff] %v3799
      %3832 = vst [vmem:[#allocation2 + $0x58] sm:$0xff] %v3800
      %3833 = vst [vmem:[#allocation2 + $0x60] sm:$0xff] %v3801
      %3834 = vst [vmem:[#allocation2 + $0x68] sm:$0xff] %v3802
      %3835 = vst [vmem:[#allocation2 + $0x70] sm:$0xff] %v3803
      %3836 = vst [vmem:[#allocation2 + $0x78] sm:$0xff] %v3804
      %3837 = vst [vmem:[#allocation2 + $0x80] sm:$0xff] %v3805
      %3838 = vst [vmem:[#allocation2 + $0x88] sm:$0xff] %v3806
      %3839 = vst [vmem:[#allocation2 + $0x90] sm:$0xff] %v3807
      %3840 = vst [vmem:[#allocation2 + $0x98] sm:$0xff] %v3808
      %3841 = vst [vmem:[#allocation2 + $0xa0] sm:$0xff] %v3809
      %3842 = vst [vmem:[#allocation2 + $0xa8] sm:$0xff] %v3810
      %3843 = vst [vmem:[#allocation2 + $0xb0] sm:$0xff] %v3811
      %3844 = vst [vmem:[#allocation2 + $0xb8] sm:$0xff] %v3812
      %3845 = vst [vmem:[#allocation2 + $0xc0] sm:$0xff] %v3813
      %3846 = vst [vmem:[#allocation2 + $0xc8] sm:$0xff] %v3814
      %3847 = vst [vmem:[#allocation2 + $0xd0] sm:$0xff] %v3815
      %3848 = vst [vmem:[#allocation2 + $0xd8] sm:$0xff] %v3816
      %3849 = vst [vmem:[#allocation2 + $0xe0] sm:$0xff] %v3817
      %3850 = vst [vmem:[#allocation2 + $0xe8] sm:$0xff] %v3818
      %3851 = vst [vmem:[#allocation2 + $0xf0] sm:$0xff] %v3819
      %3852 = vst [vmem:[#allocation2 + $0xf8] sm:$0xff] %v3820
      // Predicated region
      $region33: #{resnet18_kan_forward.5} parent=27 // pred_check
        %p3853 = pneg %p225
      $region34: #{resnet18_kan_forward.5} parent=27 // pred_check_branch
        %3855 = sbr.rel (%p3853) target = $region36
      $region35: #{resnet18_kan_forward.5} parent=27 // pred_region
        %v3856 = vld [vmem:[#allocation2] sm:$0xff]
        %v3857 = vld [vmem:[#allocation2 + $0x8] sm:$0xff]
        %v3858 = vld [vmem:[#allocation2 + $0x10] sm:$0xff]
        %v3859 = vld [vmem:[#allocation2 + $0x18] sm:$0xff]
        %v3860 = vld [vmem:[#allocation2 + $0x20] sm:$0xff]
        %v3861 = vld [vmem:[#allocation2 + $0x28] sm:$0xff]
        %v3862 = vld [vmem:[#allocation2 + $0x30] sm:$0xff]
        %v3863 = vld [vmem:[#allocation2 + $0x38] sm:$0xff]
        %v3864 = vld [vmem:[#allocation2 + $0x40] sm:$0xff]
        %v3865 = vld [vmem:[#allocation2 + $0x48] sm:$0xff]
        %v3866 = vld [vmem:[#allocation2 + $0x50] sm:$0xff]
        %v3867 = vld [vmem:[#allocation2 + $0x58] sm:$0xff]
        %v3868 = vld [vmem:[#allocation2 + $0x60] sm:$0xff]
        %v3869 = vld [vmem:[#allocation2 + $0x68] sm:$0xff]
        %v3870 = vld [vmem:[#allocation2 + $0x70] sm:$0xff]
        %v3871 = vld [vmem:[#allocation2 + $0x78] sm:$0xff]
        %v3872 = vld [vmem:[#allocation2 + $0x80] sm:$0xff]
        %v3873 = vld [vmem:[#allocation2 + $0x88] sm:$0xff]
        %v3874 = vld [vmem:[#allocation2 + $0x90] sm:$0xff]
        %v3875 = vld [vmem:[#allocation2 + $0x98] sm:$0xff]
        %v3876 = vld [vmem:[#allocation2 + $0xa0] sm:$0xff]
        %v3877 = vld [vmem:[#allocation2 + $0xa8] sm:$0xff]
        %v3878 = vld [vmem:[#allocation2 + $0xb0] sm:$0xff]
        %v3879 = vld [vmem:[#allocation2 + $0xb8] sm:$0xff]
        %v3880 = vld [vmem:[#allocation2 + $0xc0] sm:$0xff]
        %v3881 = vld [vmem:[#allocation2 + $0xc8] sm:$0xff]
        %v3882 = vld [vmem:[#allocation2 + $0xd0] sm:$0xff]
        %v3883 = vld [vmem:[#allocation2 + $0xd8] sm:$0xff]
        %v3884 = vld [vmem:[#allocation2 + $0xe0] sm:$0xff]
        %v3885 = vld [vmem:[#allocation2 + $0xe8] sm:$0xff]
        %v3886 = vld [vmem:[#allocation2 + $0xf0] sm:$0xff]
        %v3887 = vld [vmem:[#allocation2 + $0xf8] sm:$0xff]
        %3888 = vst [vmem:[%s222] sm:$0xff] %v3856
        %3889 = vst [vmem:[%s222 + $0x8] sm:$0xff] %v3857
        %3890 = vst [vmem:[%s222 + $0x10] sm:$0xff] %v3858
        %3891 = vst [vmem:[%s222 + $0x18] sm:$0xff] %v3859
        %3892 = vst [vmem:[%s222 + $0x20] sm:$0xff] %v3860
        %3893 = vst [vmem:[%s222 + $0x28] sm:$0xff] %v3861
        %3894 = vst [vmem:[%s222 + $0x30] sm:$0xff] %v3862
        %3895 = vst [vmem:[%s222 + $0x38] sm:$0xff] %v3863
        %3896 = vst [vmem:[%s222 + $0x40] sm:$0xff] %v3864
        %3897 = vst [vmem:[%s222 + $0x48] sm:$0xff] %v3865
        %3898 = vst [vmem:[%s222 + $0x50] sm:$0xff] %v3866
        %3899 = vst [vmem:[%s222 + $0x58] sm:$0xff] %v3867
        %3900 = vst [vmem:[%s222 + $0x60] sm:$0xff] %v3868
        %3901 = vst [vmem:[%s222 + $0x68] sm:$0xff] %v3869
        %3902 = vst [vmem:[%s222 + $0x70] sm:$0xff] %v3870
        %3903 = vst [vmem:[%s222 + $0x78] sm:$0xff] %v3871
        %3904 = vst [vmem:[%s222 + $0x80] sm:$0xff] %v3872
        %3905 = vst [vmem:[%s222 + $0x88] sm:$0xff] %v3873
        %3906 = vst [vmem:[%s222 + $0x90] sm:$0xff] %v3874
        %3907 = vst [vmem:[%s222 + $0x98] sm:$0xff] %v3875
        %3908 = vst [vmem:[%s222 + $0xa0] sm:$0xff] %v3876
        %3909 = vst [vmem:[%s222 + $0xa8] sm:$0xff] %v3877
        %3910 = vst [vmem:[%s222 + $0xb0] sm:$0xff] %v3878
        %3911 = vst [vmem:[%s222 + $0xb8] sm:$0xff] %v3879
        %3912 = vst [vmem:[%s222 + $0xc0] sm:$0xff] %v3880
        %3913 = vst [vmem:[%s222 + $0xc8] sm:$0xff] %v3881
        %3914 = vst [vmem:[%s222 + $0xd0] sm:$0xff] %v3882
        %3915 = vst [vmem:[%s222 + $0xd8] sm:$0xff] %v3883
        %3916 = vst [vmem:[%s222 + $0xe0] sm:$0xff] %v3884
        %3917 = vst [vmem:[%s222 + $0xe8] sm:$0xff] %v3885
        %3918 = vst [vmem:[%s222 + $0xf0] sm:$0xff] %v3886
        %3919 = vst [vmem:[%s222 + $0xf8] sm:$0xff] %v3887
      $region36: #{resnet18_kan_forward.5} parent=27 // pred_fallthru
        _
      %s3920 = smul.u32 32, %s18
      %p3921 = scmp.lt.s32.totalorder %s3920, 63
      %s3922 = scalar_select %p3921, %s3920, 63
      %p3923 = scmp.lt.s32.totalorder %s19, 0
      %s3924 = scalar_select %p3923, %s19, 0
      %s3925 = sadd.s32 %s3924, %s3922
      %s3926 = smul.addr %s3925, 8
      %s3927 = scalar_lea.vmem %s2, %s3926
      // Predicated region
      $region37: #{resnet18_kan_forward.5} parent=27 // pred_check
        %p3928 = pneg %p108
      $region38: #{resnet18_kan_forward.5} parent=27 // pred_check_branch
        %3930 = sbr.rel (%p3928) target = $region40
      $region39: #{resnet18_kan_forward.5} parent=27 // pred_region
        %s3931 = smul.u32 32, %s18
      $region40: #{resnet18_kan_forward.5} parent=27 // pred_fallthru
        _
    $region28: #{resnet18_kan_forward.5} parent=5 // pred_fallthru
      _
    %p3932 = scmp.le.s32.totalorder 2, %s8
    // Predicated region
    $region41: #{resnet18_kan_forward.5} parent=5 // pred_check
      %p3933 = pneg %p3932
    $region42: #{resnet18_kan_forward.5} parent=5 // pred_check_branch
      %3935 = sbr.rel (%p3933) target = $region44
    $region43: #{resnet18_kan_forward.5} parent=5 // pred_region
      %s3936 = ssub.s32 %s8, 2
      // Predicated region
      $region45: #{resnet18_kan_forward.5} parent=43 // pred_check
        %p3937 = pneg %p114
      $region46: #{resnet18_kan_forward.5} parent=43 // pred_check_branch
        %3939 = sbr.rel (%p3937) target = $region48
      $region47: #{resnet18_kan_forward.5} parent=43 // pred_region
        %s3940 = smul.u32 32, %s21
        %p3941 = scmp.lt.s32.totalorder %s3940, 63
        %s3942 = scalar_select %p3941, %s3940, 63
        %p3943 = scmp.lt.s32.totalorder %s22, 0
        %s3944 = scalar_select %p3943, %s22, 0
        %s3945 = sadd.s32 %s3944, %s3942
        %s3946 = smul.addr %s3945, 8
        %s3947 = scalar_lea.vmem %s2, %s3946
      $region48: #{resnet18_kan_forward.5} parent=43 // pred_fallthru
        _
    $region44: #{resnet18_kan_forward.5} parent=5 // pred_fallthru
      _
  $region6: #{resnet18_kan_forward.5} parent=0 // loop_footer
    %s12 = sadd.s32 1, %s8
  $region7: #{resnet18_kan_forward.5} parent=0 // loop_footer_branch
    %7 = sbr.rel target = $region3
  $region8: #{resnet18_kan_forward.5} parent=0 // loop_exit
    _

// kernel: resnet18_kan_forward.6
$region0: #{resnet18_kan_forward.6}
  #allocation0 [shape = 'u32[]', space=smem, size = 0x4, offset = 0x4, fixed_abs, tag = 'smem constant byte address 0x4 - core index']
  #allocation1 [shape = 'u32[144,128]{1,0:T(1,128)}', space=vmem, size = 0x12000, scoped, tag = 'internal scratch']
  #allocation2 [shape = 'f32[64,128]{1,0:T(8,128)}', space=vmem, size = 0x8000, scoped, tag = 'scratch operand']
  %s0 = inlined_call_operand.vmem [shape: f32[128,576], index: 0, kind: input, shape index: {}]
  %s1 = inlined_call_operand.vmem [shape: bf16[1,4,576,128], index: 1, kind: input, shape index: {}]
  %s2 = inlined_call_operand.vmem [shape: f32[128,128], index: 2, kind: output, shape index: {}]
  %s3 = sld [smem:[#allocation0]]
  $region49: #{resnet18_kan_forward.6} parent=0
    _
  %s5 = ssub.s32 1, %s3
  %s6 = scalar_select 0, %s5, %s3
  loop: start=0, step=1, limit=4
  $region2: #{resnet18_kan_forward.6} parent=0 // loop_pre_header
    _
  $region3: #{resnet18_kan_forward.6} parent=0 // loop_header
    %s8 = sphi 0, %s12
    %p9 = scmp.ge.s32.totalorder %s8, 4
    %s15 = sphi 0, %s34
    %s16 = sphi 0, %s30
    %s17 = sphi 0, %s26
    %s18 = sphi 0, %s15
    %s19 = sphi 0, %s16
    %s20 = sphi 0, %s17
    %s21 = sphi 0, %s18
    %s22 = sphi 0, %s19
    %s23 = sphi 0, %s20
    %s39 = sphi 0, %s41
    %s42 = sphi 0, %s39
    %s43 = sphi 0, %s42
    %s59 = sphi 0, %s43
    %s67 = sphi 0, %s69
    %s70 = sphi 0, %s67
    %s71 = sphi 0, %s70
    %s87 = sphi 0, %s71
    %s95 = sphi 0, %s97
    %s98 = sphi 0, %s95
    %s99 = sphi 0, %s98
    %s115 = sphi 0, %s99
  $region4: #{resnet18_kan_forward.6} parent=0 // loop_header_branch
    %11 = sbr.rel (%p9) target = $region8
  $region5: #{resnet18_kan_forward.6} parent=0 // loop_body
    %s13 = ssub.s32 %s8, 1
    %s14 = ssub.s32 %s8, 2
    %s24 = sadd.s32 1, %s17
    %p25 = scmp.ge.s32.totalorder %s24, 1
    %s26 = scalar_select %p25, 0, %s24
    %s27 = sadd.s32 1, %s16
    %s28 = scalar_select %p25, %s27, %s16
    %p29 = scmp.ge.s32.totalorder %s28, 1
    %s30 = scalar_select %p29, 0, %s28
    %s31 = sadd.s32 1, %s15
    %s32 = scalar_select %p29, %s31, %s15
    %p33 = scmp.ge.s32.totalorder %s32, 2
    %s34 = scalar_select %p33, 0, %s32
    %s35 = ssub.s32 %s15, %s34
    %s36 = ssub.s32 %s17, %s26
    %s37 = sor.u32 %s35, %s36
    %p38 = scmp.eq.s32.totalorder %s37, 0
    %s40 = sadd.s32 %s39, 1
    %s41 = scalar_select %p38, %s39, %s40
    %p44 = pneg %p38
    %p45 = scmp.eq.s32.totalorder %s8, 1
    %p46 = por %p44, %p45
    %p47 = scmp.ne.s32.totalorder %s39, %s42
    %p48 = scmp.eq.s32.totalorder %s8, 0
    %p49 = por %p47, %p48
    %p50 = scmp.ne.s32.totalorder %s39, %s42
    %p51 = scmp.eq.s32.totalorder %s13, 1
    %p52 = por %p50, %p51
    %p53 = scmp.ne.s32.totalorder %s42, %s43
    %p54 = scmp.eq.s32.totalorder %s13, 0
    %p55 = por %p53, %p54
    %p56 = scmp.ne.s32.totalorder %s42, %s43
    %p57 = scmp.eq.s32.totalorder %s14, 1
    %p58 = por %p56, %p57
    %p60 = scmp.ne.s32.totalorder %s43, %s59
    %p61 = scmp.eq.s32.totalorder %s14, 0
    %p62 = por %p60, %p61
    %s63 = ssub.s32 %s17, %s26
    %s64 = ssub.s32 %s16, %s30
    %s65 = sor.u32 %s63, %s64
    %p66 = scmp.eq.s32.totalorder %s65, 0
    %s68 = sadd.s32 %s67, 1
    %s69 = scalar_select %p66, %s67, %s68
    %p72 = pneg %p66
    %p73 = scmp.eq.s32.totalorder %s8, 1
    %p74 = por %p72, %p73
    %p75 = scmp.ne.s32.totalorder %s67, %s70
    %p76 = scmp.eq.s32.totalorder %s8, 0
    %p77 = por %p75, %p76
    %p78 = scmp.ne.s32.totalorder %s67, %s70
    %p79 = scmp.eq.s32.totalorder %s13, 1
    %p80 = por %p78, %p79
    %p81 = scmp.ne.s32.totalorder %s70, %s71
    %p82 = scmp.eq.s32.totalorder %s13, 0
    %p83 = por %p81, %p82
    %p84 = scmp.ne.s32.totalorder %s70, %s71
    %p85 = scmp.eq.s32.totalorder %s14, 1
    %p86 = por %p84, %p85
    %p88 = scmp.ne.s32.totalorder %s71, %s87
    %p89 = scmp.eq.s32.totalorder %s14, 0
    %p90 = por %p88, %p89
    %s91 = ssub.s32 %s15, %s34
    %s92 = ssub.s32 %s16, %s30
    %s93 = sor.u32 %s91, %s92
    %p94 = scmp.eq.s32.totalorder %s93, 0
    %s96 = sadd.s32 %s95, 1
    %s97 = scalar_select %p94, %s95, %s96
    %p100 = pneg %p94
    %p101 = scmp.eq.s32.totalorder %s8, 1
    %p102 = por %p100, %p101
    %p103 = scmp.ne.s32.totalorder %s95, %s98
    %p104 = scmp.eq.s32.totalorder %s8, 0
    %p105 = por %p103, %p104
    %p106 = scmp.ne.s32.totalorder %s95, %s98
    %p107 = scmp.eq.s32.totalorder %s13, 1
    %p108 = por %p106, %p107
    %p109 = scmp.ne.s32.totalorder %s98, %s99
    %p110 = scmp.eq.s32.totalorder %s13, 0
    %p111 = por %p109, %p110
    %p112 = scmp.ne.s32.totalorder %s98, %s99
    %p113 = scmp.eq.s32.totalorder %s14, 1
    %p114 = por %p112, %p113
    %p116 = scmp.ne.s32.totalorder %s99, %s115
    %p117 = scmp.eq.s32.totalorder %s14, 0
    %p118 = por %p116, %p117
    %p119 = scmp.le.s32.totalorder 1, %s8
    %p120 = scmp.lt.s32.totalorder %s8, 3
    %p121 = pnand %p119, %p120
    %p122 = pneg %p121
    // Predicated region
    $region9: #{resnet18_kan_forward.6} parent=5 // pred_check
      _
    $region10: #{resnet18_kan_forward.6} parent=5 // pred_check_branch
      %124 = sbr.rel (%p121) target = $region12
    $region11: #{resnet18_kan_forward.6} parent=5 // pred_region
      %s125 = ssub.s32 %s8, 1
      // Predicated region
      $region13: #{resnet18_kan_forward.6} parent=11 // pred_check
        %p126 = pneg %p83
      $region14: #{resnet18_kan_forward.6} parent=11 // pred_check_branch
        %128 = sbr.rel (%p126) target = $region16
      $region15: #{resnet18_kan_forward.6} parent=11 // pred_region
        %p129 = scmp.lt.s32.totalorder %s20, 0
        %s130 = scalar_select %p129, %s20, 0
        %p131 = scmp.lt.s32.totalorder %s19, 0
        %s132 = scalar_select %p131, %s19, 0
        %s133 = smul.addr %s130, 288
        %s134 = sadd.s32 %s132, %s133
        %s135 = smul.addr %s134, 4
        %s136 = scalar_lea.vmem %s1, %s135
      $region16: #{resnet18_kan_forward.6} parent=11 // pred_fallthru
        _
    $region12: #{resnet18_kan_forward.6} parent=5 // pred_fallthru
      _
    %p137 = scmp.lt.s32.totalorder %s8, 2
    // Predicated region
    $region17: #{resnet18_kan_forward.6} parent=5 // pred_check
      %p138 = pneg %p137
    $region18: #{resnet18_kan_forward.6} parent=5 // pred_check_branch
      %140 = sbr.rel (%p138) target = $region20
    $region19: #{resnet18_kan_forward.6} parent=5 // pred_region
      // Predicated region
      $region21: #{resnet18_kan_forward.6} parent=19 // pred_check
        %p141 = pneg %p49
      $region22: #{resnet18_kan_forward.6} parent=19 // pred_check_branch
        %143 = sbr.rel (%p141) target = $region24
      $region23: #{resnet18_kan_forward.6} parent=19 // pred_region
        %s144 = smul.u32 8, %s15
        %s145 = smul.u32 5, %s17
        %p146 = scmp.lt.s32.totalorder %s144, 15
        %s147 = scalar_select %p146, %s144, 15
        %p148 = scmp.lt.s32.totalorder %s145, 4
        %s149 = scalar_select %p148, %s145, 4
        %s150 = smul.addr %s147, 5
        %s151 = sadd.s32 %s149, %s150
        %s152 = smul.addr %s151, 8
        %s153 = scalar_lea.vmem %s0, %s152
        %s154 = smul.u32 8, %s15
        %s155 = smul.u32 5, %s17
      $region24: #{resnet18_kan_forward.6} parent=19 // pred_fallthru
        _
    $region20: #{resnet18_kan_forward.6} parent=5 // pred_fallthru
      _
    %p156 = scmp.le.s32.totalorder 1, %s8
    %p157 = scmp.lt.s32.totalorder %s8, 3
    %p158 = pnand %p156, %p157
    %p159 = pneg %p158
    // Predicated region
    $region25: #{resnet18_kan_forward.6} parent=5 // pred_check
      _
    $region26: #{resnet18_kan_forward.6} parent=5 // pred_check_branch
      %161 = sbr.rel (%p158) target = $region28
    $region27: #{resnet18_kan_forward.6} parent=5 // pred_region
      %s162 = ssub.s32 %s8, 1
      %s163 = smul.u32 8, %s18
      %s164 = smul.u32 5, %s20
      %p165 = scmp.lt.s32.totalorder %s163, 15
      %s166 = scalar_select %p165, %s163, 15
      %p167 = scmp.lt.s32.totalorder %s164, 4
      %s168 = scalar_select %p167, %s164, 4
      %s169 = smul.addr %s166, 5
      %s170 = sadd.s32 %s168, %s169
      %s171 = smul.addr %s170, 8
      %s172 = scalar_lea.vmem %s0, %s171
      %p173 = pneg %p55
      %p174 = pneg %p52
      %p175 = scmp.lt.s32.totalorder %s20, 0
      %s176 = scalar_select %p175, %s20, 0
      %p177 = scmp.lt.s32.totalorder %s19, 0
      %s178 = scalar_select %p177, %s19, 0
      %s179 = smul.addr %s176, 288
      %s180 = sadd.s32 %s178, %s179
      %s181 = smul.addr %s180, 4
      %s182 = scalar_lea.vmem %s1, %s181
      %p183 = pneg %p83
      %p184 = pneg %p80
      %p185 = pneg %p111
      %p186 = pneg %p108
      %s187 = smul.u32 8, %s18
      %p188 = scmp.lt.s32.totalorder %s187, 15
      %s189 = scalar_select %p188, %s187, 15
      %p190 = scmp.lt.s32.totalorder %s19, 0
      %s191 = scalar_select %p190, %s19, 0
      %s192 = sadd.s32 %s191, %s189
      %s193 = smul.addr %s192, 8
      %s194 = scalar_lea.vmem %s2, %s193
      %s195 = smul.u32 8, %s18
      %s196 = smul.u32 5, %s20
      %p197 = scmp.lt.s32.totalorder %s195, 15
      %s198 = scalar_select %p197, %s195, 15
      %p199 = scmp.lt.s32.totalorder %s196, 4
      %s200 = scalar_select %p199, %s196, 4
      %s201 = smul.addr %s198, 5
      %s202 = sadd.s32 %s200, %s201
      %s203 = smul.addr %s202, 8
      %s204 = scalar_lea.vmem %s0, %s203
      %s205 = smul.u32 8, %s18
      %s206 = smul.u32 5, %s20
      %p207 = scmp.lt.s32.totalorder %s20, 0
      %s208 = scalar_select %p207, %s20, 0
      %p209 = scmp.lt.s32.totalorder %s19, 0
      %s210 = scalar_select %p209, %s19, 0
      %s211 = smul.addr %s208, 288
      %s212 = sadd.s32 %s210, %s211
      %s213 = smul.addr %s212, 4
      %s214 = scalar_lea.vmem %s1, %s213
      %s215 = smul.u32 8, %s18
      %p216 = scmp.lt.s32.totalorder %s215, 15
      %s217 = scalar_select %p216, %s215, 15
      %p218 = scmp.lt.s32.totalorder %s19, 0
      %s219 = scalar_select %p218, %s19, 0
      %s220 = sadd.s32 %s219, %s217
      %s221 = smul.addr %s220, 8
      %s222 = scalar_lea.vmem %s2, %s221
      %s223 = smul.u32 8, %s18
      %p225 = scmp.eq.s32.totalorder %s20, 0
      // Predicated region
      $region29: #{resnet18_kan_forward.6} parent=27 // pred_check
        %p226 = pneg %p225
      $region30: #{resnet18_kan_forward.6} parent=27 // pred_check_branch
        %228 = sbr.rel (%p226) target = $region32
      $region31: #{resnet18_kan_forward.6} parent=27 // pred_region
        %229 = vst [vmem:[#allocation2] sm:$0xff] 0.0
        %230 = vst [vmem:[#allocation2 + $0x8] sm:$0xff] 0.0
        %231 = vst [vmem:[#allocation2 + $0x10] sm:$0xff] 0.0
        %232 = vst [vmem:[#allocation2 + $0x18] sm:$0xff] 0.0
        %233 = vst [vmem:[#allocation2 + $0x20] sm:$0xff] 0.0
        %234 = vst [vmem:[#allocation2 + $0x28] sm:$0xff] 0.0
        %235 = vst [vmem:[#allocation2 + $0x30] sm:$0xff] 0.0
        %236 = vst [vmem:[#allocation2 + $0x38] sm:$0xff] 0.0
      $region32: #{resnet18_kan_forward.6} parent=27 // pred_fallthru
        _
      %v237 = vld [vmem:[%s204] sm:$0xff]
      %v238 = vld [vmem:[%s204 + $0x8] sm:$0xff]
      %v239 = vld [vmem:[%s204 + $0x10] sm:$0xff]
      %v240 = vld [vmem:[%s204 + $0x18] sm:$0xff]
      %v241 = vld [vmem:[%s204 + $0x20] sm:$0xff]
      %v242 = vld [vmem:[%s204 + $0x28] sm:$0xff]
      %v243 = vld [vmem:[%s204 + $0x30] sm:$0xff]
      %v244 = vld [vmem:[%s204 + $0x38] sm:$0xff]
      %v245 = vld [vmem:[%s204 + $0x40] sm:$0xff]
      %v246 = vld [vmem:[%s204 + $0x48] sm:$0xff]
      %v247 = vld [vmem:[%s204 + $0x50] sm:$0xff]
      %v248 = vld [vmem:[%s204 + $0x58] sm:$0xff]
      %v249 = vld [vmem:[%s204 + $0x60] sm:$0xff]
      %v250 = vld [vmem:[%s204 + $0x68] sm:$0xff]
      %v251 = vld [vmem:[%s204 + $0x70] sm:$0xff]
      %v252 = vld [vmem:[%s204 + $0x78] sm:$0xff]
      %v253 = vld [vmem:[%s204 + $0x80] sm:$0xff]
      %v254 = vld [vmem:[%s204 + $0x88] sm:$0xff]
      %v255 = vld [vmem:[%s204 + $0x90] sm:$0xff]
      %v256 = vld [vmem:[%s204 + $0x98] sm:$0xff]
      %v257 = vld [vmem:[%s204 + $0xa0] sm:$0xff]
      %v258 = vld [vmem:[%s204 + $0xa8] sm:$0xff]
      %v259 = vld [vmem:[%s204 + $0xb0] sm:$0xff]
      %v260 = vld [vmem:[%s204 + $0xb8] sm:$0xff]
      %v261 = vld [vmem:[%s204 + $0xc0] sm:$0xff]
      %v262 = vld [vmem:[%s204 + $0xc8] sm:$0xff]
      %v263 = vld [vmem:[%s204 + $0xd0] sm:$0xff]
      %v264 = vld [vmem:[%s204 + $0xd8] sm:$0xff]
      %v265 = vld [vmem:[%s204 + $0xe0] sm:$0xff]
      %v266 = vld [vmem:[%s204 + $0xe8] sm:$0xff]
      %v267 = vld [vmem:[%s204 + $0xf0] sm:$0xff]
      %v268 = vld [vmem:[%s204 + $0xf8] sm:$0xff]
      %v269 = vld [vmem:[%s204 + $0x100] sm:$0xff]
      %v270 = vld [vmem:[%s204 + $0x108] sm:$0xff]
      %v271 = vld [vmem:[%s204 + $0x110] sm:$0xff]
      %v272 = vld [vmem:[%s204 + $0x118] sm:$0xff]
      %v273 = vld [vmem:[%s204 + $0x120] sm:$0xff]
      %v274 = vld [vmem:[%s204 + $0x128] sm:$0xff]
      %v275 = vld [vmem:[%s204 + $0x130] sm:$0xff]
      %v276 = vld [vmem:[%s204 + $0x138] sm:$0xff]
      %v277 = vmul.f32 %v237, 6.0
      %v278 = vmul.f32 %v238, 6.0
      %v279 = vmul.f32 %v239, 6.0
      %v280 = vmul.f32 %v240, 6.0
      %v281 = vmul.f32 %v241, 6.0
      %v282 = vmul.f32 %v242, 6.0
      %v283 = vmul.f32 %v243, 6.0
      %v284 = vmul.f32 %v244, 6.0
      %v285 = vmul.f32 %v245, 6.0
      %v286 = vmul.f32 %v246, 6.0
      %v287 = vmul.f32 %v247, 6.0
      %v288 = vmul.f32 %v248, 6.0
      %v289 = vmul.f32 %v249, 6.0
      %v290 = vmul.f32 %v250, 6.0
      %v291 = vmul.f32 %v251, 6.0
      %v292 = vmul.f32 %v252, 6.0
      %v293 = vmul.f32 %v253, 6.0
      %v294 = vmul.f32 %v254, 6.0
      %v295 = vmul.f32 %v255, 6.0
      %v296 = vmul.f32 %v256, 6.0
      %v297 = vmul.f32 %v257, 6.0
      %v298 = vmul.f32 %v258, 6.0
      %v299 = vmul.f32 %v259, 6.0
      %v300 = vmul.f32 %v260, 6.0
      %v301 = vmul.f32 %v261, 6.0
      %v302 = vmul.f32 %v262, 6.0
      %v303 = vmul.f32 %v263, 6.0
      %v304 = vmul.f32 %v264, 6.0
      %v305 = vmul.f32 %v265, 6.0
      %v306 = vmul.f32 %v266, 6.0
      %v307 = vmul.f32 %v267, 6.0
      %v308 = vmul.f32 %v268, 6.0
      %v309 = vmul.f32 %v269, 6.0
      %v310 = vmul.f32 %v270, 6.0
      %v311 = vmul.f32 %v271, 6.0
      %v312 = vmul.f32 %v272, 6.0
      %v313 = vmul.f32 %v273, 6.0
      %v314 = vmul.f32 %v274, 6.0
      %v315 = vmul.f32 %v275, 6.0
      %v316 = vmul.f32 %v276, 6.0
      %v317 = vfloor.f32 %v277
      %v318 = vfloor.f32 %v278
      %v319 = vfloor.f32 %v279
      %v320 = vfloor.f32 %v280
      %v321 = vfloor.f32 %v281
      %v322 = vfloor.f32 %v282
      %v323 = vfloor.f32 %v283
      %v324 = vfloor.f32 %v284
      %v325 = vfloor.f32 %v285
      %v326 = vfloor.f32 %v286
      %v327 = vfloor.f32 %v287
      %v328 = vfloor.f32 %v288
      %v329 = vfloor.f32 %v289
      %v330 = vfloor.f32 %v290
      %v331 = vfloor.f32 %v291
      %v332 = vfloor.f32 %v292
      %v333 = vfloor.f32 %v293
      %v334 = vfloor.f32 %v294
      %v335 = vfloor.f32 %v295
      %v336 = vfloor.f32 %v296
      %v337 = vfloor.f32 %v297
      %v338 = vfloor.f32 %v298
      %v339 = vfloor.f32 %v299
      %v340 = vfloor.f32 %v300
      %v341 = vfloor.f32 %v301
      %v342 = vfloor.f32 %v302
      %v343 = vfloor.f32 %v303
      %v344 = vfloor.f32 %v304
      %v345 = vfloor.f32 %v305
      %v346 = vfloor.f32 %v306
      %v347 = vfloor.f32 %v307
      %v348 = vfloor.f32 %v308
      %v349 = vfloor.f32 %v309
      %v350 = vfloor.f32 %v310
      %v351 = vfloor.f32 %v311
      %v352 = vfloor.f32 %v312
      %v353 = vfloor.f32 %v313
      %v354 = vfloor.f32 %v314
      %v355 = vfloor.f32 %v315
      %v356 = vfloor.f32 %v316
      %v357 = vsub.f32 %v277, %v317
      %v358 = vsub.f32 %v278, %v318
      %v359 = vsub.f32 %v279, %v319
      %v360 = vsub.f32 %v280, %v320
      %v361 = vsub.f32 %v281, %v321
      %v362 = vsub.f32 %v282, %v322
      %v363 = vsub.f32 %v283, %v323
      %v364 = vsub.f32 %v284, %v324
      %v365 = vsub.f32 %v285, %v325
      %v366 = vsub.f32 %v286, %v326
      %v367 = vsub.f32 %v287, %v327
      %v368 = vsub.f32 %v288, %v328
      %v369 = vsub.f32 %v289, %v329
      %v370 = vsub.f32 %v290, %v330
      %v371 = vsub.f32 %v291, %v331
      %v372 = vsub.f32 %v292, %v332
      %v373 = vsub.f32 %v293, %v333
      %v374 = vsub.f32 %v294, %v334
      %v375 = vsub.f32 %v295, %v335
      %v376 = vsub.f32 %v296, %v336
      %v377 = vsub.f32 %v297, %v337
      %v378 = vsub.f32 %v298, %v338
      %v379 = vsub.f32 %v299, %v339
      %v380 = vsub.f32 %v300, %v340
      %v381 = vsub.f32 %v301, %v341
      %v382 = vsub.f32 %v302, %v342
      %v383 = vsub.f32 %v303, %v343
      %v384 = vsub.f32 %v304, %v344
      %v385 = vsub.f32 %v305, %v345
      %v386 = vsub.f32 %v306, %v346
      %v387 = vsub.f32 %v307, %v347
      %v388 = vsub.f32 %v308, %v348
      %v389 = vsub.f32 %v309, %v349
      %v390 = vsub.f32 %v310, %v350
      %v391 = vsub.f32 %v311, %v351
      %v392 = vsub.f32 %v312, %v352
      %v393 = vsub.f32 %v313, %v353
      %v394 = vsub.f32 %v314, %v354
      %v395 = vsub.f32 %v315, %v355
      %v396 = vsub.f32 %v316, %v356
      %v397 = vmul.f32 %v357, 0.5
      %v398 = vmul.f32 %v358, 0.5
      %v399 = vmul.f32 %v359, 0.5
      %v400 = vmul.f32 %v360, 0.5
      %v401 = vmul.f32 %v361, 0.5
      %v402 = vmul.f32 %v362, 0.5
      %v403 = vmul.f32 %v363, 0.5
      %v404 = vmul.f32 %v364, 0.5
      %v405 = vmul.f32 %v365, 0.5
      %v406 = vmul.f32 %v366, 0.5
      %v407 = vmul.f32 %v367, 0.5
      %v408 = vmul.f32 %v368, 0.5
      %v409 = vmul.f32 %v369, 0.5
      %v410 = vmul.f32 %v370, 0.5
      %v411 = vmul.f32 %v371, 0.5
      %v412 = vmul.f32 %v372, 0.5
      %v413 = vmul.f32 %v373, 0.5
      %v414 = vmul.f32 %v374, 0.5
      %v415 = vmul.f32 %v375, 0.5
      %v416 = vmul.f32 %v376, 0.5
      %v417 = vmul.f32 %v377, 0.5
      %v418 = vmul.f32 %v378, 0.5
      %v419 = vmul.f32 %v379, 0.5
      %v420 = vmul.f32 %v380, 0.5
      %v421 = vmul.f32 %v381, 0.5
      %v422 = vmul.f32 %v382, 0.5
      %v423 = vmul.f32 %v383, 0.5
      %v424 = vmul.f32 %v384, 0.5
      %v425 = vmul.f32 %v385, 0.5
      %v426 = vmul.f32 %v386, 0.5
      %v427 = vmul.f32 %v387, 0.5
      %v428 = vmul.f32 %v388, 0.5
      %v429 = vmul.f32 %v389, 0.5
      %v430 = vmul.f32 %v390, 0.5
      %v431 = vmul.f32 %v391, 0.5
      %v432 = vmul.f32 %v392, 0.5
      %v433 = vmul.f32 %v393, 0.5
      %v434 = vmul.f32 %v394, 0.5
      %v435 = vmul.f32 %v395, 0.5
      %v436 = vmul.f32 %v396, 0.5
      %v437 = vadd.f32 %v397, 0.0
      %v438 = vadd.f32 %v398, 0.0
      %v439 = vadd.f32 %v399, 0.0
      %v440 = vadd.f32 %v400, 0.0
      %v441 = vadd.f32 %v401, 0.0
      %v442 = vadd.f32 %v402, 0.0
      %v443 = vadd.f32 %v403, 0.0
      %v444 = vadd.f32 %v404, 0.0
      %v445 = vadd.f32 %v405, 0.0
      %v446 = vadd.f32 %v406, 0.0
      %v447 = vadd.f32 %v407, 0.0
      %v448 = vadd.f32 %v408, 0.0
      %v449 = vadd.f32 %v409, 0.0
      %v450 = vadd.f32 %v410, 0.0
      %v451 = vadd.f32 %v411, 0.0
      %v452 = vadd.f32 %v412, 0.0
      %v453 = vadd.f32 %v413, 0.0
      %v454 = vadd.f32 %v414, 0.0
      %v455 = vadd.f32 %v415, 0.0
      %v456 = vadd.f32 %v416, 0.0
      %v457 = vadd.f32 %v417, 0.0
      %v458 = vadd.f32 %v418, 0.0
      %v459 = vadd.f32 %v419, 0.0
      %v460 = vadd.f32 %v420, 0.0
      %v461 = vadd.f32 %v421, 0.0
      %v462 = vadd.f32 %v422, 0.0
      %v463 = vadd.f32 %v423, 0.0
      %v464 = vadd.f32 %v424, 0.0
      %v465 = vadd.f32 %v425, 0.0
      %v466 = vadd.f32 %v426, 0.0
      %v467 = vadd.f32 %v427, 0.0
      %v468 = vadd.f32 %v428, 0.0
      %v469 = vadd.f32 %v429, 0.0
      %v470 = vadd.f32 %v430, 0.0
      %v471 = vadd.f32 %v431, 0.0
      %v472 = vadd.f32 %v432, 0.0
      %v473 = vadd.f32 %v433, 0.0
      %v474 = vadd.f32 %v434, 0.0
      %v475 = vadd.f32 %v435, 0.0
      %v476 = vadd.f32 %v436, 0.0
      %v477 = vmul.f32 %v437, %v357
      %v478 = vmul.f32 %v438, %v358
      %v479 = vmul.f32 %v439, %v359
      %v480 = vmul.f32 %v440, %v360
      %v481 = vmul.f32 %v441, %v361
      %v482 = vmul.f32 %v442, %v362
      %v483 = vmul.f32 %v443, %v363
      %v484 = vmul.f32 %v444, %v364
      %v485 = vmul.f32 %v445, %v365
      %v486 = vmul.f32 %v446, %v366
      %v487 = vmul.f32 %v447, %v367
      %v488 = vmul.f32 %v448, %v368
      %v489 = vmul.f32 %v449, %v369
      %v490 = vmul.f32 %v450, %v370
      %v491 = vmul.f32 %v451, %v371
      %v492 = vmul.f32 %v452, %v372
      %v493 = vmul.f32 %v453, %v373
      %v494 = vmul.f32 %v454, %v374
      %v495 = vmul.f32 %v455, %v375
      %v496 = vmul.f32 %v456, %v376
      %v497 = vmul.f32 %v457, %v377
      %v498 = vmul.f32 %v458, %v378
      %v499 = vmul.f32 %v459, %v379
      %v500 = vmul.f32 %v460, %v380
      %v501 = vmul.f32 %v461, %v381
      %v502 = vmul.f32 %v462, %v382
      %v503 = vmul.f32 %v463, %v383
      %v504 = vmul.f32 %v464, %v384
      %v505 = vmul.f32 %v465, %v385
      %v506 = vmul.f32 %v466, %v386
      %v507 = vmul.f32 %v467, %v387
      %v508 = vmul.f32 %v468, %v388
      %v509 = vmul.f32 %v469, %v389
      %v510 = vmul.f32 %v470, %v390
      %v511 = vmul.f32 %v471, %v391
      %v512 = vmul.f32 %v472, %v392
      %v513 = vmul.f32 %v473, %v393
      %v514 = vmul.f32 %v474, %v394
      %v515 = vmul.f32 %v475, %v395
      %v516 = vmul.f32 %v476, %v396
      %v517 = vadd.f32 %v477, 0.0
      %v518 = vadd.f32 %v478, 0.0
      %v519 = vadd.f32 %v479, 0.0
      %v520 = vadd.f32 %v480, 0.0
      %v521 = vadd.f32 %v481, 0.0
      %v522 = vadd.f32 %v482, 0.0
      %v523 = vadd.f32 %v483, 0.0
      %v524 = vadd.f32 %v484, 0.0
      %v525 = vadd.f32 %v485, 0.0
      %v526 = vadd.f32 %v486, 0.0
      %v527 = vadd.f32 %v487, 0.0
      %v528 = vadd.f32 %v488, 0.0
      %v529 = vadd.f32 %v489, 0.0
      %v530 = vadd.f32 %v490, 0.0
      %v531 = vadd.f32 %v491, 0.0
      %v532 = vadd.f32 %v492, 0.0
      %v533 = vadd.f32 %v493, 0.0
      %v534 = vadd.f32 %v494, 0.0
      %v535 = vadd.f32 %v495, 0.0
      %v536 = vadd.f32 %v496, 0.0
      %v537 = vadd.f32 %v497, 0.0
      %v538 = vadd.f32 %v498, 0.0
      %v539 = vadd.f32 %v499, 0.0
      %v540 = vadd.f32 %v500, 0.0
      %v541 = vadd.f32 %v501, 0.0
      %v542 = vadd.f32 %v502, 0.0
      %v543 = vadd.f32 %v503, 0.0
      %v544 = vadd.f32 %v504, 0.0
      %v545 = vadd.f32 %v505, 0.0
      %v546 = vadd.f32 %v506, 0.0
      %v547 = vadd.f32 %v507, 0.0
      %v548 = vadd.f32 %v508, 0.0
      %v549 = vadd.f32 %v509, 0.0
      %v550 = vadd.f32 %v510, 0.0
      %v551 = vadd.f32 %v511, 0.0
      %v552 = vadd.f32 %v512, 0.0
      %v553 = vadd.f32 %v513, 0.0
      %v554 = vadd.f32 %v514, 0.0
      %v555 = vadd.f32 %v515, 0.0
      %v556 = vadd.f32 %v516, 0.0
      %v557 = vmul.f32 %v357, -1.0
      %v558 = vmul.f32 %v358, -1.0
      %v559 = vmul.f32 %v359, -1.0
      %v560 = vmul.f32 %v360, -1.0
      %v561 = vmul.f32 %v361, -1.0
      %v562 = vmul.f32 %v362, -1.0
      %v563 = vmul.f32 %v363, -1.0
      %v564 = vmul.f32 %v364, -1.0
      %v565 = vmul.f32 %v365, -1.0
      %v566 = vmul.f32 %v366, -1.0
      %v567 = vmul.f32 %v367, -1.0
      %v568 = vmul.f32 %v368, -1.0
      %v569 = vmul.f32 %v369, -1.0
      %v570 = vmul.f32 %v370, -1.0
      %v571 = vmul.f32 %v371, -1.0
      %v572 = vmul.f32 %v372, -1.0
      %v573 = vmul.f32 %v373, -1.0
      %v574 = vmul.f32 %v374, -1.0
      %v575 = vmul.f32 %v375, -1.0
      %v576 = vmul.f32 %v376, -1.0
      %v577 = vmul.f32 %v377, -1.0
      %v578 = vmul.f32 %v378, -1.0
      %v579 = vmul.f32 %v379, -1.0
      %v580 = vmul.f32 %v380, -1.0
      %v581 = vmul.f32 %v381, -1.0
      %v582 = vmul.f32 %v382, -1.0
      %v583 = vmul.f32 %v383, -1.0
      %v584 = vmul.f32 %v384, -1.0
      %v585 = vmul.f32 %v385, -1.0
      %v586 = vmul.f32 %v386, -1.0
      %v587 = vmul.f32 %v387, -1.0
      %v588 = vmul.f32 %v388, -1.0
      %v589 = vmul.f32 %v389, -1.0
      %v590 = vmul.f32 %v390, -1.0
      %v591 = vmul.f32 %v391, -1.0
      %v592 = vmul.f32 %v392, -1.0
      %v593 = vmul.f32 %v393, -1.0
      %v594 = vmul.f32 %v394, -1.0
      %v595 = vmul.f32 %v395, -1.0
      %v596 = vmul.f32 %v396, -1.0
      %v597 = vadd.f32 %v557, 1.0
      %v598 = vadd.f32 %v558, 1.0
      %v599 = vadd.f32 %v559, 1.0
      %v600 = vadd.f32 %v560, 1.0
      %v601 = vadd.f32 %v561, 1.0
      %v602 = vadd.f32 %v562, 1.0
      %v603 = vadd.f32 %v563, 1.0
      %v604 = vadd.f32 %v564, 1.0
      %v605 = vadd.f32 %v565, 1.0
      %v606 = vadd.f32 %v566, 1.0
      %v607 = vadd.f32 %v567, 1.0
      %v608 = vadd.f32 %v568, 1.0
      %v609 = vadd.f32 %v569, 1.0
      %v610 = vadd.f32 %v570, 1.0
      %v611 = vadd.f32 %v571, 1.0
      %v612 = vadd.f32 %v572, 1.0
      %v613 = vadd.f32 %v573, 1.0
      %v614 = vadd.f32 %v574, 1.0
      %v615 = vadd.f32 %v575, 1.0
      %v616 = vadd.f32 %v576, 1.0
      %v617 = vadd.f32 %v577, 1.0
      %v618 = vadd.f32 %v578, 1.0
      %v619 = vadd.f32 %v579, 1.0
      %v620 = vadd.f32 %v580, 1.0
      %v621 = vadd.f32 %v581, 1.0
      %v622 = vadd.f32 %v582, 1.0
      %v623 = vadd.f32 %v583, 1.0
      %v624 = vadd.f32 %v584, 1.0
      %v625 = vadd.f32 %v585, 1.0
      %v626 = vadd.f32 %v586, 1.0
      %v627 = vadd.f32 %v587, 1.0
      %v628 = vadd.f32 %v588, 1.0
      %v629 = vadd.f32 %v589, 1.0
      %v630 = vadd.f32 %v590, 1.0
      %v631 = vadd.f32 %v591, 1.0
      %v632 = vadd.f32 %v592, 1.0
      %v633 = vadd.f32 %v593, 1.0
      %v634 = vadd.f32 %v594, 1.0
      %v635 = vadd.f32 %v595, 1.0
      %v636 = vadd.f32 %v596, 1.0
      %v637 = vmul.f32 %v597, %v357
      %v638 = vmul.f32 %v598, %v358
      %v639 = vmul.f32 %v599, %v359
      %v640 = vmul.f32 %v600, %v360
      %v641 = vmul.f32 %v601, %v361
      %v642 = vmul.f32 %v602, %v362
      %v643 = vmul.f32 %v603, %v363
      %v644 = vmul.f32 %v604, %v364
      %v645 = vmul.f32 %v605, %v365
      %v646 = vmul.f32 %v606, %v366
      %v647 = vmul.f32 %v607, %v367
      %v648 = vmul.f32 %v608, %v368
      %v649 = vmul.f32 %v609, %v369
      %v650 = vmul.f32 %v610, %v370
      %v651 = vmul.f32 %v611, %v371
      %v652 = vmul.f32 %v612, %v372
      %v653 = vmul.f32 %v613, %v373
      %v654 = vmul.f32 %v614, %v374
      %v655 = vmul.f32 %v615, %v375
      %v656 = vmul.f32 %v616, %v376
      %v657 = vmul.f32 %v617, %v377
      %v658 = vmul.f32 %v618, %v378
      %v659 = vmul.f32 %v619, %v379
      %v660 = vmul.f32 %v620, %v380
      %v661 = vmul.f32 %v621, %v381
      %v662 = vmul.f32 %v622, %v382
      %v663 = vmul.f32 %v623, %v383
      %v664 = vmul.f32 %v624, %v384
      %v665 = vmul.f32 %v625, %v385
      %v666 = vmul.f32 %v626, %v386
      %v667 = vmul.f32 %v627, %v387
      %v668 = vmul.f32 %v628, %v388
      %v669 = vmul.f32 %v629, %v389
      %v670 = vmul.f32 %v630, %v390
      %v671 = vmul.f32 %v631, %v391
      %v672 = vmul.f32 %v632, %v392
      %v673 = vmul.f32 %v633, %v393
      %v674 = vmul.f32 %v634, %v394
      %v675 = vmul.f32 %v635, %v395
      %v676 = vmul.f32 %v636, %v396
      %v677 = vadd.f32 %v637, 0.5
      %v678 = vadd.f32 %v638, 0.5
      %v679 = vadd.f32 %v639, 0.5
      %v680 = vadd.f32 %v640, 0.5
      %v681 = vadd.f32 %v641, 0.5
      %v682 = vadd.f32 %v642, 0.5
      %v683 = vadd.f32 %v643, 0.5
      %v684 = vadd.f32 %v644, 0.5
      %v685 = vadd.f32 %v645, 0.5
      %v686 = vadd.f32 %v646, 0.5
      %v687 = vadd.f32 %v647, 0.5
      %v688 = vadd.f32 %v648, 0.5
      %v689 = vadd.f32 %v649, 0.5
      %v690 = vadd.f32 %v650, 0.5
      %v691 = vadd.f32 %v651, 0.5
      %v692 = vadd.f32 %v652, 0.5
      %v693 = vadd.f32 %v653, 0.5
      %v694 = vadd.f32 %v654, 0.5
      %v695 = vadd.f32 %v655, 0.5
      %v696 = vadd.f32 %v656, 0.5
      %v697 = vadd.f32 %v657, 0.5
      %v698 = vadd.f32 %v658, 0.5
      %v699 = vadd.f32 %v659, 0.5
      %v700 = vadd.f32 %v660, 0.5
      %v701 = vadd.f32 %v661, 0.5
      %v702 = vadd.f32 %v662, 0.5
      %v703 = vadd.f32 %v663, 0.5
      %v704 = vadd.f32 %v664, 0.5
      %v705 = vadd.f32 %v665, 0.5
      %v706 = vadd.f32 %v666, 0.5
      %v707 = vadd.f32 %v667, 0.5
      %v708 = vadd.f32 %v668, 0.5
      %v709 = vadd.f32 %v669, 0.5
      %v710 = vadd.f32 %v670, 0.5
      %v711 = vadd.f32 %v671, 0.5
      %v712 = vadd.f32 %v672, 0.5
      %v713 = vadd.f32 %v673, 0.5
      %v714 = vadd.f32 %v674, 0.5
      %v715 = vadd.f32 %v675, 0.5
      %v716 = vadd.f32 %v676, 0.5
      %v717 = vadd.f32 %v397, -1.0
      %v718 = vadd.f32 %v398, -1.0
      %v719 = vadd.f32 %v399, -1.0
      %v720 = vadd.f32 %v400, -1.0
      %v721 = vadd.f32 %v401, -1.0
      %v722 = vadd.f32 %v402, -1.0
      %v723 = vadd.f32 %v403, -1.0
      %v724 = vadd.f32 %v404, -1.0
      %v725 = vadd.f32 %v405, -1.0
      %v726 = vadd.f32 %v406, -1.0
      %v727 = vadd.f32 %v407, -1.0
      %v728 = vadd.f32 %v408, -1.0
      %v729 = vadd.f32 %v409, -1.0
      %v730 = vadd.f32 %v410, -1.0
      %v731 = vadd.f32 %v411, -1.0
      %v732 = vadd.f32 %v412, -1.0
      %v733 = vadd.f32 %v413, -1.0
      %v734 = vadd.f32 %v414, -1.0
      %v735 = vadd.f32 %v415, -1.0
      %v736 = vadd.f32 %v416, -1.0
      %v737 = vadd.f32 %v417, -1.0
      %v738 = vadd.f32 %v418, -1.0
      %v739 = vadd.f32 %v419, -1.0
      %v740 = vadd.f32 %v420, -1.0
      %v741 = vadd.f32 %v421, -1.0
      %v742 = vadd.f32 %v422, -1.0
      %v743 = vadd.f32 %v423, -1.0
      %v744 = vadd.f32 %v424, -1.0
      %v745 = vadd.f32 %v425, -1.0
      %v746 = vadd.f32 %v426, -1.0
      %v747 = vadd.f32 %v427, -1.0
      %v748 = vadd.f32 %v428, -1.0
      %v749 = vadd.f32 %v429, -1.0
      %v750 = vadd.f32 %v430, -1.0
      %v751 = vadd.f32 %v431, -1.0
      %v752 = vadd.f32 %v432, -1.0
      %v753 = vadd.f32 %v433, -1.0
      %v754 = vadd.f32 %v434, -1.0
      %v755 = vadd.f32 %v435, -1.0
      %v756 = vadd.f32 %v436, -1.0
      %v757 = vmul.f32 %v717, %v357
      %v758 = vmul.f32 %v718, %v358
      %v759 = vmul.f32 %v719, %v359
      %v760 = vmul.f32 %v720, %v360
      %v761 = vmul.f32 %v721, %v361
      %v762 = vmul.f32 %v722, %v362
      %v763 = vmul.f32 %v723, %v363
      %v764 = vmul.f32 %v724, %v364
      %v765 = vmul.f32 %v725, %v365
      %v766 = vmul.f32 %v726, %v366
      %v767 = vmul.f32 %v727, %v367
      %v768 = vmul.f32 %v728, %v368
      %v769 = vmul.f32 %v729, %v369
      %v770 = vmul.f32 %v730, %v370
      %v771 = vmul.f32 %v731, %v371
      %v772 = vmul.f32 %v732, %v372
      %v773 = vmul.f32 %v733, %v373
      %v774 = vmul.f32 %v734, %v374
      %v775 = vmul.f32 %v735, %v375
      %v776 = vmul.f32 %v736, %v376
      %v777 = vmul.f32 %v737, %v377
      %v778 = vmul.f32 %v738, %v378
      %v779 = vmul.f32 %v739, %v379
      %v780 = vmul.f32 %v740, %v380
      %v781 = vmul.f32 %v741, %v381
      %v782 = vmul.f32 %v742, %v382
      %v783 = vmul.f32 %v743, %v383
      %v784 = vmul.f32 %v744, %v384
      %v785 = vmul.f32 %v745, %v385
      %v786 = vmul.f32 %v746, %v386
      %v787 = vmul.f32 %v747, %v387
      %v788 = vmul.f32 %v748, %v388
      %v789 = vmul.f32 %v749, %v389
      %v790 = vmul.f32 %v750, %v390
      %v791 = vmul.f32 %v751, %v391
      %v792 = vmul.f32 %v752, %v392
      %v793 = vmul.f32 %v753, %v393
      %v794 = vmul.f32 %v754, %v394
      %v795 = vmul.f32 %v755, %v395
      %v796 = vmul.f32 %v756, %v396
      %v797 = vadd.f32 %v757, 0.5
      %v798 = vadd.f32 %v758, 0.5
      %v799 = vadd.f32 %v759, 0.5
      %v800 = vadd.f32 %v760, 0.5
      %v801 = vadd.f32 %v761, 0.5
      %v802 = vadd.f32 %v762, 0.5
      %v803 = vadd.f32 %v763, 0.5
      %v804 = vadd.f32 %v764, 0.5
      %v805 = vadd.f32 %v765, 0.5
      %v806 = vadd.f32 %v766, 0.5
      %v807 = vadd.f32 %v767, 0.5
      %v808 = vadd.f32 %v768, 0.5
      %v809 = vadd.f32 %v769, 0.5
      %v810 = vadd.f32 %v770, 0.5
      %v811 = vadd.f32 %v771, 0.5
      %v812 = vadd.f32 %v772, 0.5
      %v813 = vadd.f32 %v773, 0.5
      %v814 = vadd.f32 %v774, 0.5
      %v815 = vadd.f32 %v775, 0.5
      %v816 = vadd.f32 %v776, 0.5
      %v817 = vadd.f32 %v777, 0.5
      %v818 = vadd.f32 %v778, 0.5
      %v819 = vadd.f32 %v779, 0.5
      %v820 = vadd.f32 %v780, 0.5
      %v821 = vadd.f32 %v781, 0.5
      %v822 = vadd.f32 %v782, 0.5
      %v823 = vadd.f32 %v783, 0.5
      %v824 = vadd.f32 %v784, 0.5
      %v825 = vadd.f32 %v785, 0.5
      %v826 = vadd.f32 %v786, 0.5
      %v827 = vadd.f32 %v787, 0.5
      %v828 = vadd.f32 %v788, 0.5
      %v829 = vadd.f32 %v789, 0.5
      %v830 = vadd.f32 %v790, 0.5
      %v831 = vadd.f32 %v791, 0.5
      %v832 = vadd.f32 %v792, 0.5
      %v833 = vadd.f32 %v793, 0.5
      %v834 = vadd.f32 %v794, 0.5
      %v835 = vadd.f32 %v795, 0.5
      %v836 = vadd.f32 %v796, 0.5
      %vm837 = vcmp.eq.f32.partialorder %v317, 0.0
      %vm838 = vcmp.eq.f32.partialorder %v318, 0.0
      %vm839 = vcmp.eq.f32.partialorder %v319, 0.0
      %vm840 = vcmp.eq.f32.partialorder %v320, 0.0
      %vm841 = vcmp.eq.f32.partialorder %v321, 0.0
      %vm842 = vcmp.eq.f32.partialorder %v322, 0.0
      %vm843 = vcmp.eq.f32.partialorder %v323, 0.0
      %vm844 = vcmp.eq.f32.partialorder %v324, 0.0
      %vm845 = vcmp.eq.f32.partialorder %v325, 0.0
      %vm846 = vcmp.eq.f32.partialorder %v326, 0.0
      %vm847 = vcmp.eq.f32.partialorder %v327, 0.0
      %vm848 = vcmp.eq.f32.partialorder %v328, 0.0
      %vm849 = vcmp.eq.f32.partialorder %v329, 0.0
      %vm850 = vcmp.eq.f32.partialorder %v330, 0.0
      %vm851 = vcmp.eq.f32.partialorder %v331, 0.0
      %vm852 = vcmp.eq.f32.partialorder %v332, 0.0
      %vm853 = vcmp.eq.f32.partialorder %v333, 0.0
      %vm854 = vcmp.eq.f32.partialorder %v334, 0.0
      %vm855 = vcmp.eq.f32.partialorder %v335, 0.0
      %vm856 = vcmp.eq.f32.partialorder %v336, 0.0
      %vm857 = vcmp.eq.f32.partialorder %v337, 0.0
      %vm858 = vcmp.eq.f32.partialorder %v338, 0.0
      %vm859 = vcmp.eq.f32.partialorder %v339, 0.0
      %vm860 = vcmp.eq.f32.partialorder %v340, 0.0
      %vm861 = vcmp.eq.f32.partialorder %v341, 0.0
      %vm862 = vcmp.eq.f32.partialorder %v342, 0.0
      %vm863 = vcmp.eq.f32.partialorder %v343, 0.0
      %vm864 = vcmp.eq.f32.partialorder %v344, 0.0
      %vm865 = vcmp.eq.f32.partialorder %v345, 0.0
      %vm866 = vcmp.eq.f32.partialorder %v346, 0.0
      %vm867 = vcmp.eq.f32.partialorder %v347, 0.0
      %vm868 = vcmp.eq.f32.partialorder %v348, 0.0
      %vm869 = vcmp.eq.f32.partialorder %v349, 0.0
      %vm870 = vcmp.eq.f32.partialorder %v350, 0.0
      %vm871 = vcmp.eq.f32.partialorder %v351, 0.0
      %vm872 = vcmp.eq.f32.partialorder %v352, 0.0
      %vm873 = vcmp.eq.f32.partialorder %v353, 0.0
      %vm874 = vcmp.eq.f32.partialorder %v354, 0.0
      %vm875 = vcmp.eq.f32.partialorder %v355, 0.0
      %vm876 = vcmp.eq.f32.partialorder %v356, 0.0
      %vm877 = vcmp.eq.f32.partialorder %v317, 1.0
      %vm878 = vcmp.eq.f32.partialorder %v318, 1.0
      %vm879 = vcmp.eq.f32.partialorder %v319, 1.0
      %vm880 = vcmp.eq.f32.partialorder %v320, 1.0
      %vm881 = vcmp.eq.f32.partialorder %v321, 1.0
      %vm882 = vcmp.eq.f32.partialorder %v322, 1.0
      %vm883 = vcmp.eq.f32.partialorder %v323, 1.0
      %vm884 = vcmp.eq.f32.partialorder %v324, 1.0
      %vm885 = vcmp.eq.f32.partialorder %v325, 1.0
      %vm886 = vcmp.eq.f32.partialorder %v326, 1.0
      %vm887 = vcmp.eq.f32.partialorder %v327, 1.0
      %vm888 = vcmp.eq.f32.partialorder %v328, 1.0
      %vm889 = vcmp.eq.f32.partialorder %v329, 1.0
      %vm890 = vcmp.eq.f32.partialorder %v330, 1.0
      %vm891 = vcmp.eq.f32.partialorder %v331, 1.0
      %vm892 = vcmp.eq.f32.partialorder %v332, 1.0
      %vm893 = vcmp.eq.f32.partialorder %v333, 1.0
      %vm894 = vcmp.eq.f32.partialorder %v334, 1.0
      %vm895 = vcmp.eq.f32.partialorder %v335, 1.0
      %vm896 = vcmp.eq.f32.partialorder %v336, 1.0
      %vm897 = vcmp.eq.f32.partialorder %v337, 1.0
      %vm898 = vcmp.eq.f32.partialorder %v338, 1.0
      %vm899 = vcmp.eq.f32.partialorder %v339, 1.0
      %vm900 = vcmp.eq.f32.partialorder %v340, 1.0
      %vm901 = vcmp.eq.f32.partialorder %v341, 1.0
      %vm902 = vcmp.eq.f32.partialorder %v342, 1.0
      %vm903 = vcmp.eq.f32.partialorder %v343, 1.0
      %vm904 = vcmp.eq.f32.partialorder %v344, 1.0
      %vm905 = vcmp.eq.f32.partialorder %v345, 1.0
      %vm906 = vcmp.eq.f32.partialorder %v346, 1.0
      %vm907 = vcmp.eq.f32.partialorder %v347, 1.0
      %vm908 = vcmp.eq.f32.partialorder %v348, 1.0
      %vm909 = vcmp.eq.f32.partialorder %v349, 1.0
      %vm910 = vcmp.eq.f32.partialorder %v350, 1.0
      %vm911 = vcmp.eq.f32.partialorder %v351, 1.0
      %vm912 = vcmp.eq.f32.partialorder %v352, 1.0
      %vm913 = vcmp.eq.f32.partialorder %v353, 1.0
      %vm914 = vcmp.eq.f32.partialorder %v354, 1.0
      %vm915 = vcmp.eq.f32.partialorder %v355, 1.0
      %vm916 = vcmp.eq.f32.partialorder %v356, 1.0
      %vm917 = vcmp.eq.f32.partialorder %v317, 2.0
      %vm918 = vcmp.eq.f32.partialorder %v318, 2.0
      %vm919 = vcmp.eq.f32.partialorder %v319, 2.0
      %vm920 = vcmp.eq.f32.partialorder %v320, 2.0
      %vm921 = vcmp.eq.f32.partialorder %v321, 2.0
      %vm922 = vcmp.eq.f32.partialorder %v322, 2.0
      %vm923 = vcmp.eq.f32.partialorder %v323, 2.0
      %vm924 = vcmp.eq.f32.partialorder %v324, 2.0
      %vm925 = vcmp.eq.f32.partialorder %v325, 2.0
      %vm926 = vcmp.eq.f32.partialorder %v326, 2.0
      %vm927 = vcmp.eq.f32.partialorder %v327, 2.0
      %vm928 = vcmp.eq.f32.partialorder %v328, 2.0
      %vm929 = vcmp.eq.f32.partialorder %v329, 2.0
      %vm930 = vcmp.eq.f32.partialorder %v330, 2.0
      %vm931 = vcmp.eq.f32.partialorder %v331, 2.0
      %vm932 = vcmp.eq.f32.partialorder %v332, 2.0
      %vm933 = vcmp.eq.f32.partialorder %v333, 2.0
      %vm934 = vcmp.eq.f32.partialorder %v334, 2.0
      %vm935 = vcmp.eq.f32.partialorder %v335, 2.0
      %vm936 = vcmp.eq.f32.partialorder %v336, 2.0
      %vm937 = vcmp.eq.f32.partialorder %v337, 2.0
      %vm938 = vcmp.eq.f32.partialorder %v338, 2.0
      %vm939 = vcmp.eq.f32.partialorder %v339, 2.0
      %vm940 = vcmp.eq.f32.partialorder %v340, 2.0
      %vm941 = vcmp.eq.f32.partialorder %v341, 2.0
      %vm942 = vcmp.eq.f32.partialorder %v342, 2.0
      %vm943 = vcmp.eq.f32.partialorder %v343, 2.0
      %vm944 = vcmp.eq.f32.partialorder %v344, 2.0
      %vm945 = vcmp.eq.f32.partialorder %v345, 2.0
      %vm946 = vcmp.eq.f32.partialorder %v346, 2.0
      %vm947 = vcmp.eq.f32.partialorder %v347, 2.0
      %vm948 = vcmp.eq.f32.partialorder %v348, 2.0
      %vm949 = vcmp.eq.f32.partialorder %v349, 2.0
      %vm950 = vcmp.eq.f32.partialorder %v350, 2.0
      %vm951 = vcmp.eq.f32.partialorder %v351, 2.0
      %vm952 = vcmp.eq.f32.partialorder %v352, 2.0
      %vm953 = vcmp.eq.f32.partialorder %v353, 2.0
      %vm954 = vcmp.eq.f32.partialorder %v354, 2.0
      %vm955 = vcmp.eq.f32.partialorder %v355, 2.0
      %vm956 = vcmp.eq.f32.partialorder %v356, 2.0
      %vm957 = vcmp.eq.f32.partialorder %v317, 3.0
      %vm958 = vcmp.eq.f32.partialorder %v318, 3.0
      %vm959 = vcmp.eq.f32.partialorder %v319, 3.0
      %vm960 = vcmp.eq.f32.partialorder %v320, 3.0
      %vm961 = vcmp.eq.f32.partialorder %v321, 3.0
      %vm962 = vcmp.eq.f32.partialorder %v322, 3.0
      %vm963 = vcmp.eq.f32.partialorder %v323, 3.0
      %vm964 = vcmp.eq.f32.partialorder %v324, 3.0
      %vm965 = vcmp.eq.f32.partialorder %v325, 3.0
      %vm966 = vcmp.eq.f32.partialorder %v326, 3.0
      %vm967 = vcmp.eq.f32.partialorder %v327, 3.0
      %vm968 = vcmp.eq.f32.partialorder %v328, 3.0
      %vm969 = vcmp.eq.f32.partialorder %v329, 3.0
      %vm970 = vcmp.eq.f32.partialorder %v330, 3.0
      %vm971 = vcmp.eq.f32.partialorder %v331, 3.0
      %vm972 = vcmp.eq.f32.partialorder %v332, 3.0
      %vm973 = vcmp.eq.f32.partialorder %v333, 3.0
      %vm974 = vcmp.eq.f32.partialorder %v334, 3.0
      %vm975 = vcmp.eq.f32.partialorder %v335, 3.0
      %vm976 = vcmp.eq.f32.partialorder %v336, 3.0
      %vm977 = vcmp.eq.f32.partialorder %v337, 3.0
      %vm978 = vcmp.eq.f32.partialorder %v338, 3.0
      %vm979 = vcmp.eq.f32.partialorder %v339, 3.0
      %vm980 = vcmp.eq.f32.partialorder %v340, 3.0
      %vm981 = vcmp.eq.f32.partialorder %v341, 3.0
      %vm982 = vcmp.eq.f32.partialorder %v342, 3.0
      %vm983 = vcmp.eq.f32.partialorder %v343, 3.0
      %vm984 = vcmp.eq.f32.partialorder %v344, 3.0
      %vm985 = vcmp.eq.f32.partialorder %v345, 3.0
      %vm986 = vcmp.eq.f32.partialorder %v346, 3.0
      %vm987 = vcmp.eq.f32.partialorder %v347, 3.0
      %vm988 = vcmp.eq.f32.partialorder %v348, 3.0
      %vm989 = vcmp.eq.f32.partialorder %v349, 3.0
      %vm990 = vcmp.eq.f32.partialorder %v350, 3.0
      %vm991 = vcmp.eq.f32.partialorder %v351, 3.0
      %vm992 = vcmp.eq.f32.partialorder %v352, 3.0
      %vm993 = vcmp.eq.f32.partialorder %v353, 3.0
      %vm994 = vcmp.eq.f32.partialorder %v354, 3.0
      %vm995 = vcmp.eq.f32.partialorder %v355, 3.0
      %vm996 = vcmp.eq.f32.partialorder %v356, 3.0
      %vm997 = vcmp.eq.f32.partialorder %v317, 4.0
      %vm998 = vcmp.eq.f32.partialorder %v318, 4.0
      %vm999 = vcmp.eq.f32.partialorder %v319, 4.0
      %vm1000 = vcmp.eq.f32.partialorder %v320, 4.0
      %vm1001 = vcmp.eq.f32.partialorder %v321, 4.0
      %vm1002 = vcmp.eq.f32.partialorder %v322, 4.0
      %vm1003 = vcmp.eq.f32.partialorder %v323, 4.0
      %vm1004 = vcmp.eq.f32.partialorder %v324, 4.0
      %vm1005 = vcmp.eq.f32.partialorder %v325, 4.0
      %vm1006 = vcmp.eq.f32.partialorder %v326, 4.0
      %vm1007 = vcmp.eq.f32.partialorder %v327, 4.0
      %vm1008 = vcmp.eq.f32.partialorder %v328, 4.0
      %vm1009 = vcmp.eq.f32.partialorder %v329, 4.0
      %vm1010 = vcmp.eq.f32.partialorder %v330, 4.0
      %vm1011 = vcmp.eq.f32.partialorder %v331, 4.0
      %vm1012 = vcmp.eq.f32.partialorder %v332, 4.0
      %vm1013 = vcmp.eq.f32.partialorder %v333, 4.0
      %vm1014 = vcmp.eq.f32.partialorder %v334, 4.0
      %vm1015 = vcmp.eq.f32.partialorder %v335, 4.0
      %vm1016 = vcmp.eq.f32.partialorder %v336, 4.0
      %vm1017 = vcmp.eq.f32.partialorder %v337, 4.0
      %vm1018 = vcmp.eq.f32.partialorder %v338, 4.0
      %vm1019 = vcmp.eq.f32.partialorder %v339, 4.0
      %vm1020 = vcmp.eq.f32.partialorder %v340, 4.0
      %vm1021 = vcmp.eq.f32.partialorder %v341, 4.0
      %vm1022 = vcmp.eq.f32.partialorder %v342, 4.0
      %vm1023 = vcmp.eq.f32.partialorder %v343, 4.0
      %vm1024 = vcmp.eq.f32.partialorder %v344, 4.0
      %vm1025 = vcmp.eq.f32.partialorder %v345, 4.0
      %vm1026 = vcmp.eq.f32.partialorder %v346, 4.0
      %vm1027 = vcmp.eq.f32.partialorder %v347, 4.0
      %vm1028 = vcmp.eq.f32.partialorder %v348, 4.0
      %vm1029 = vcmp.eq.f32.partialorder %v349, 4.0
      %vm1030 = vcmp.eq.f32.partialorder %v350, 4.0
      %vm1031 = vcmp.eq.f32.partialorder %v351, 4.0
      %vm1032 = vcmp.eq.f32.partialorder %v352, 4.0
      %vm1033 = vcmp.eq.f32.partialorder %v353, 4.0
      %vm1034 = vcmp.eq.f32.partialorder %v354, 4.0
      %vm1035 = vcmp.eq.f32.partialorder %v355, 4.0
      %vm1036 = vcmp.eq.f32.partialorder %v356, 4.0
      %vm1037 = vcmp.eq.f32.partialorder %v317, 5.0
      %vm1038 = vcmp.eq.f32.partialorder %v318, 5.0
      %vm1039 = vcmp.eq.f32.partialorder %v319, 5.0
      %vm1040 = vcmp.eq.f32.partialorder %v320, 5.0
      %vm1041 = vcmp.eq.f32.partialorder %v321, 5.0
      %vm1042 = vcmp.eq.f32.partialorder %v322, 5.0
      %vm1043 = vcmp.eq.f32.partialorder %v323, 5.0
      %vm1044 = vcmp.eq.f32.partialorder %v324, 5.0
      %vm1045 = vcmp.eq.f32.partialorder %v325, 5.0
      %vm1046 = vcmp.eq.f32.partialorder %v326, 5.0
      %vm1047 = vcmp.eq.f32.partialorder %v327, 5.0
      %vm1048 = vcmp.eq.f32.partialorder %v328, 5.0
      %vm1049 = vcmp.eq.f32.partialorder %v329, 5.0
      %vm1050 = vcmp.eq.f32.partialorder %v330, 5.0
      %vm1051 = vcmp.eq.f32.partialorder %v331, 5.0
      %vm1052 = vcmp.eq.f32.partialorder %v332, 5.0
      %vm1053 = vcmp.eq.f32.partialorder %v333, 5.0
      %vm1054 = vcmp.eq.f32.partialorder %v334, 5.0
      %vm1055 = vcmp.eq.f32.partialorder %v335, 5.0
      %vm1056 = vcmp.eq.f32.partialorder %v336, 5.0
      %vm1057 = vcmp.eq.f32.partialorder %v337, 5.0
      %vm1058 = vcmp.eq.f32.partialorder %v338, 5.0
      %vm1059 = vcmp.eq.f32.partialorder %v339, 5.0
      %vm1060 = vcmp.eq.f32.partialorder %v340, 5.0
      %vm1061 = vcmp.eq.f32.partialorder %v341, 5.0
      %vm1062 = vcmp.eq.f32.partialorder %v342, 5.0
      %vm1063 = vcmp.eq.f32.partialorder %v343, 5.0
      %vm1064 = vcmp.eq.f32.partialorder %v344, 5.0
      %vm1065 = vcmp.eq.f32.partialorder %v345, 5.0
      %vm1066 = vcmp.eq.f32.partialorder %v346, 5.0
      %vm1067 = vcmp.eq.f32.partialorder %v347, 5.0
      %vm1068 = vcmp.eq.f32.partialorder %v348, 5.0
      %vm1069 = vcmp.eq.f32.partialorder %v349, 5.0
      %vm1070 = vcmp.eq.f32.partialorder %v350, 5.0
      %vm1071 = vcmp.eq.f32.partialorder %v351, 5.0
      %vm1072 = vcmp.eq.f32.partialorder %v352, 5.0
      %vm1073 = vcmp.eq.f32.partialorder %v353, 5.0
      %vm1074 = vcmp.eq.f32.partialorder %v354, 5.0
      %vm1075 = vcmp.eq.f32.partialorder %v355, 5.0
      %vm1076 = vcmp.eq.f32.partialorder %v356, 5.0
      %v1077 = vld [vmem:[#allocation2] sm:$0xff]
      %v1078 = vld [vmem:[#allocation2 + $0x8] sm:$0xff]
      %v1079 = vld [vmem:[#allocation2 + $0x10] sm:$0xff]
      %v1080 = vld [vmem:[#allocation2 + $0x18] sm:$0xff]
      %v1081 = vld [vmem:[#allocation2 + $0x20] sm:$0xff]
      %v1082 = vld [vmem:[#allocation2 + $0x28] sm:$0xff]
      %v1083 = vld [vmem:[#allocation2 + $0x30] sm:$0xff]
      %v1084 = vld [vmem:[#allocation2 + $0x38] sm:$0xff]
      %v1085 = vsel %vm917, %v797, 0.0
      %v1086 = vsel %vm918, %v798, 0.0
      %v1087 = vsel %vm919, %v799, 0.0
      %v1088 = vsel %vm920, %v800, 0.0
      %v1089 = vsel %vm921, %v801, 0.0
      %v1090 = vsel %vm922, %v802, 0.0
      %v1091 = vsel %vm923, %v803, 0.0
      %v1092 = vsel %vm924, %v804, 0.0
      %v1093 = vsel %vm925, %v805, 0.0
      %v1094 = vsel %vm926, %v806, 0.0
      %v1095 = vsel %vm927, %v807, 0.0
      %v1096 = vsel %vm928, %v808, 0.0
      %v1097 = vsel %vm929, %v809, 0.0
      %v1098 = vsel %vm930, %v810, 0.0
      %v1099 = vsel %vm931, %v811, 0.0
      %v1100 = vsel %vm932, %v812, 0.0
      %v1101 = vsel %vm933, %v813, 0.0
      %v1102 = vsel %vm934, %v814, 0.0
      %v1103 = vsel %vm935, %v815, 0.0
      %v1104 = vsel %vm936, %v816, 0.0
      %v1105 = vsel %vm937, %v817, 0.0
      %v1106 = vsel %vm938, %v818, 0.0
      %v1107 = vsel %vm939, %v819, 0.0
      %v1108 = vsel %vm940, %v820, 0.0
      %v1109 = vsel %vm941, %v821, 0.0
      %v1110 = vsel %vm942, %v822, 0.0
      %v1111 = vsel %vm943, %v823, 0.0
      %v1112 = vsel %vm944, %v824, 0.0
      %v1113 = vsel %vm945, %v825, 0.0
      %v1114 = vsel %vm946, %v826, 0.0
      %v1115 = vsel %vm947, %v827, 0.0
      %v1116 = vsel %vm948, %v828, 0.0
      %v1117 = vsel %vm949, %v829, 0.0
      %v1118 = vsel %vm950, %v830, 0.0
      %v1119 = vsel %vm951, %v831, 0.0
      %v1120 = vsel %vm952, %v832, 0.0
      %v1121 = vsel %vm953, %v833, 0.0
      %v1122 = vsel %vm954, %v834, 0.0
      %v1123 = vsel %vm955, %v835, 0.0
      %v1124 = vsel %vm956, %v836, 0.0
      %v1125 = vsel %vm877, %v677, %v1085
      %v1126 = vsel %vm878, %v678, %v1086
      %v1127 = vsel %vm879, %v679, %v1087
      %v1128 = vsel %vm880, %v680, %v1088
      %v1129 = vsel %vm881, %v681, %v1089
      %v1130 = vsel %vm882, %v682, %v1090
      %v1131 = vsel %vm883, %v683, %v1091
      %v1132 = vsel %vm884, %v684, %v1092
      %v1133 = vsel %vm885, %v685, %v1093
      %v1134 = vsel %vm886, %v686, %v1094
      %v1135 = vsel %vm887, %v687, %v1095
      %v1136 = vsel %vm888, %v688, %v1096
      %v1137 = vsel %vm889, %v689, %v1097
      %v1138 = vsel %vm890, %v690, %v1098
      %v1139 = vsel %vm891, %v691, %v1099
      %v1140 = vsel %vm892, %v692, %v1100
      %v1141 = vsel %vm893, %v693, %v1101
      %v1142 = vsel %vm894, %v694, %v1102
      %v1143 = vsel %vm895, %v695, %v1103
      %v1144 = vsel %vm896, %v696, %v1104
      %v1145 = vsel %vm897, %v697, %v1105
      %v1146 = vsel %vm898, %v698, %v1106
      %v1147 = vsel %vm899, %v699, %v1107
      %v1148 = vsel %vm900, %v700, %v1108
      %v1149 = vsel %vm901, %v701, %v1109
      %v1150 = vsel %vm902, %v702, %v1110
      %v1151 = vsel %vm903, %v703, %v1111
      %v1152 = vsel %vm904, %v704, %v1112
      %v1153 = vsel %vm905, %v705, %v1113
      %v1154 = vsel %vm906, %v706, %v1114
      %v1155 = vsel %vm907, %v707, %v1115
      %v1156 = vsel %vm908, %v708, %v1116
      %v1157 = vsel %vm909, %v709, %v1117
      %v1158 = vsel %vm910, %v710, %v1118
      %v1159 = vsel %vm911, %v711, %v1119
      %v1160 = vsel %vm912, %v712, %v1120
      %v1161 = vsel %vm913, %v713, %v1121
      %v1162 = vsel %vm914, %v714, %v1122
      %v1163 = vsel %vm915, %v715, %v1123
      %v1164 = vsel %vm916, %v716, %v1124
      %v1165 = vsel %vm837, %v517, %v1125
      %v1166 = vsel %vm838, %v518, %v1126
      %v1167 = vsel %vm839, %v519, %v1127
      %v1168 = vsel %vm840, %v520, %v1128
      %v1169 = vsel %vm841, %v521, %v1129
      %v1170 = vsel %vm842, %v522, %v1130
      %v1171 = vsel %vm843, %v523, %v1131
      %v1172 = vsel %vm844, %v524, %v1132
      %v1173 = vsel %vm845, %v525, %v1133
      %v1174 = vsel %vm846, %v526, %v1134
      %v1175 = vsel %vm847, %v527, %v1135
      %v1176 = vsel %vm848, %v528, %v1136
      %v1177 = vsel %vm849, %v529, %v1137
      %v1178 = vsel %vm850, %v530, %v1138
      %v1179 = vsel %vm851, %v531, %v1139
      %v1180 = vsel %vm852, %v532, %v1140
      %v1181 = vsel %vm853, %v533, %v1141
      %v1182 = vsel %vm854, %v534, %v1142
      %v1183 = vsel %vm855, %v535, %v1143
      %v1184 = vsel %vm856, %v536, %v1144
      %v1185 = vsel %vm857, %v537, %v1145
      %v1186 = vsel %vm858, %v538, %v1146
      %v1187 = vsel %vm859, %v539, %v1147
      %v1188 = vsel %vm860, %v540, %v1148
      %v1189 = vsel %vm861, %v541, %v1149
      %v1190 = vsel %vm862, %v542, %v1150
      %v1191 = vsel %vm863, %v543, %v1151
      %v1192 = vsel %vm864, %v544, %v1152
      %v1193 = vsel %vm865, %v545, %v1153
      %v1194 = vsel %vm866, %v546, %v1154
      %v1195 = vsel %vm867, %v547, %v1155
      %v1196 = vsel %vm868, %v548, %v1156
      %v1197 = vsel %vm869, %v549, %v1157
      %v1198 = vsel %vm870, %v550, %v1158
      %v1199 = vsel %vm871, %v551, %v1159
      %v1200 = vsel %vm872, %v552, %v1160
      %v1201 = vsel %vm873, %v553, %v1161
      %v1202 = vsel %vm874, %v554, %v1162
      %v1203 = vsel %vm875, %v555, %v1163
      %v1204 = vsel %vm876, %v556, %v1164
      %v1205 = vpack.c.bf16 %v1170, %v1165
      %v1206 = vpack.c.bf16 %v1171, %v1166
      %v1207 = vpack.c.bf16 %v1172, %v1167
      %v1208 = vpack.c.bf16 %v1173, %v1168
      %v1209 = vpack.c.bf16 %v1174, %v1169
      %v1210 = vpack.c.bf16 %v1180, %v1175
      %v1211 = vpack.c.bf16 %v1181, %v1176
      %v1212 = vpack.c.bf16 %v1182, %v1177
      %v1213 = vpack.c.bf16 %v1183, %v1178
      %v1214 = vpack.c.bf16 %v1184, %v1179
      %v1215 = vpack.c.bf16 %v1190, %v1185
      %v1216 = vpack.c.bf16 %v1191, %v1186
      %v1217 = vpack.c.bf16 %v1192, %v1187
      %v1218 = vpack.c.bf16 %v1193, %v1188
      %v1219 = vpack.c.bf16 %v1194, %v1189
      %v1220 = vpack.c.bf16 %v1200, %v1195
      %v1221 = vpack.c.bf16 %v1201, %v1196
      %v1222 = vpack.c.bf16 %v1202, %v1197
      %v1223 = vpack.c.bf16 %v1203, %v1198
      %v1224 = vpack.c.bf16 %v1204, %v1199
      %v1225 = vld [vmem:[%s214] sm:$0xf]
      %v1226 = vld [vmem:[%s214 + $0x4] sm:$0xf]
      %v1227 = vld [vmem:[%s214 + $0x8] sm:$0xf]
      %v1228 = vld [vmem:[%s214 + $0xc] sm:$0xf]
      %v1229 = vld [vmem:[%s214 + $0x10] sm:$0xf]
      %v1230 = vld [vmem:[%s214 + $0x14] sm:$0xf]
      %v1231 = vld [vmem:[%s214 + $0x18] sm:$0xf]
      %v1232 = vld [vmem:[%s214 + $0x1c] sm:$0xf]
      %v1233 = vld [vmem:[%s214 + $0x20] sm:$0xf]
      %v1234 = vld [vmem:[%s214 + $0x24] sm:$0xf]
      %v1235 = vld [vmem:[%s214 + $0x28] sm:$0xf]
      %v1236 = vld [vmem:[%s214 + $0x2c] sm:$0xf]
      %v1237 = vld [vmem:[%s214 + $0x30] sm:$0xf]
      %v1238 = vld [vmem:[%s214 + $0x34] sm:$0xf]
      %v1239 = vld [vmem:[%s214 + $0x38] sm:$0xf]
      %v1240 = vld [vmem:[%s214 + $0x3c] sm:$0xf]
      %v1241 = vld [vmem:[%s214 + $0x40] sm:$0xf]
      %v1242 = vld [vmem:[%s214 + $0x44] sm:$0xf]
      %v1243 = vld [vmem:[%s214 + $0x48] sm:$0xf]
      %v1244 = vld [vmem:[%s214 + $0x4c] sm:$0xf]
      %v1245 = vld [vmem:[%s214 + $0x50] sm:$0xf]
      %v1246 = vld [vmem:[%s214 + $0x54] sm:$0xf]
      %v1247 = vld [vmem:[%s214 + $0x58] sm:$0xf]
      %v1248 = vld [vmem:[%s214 + $0x5c] sm:$0xf]
      %v1249 = vld [vmem:[%s214 + $0x60] sm:$0xf]
      %v1250 = vld [vmem:[%s214 + $0x64] sm:$0xf]
      %v1251 = vld [vmem:[%s214 + $0x68] sm:$0xf]
      %v1252 = vld [vmem:[%s214 + $0x6c] sm:$0xf]
      %v1253 = vld [vmem:[%s214 + $0x70] sm:$0xf]
      %v1254 = vld [vmem:[%s214 + $0x74] sm:$0xf]
      %v1255 = vld [vmem:[%s214 + $0x78] sm:$0xf]
      %v1256 = vld [vmem:[%s214 + $0x7c] sm:$0xf]
      %v1257 = vld [vmem:[%s214 + $0x80] sm:$0xf]
      %v1258 = vld [vmem:[%s214 + $0x84] sm:$0xf]
      %v1259 = vld [vmem:[%s214 + $0x88] sm:$0xf]
      %v1260 = vld [vmem:[%s214 + $0x8c] sm:$0xf]
      %v1261 = vld [vmem:[%s214 + $0x90] sm:$0xf]
      %v1262 = vld [vmem:[%s214 + $0x94] sm:$0xf]
      %v1263 = vld [vmem:[%s214 + $0x98] sm:$0xf]
      %v1264 = vld [vmem:[%s214 + $0x9c] sm:$0xf]
      %v1265 = vld [vmem:[%s214 + $0xa0] sm:$0xf]
      %v1266 = vld [vmem:[%s214 + $0xa4] sm:$0xf]
      %v1267 = vld [vmem:[%s214 + $0xa8] sm:$0xf]
      %v1268 = vld [vmem:[%s214 + $0xac] sm:$0xf]
      %v1269 = vld [vmem:[%s214 + $0xb0] sm:$0xf]
      %v1270 = vld [vmem:[%s214 + $0xb4] sm:$0xf]
      %v1271 = vld [vmem:[%s214 + $0xb8] sm:$0xf]
      %v1272 = vld [vmem:[%s214 + $0xbc] sm:$0xf]
      %v1273 = vld [vmem:[%s214 + $0xc0] sm:$0xf]
      %v1274 = vld [vmem:[%s214 + $0xc4] sm:$0xf]
      %v1275 = vld [vmem:[%s214 + $0xc8] sm:$0xf]
      %v1276 = vld [vmem:[%s214 + $0xcc] sm:$0xf]
      %v1277 = vld [vmem:[%s214 + $0xd0] sm:$0xf]
      %v1278 = vld [vmem:[%s214 + $0xd4] sm:$0xf]
      %v1279 = vld [vmem:[%s214 + $0xd8] sm:$0xf]
      %v1280 = vld [vmem:[%s214 + $0xdc] sm:$0xf]
      %v1281 = vld [vmem:[%s214 + $0xe0] sm:$0xf]
      %v1282 = vld [vmem:[%s214 + $0xe4] sm:$0xf]
      %v1283 = vld [vmem:[%s214 + $0xe8] sm:$0xf]
      %v1284 = vld [vmem:[%s214 + $0xec] sm:$0xf]
      %v1285 = vld [vmem:[%s214 + $0xf0] sm:$0xf]
      %v1286 = vld [vmem:[%s214 + $0xf4] sm:$0xf]
      %v1287 = vld [vmem:[%s214 + $0xf8] sm:$0xf]
      %v1288 = vld [vmem:[%s214 + $0xfc] sm:$0xf]
      %v1289 = vld [vmem:[%s214 + $0x100] sm:$0xf]
      %v1290 = vld [vmem:[%s214 + $0x104] sm:$0xf]
      %v1291 = vld [vmem:[%s214 + $0x108] sm:$0xf]
      %v1292 = vld [vmem:[%s214 + $0x10c] sm:$0xf]
      %v1293 = vld [vmem:[%s214 + $0x110] sm:$0xf]
      %v1294 = vld [vmem:[%s214 + $0x114] sm:$0xf]
      %v1295 = vld [vmem:[%s214 + $0x118] sm:$0xf]
      %v1296 = vld [vmem:[%s214 + $0x11c] sm:$0xf]
      %v1369 = vunpack.c.l.b16 %v1225
      %v1370 = vunpack.c.l.b16 %v1226
      %v1371 = vunpack.c.l.b16 %v1227
      %v1372 = vunpack.c.l.b16 %v1228
      %v1373 = vunpack.c.l.b16 %v1229
      %v1374 = vunpack.c.l.b16 %v1230
      %v1375 = vunpack.c.l.b16 %v1231
      %v1376 = vunpack.c.l.b16 %v1232
      %v1377 = vunpack.c.l.b16 %v1233
      %v1378 = vunpack.c.l.b16 %v1234
      %v1379 = vunpack.c.l.b16 %v1235
      %v1380 = vunpack.c.l.b16 %v1236
      %v1381 = vunpack.c.l.b16 %v1237
      %v1382 = vunpack.c.l.b16 %v1238
      %v1383 = vunpack.c.l.b16 %v1239
      %v1384 = vunpack.c.l.b16 %v1240
      %v1385 = vunpack.c.l.b16 %v1241
      %v1386 = vunpack.c.l.b16 %v1242
      %v1387 = vunpack.c.l.b16 %v1243
      %v1388 = vunpack.c.l.b16 %v1244
      %v1389 = vunpack.c.l.b16 %v1245
      %v1390 = vunpack.c.l.b16 %v1246
      %v1391 = vunpack.c.l.b16 %v1247
      %v1392 = vunpack.c.l.b16 %v1248
      %v1393 = vunpack.c.l.b16 %v1249
      %v1394 = vunpack.c.l.b16 %v1250
      %v1395 = vunpack.c.l.b16 %v1251
      %v1396 = vunpack.c.l.b16 %v1252
      %v1397 = vunpack.c.l.b16 %v1253
      %v1398 = vunpack.c.l.b16 %v1254
      %v1399 = vunpack.c.l.b16 %v1255
      %v1400 = vunpack.c.l.b16 %v1256
      %v1401 = vunpack.c.l.b16 %v1257
      %v1402 = vunpack.c.l.b16 %v1258
      %v1403 = vunpack.c.l.b16 %v1259
      %v1404 = vunpack.c.l.b16 %v1260
      %v1405 = vunpack.c.l.b16 %v1261
      %v1406 = vunpack.c.l.b16 %v1262
      %v1407 = vunpack.c.l.b16 %v1263
      %v1408 = vunpack.c.l.b16 %v1264
      %v1409 = vunpack.c.l.b16 %v1265
      %v1410 = vunpack.c.l.b16 %v1266
      %v1411 = vunpack.c.l.b16 %v1267
      %v1412 = vunpack.c.l.b16 %v1268
      %v1413 = vunpack.c.l.b16 %v1269
      %v1414 = vunpack.c.l.b16 %v1270
      %v1415 = vunpack.c.l.b16 %v1271
      %v1416 = vunpack.c.l.b16 %v1272
      %v1417 = vunpack.c.l.b16 %v1273
      %v1418 = vunpack.c.l.b16 %v1274
      %v1419 = vunpack.c.l.b16 %v1275
      %v1420 = vunpack.c.l.b16 %v1276
      %v1421 = vunpack.c.l.b16 %v1277
      %v1422 = vunpack.c.l.b16 %v1278
      %v1423 = vunpack.c.l.b16 %v1279
      %v1424 = vunpack.c.l.b16 %v1280
      %v1425 = vunpack.c.l.b16 %v1281
      %v1426 = vunpack.c.l.b16 %v1282
      %v1427 = vunpack.c.l.b16 %v1283
      %v1428 = vunpack.c.l.b16 %v1284
      %v1429 = vunpack.c.l.b16 %v1285
      %v1430 = vunpack.c.l.b16 %v1286
      %v1431 = vunpack.c.l.b16 %v1287
      %v1432 = vunpack.c.l.b16 %v1288
      %v1433 = vunpack.c.l.b16 %v1289
      %v1434 = vunpack.c.l.b16 %v1290
      %v1435 = vunpack.c.l.b16 %v1291
      %v1436 = vunpack.c.l.b16 %v1292
      %v1437 = vunpack.c.l.b16 %v1293
      %v1438 = vunpack.c.l.b16 %v1294
      %v1439 = vunpack.c.l.b16 %v1295
      %v1440 = vunpack.c.l.b16 %v1296
      %v1441 = vpack.c.b16 %v1370, %v1369
      %v1442 = vpack.c.b16 %v1372, %v1371
      %v1443 = vpack.c.b16 %v1374, %v1373
      %v1444 = vpack.c.b16 %v1376, %v1375
      %v1445 = vpack.c.b16 %v1378, %v1377
      %v1446 = vpack.c.b16 %v1380, %v1379
      %v1447 = vpack.c.b16 %v1382, %v1381
      %v1448 = vpack.c.b16 %v1384, %v1383
      %v1449 = vpack.c.b16 %v1386, %v1385
      %v1450 = vpack.c.b16 %v1388, %v1387
      %v1451 = vpack.c.b16 %v1390, %v1389
      %v1452 = vpack.c.b16 %v1392, %v1391
      %v1453 = vpack.c.b16 %v1394, %v1393
      %v1454 = vpack.c.b16 %v1396, %v1395
      %v1455 = vpack.c.b16 %v1398, %v1397
      %v1456 = vpack.c.b16 %v1400, %v1399
      %v1457 = vpack.c.b16 %v1402, %v1401
      %v1458 = vpack.c.b16 %v1404, %v1403
      %v1459 = vpack.c.b16 %v1406, %v1405
      %v1460 = vpack.c.b16 %v1408, %v1407
      %v1461 = vpack.c.b16 %v1410, %v1409
      %v1462 = vpack.c.b16 %v1412, %v1411
      %v1463 = vpack.c.b16 %v1414, %v1413
      %v1464 = vpack.c.b16 %v1416, %v1415
      %v1465 = vpack.c.b16 %v1418, %v1417
      %v1466 = vpack.c.b16 %v1420, %v1419
      %v1467 = vpack.c.b16 %v1422, %v1421
      %v1468 = vpack.c.b16 %v1424, %v1423
      %v1469 = vpack.c.b16 %v1426, %v1425
      %v1470 = vpack.c.b16 %v1428, %v1427
      %v1471 = vpack.c.b16 %v1430, %v1429
      %v1472 = vpack.c.b16 %v1432, %v1431
      %v1473 = vpack.c.b16 %v1434, %v1433
      %v1474 = vpack.c.b16 %v1436, %v1435
      %v1475 = vpack.c.b16 %v1438, %v1437
      %v1476 = vpack.c.b16 %v1440, %v1439
      %vm1513 = vcmask 523264
      %v1515 = vsel %vm1513, %v1209, 0
      %v1518 = vsel %vm1513, %v1214, 0
      %v1521 = vsel %vm1513, %v1219, 0
      %v1524 = vsel %vm1513, %v1224, 0
      %1526 = vmatprep.subr.bf16.mxu0 0
      %1527 = vmatpush1.bf16.msra.mxu0 %v1448
      %1528 = vmatprep.subr.bf16.mxu0 0
      %1529 = vmatpush1.bf16.msra.mxu0 %v1447
      %1530 = vmatprep.subr.bf16.mxu0 0
      %1531 = vmatpush1.bf16.msra.mxu0 %v1446
      %1532 = vmatprep.subr.bf16.mxu0 0
      %1533 = vmatpush1.bf16.msra.mxu0 %v1445
      %1534 = vmatprep.subr.bf16.mxu0 0
      %1535 = vmatpush1.bf16.msra.mxu0 %v1444
      %1536 = vmatprep.subr.bf16.mxu0 0
      %1537 = vmatpush1.bf16.msra.mxu0 %v1443
      %1538 = vmatprep.subr.bf16.mxu0 0
      %1539 = vmatpush1.bf16.msra.mxu0 %v1442
      %1540 = vmatprep.subr.bf16.mxu0 0
      %1541 = vmatpush1.bf16.msra.mxu0 %v1441
      %1542 = vmatprep.subr.bf16.mxu0 0
      %1543 = vmatpush2.bf16.msra.mxu0 %v1456
      %1544 = vmatprep.subr.bf16.mxu0 0
      %1545 = vmatpush2.bf16.msra.mxu0 %v1455
      %1546 = vmatprep.subr.bf16.mxu0 0
      %1547 = vmatpush2.bf16.msra.mxu0 %v1454
      %1548 = vmatprep.subr.bf16.mxu0 0
      %1549 = vmatpush2.bf16.msra.mxu0 %v1453
      %1550 = vmatprep.subr.bf16.mxu0 0
      %1551 = vmatpush2.bf16.msra.mxu0 %v1452
      %1552 = vmatprep.subr.bf16.mxu0 0
      %1553 = vmatpush2.bf16.msra.mxu0 %v1451
      %1554 = vmatprep.subr.bf16.mxu0 0
      %1555 = vmatpush2.bf16.msra.mxu0 %v1450
      %1556 = vmatprep.subr.bf16.mxu0 0
      %1557 = vmatpush2.bf16.msra.mxu0 %v1449
      %1558 = vmatprep.mubr.bf16.mxu0 %v1206
      %1559 = vmatmul.mubr.bf16.gmra.mxu0 %v1205
      %v1560 = vpop.f32.mrf.mxu0
      %v1561 = vadd.f32 0.0, %v1560
      %v1562 = vpop.f32.mrf.mxu0
      %v1563 = vpop.f32.mrf.mxu0
      %v1564 = vadd.f32 0.0, %v1563
      %v1565 = vpop.f32.mrf.mxu0
      %1566 = vmatprep.mubr.bf16.mxu0 %v1211
      %1567 = vmatmul.mubr.bf16.gmra.mxu0 %v1210
      %v1568 = vpop.f32.mrf.mxu0
      %v1569 = vadd.f32 0.0, %v1568
      %v1570 = vpop.f32.mrf.mxu0
      %v1571 = vpop.f32.mrf.mxu0
      %v1572 = vadd.f32 0.0, %v1571
      %v1573 = vpop.f32.mrf.mxu0
      %1574 = vmatprep.mubr.bf16.mxu0 %v1216
      %1575 = vmatmul.mubr.bf16.gmra.mxu0 %v1215
      %v1576 = vpop.f32.mrf.mxu0
      %v1577 = vadd.f32 0.0, %v1576
      %v1578 = vpop.f32.mrf.mxu0
      %v1579 = vpop.f32.mrf.mxu0
      %v1580 = vadd.f32 0.0, %v1579
      %v1581 = vpop.f32.mrf.mxu0
      %1582 = vmatprep.mubr.bf16.mxu0 %v1221
      %1583 = vmatmul.mubr.bf16.gmra.mxu0 %v1220
      %v1584 = vpop.f32.mrf.mxu0
      %v1585 = vadd.f32 0.0, %v1584
      %v1586 = vpop.f32.mrf.mxu0
      %v1587 = vpop.f32.mrf.mxu0
      %v1588 = vadd.f32 0.0, %v1587
      %v1589 = vpop.f32.mrf.mxu0
      %1590 = vdwg.mxu0
      %1591 = vmatprep.subr.bf16.mxu0 0
      %1592 = vmatpush1.bf16.msra.mxu0 %v1464
      %1593 = vmatprep.subr.bf16.mxu0 0
      %1594 = vmatpush1.bf16.msra.mxu0 %v1463
      %1595 = vmatprep.subr.bf16.mxu0 0
      %1596 = vmatpush1.bf16.msra.mxu0 %v1462
      %1597 = vmatprep.subr.bf16.mxu0 0
      %1598 = vmatpush1.bf16.msra.mxu0 %v1461
      %1599 = vmatprep.subr.bf16.mxu0 0
      %1600 = vmatpush1.bf16.msra.mxu0 %v1460
      %1601 = vmatprep.subr.bf16.mxu0 0
      %1602 = vmatpush1.bf16.msra.mxu0 %v1459
      %1603 = vmatprep.subr.bf16.mxu0 0
      %1604 = vmatpush1.bf16.msra.mxu0 %v1458
      %1605 = vmatprep.subr.bf16.mxu0 0
      %1606 = vmatpush1.bf16.msra.mxu0 %v1457
      %1607 = vmatprep.subr.bf16.mxu0 0
      %1608 = vmatpush2.bf16.msra.mxu0 %v1472
      %1609 = vmatprep.subr.bf16.mxu0 0
      %1610 = vmatpush2.bf16.msra.mxu0 %v1471
      %1611 = vmatprep.subr.bf16.mxu0 0
      %1612 = vmatpush2.bf16.msra.mxu0 %v1470
      %1613 = vmatprep.subr.bf16.mxu0 0
      %1614 = vmatpush2.bf16.msra.mxu0 %v1469
      %1615 = vmatprep.subr.bf16.mxu0 0
      %1616 = vmatpush2.bf16.msra.mxu0 %v1468
      %1617 = vmatprep.subr.bf16.mxu0 0
      %1618 = vmatpush2.bf16.msra.mxu0 %v1467
      %1619 = vmatprep.subr.bf16.mxu0 0
      %1620 = vmatpush2.bf16.msra.mxu0 %v1466
      %1621 = vmatprep.subr.bf16.mxu0 0
      %1622 = vmatpush2.bf16.msra.mxu0 %v1465
      %1623 = vmatprep.mubr.bf16.mxu0 %v1208
      %1624 = vmatmul.mubr.bf16.gmra.mxu0 %v1207
      %v1625 = vpop.f32.mrf.mxu0
      %v1626 = vadd.f32 %v1561, %v1625
      %v1627 = vpop.f32.mrf.mxu0
      %v1628 = vpop.f32.mrf.mxu0
      %v1629 = vadd.f32 %v1564, %v1628
      %v1630 = vpop.f32.mrf.mxu0
      %1631 = vmatprep.mubr.bf16.mxu0 %v1213
      %1632 = vmatmul.mubr.bf16.gmra.mxu0 %v1212
      %v1633 = vpop.f32.mrf.mxu0
      %v1634 = vadd.f32 %v1569, %v1633
      %v1635 = vpop.f32.mrf.mxu0
      %v1636 = vpop.f32.mrf.mxu0
      %v1637 = vadd.f32 %v1572, %v1636
      %v1638 = vpop.f32.mrf.mxu0
      %1639 = vmatprep.mubr.bf16.mxu0 %v1218
      %1640 = vmatmul.mubr.bf16.gmra.mxu0 %v1217
      %v1641 = vpop.f32.mrf.mxu0
      %v1642 = vadd.f32 %v1577, %v1641
      %v1643 = vpop.f32.mrf.mxu0
      %v1644 = vpop.f32.mrf.mxu0
      %v1645 = vadd.f32 %v1580, %v1644
      %v1646 = vpop.f32.mrf.mxu0
      %1647 = vmatprep.mubr.bf16.mxu0 %v1223
      %1648 = vmatmul.mubr.bf16.gmra.mxu0 %v1222
      %v1649 = vpop.f32.mrf.mxu0
      %v1650 = vadd.f32 %v1585, %v1649
      %v1651 = vpop.f32.mrf.mxu0
      %v1652 = vpop.f32.mrf.mxu0
      %v1653 = vadd.f32 %v1588, %v1652
      %v1654 = vpop.f32.mrf.mxu0
      %1655 = vdwg.mxu0
      %1656 = vmatprep.subr.bf16.mxu0 0
      %1657 = vmatpush1.bf16.msra.mxu0 0
      %1658 = vmatprep.subr.bf16.mxu0 0
      %1659 = vmatpush1.bf16.msra.mxu0 0
      %1660 = vmatprep.subr.bf16.mxu0 0
      %1661 = vmatpush1.bf16.msra.mxu0 0
      %1662 = vmatprep.subr.bf16.mxu0 0
      %1663 = vmatpush1.bf16.msra.mxu0 0
      %1664 = vmatprep.subr.bf16.mxu0 0
      %1665 = vmatpush1.bf16.msra.mxu0 %v1476
      %1666 = vmatprep.subr.bf16.mxu0 0
      %1667 = vmatpush1.bf16.msra.mxu0 %v1475
      %1668 = vmatprep.subr.bf16.mxu0 0
      %1669 = vmatpush1.bf16.msra.mxu0 %v1474
      %1670 = vmatprep.subr.bf16.mxu0 0
      %1671 = vmatpush1.bf16.msra.mxu0 %v1473
      %1672 = vmatprep.subr.bf16.mxu0 0
      %1673 = vmatpush2.bf16.msra.mxu0 0
      %1674 = vmatprep.subr.bf16.mxu0 0
      %1675 = vmatpush2.bf16.msra.mxu0 0
      %1676 = vmatprep.subr.bf16.mxu0 0
      %1677 = vmatpush2.bf16.msra.mxu0 0
      %1678 = vmatprep.subr.bf16.mxu0 0
      %1679 = vmatpush2.bf16.msra.mxu0 0
      %1680 = vmatprep.subr.bf16.mxu0 0
      %1681 = vmatpush2.bf16.msra.mxu0 0
      %1682 = vmatprep.subr.bf16.mxu0 0
      %1683 = vmatpush2.bf16.msra.mxu0 0
      %1684 = vmatprep.subr.bf16.mxu0 0
      %1685 = vmatpush2.bf16.msra.mxu0 0
      %1686 = vmatprep.subr.bf16.mxu0 0
      %1687 = vmatpush2.bf16.msra.mxu0 0
      %1688 = vmatprep.mubr.bf16.mxu0 0
      %1689 = vmatmul.mubr.bf16.gmra.mxu0 %v1515
      %v1690 = vpop.f32.mrf.mxu0
      %v1691 = vadd.f32 %v1626, %v1690
      %v1692 = vpop.f32.mrf.mxu0
      %v1693 = vpop.f32.mrf.mxu0
      %v1694 = vadd.f32 %v1629, %v1693
      %v1695 = vpop.f32.mrf.mxu0
      %1696 = vmatprep.mubr.bf16.mxu0 0
      %1697 = vmatmul.mubr.bf16.gmra.mxu0 %v1518
      %v1698 = vpop.f32.mrf.mxu0
      %v1699 = vadd.f32 %v1634, %v1698
      %v1700 = vpop.f32.mrf.mxu0
      %v1701 = vpop.f32.mrf.mxu0
      %v1702 = vadd.f32 %v1637, %v1701
      %v1703 = vpop.f32.mrf.mxu0
      %1704 = vmatprep.mubr.bf16.mxu0 0
      %1705 = vmatmul.mubr.bf16.gmra.mxu0 %v1521
      %v1706 = vpop.f32.mrf.mxu0
      %v1707 = vadd.f32 %v1642, %v1706
      %v1708 = vpop.f32.mrf.mxu0
      %v1709 = vpop.f32.mrf.mxu0
      %v1710 = vadd.f32 %v1645, %v1709
      %v1711 = vpop.f32.mrf.mxu0
      %1712 = vmatprep.mubr.bf16.mxu0 0
      %1713 = vmatmul.mubr.bf16.gmra.mxu0 %v1524
      %v1714 = vpop.f32.mrf.mxu0
      %v1715 = vadd.f32 %v1650, %v1714
      %v1716 = vpop.f32.mrf.mxu0
      %v1717 = vpop.f32.mrf.mxu0
      %v1718 = vadd.f32 %v1653, %v1717
      %v1719 = vpop.f32.mrf.mxu0
      %1720 = vdwg.mxu0
      %v1721 = vadd.f32 %v1077, %v1691
      %v1722 = vadd.f32 %v1078, %v1694
      %v1723 = vadd.f32 %v1079, %v1699
      %v1724 = vadd.f32 %v1080, %v1702
      %v1725 = vadd.f32 %v1081, %v1707
      %v1726 = vadd.f32 %v1082, %v1710
      %v1727 = vadd.f32 %v1083, %v1715
      %v1728 = vadd.f32 %v1084, %v1718
      %v1729 = vsel %vm957, %v797, 0.0
      %v1730 = vsel %vm958, %v798, 0.0
      %v1731 = vsel %vm959, %v799, 0.0
      %v1732 = vsel %vm960, %v800, 0.0
      %v1733 = vsel %vm961, %v801, 0.0
      %v1734 = vsel %vm962, %v802, 0.0
      %v1735 = vsel %vm963, %v803, 0.0
      %v1736 = vsel %vm964, %v804, 0.0
      %v1737 = vsel %vm965, %v805, 0.0
      %v1738 = vsel %vm966, %v806, 0.0
      %v1739 = vsel %vm967, %v807, 0.0
      %v1740 = vsel %vm968, %v808, 0.0
      %v1741 = vsel %vm969, %v809, 0.0
      %v1742 = vsel %vm970, %v810, 0.0
      %v1743 = vsel %vm971, %v811, 0.0
      %v1744 = vsel %vm972, %v812, 0.0
      %v1745 = vsel %vm973, %v813, 0.0
      %v1746 = vsel %vm974, %v814, 0.0
      %v1747 = vsel %vm975, %v815, 0.0
      %v1748 = vsel %vm976, %v816, 0.0
      %v1749 = vsel %vm977, %v817, 0.0
      %v1750 = vsel %vm978, %v818, 0.0
      %v1751 = vsel %vm979, %v819, 0.0
      %v1752 = vsel %vm980, %v820, 0.0
      %v1753 = vsel %vm981, %v821, 0.0
      %v1754 = vsel %vm982, %v822, 0.0
      %v1755 = vsel %vm983, %v823, 0.0
      %v1756 = vsel %vm984, %v824, 0.0
      %v1757 = vsel %vm985, %v825, 0.0
      %v1758 = vsel %vm986, %v826, 0.0
      %v1759 = vsel %vm987, %v827, 0.0
      %v1760 = vsel %vm988, %v828, 0.0
      %v1761 = vsel %vm989, %v829, 0.0
      %v1762 = vsel %vm990, %v830, 0.0
      %v1763 = vsel %vm991, %v831, 0.0
      %v1764 = vsel %vm992, %v832, 0.0
      %v1765 = vsel %vm993, %v833, 0.0
      %v1766 = vsel %vm994, %v834, 0.0
      %v1767 = vsel %vm995, %v835, 0.0
      %v1768 = vsel %vm996, %v836, 0.0
      %v1769 = vsel %vm917, %v677, %v1729
      %v1770 = vsel %vm918, %v678, %v1730
      %v1771 = vsel %vm919, %v679, %v1731
      %v1772 = vsel %vm920, %v680, %v1732
      %v1773 = vsel %vm921, %v681, %v1733
      %v1774 = vsel %vm922, %v682, %v1734
      %v1775 = vsel %vm923, %v683, %v1735
      %v1776 = vsel %vm924, %v684, %v1736
      %v1777 = vsel %vm925, %v685, %v1737
      %v1778 = vsel %vm926, %v686, %v1738
      %v1779 = vsel %vm927, %v687, %v1739
      %v1780 = vsel %vm928, %v688, %v1740
      %v1781 = vsel %vm929, %v689, %v1741
      %v1782 = vsel %vm930, %v690, %v1742
      %v1783 = vsel %vm931, %v691, %v1743
      %v1784 = vsel %vm932, %v692, %v1744
      %v1785 = vsel %vm933, %v693, %v1745
      %v1786 = vsel %vm934, %v694, %v1746
      %v1787 = vsel %vm935, %v695, %v1747
      %v1788 = vsel %vm936, %v696, %v1748
      %v1789 = vsel %vm937, %v697, %v1749
      %v1790 = vsel %vm938, %v698, %v1750
      %v1791 = vsel %vm939, %v699, %v1751
      %v1792 = vsel %vm940, %v700, %v1752
      %v1793 = vsel %vm941, %v701, %v1753
      %v1794 = vsel %vm942, %v702, %v1754
      %v1795 = vsel %vm943, %v703, %v1755
      %v1796 = vsel %vm944, %v704, %v1756
      %v1797 = vsel %vm945, %v705, %v1757
      %v1798 = vsel %vm946, %v706, %v1758
      %v1799 = vsel %vm947, %v707, %v1759
      %v1800 = vsel %vm948, %v708, %v1760
      %v1801 = vsel %vm949, %v709, %v1761
      %v1802 = vsel %vm950, %v710, %v1762
      %v1803 = vsel %vm951, %v711, %v1763
      %v1804 = vsel %vm952, %v712, %v1764
      %v1805 = vsel %vm953, %v713, %v1765
      %v1806 = vsel %vm954, %v714, %v1766
      %v1807 = vsel %vm955, %v715, %v1767
      %v1808 = vsel %vm956, %v716, %v1768
      %v1809 = vsel %vm877, %v517, %v1769
      %v1810 = vsel %vm878, %v518, %v1770
      %v1811 = vsel %vm879, %v519, %v1771
      %v1812 = vsel %vm880, %v520, %v1772
      %v1813 = vsel %vm881, %v521, %v1773
      %v1814 = vsel %vm882, %v522, %v1774
      %v1815 = vsel %vm883, %v523, %v1775
      %v1816 = vsel %vm884, %v524, %v1776
      %v1817 = vsel %vm885, %v525, %v1777
      %v1818 = vsel %vm886, %v526, %v1778
      %v1819 = vsel %vm887, %v527, %v1779
      %v1820 = vsel %vm888, %v528, %v1780
      %v1821 = vsel %vm889, %v529, %v1781
      %v1822 = vsel %vm890, %v530, %v1782
      %v1823 = vsel %vm891, %v531, %v1783
      %v1824 = vsel %vm892, %v532, %v1784
      %v1825 = vsel %vm893, %v533, %v1785
      %v1826 = vsel %vm894, %v534, %v1786
      %v1827 = vsel %vm895, %v535, %v1787
      %v1828 = vsel %vm896, %v536, %v1788
      %v1829 = vsel %vm897, %v537, %v1789
      %v1830 = vsel %vm898, %v538, %v1790
      %v1831 = vsel %vm899, %v539, %v1791
      %v1832 = vsel %vm900, %v540, %v1792
      %v1833 = vsel %vm901, %v541, %v1793
      %v1834 = vsel %vm902, %v542, %v1794
      %v1835 = vsel %vm903, %v543, %v1795
      %v1836 = vsel %vm904, %v544, %v1796
      %v1837 = vsel %vm905, %v545, %v1797
      %v1838 = vsel %vm906, %v546, %v1798
      %v1839 = vsel %vm907, %v547, %v1799
      %v1840 = vsel %vm908, %v548, %v1800
      %v1841 = vsel %vm909, %v549, %v1801
      %v1842 = vsel %vm910, %v550, %v1802
      %v1843 = vsel %vm911, %v551, %v1803
      %v1844 = vsel %vm912, %v552, %v1804
      %v1845 = vsel %vm913, %v553, %v1805
      %v1846 = vsel %vm914, %v554, %v1806
      %v1847 = vsel %vm915, %v555, %v1807
      %v1848 = vsel %vm916, %v556, %v1808
      %v1849 = vpack.c.bf16 %v1814, %v1809
      %v1850 = vpack.c.bf16 %v1815, %v1810
      %v1851 = vpack.c.bf16 %v1816, %v1811
      %v1852 = vpack.c.bf16 %v1817, %v1812
      %v1853 = vpack.c.bf16 %v1818, %v1813
      %v1854 = vpack.c.bf16 %v1824, %v1819
      %v1855 = vpack.c.bf16 %v1825, %v1820
      %v1856 = vpack.c.bf16 %v1826, %v1821
      %v1857 = vpack.c.bf16 %v1827, %v1822
      %v1858 = vpack.c.bf16 %v1828, %v1823
      %v1859 = vpack.c.bf16 %v1834, %v1829
      %v1860 = vpack.c.bf16 %v1835, %v1830
      %v1861 = vpack.c.bf16 %v1836, %v1831
      %v1862 = vpack.c.bf16 %v1837, %v1832
      %v1863 = vpack.c.bf16 %v1838, %v1833
      %v1864 = vpack.c.bf16 %v1844, %v1839
      %v1865 = vpack.c.bf16 %v1845, %v1840
      %v1866 = vpack.c.bf16 %v1846, %v1841
      %v1867 = vpack.c.bf16 %v1847, %v1842
      %v1868 = vpack.c.bf16 %v1848, %v1843
      %s1869 = scalar_lea.vmem %s214, 288
      %v1870 = vld [vmem:[%s1869] sm:$0xf]
      %v1871 = vld [vmem:[%s1869 + $0x4] sm:$0xf]
      %v1872 = vld [vmem:[%s1869 + $0x8] sm:$0xf]
      %v1873 = vld [vmem:[%s1869 + $0xc] sm:$0xf]
      %v1874 = vld [vmem:[%s1869 + $0x10] sm:$0xf]
      %v1875 = vld [vmem:[%s1869 + $0x14] sm:$0xf]
      %v1876 = vld [vmem:[%s1869 + $0x18] sm:$0xf]
      %v1877 = vld [vmem:[%s1869 + $0x1c] sm:$0xf]
      %v1878 = vld [vmem:[%s1869 + $0x20] sm:$0xf]
      %v1879 = vld [vmem:[%s1869 + $0x24] sm:$0xf]
      %v1880 = vld [vmem:[%s1869 + $0x28] sm:$0xf]
      %v1881 = vld [vmem:[%s1869 + $0x2c] sm:$0xf]
      %v1882 = vld [vmem:[%s1869 + $0x30] sm:$0xf]
      %v1883 = vld [vmem:[%s1869 + $0x34] sm:$0xf]
      %v1884 = vld [vmem:[%s1869 + $0x38] sm:$0xf]
      %v1885 = vld [vmem:[%s1869 + $0x3c] sm:$0xf]
      %v1886 = vld [vmem:[%s1869 + $0x40] sm:$0xf]
      %v1887 = vld [vmem:[%s1869 + $0x44] sm:$0xf]
      %v1888 = vld [vmem:[%s1869 + $0x48] sm:$0xf]
      %v1889 = vld [vmem:[%s1869 + $0x4c] sm:$0xf]
      %v1890 = vld [vmem:[%s1869 + $0x50] sm:$0xf]
      %v1891 = vld [vmem:[%s1869 + $0x54] sm:$0xf]
      %v1892 = vld [vmem:[%s1869 + $0x58] sm:$0xf]
      %v1893 = vld [vmem:[%s1869 + $0x5c] sm:$0xf]
      %v1894 = vld [vmem:[%s1869 + $0x60] sm:$0xf]
      %v1895 = vld [vmem:[%s1869 + $0x64] sm:$0xf]
      %v1896 = vld [vmem:[%s1869 + $0x68] sm:$0xf]
      %v1897 = vld [vmem:[%s1869 + $0x6c] sm:$0xf]
      %v1898 = vld [vmem:[%s1869 + $0x70] sm:$0xf]
      %v1899 = vld [vmem:[%s1869 + $0x74] sm:$0xf]
      %v1900 = vld [vmem:[%s1869 + $0x78] sm:$0xf]
      %v1901 = vld [vmem:[%s1869 + $0x7c] sm:$0xf]
      %v1902 = vld [vmem:[%s1869 + $0x80] sm:$0xf]
      %v1903 = vld [vmem:[%s1869 + $0x84] sm:$0xf]
      %v1904 = vld [vmem:[%s1869 + $0x88] sm:$0xf]
      %v1905 = vld [vmem:[%s1869 + $0x8c] sm:$0xf]
      %v1906 = vld [vmem:[%s1869 + $0x90] sm:$0xf]
      %v1907 = vld [vmem:[%s1869 + $0x94] sm:$0xf]
      %v1908 = vld [vmem:[%s1869 + $0x98] sm:$0xf]
      %v1909 = vld [vmem:[%s1869 + $0x9c] sm:$0xf]
      %v1910 = vld [vmem:[%s1869 + $0xa0] sm:$0xf]
      %v1911 = vld [vmem:[%s1869 + $0xa4] sm:$0xf]
      %v1912 = vld [vmem:[%s1869 + $0xa8] sm:$0xf]
      %v1913 = vld [vmem:[%s1869 + $0xac] sm:$0xf]
      %v1914 = vld [vmem:[%s1869 + $0xb0] sm:$0xf]
      %v1915 = vld [vmem:[%s1869 + $0xb4] sm:$0xf]
      %v1916 = vld [vmem:[%s1869 + $0xb8] sm:$0xf]
      %v1917 = vld [vmem:[%s1869 + $0xbc] sm:$0xf]
      %v1918 = vld [vmem:[%s1869 + $0xc0] sm:$0xf]
      %v1919 = vld [vmem:[%s1869 + $0xc4] sm:$0xf]
      %v1920 = vld [vmem:[%s1869 + $0xc8] sm:$0xf]
      %v1921 = vld [vmem:[%s1869 + $0xcc] sm:$0xf]
      %v1922 = vld [vmem:[%s1869 + $0xd0] sm:$0xf]
      %v1923 = vld [vmem:[%s1869 + $0xd4] sm:$0xf]
      %v1924 = vld [vmem:[%s1869 + $0xd8] sm:$0xf]
      %v1925 = vld [vmem:[%s1869 + $0xdc] sm:$0xf]
      %v1926 = vld [vmem:[%s1869 + $0xe0] sm:$0xf]
      %v1927 = vld [vmem:[%s1869 + $0xe4] sm:$0xf]
      %v1928 = vld [vmem:[%s1869 + $0xe8] sm:$0xf]
      %v1929 = vld [vmem:[%s1869 + $0xec] sm:$0xf]
      %v1930 = vld [vmem:[%s1869 + $0xf0] sm:$0xf]
      %v1931 = vld [vmem:[%s1869 + $0xf4] sm:$0xf]
      %v1932 = vld [vmem:[%s1869 + $0xf8] sm:$0xf]
      %v1933 = vld [vmem:[%s1869 + $0xfc] sm:$0xf]
      %v1934 = vld [vmem:[%s1869 + $0x100] sm:$0xf]
      %v1935 = vld [vmem:[%s1869 + $0x104] sm:$0xf]
      %v1936 = vld [vmem:[%s1869 + $0x108] sm:$0xf]
      %v1937 = vld [vmem:[%s1869 + $0x10c] sm:$0xf]
      %v1938 = vld [vmem:[%s1869 + $0x110] sm:$0xf]
      %v1939 = vld [vmem:[%s1869 + $0x114] sm:$0xf]
      %v1940 = vld [vmem:[%s1869 + $0x118] sm:$0xf]
      %v1941 = vld [vmem:[%s1869 + $0x11c] sm:$0xf]
      %v2014 = vunpack.c.l.b16 %v1870
      %v2015 = vunpack.c.l.b16 %v1871
      %v2016 = vunpack.c.l.b16 %v1872
      %v2017 = vunpack.c.l.b16 %v1873
      %v2018 = vunpack.c.l.b16 %v1874
      %v2019 = vunpack.c.l.b16 %v1875
      %v2020 = vunpack.c.l.b16 %v1876
      %v2021 = vunpack.c.l.b16 %v1877
      %v2022 = vunpack.c.l.b16 %v1878
      %v2023 = vunpack.c.l.b16 %v1879
      %v2024 = vunpack.c.l.b16 %v1880
      %v2025 = vunpack.c.l.b16 %v1881
      %v2026 = vunpack.c.l.b16 %v1882
      %v2027 = vunpack.c.l.b16 %v1883
      %v2028 = vunpack.c.l.b16 %v1884
      %v2029 = vunpack.c.l.b16 %v1885
      %v2030 = vunpack.c.l.b16 %v1886
      %v2031 = vunpack.c.l.b16 %v1887
      %v2032 = vunpack.c.l.b16 %v1888
      %v2033 = vunpack.c.l.b16 %v1889
      %v2034 = vunpack.c.l.b16 %v1890
      %v2035 = vunpack.c.l.b16 %v1891
      %v2036 = vunpack.c.l.b16 %v1892
      %v2037 = vunpack.c.l.b16 %v1893
      %v2038 = vunpack.c.l.b16 %v1894
      %v2039 = vunpack.c.l.b16 %v1895
      %v2040 = vunpack.c.l.b16 %v1896
      %v2041 = vunpack.c.l.b16 %v1897
      %v2042 = vunpack.c.l.b16 %v1898
      %v2043 = vunpack.c.l.b16 %v1899
      %v2044 = vunpack.c.l.b16 %v1900
      %v2045 = vunpack.c.l.b16 %v1901
      %v2046 = vunpack.c.l.b16 %v1902
      %v2047 = vunpack.c.l.b16 %v1903
      %v2048 = vunpack.c.l.b16 %v1904
      %v2049 = vunpack.c.l.b16 %v1905
      %v2050 = vunpack.c.l.b16 %v1906
      %v2051 = vunpack.c.l.b16 %v1907
      %v2052 = vunpack.c.l.b16 %v1908
      %v2053 = vunpack.c.l.b16 %v1909
      %v2054 = vunpack.c.l.b16 %v1910
      %v2055 = vunpack.c.l.b16 %v1911
      %v2056 = vunpack.c.l.b16 %v1912
      %v2057 = vunpack.c.l.b16 %v1913
      %v2058 = vunpack.c.l.b16 %v1914
      %v2059 = vunpack.c.l.b16 %v1915
      %v2060 = vunpack.c.l.b16 %v1916
      %v2061 = vunpack.c.l.b16 %v1917
      %v2062 = vunpack.c.l.b16 %v1918
      %v2063 = vunpack.c.l.b16 %v1919
      %v2064 = vunpack.c.l.b16 %v1920
      %v2065 = vunpack.c.l.b16 %v1921
      %v2066 = vunpack.c.l.b16 %v1922
      %v2067 = vunpack.c.l.b16 %v1923
      %v2068 = vunpack.c.l.b16 %v1924
      %v2069 = vunpack.c.l.b16 %v1925
      %v2070 = vunpack.c.l.b16 %v1926
      %v2071 = vunpack.c.l.b16 %v1927
      %v2072 = vunpack.c.l.b16 %v1928
      %v2073 = vunpack.c.l.b16 %v1929
      %v2074 = vunpack.c.l.b16 %v1930
      %v2075 = vunpack.c.l.b16 %v1931
      %v2076 = vunpack.c.l.b16 %v1932
      %v2077 = vunpack.c.l.b16 %v1933
      %v2078 = vunpack.c.l.b16 %v1934
      %v2079 = vunpack.c.l.b16 %v1935
      %v2080 = vunpack.c.l.b16 %v1936
      %v2081 = vunpack.c.l.b16 %v1937
      %v2082 = vunpack.c.l.b16 %v1938
      %v2083 = vunpack.c.l.b16 %v1939
      %v2084 = vunpack.c.l.b16 %v1940
      %v2085 = vunpack.c.l.b16 %v1941
      %v2086 = vpack.c.b16 %v2015, %v2014
      %v2087 = vpack.c.b16 %v2017, %v2016
      %v2088 = vpack.c.b16 %v2019, %v2018
      %v2089 = vpack.c.b16 %v2021, %v2020
      %v2090 = vpack.c.b16 %v2023, %v2022
      %v2091 = vpack.c.b16 %v2025, %v2024
      %v2092 = vpack.c.b16 %v2027, %v2026
      %v2093 = vpack.c.b16 %v2029, %v2028
      %v2094 = vpack.c.b16 %v2031, %v2030
      %v2095 = vpack.c.b16 %v2033, %v2032
      %v2096 = vpack.c.b16 %v2035, %v2034
      %v2097 = vpack.c.b16 %v2037, %v2036
      %v2098 = vpack.c.b16 %v2039, %v2038
      %v2099 = vpack.c.b16 %v2041, %v2040
      %v2100 = vpack.c.b16 %v2043, %v2042
      %v2101 = vpack.c.b16 %v2045, %v2044
      %v2102 = vpack.c.b16 %v2047, %v2046
      %v2103 = vpack.c.b16 %v2049, %v2048
      %v2104 = vpack.c.b16 %v2051, %v2050
      %v2105 = vpack.c.b16 %v2053, %v2052
      %v2106 = vpack.c.b16 %v2055, %v2054
      %v2107 = vpack.c.b16 %v2057, %v2056
      %v2108 = vpack.c.b16 %v2059, %v2058
      %v2109 = vpack.c.b16 %v2061, %v2060
      %v2110 = vpack.c.b16 %v2063, %v2062
      %v2111 = vpack.c.b16 %v2065, %v2064
      %v2112 = vpack.c.b16 %v2067, %v2066
      %v2113 = vpack.c.b16 %v2069, %v2068
      %v2114 = vpack.c.b16 %v2071, %v2070
      %v2115 = vpack.c.b16 %v2073, %v2072
      %v2116 = vpack.c.b16 %v2075, %v2074
      %v2117 = vpack.c.b16 %v2077, %v2076
      %v2118 = vpack.c.b16 %v2079, %v2078
      %v2119 = vpack.c.b16 %v2081, %v2080
      %v2120 = vpack.c.b16 %v2083, %v2082
      %v2121 = vpack.c.b16 %v2085, %v2084
      %v2159 = vsel %vm1513, %v1853, 0
      %v2162 = vsel %vm1513, %v1858, 0
      %v2165 = vsel %vm1513, %v1863, 0
      %v2168 = vsel %vm1513, %v1868, 0
      %2170 = vmatprep.subr.bf16.mxu0 0
      %2171 = vmatpush1.bf16.msra.mxu0 %v2093
      %2172 = vmatprep.subr.bf16.mxu0 0
      %2173 = vmatpush1.bf16.msra.mxu0 %v2092
      %2174 = vmatprep.subr.bf16.mxu0 0
      %2175 = vmatpush1.bf16.msra.mxu0 %v2091
      %2176 = vmatprep.subr.bf16.mxu0 0
      %2177 = vmatpush1.bf16.msra.mxu0 %v2090
      %2178 = vmatprep.subr.bf16.mxu0 0
      %2179 = vmatpush1.bf16.msra.mxu0 %v2089
      %2180 = vmatprep.subr.bf16.mxu0 0
      %2181 = vmatpush1.bf16.msra.mxu0 %v2088
      %2182 = vmatprep.subr.bf16.mxu0 0
      %2183 = vmatpush1.bf16.msra.mxu0 %v2087
      %2184 = vmatprep.subr.bf16.mxu0 0
      %2185 = vmatpush1.bf16.msra.mxu0 %v2086
      %2186 = vmatprep.subr.bf16.mxu0 0
      %2187 = vmatpush2.bf16.msra.mxu0 %v2101
      %2188 = vmatprep.subr.bf16.mxu0 0
      %2189 = vmatpush2.bf16.msra.mxu0 %v2100
      %2190 = vmatprep.subr.bf16.mxu0 0
      %2191 = vmatpush2.bf16.msra.mxu0 %v2099
      %2192 = vmatprep.subr.bf16.mxu0 0
      %2193 = vmatpush2.bf16.msra.mxu0 %v2098
      %2194 = vmatprep.subr.bf16.mxu0 0
      %2195 = vmatpush2.bf16.msra.mxu0 %v2097
      %2196 = vmatprep.subr.bf16.mxu0 0
      %2197 = vmatpush2.bf16.msra.mxu0 %v2096
      %2198 = vmatprep.subr.bf16.mxu0 0
      %2199 = vmatpush2.bf16.msra.mxu0 %v2095
      %2200 = vmatprep.subr.bf16.mxu0 0
      %2201 = vmatpush2.bf16.msra.mxu0 %v2094
      %2202 = vmatprep.mubr.bf16.mxu0 %v1850
      %2203 = vmatmul.mubr.bf16.gmra.mxu0 %v1849
      %v2204 = vpop.f32.mrf.mxu0
      %v2205 = vadd.f32 0.0, %v2204
      %v2206 = vpop.f32.mrf.mxu0
      %v2207 = vpop.f32.mrf.mxu0
      %v2208 = vadd.f32 0.0, %v2207
      %v2209 = vpop.f32.mrf.mxu0
      %2210 = vmatprep.mubr.bf16.mxu0 %v1855
      %2211 = vmatmul.mubr.bf16.gmra.mxu0 %v1854
      %v2212 = vpop.f32.mrf.mxu0
      %v2213 = vadd.f32 0.0, %v2212
      %v2214 = vpop.f32.mrf.mxu0
      %v2215 = vpop.f32.mrf.mxu0
      %v2216 = vadd.f32 0.0, %v2215
      %v2217 = vpop.f32.mrf.mxu0
      %2218 = vmatprep.mubr.bf16.mxu0 %v1860
      %2219 = vmatmul.mubr.bf16.gmra.mxu0 %v1859
      %v2220 = vpop.f32.mrf.mxu0
      %v2221 = vadd.f32 0.0, %v2220
      %v2222 = vpop.f32.mrf.mxu0
      %v2223 = vpop.f32.mrf.mxu0
      %v2224 = vadd.f32 0.0, %v2223
      %v2225 = vpop.f32.mrf.mxu0
      %2226 = vmatprep.mubr.bf16.mxu0 %v1865
      %2227 = vmatmul.mubr.bf16.gmra.mxu0 %v1864
      %v2228 = vpop.f32.mrf.mxu0
      %v2229 = vadd.f32 0.0, %v2228
      %v2230 = vpop.f32.mrf.mxu0
      %v2231 = vpop.f32.mrf.mxu0
      %v2232 = vadd.f32 0.0, %v2231
      %v2233 = vpop.f32.mrf.mxu0
      %2234 = vdwg.mxu0
      %2235 = vmatprep.subr.bf16.mxu0 0
      %2236 = vmatpush1.bf16.msra.mxu0 %v2109
      %2237 = vmatprep.subr.bf16.mxu0 0
      %2238 = vmatpush1.bf16.msra.mxu0 %v2108
      %2239 = vmatprep.subr.bf16.mxu0 0
      %2240 = vmatpush1.bf16.msra.mxu0 %v2107
      %2241 = vmatprep.subr.bf16.mxu0 0
      %2242 = vmatpush1.bf16.msra.mxu0 %v2106
      %2243 = vmatprep.subr.bf16.mxu0 0
      %2244 = vmatpush1.bf16.msra.mxu0 %v2105
      %2245 = vmatprep.subr.bf16.mxu0 0
      %2246 = vmatpush1.bf16.msra.mxu0 %v2104
      %2247 = vmatprep.subr.bf16.mxu0 0
      %2248 = vmatpush1.bf16.msra.mxu0 %v2103
      %2249 = vmatprep.subr.bf16.mxu0 0
      %2250 = vmatpush1.bf16.msra.mxu0 %v2102
      %2251 = vmatprep.subr.bf16.mxu0 0
      %2252 = vmatpush2.bf16.msra.mxu0 %v2117
      %2253 = vmatprep.subr.bf16.mxu0 0
      %2254 = vmatpush2.bf16.msra.mxu0 %v2116
      %2255 = vmatprep.subr.bf16.mxu0 0
      %2256 = vmatpush2.bf16.msra.mxu0 %v2115
      %2257 = vmatprep.subr.bf16.mxu0 0
      %2258 = vmatpush2.bf16.msra.mxu0 %v2114
      %2259 = vmatprep.subr.bf16.mxu0 0
      %2260 = vmatpush2.bf16.msra.mxu0 %v2113
      %2261 = vmatprep.subr.bf16.mxu0 0
      %2262 = vmatpush2.bf16.msra.mxu0 %v2112
      %2263 = vmatprep.subr.bf16.mxu0 0
      %2264 = vmatpush2.bf16.msra.mxu0 %v2111
      %2265 = vmatprep.subr.bf16.mxu0 0
      %2266 = vmatpush2.bf16.msra.mxu0 %v2110
      %2267 = vmatprep.mubr.bf16.mxu0 %v1852
      %2268 = vmatmul.mubr.bf16.gmra.mxu0 %v1851
      %v2269 = vpop.f32.mrf.mxu0
      %v2270 = vadd.f32 %v2205, %v2269
      %v2271 = vpop.f32.mrf.mxu0
      %v2272 = vpop.f32.mrf.mxu0
      %v2273 = vadd.f32 %v2208, %v2272
      %v2274 = vpop.f32.mrf.mxu0
      %2275 = vmatprep.mubr.bf16.mxu0 %v1857
      %2276 = vmatmul.mubr.bf16.gmra.mxu0 %v1856
      %v2277 = vpop.f32.mrf.mxu0
      %v2278 = vadd.f32 %v2213, %v2277
      %v2279 = vpop.f32.mrf.mxu0
      %v2280 = vpop.f32.mrf.mxu0
      %v2281 = vadd.f32 %v2216, %v2280
      %v2282 = vpop.f32.mrf.mxu0
      %2283 = vmatprep.mubr.bf16.mxu0 %v1862
      %2284 = vmatmul.mubr.bf16.gmra.mxu0 %v1861
      %v2285 = vpop.f32.mrf.mxu0
      %v2286 = vadd.f32 %v2221, %v2285
      %v2287 = vpop.f32.mrf.mxu0
      %v2288 = vpop.f32.mrf.mxu0
      %v2289 = vadd.f32 %v2224, %v2288
      %v2290 = vpop.f32.mrf.mxu0
      %2291 = vmatprep.mubr.bf16.mxu0 %v1867
      %2292 = vmatmul.mubr.bf16.gmra.mxu0 %v1866
      %v2293 = vpop.f32.mrf.mxu0
      %v2294 = vadd.f32 %v2229, %v2293
      %v2295 = vpop.f32.mrf.mxu0
      %v2296 = vpop.f32.mrf.mxu0
      %v2297 = vadd.f32 %v2232, %v2296
      %v2298 = vpop.f32.mrf.mxu0
      %2299 = vdwg.mxu0
      %2300 = vmatprep.subr.bf16.mxu0 0
      %2301 = vmatpush1.bf16.msra.mxu0 0
      %2302 = vmatprep.subr.bf16.mxu0 0
      %2303 = vmatpush1.bf16.msra.mxu0 0
      %2304 = vmatprep.subr.bf16.mxu0 0
      %2305 = vmatpush1.bf16.msra.mxu0 0
      %2306 = vmatprep.subr.bf16.mxu0 0
      %2307 = vmatpush1.bf16.msra.mxu0 0
      %2308 = vmatprep.subr.bf16.mxu0 0
      %2309 = vmatpush1.bf16.msra.mxu0 %v2121
      %2310 = vmatprep.subr.bf16.mxu0 0
      %2311 = vmatpush1.bf16.msra.mxu0 %v2120
      %2312 = vmatprep.subr.bf16.mxu0 0
      %2313 = vmatpush1.bf16.msra.mxu0 %v2119
      %2314 = vmatprep.subr.bf16.mxu0 0
      %2315 = vmatpush1.bf16.msra.mxu0 %v2118
      %2316 = vmatprep.subr.bf16.mxu0 0
      %2317 = vmatpush2.bf16.msra.mxu0 0
      %2318 = vmatprep.subr.bf16.mxu0 0
      %2319 = vmatpush2.bf16.msra.mxu0 0
      %2320 = vmatprep.subr.bf16.mxu0 0
      %2321 = vmatpush2.bf16.msra.mxu0 0
      %2322 = vmatprep.subr.bf16.mxu0 0
      %2323 = vmatpush2.bf16.msra.mxu0 0
      %2324 = vmatprep.subr.bf16.mxu0 0
      %2325 = vmatpush2.bf16.msra.mxu0 0
      %2326 = vmatprep.subr.bf16.mxu0 0
      %2327 = vmatpush2.bf16.msra.mxu0 0
      %2328 = vmatprep.subr.bf16.mxu0 0
      %2329 = vmatpush2.bf16.msra.mxu0 0
      %2330 = vmatprep.subr.bf16.mxu0 0
      %2331 = vmatpush2.bf16.msra.mxu0 0
      %2332 = vmatprep.mubr.bf16.mxu0 0
      %2333 = vmatmul.mubr.bf16.gmra.mxu0 %v2159
      %v2334 = vpop.f32.mrf.mxu0
      %v2335 = vadd.f32 %v2270, %v2334
      %v2336 = vpop.f32.mrf.mxu0
      %v2337 = vpop.f32.mrf.mxu0
      %v2338 = vadd.f32 %v2273, %v2337
      %v2339 = vpop.f32.mrf.mxu0
      %2340 = vmatprep.mubr.bf16.mxu0 0
      %2341 = vmatmul.mubr.bf16.gmra.mxu0 %v2162
      %v2342 = vpop.f32.mrf.mxu0
      %v2343 = vadd.f32 %v2278, %v2342
      %v2344 = vpop.f32.mrf.mxu0
      %v2345 = vpop.f32.mrf.mxu0
      %v2346 = vadd.f32 %v2281, %v2345
      %v2347 = vpop.f32.mrf.mxu0
      %2348 = vmatprep.mubr.bf16.mxu0 0
      %2349 = vmatmul.mubr.bf16.gmra.mxu0 %v2165
      %v2350 = vpop.f32.mrf.mxu0
      %v2351 = vadd.f32 %v2286, %v2350
      %v2352 = vpop.f32.mrf.mxu0
      %v2353 = vpop.f32.mrf.mxu0
      %v2354 = vadd.f32 %v2289, %v2353
      %v2355 = vpop.f32.mrf.mxu0
      %2356 = vmatprep.mubr.bf16.mxu0 0
      %2357 = vmatmul.mubr.bf16.gmra.mxu0 %v2168
      %v2358 = vpop.f32.mrf.mxu0
      %v2359 = vadd.f32 %v2294, %v2358
      %v2360 = vpop.f32.mrf.mxu0
      %v2361 = vpop.f32.mrf.mxu0
      %v2362 = vadd.f32 %v2297, %v2361
      %v2363 = vpop.f32.mrf.mxu0
      %2364 = vdwg.mxu0
      %v2365 = vadd.f32 %v1721, %v2335
      %v2366 = vadd.f32 %v1722, %v2338
      %v2367 = vadd.f32 %v1723, %v2343
      %v2368 = vadd.f32 %v1724, %v2346
      %v2369 = vadd.f32 %v1725, %v2351
      %v2370 = vadd.f32 %v1726, %v2354
      %v2371 = vadd.f32 %v1727, %v2359
      %v2372 = vadd.f32 %v1728, %v2362
      %v2373 = vsel %vm997, %v797, 0.0
      %v2374 = vsel %vm998, %v798, 0.0
      %v2375 = vsel %vm999, %v799, 0.0
      %v2376 = vsel %vm1000, %v800, 0.0
      %v2377 = vsel %vm1001, %v801, 0.0
      %v2378 = vsel %vm1002, %v802, 0.0
      %v2379 = vsel %vm1003, %v803, 0.0
      %v2380 = vsel %vm1004, %v804, 0.0
      %v2381 = vsel %vm1005, %v805, 0.0
      %v2382 = vsel %vm1006, %v806, 0.0
      %v2383 = vsel %vm1007, %v807, 0.0
      %v2384 = vsel %vm1008, %v808, 0.0
      %v2385 = vsel %vm1009, %v809, 0.0
      %v2386 = vsel %vm1010, %v810, 0.0
      %v2387 = vsel %vm1011, %v811, 0.0
      %v2388 = vsel %vm1012, %v812, 0.0
      %v2389 = vsel %vm1013, %v813, 0.0
      %v2390 = vsel %vm1014, %v814, 0.0
      %v2391 = vsel %vm1015, %v815, 0.0
      %v2392 = vsel %vm1016, %v816, 0.0
      %v2393 = vsel %vm1017, %v817, 0.0
      %v2394 = vsel %vm1018, %v818, 0.0
      %v2395 = vsel %vm1019, %v819, 0.0
      %v2396 = vsel %vm1020, %v820, 0.0
      %v2397 = vsel %vm1021, %v821, 0.0
      %v2398 = vsel %vm1022, %v822, 0.0
      %v2399 = vsel %vm1023, %v823, 0.0
      %v2400 = vsel %vm1024, %v824, 0.0
      %v2401 = vsel %vm1025, %v825, 0.0
      %v2402 = vsel %vm1026, %v826, 0.0
      %v2403 = vsel %vm1027, %v827, 0.0
      %v2404 = vsel %vm1028, %v828, 0.0
      %v2405 = vsel %vm1029, %v829, 0.0
      %v2406 = vsel %vm1030, %v830, 0.0
      %v2407 = vsel %vm1031, %v831, 0.0
      %v2408 = vsel %vm1032, %v832, 0.0
      %v2409 = vsel %vm1033, %v833, 0.0
      %v2410 = vsel %vm1034, %v834, 0.0
      %v2411 = vsel %vm1035, %v835, 0.0
      %v2412 = vsel %vm1036, %v836, 0.0
      %v2413 = vsel %vm957, %v677, %v2373
      %v2414 = vsel %vm958, %v678, %v2374
      %v2415 = vsel %vm959, %v679, %v2375
      %v2416 = vsel %vm960, %v680, %v2376
      %v2417 = vsel %vm961, %v681, %v2377
      %v2418 = vsel %vm962, %v682, %v2378
      %v2419 = vsel %vm963, %v683, %v2379
      %v2420 = vsel %vm964, %v684, %v2380
      %v2421 = vsel %vm965, %v685, %v2381
      %v2422 = vsel %vm966, %v686, %v2382
      %v2423 = vsel %vm967, %v687, %v2383
      %v2424 = vsel %vm968, %v688, %v2384
      %v2425 = vsel %vm969, %v689, %v2385
      %v2426 = vsel %vm970, %v690, %v2386
      %v2427 = vsel %vm971, %v691, %v2387
      %v2428 = vsel %vm972, %v692, %v2388
      %v2429 = vsel %vm973, %v693, %v2389
      %v2430 = vsel %vm974, %v694, %v2390
      %v2431 = vsel %vm975, %v695, %v2391
      %v2432 = vsel %vm976, %v696, %v2392
      %v2433 = vsel %vm977, %v697, %v2393
      %v2434 = vsel %vm978, %v698, %v2394
      %v2435 = vsel %vm979, %v699, %v2395
      %v2436 = vsel %vm980, %v700, %v2396
      %v2437 = vsel %vm981, %v701, %v2397
      %v2438 = vsel %vm982, %v702, %v2398
      %v2439 = vsel %vm983, %v703, %v2399
      %v2440 = vsel %vm984, %v704, %v2400
      %v2441 = vsel %vm985, %v705, %v2401
      %v2442 = vsel %vm986, %v706, %v2402
      %v2443 = vsel %vm987, %v707, %v2403
      %v2444 = vsel %vm988, %v708, %v2404
      %v2445 = vsel %vm989, %v709, %v2405
      %v2446 = vsel %vm990, %v710, %v2406
      %v2447 = vsel %vm991, %v711, %v2407
      %v2448 = vsel %vm992, %v712, %v2408
      %v2449 = vsel %vm993, %v713, %v2409
      %v2450 = vsel %vm994, %v714, %v2410
      %v2451 = vsel %vm995, %v715, %v2411
      %v2452 = vsel %vm996, %v716, %v2412
      %v2453 = vsel %vm917, %v517, %v2413
      %v2454 = vsel %vm918, %v518, %v2414
      %v2455 = vsel %vm919, %v519, %v2415
      %v2456 = vsel %vm920, %v520, %v2416
      %v2457 = vsel %vm921, %v521, %v2417
      %v2458 = vsel %vm922, %v522, %v2418
      %v2459 = vsel %vm923, %v523, %v2419
      %v2460 = vsel %vm924, %v524, %v2420
      %v2461 = vsel %vm925, %v525, %v2421
      %v2462 = vsel %vm926, %v526, %v2422
      %v2463 = vsel %vm927, %v527, %v2423
      %v2464 = vsel %vm928, %v528, %v2424
      %v2465 = vsel %vm929, %v529, %v2425
      %v2466 = vsel %vm930, %v530, %v2426
      %v2467 = vsel %vm931, %v531, %v2427
      %v2468 = vsel %vm932, %v532, %v2428
      %v2469 = vsel %vm933, %v533, %v2429
      %v2470 = vsel %vm934, %v534, %v2430
      %v2471 = vsel %vm935, %v535, %v2431
      %v2472 = vsel %vm936, %v536, %v2432
      %v2473 = vsel %vm937, %v537, %v2433
      %v2474 = vsel %vm938, %v538, %v2434
      %v2475 = vsel %vm939, %v539, %v2435
      %v2476 = vsel %vm940, %v540, %v2436
      %v2477 = vsel %vm941, %v541, %v2437
      %v2478 = vsel %vm942, %v542, %v2438
      %v2479 = vsel %vm943, %v543, %v2439
      %v2480 = vsel %vm944, %v544, %v2440
      %v2481 = vsel %vm945, %v545, %v2441
      %v2482 = vsel %vm946, %v546, %v2442
      %v2483 = vsel %vm947, %v547, %v2443
      %v2484 = vsel %vm948, %v548, %v2444
      %v2485 = vsel %vm949, %v549, %v2445
      %v2486 = vsel %vm950, %v550, %v2446
      %v2487 = vsel %vm951, %v551, %v2447
      %v2488 = vsel %vm952, %v552, %v2448
      %v2489 = vsel %vm953, %v553, %v2449
      %v2490 = vsel %vm954, %v554, %v2450
      %v2491 = vsel %vm955, %v555, %v2451
      %v2492 = vsel %vm956, %v556, %v2452
      %v2493 = vpack.c.bf16 %v2458, %v2453
      %v2494 = vpack.c.bf16 %v2459, %v2454
      %v2495 = vpack.c.bf16 %v2460, %v2455
      %v2496 = vpack.c.bf16 %v2461, %v2456
      %v2497 = vpack.c.bf16 %v2462, %v2457
      %v2498 = vpack.c.bf16 %v2468, %v2463
      %v2499 = vpack.c.bf16 %v2469, %v2464
      %v2500 = vpack.c.bf16 %v2470, %v2465
      %v2501 = vpack.c.bf16 %v2471, %v2466
      %v2502 = vpack.c.bf16 %v2472, %v2467
      %v2503 = vpack.c.bf16 %v2478, %v2473
      %v2504 = vpack.c.bf16 %v2479, %v2474
      %v2505 = vpack.c.bf16 %v2480, %v2475
      %v2506 = vpack.c.bf16 %v2481, %v2476
      %v2507 = vpack.c.bf16 %v2482, %v2477
      %v2508 = vpack.c.bf16 %v2488, %v2483
      %v2509 = vpack.c.bf16 %v2489, %v2484
      %v2510 = vpack.c.bf16 %v2490, %v2485
      %v2511 = vpack.c.bf16 %v2491, %v2486
      %v2512 = vpack.c.bf16 %v2492, %v2487
      %s2513 = scalar_lea.vmem %s214, 576
      %v2514 = vld [vmem:[%s2513] sm:$0xf]
      %v2515 = vld [vmem:[%s2513 + $0x4] sm:$0xf]
      %v2516 = vld [vmem:[%s2513 + $0x8] sm:$0xf]
      %v2517 = vld [vmem:[%s2513 + $0xc] sm:$0xf]
      %v2518 = vld [vmem:[%s2513 + $0x10] sm:$0xf]
      %v2519 = vld [vmem:[%s2513 + $0x14] sm:$0xf]
      %v2520 = vld [vmem:[%s2513 + $0x18] sm:$0xf]
      %v2521 = vld [vmem:[%s2513 + $0x1c] sm:$0xf]
      %v2522 = vld [vmem:[%s2513 + $0x20] sm:$0xf]
      %v2523 = vld [vmem:[%s2513 + $0x24] sm:$0xf]
      %v2524 = vld [vmem:[%s2513 + $0x28] sm:$0xf]
      %v2525 = vld [vmem:[%s2513 + $0x2c] sm:$0xf]
      %v2526 = vld [vmem:[%s2513 + $0x30] sm:$0xf]
      %v2527 = vld [vmem:[%s2513 + $0x34] sm:$0xf]
      %v2528 = vld [vmem:[%s2513 + $0x38] sm:$0xf]
      %v2529 = vld [vmem:[%s2513 + $0x3c] sm:$0xf]
      %v2530 = vld [vmem:[%s2513 + $0x40] sm:$0xf]
      %v2531 = vld [vmem:[%s2513 + $0x44] sm:$0xf]
      %v2532 = vld [vmem:[%s2513 + $0x48] sm:$0xf]
      %v2533 = vld [vmem:[%s2513 + $0x4c] sm:$0xf]
      %v2534 = vld [vmem:[%s2513 + $0x50] sm:$0xf]
      %v2535 = vld [vmem:[%s2513 + $0x54] sm:$0xf]
      %v2536 = vld [vmem:[%s2513 + $0x58] sm:$0xf]
      %v2537 = vld [vmem:[%s2513 + $0x5c] sm:$0xf]
      %v2538 = vld [vmem:[%s2513 + $0x60] sm:$0xf]
      %v2539 = vld [vmem:[%s2513 + $0x64] sm:$0xf]
      %v2540 = vld [vmem:[%s2513 + $0x68] sm:$0xf]
      %v2541 = vld [vmem:[%s2513 + $0x6c] sm:$0xf]
      %v2542 = vld [vmem:[%s2513 + $0x70] sm:$0xf]
      %v2543 = vld [vmem:[%s2513 + $0x74] sm:$0xf]
      %v2544 = vld [vmem:[%s2513 + $0x78] sm:$0xf]
      %v2545 = vld [vmem:[%s2513 + $0x7c] sm:$0xf]
      %v2546 = vld [vmem:[%s2513 + $0x80] sm:$0xf]
      %v2547 = vld [vmem:[%s2513 + $0x84] sm:$0xf]
      %v2548 = vld [vmem:[%s2513 + $0x88] sm:$0xf]
      %v2549 = vld [vmem:[%s2513 + $0x8c] sm:$0xf]
      %v2550 = vld [vmem:[%s2513 + $0x90] sm:$0xf]
      %v2551 = vld [vmem:[%s2513 + $0x94] sm:$0xf]
      %v2552 = vld [vmem:[%s2513 + $0x98] sm:$0xf]
      %v2553 = vld [vmem:[%s2513 + $0x9c] sm:$0xf]
      %v2554 = vld [vmem:[%s2513 + $0xa0] sm:$0xf]
      %v2555 = vld [vmem:[%s2513 + $0xa4] sm:$0xf]
      %v2556 = vld [vmem:[%s2513 + $0xa8] sm:$0xf]
      %v2557 = vld [vmem:[%s2513 + $0xac] sm:$0xf]
      %v2558 = vld [vmem:[%s2513 + $0xb0] sm:$0xf]
      %v2559 = vld [vmem:[%s2513 + $0xb4] sm:$0xf]
      %v2560 = vld [vmem:[%s2513 + $0xb8] sm:$0xf]
      %v2561 = vld [vmem:[%s2513 + $0xbc] sm:$0xf]
      %v2562 = vld [vmem:[%s2513 + $0xc0] sm:$0xf]
      %v2563 = vld [vmem:[%s2513 + $0xc4] sm:$0xf]
      %v2564 = vld [vmem:[%s2513 + $0xc8] sm:$0xf]
      %v2565 = vld [vmem:[%s2513 + $0xcc] sm:$0xf]
      %v2566 = vld [vmem:[%s2513 + $0xd0] sm:$0xf]
      %v2567 = vld [vmem:[%s2513 + $0xd4] sm:$0xf]
      %v2568 = vld [vmem:[%s2513 + $0xd8] sm:$0xf]
      %v2569 = vld [vmem:[%s2513 + $0xdc] sm:$0xf]
      %v2570 = vld [vmem:[%s2513 + $0xe0] sm:$0xf]
      %v2571 = vld [vmem:[%s2513 + $0xe4] sm:$0xf]
      %v2572 = vld [vmem:[%s2513 + $0xe8] sm:$0xf]
      %v2573 = vld [vmem:[%s2513 + $0xec] sm:$0xf]
      %v2574 = vld [vmem:[%s2513 + $0xf0] sm:$0xf]
      %v2575 = vld [vmem:[%s2513 + $0xf4] sm:$0xf]
      %v2576 = vld [vmem:[%s2513 + $0xf8] sm:$0xf]
      %v2577 = vld [vmem:[%s2513 + $0xfc] sm:$0xf]
      %v2578 = vld [vmem:[%s2513 + $0x100] sm:$0xf]
      %v2579 = vld [vmem:[%s2513 + $0x104] sm:$0xf]
      %v2580 = vld [vmem:[%s2513 + $0x108] sm:$0xf]
      %v2581 = vld [vmem:[%s2513 + $0x10c] sm:$0xf]
      %v2582 = vld [vmem:[%s2513 + $0x110] sm:$0xf]
      %v2583 = vld [vmem:[%s2513 + $0x114] sm:$0xf]
      %v2584 = vld [vmem:[%s2513 + $0x118] sm:$0xf]
      %v2585 = vld [vmem:[%s2513 + $0x11c] sm:$0xf]
      %v2658 = vunpack.c.l.b16 %v2514
      %v2659 = vunpack.c.l.b16 %v2515
      %v2660 = vunpack.c.l.b16 %v2516
      %v2661 = vunpack.c.l.b16 %v2517
      %v2662 = vunpack.c.l.b16 %v2518
      %v2663 = vunpack.c.l.b16 %v2519
      %v2664 = vunpack.c.l.b16 %v2520
      %v2665 = vunpack.c.l.b16 %v2521
      %v2666 = vunpack.c.l.b16 %v2522
      %v2667 = vunpack.c.l.b16 %v2523
      %v2668 = vunpack.c.l.b16 %v2524
      %v2669 = vunpack.c.l.b16 %v2525
      %v2670 = vunpack.c.l.b16 %v2526
      %v2671 = vunpack.c.l.b16 %v2527
      %v2672 = vunpack.c.l.b16 %v2528
      %v2673 = vunpack.c.l.b16 %v2529
      %v2674 = vunpack.c.l.b16 %v2530
      %v2675 = vunpack.c.l.b16 %v2531
      %v2676 = vunpack.c.l.b16 %v2532
      %v2677 = vunpack.c.l.b16 %v2533
      %v2678 = vunpack.c.l.b16 %v2534
      %v2679 = vunpack.c.l.b16 %v2535
      %v2680 = vunpack.c.l.b16 %v2536
      %v2681 = vunpack.c.l.b16 %v2537
      %v2682 = vunpack.c.l.b16 %v2538
      %v2683 = vunpack.c.l.b16 %v2539
      %v2684 = vunpack.c.l.b16 %v2540
      %v2685 = vunpack.c.l.b16 %v2541
      %v2686 = vunpack.c.l.b16 %v2542
      %v2687 = vunpack.c.l.b16 %v2543
      %v2688 = vunpack.c.l.b16 %v2544
      %v2689 = vunpack.c.l.b16 %v2545
      %v2690 = vunpack.c.l.b16 %v2546
      %v2691 = vunpack.c.l.b16 %v2547
      %v2692 = vunpack.c.l.b16 %v2548
      %v2693 = vunpack.c.l.b16 %v2549
      %v2694 = vunpack.c.l.b16 %v2550
      %v2695 = vunpack.c.l.b16 %v2551
      %v2696 = vunpack.c.l.b16 %v2552
      %v2697 = vunpack.c.l.b16 %v2553
      %v2698 = vunpack.c.l.b16 %v2554
      %v2699 = vunpack.c.l.b16 %v2555
      %v2700 = vunpack.c.l.b16 %v2556
      %v2701 = vunpack.c.l.b16 %v2557
      %v2702 = vunpack.c.l.b16 %v2558
      %v2703 = vunpack.c.l.b16 %v2559
      %v2704 = vunpack.c.l.b16 %v2560
      %v2705 = vunpack.c.l.b16 %v2561
      %v2706 = vunpack.c.l.b16 %v2562
      %v2707 = vunpack.c.l.b16 %v2563
      %v2708 = vunpack.c.l.b16 %v2564
      %v2709 = vunpack.c.l.b16 %v2565
      %v2710 = vunpack.c.l.b16 %v2566
      %v2711 = vunpack.c.l.b16 %v2567
      %v2712 = vunpack.c.l.b16 %v2568
      %v2713 = vunpack.c.l.b16 %v2569
      %v2714 = vunpack.c.l.b16 %v2570
      %v2715 = vunpack.c.l.b16 %v2571
      %v2716 = vunpack.c.l.b16 %v2572
      %v2717 = vunpack.c.l.b16 %v2573
      %v2718 = vunpack.c.l.b16 %v2574
      %v2719 = vunpack.c.l.b16 %v2575
      %v2720 = vunpack.c.l.b16 %v2576
      %v2721 = vunpack.c.l.b16 %v2577
      %v2722 = vunpack.c.l.b16 %v2578
      %v2723 = vunpack.c.l.b16 %v2579
      %v2724 = vunpack.c.l.b16 %v2580
      %v2725 = vunpack.c.l.b16 %v2581
      %v2726 = vunpack.c.l.b16 %v2582
      %v2727 = vunpack.c.l.b16 %v2583
      %v2728 = vunpack.c.l.b16 %v2584
      %v2729 = vunpack.c.l.b16 %v2585
      %v2730 = vpack.c.b16 %v2659, %v2658
      %v2731 = vpack.c.b16 %v2661, %v2660
      %v2732 = vpack.c.b16 %v2663, %v2662
      %v2733 = vpack.c.b16 %v2665, %v2664
      %v2734 = vpack.c.b16 %v2667, %v2666
      %v2735 = vpack.c.b16 %v2669, %v2668
      %v2736 = vpack.c.b16 %v2671, %v2670
      %v2737 = vpack.c.b16 %v2673, %v2672
      %v2738 = vpack.c.b16 %v2675, %v2674
      %v2739 = vpack.c.b16 %v2677, %v2676
      %v2740 = vpack.c.b16 %v2679, %v2678
      %v2741 = vpack.c.b16 %v2681, %v2680
      %v2742 = vpack.c.b16 %v2683, %v2682
      %v2743 = vpack.c.b16 %v2685, %v2684
      %v2744 = vpack.c.b16 %v2687, %v2686
      %v2745 = vpack.c.b16 %v2689, %v2688
      %v2746 = vpack.c.b16 %v2691, %v2690
      %v2747 = vpack.c.b16 %v2693, %v2692
      %v2748 = vpack.c.b16 %v2695, %v2694
      %v2749 = vpack.c.b16 %v2697, %v2696
      %v2750 = vpack.c.b16 %v2699, %v2698
      %v2751 = vpack.c.b16 %v2701, %v2700
      %v2752 = vpack.c.b16 %v2703, %v2702
      %v2753 = vpack.c.b16 %v2705, %v2704
      %v2754 = vpack.c.b16 %v2707, %v2706
      %v2755 = vpack.c.b16 %v2709, %v2708
      %v2756 = vpack.c.b16 %v2711, %v2710
      %v2757 = vpack.c.b16 %v2713, %v2712
      %v2758 = vpack.c.b16 %v2715, %v2714
      %v2759 = vpack.c.b16 %v2717, %v2716
      %v2760 = vpack.c.b16 %v2719, %v2718
      %v2761 = vpack.c.b16 %v2721, %v2720
      %v2762 = vpack.c.b16 %v2723, %v2722
      %v2763 = vpack.c.b16 %v2725, %v2724
      %v2764 = vpack.c.b16 %v2727, %v2726
      %v2765 = vpack.c.b16 %v2729, %v2728
      %v2803 = vsel %vm1513, %v2497, 0
      %v2806 = vsel %vm1513, %v2502, 0
      %v2809 = vsel %vm1513, %v2507, 0
      %v2812 = vsel %vm1513, %v2512, 0
      %2814 = vmatprep.subr.bf16.mxu0 0
      %2815 = vmatpush1.bf16.msra.mxu0 %v2737
      %2816 = vmatprep.subr.bf16.mxu0 0
      %2817 = vmatpush1.bf16.msra.mxu0 %v2736
      %2818 = vmatprep.subr.bf16.mxu0 0
      %2819 = vmatpush1.bf16.msra.mxu0 %v2735
      %2820 = vmatprep.subr.bf16.mxu0 0
      %2821 = vmatpush1.bf16.msra.mxu0 %v2734
      %2822 = vmatprep.subr.bf16.mxu0 0
      %2823 = vmatpush1.bf16.msra.mxu0 %v2733
      %2824 = vmatprep.subr.bf16.mxu0 0
      %2825 = vmatpush1.bf16.msra.mxu0 %v2732
      %2826 = vmatprep.subr.bf16.mxu0 0
      %2827 = vmatpush1.bf16.msra.mxu0 %v2731
      %2828 = vmatprep.subr.bf16.mxu0 0
      %2829 = vmatpush1.bf16.msra.mxu0 %v2730
      %2830 = vmatprep.subr.bf16.mxu0 0
      %2831 = vmatpush2.bf16.msra.mxu0 %v2745
      %2832 = vmatprep.subr.bf16.mxu0 0
      %2833 = vmatpush2.bf16.msra.mxu0 %v2744
      %2834 = vmatprep.subr.bf16.mxu0 0
      %2835 = vmatpush2.bf16.msra.mxu0 %v2743
      %2836 = vmatprep.subr.bf16.mxu0 0
      %2837 = vmatpush2.bf16.msra.mxu0 %v2742
      %2838 = vmatprep.subr.bf16.mxu0 0
      %2839 = vmatpush2.bf16.msra.mxu0 %v2741
      %2840 = vmatprep.subr.bf16.mxu0 0
      %2841 = vmatpush2.bf16.msra.mxu0 %v2740
      %2842 = vmatprep.subr.bf16.mxu0 0
      %2843 = vmatpush2.bf16.msra.mxu0 %v2739
      %2844 = vmatprep.subr.bf16.mxu0 0
      %2845 = vmatpush2.bf16.msra.mxu0 %v2738
      %2846 = vmatprep.mubr.bf16.mxu0 %v2494
      %2847 = vmatmul.mubr.bf16.gmra.mxu0 %v2493
      %v2848 = vpop.f32.mrf.mxu0
      %v2849 = vadd.f32 0.0, %v2848
      %v2850 = vpop.f32.mrf.mxu0
      %v2851 = vpop.f32.mrf.mxu0
      %v2852 = vadd.f32 0.0, %v2851
      %v2853 = vpop.f32.mrf.mxu0
      %2854 = vmatprep.mubr.bf16.mxu0 %v2499
      %2855 = vmatmul.mubr.bf16.gmra.mxu0 %v2498
      %v2856 = vpop.f32.mrf.mxu0
      %v2857 = vadd.f32 0.0, %v2856
      %v2858 = vpop.f32.mrf.mxu0
      %v2859 = vpop.f32.mrf.mxu0
      %v2860 = vadd.f32 0.0, %v2859
      %v2861 = vpop.f32.mrf.mxu0
      %2862 = vmatprep.mubr.bf16.mxu0 %v2504
      %2863 = vmatmul.mubr.bf16.gmra.mxu0 %v2503
      %v2864 = vpop.f32.mrf.mxu0
      %v2865 = vadd.f32 0.0, %v2864
      %v2866 = vpop.f32.mrf.mxu0
      %v2867 = vpop.f32.mrf.mxu0
      %v2868 = vadd.f32 0.0, %v2867
      %v2869 = vpop.f32.mrf.mxu0
      %2870 = vmatprep.mubr.bf16.mxu0 %v2509
      %2871 = vmatmul.mubr.bf16.gmra.mxu0 %v2508
      %v2872 = vpop.f32.mrf.mxu0
      %v2873 = vadd.f32 0.0, %v2872
      %v2874 = vpop.f32.mrf.mxu0
      %v2875 = vpop.f32.mrf.mxu0
      %v2876 = vadd.f32 0.0, %v2875
      %v2877 = vpop.f32.mrf.mxu0
      %2878 = vdwg.mxu0
      %2879 = vmatprep.subr.bf16.mxu0 0
      %2880 = vmatpush1.bf16.msra.mxu0 %v2753
      %2881 = vmatprep.subr.bf16.mxu0 0
      %2882 = vmatpush1.bf16.msra.mxu0 %v2752
      %2883 = vmatprep.subr.bf16.mxu0 0
      %2884 = vmatpush1.bf16.msra.mxu0 %v2751
      %2885 = vmatprep.subr.bf16.mxu0 0
      %2886 = vmatpush1.bf16.msra.mxu0 %v2750
      %2887 = vmatprep.subr.bf16.mxu0 0
      %2888 = vmatpush1.bf16.msra.mxu0 %v2749
      %2889 = vmatprep.subr.bf16.mxu0 0
      %2890 = vmatpush1.bf16.msra.mxu0 %v2748
      %2891 = vmatprep.subr.bf16.mxu0 0
      %2892 = vmatpush1.bf16.msra.mxu0 %v2747
      %2893 = vmatprep.subr.bf16.mxu0 0
      %2894 = vmatpush1.bf16.msra.mxu0 %v2746
      %2895 = vmatprep.subr.bf16.mxu0 0
      %2896 = vmatpush2.bf16.msra.mxu0 %v2761
      %2897 = vmatprep.subr.bf16.mxu0 0
      %2898 = vmatpush2.bf16.msra.mxu0 %v2760
      %2899 = vmatprep.subr.bf16.mxu0 0
      %2900 = vmatpush2.bf16.msra.mxu0 %v2759
      %2901 = vmatprep.subr.bf16.mxu0 0
      %2902 = vmatpush2.bf16.msra.mxu0 %v2758
      %2903 = vmatprep.subr.bf16.mxu0 0
      %2904 = vmatpush2.bf16.msra.mxu0 %v2757
      %2905 = vmatprep.subr.bf16.mxu0 0
      %2906 = vmatpush2.bf16.msra.mxu0 %v2756
      %2907 = vmatprep.subr.bf16.mxu0 0
      %2908 = vmatpush2.bf16.msra.mxu0 %v2755
      %2909 = vmatprep.subr.bf16.mxu0 0
      %2910 = vmatpush2.bf16.msra.mxu0 %v2754
      %2911 = vmatprep.mubr.bf16.mxu0 %v2496
      %2912 = vmatmul.mubr.bf16.gmra.mxu0 %v2495
      %v2913 = vpop.f32.mrf.mxu0
      %v2914 = vadd.f32 %v2849, %v2913
      %v2915 = vpop.f32.mrf.mxu0
      %v2916 = vpop.f32.mrf.mxu0
      %v2917 = vadd.f32 %v2852, %v2916
      %v2918 = vpop.f32.mrf.mxu0
      %2919 = vmatprep.mubr.bf16.mxu0 %v2501
      %2920 = vmatmul.mubr.bf16.gmra.mxu0 %v2500
      %v2921 = vpop.f32.mrf.mxu0
      %v2922 = vadd.f32 %v2857, %v2921
      %v2923 = vpop.f32.mrf.mxu0
      %v2924 = vpop.f32.mrf.mxu0
      %v2925 = vadd.f32 %v2860, %v2924
      %v2926 = vpop.f32.mrf.mxu0
      %2927 = vmatprep.mubr.bf16.mxu0 %v2506
      %2928 = vmatmul.mubr.bf16.gmra.mxu0 %v2505
      %v2929 = vpop.f32.mrf.mxu0
      %v2930 = vadd.f32 %v2865, %v2929
      %v2931 = vpop.f32.mrf.mxu0
      %v2932 = vpop.f32.mrf.mxu0
      %v2933 = vadd.f32 %v2868, %v2932
      %v2934 = vpop.f32.mrf.mxu0
      %2935 = vmatprep.mubr.bf16.mxu0 %v2511
      %2936 = vmatmul.mubr.bf16.gmra.mxu0 %v2510
      %v2937 = vpop.f32.mrf.mxu0
      %v2938 = vadd.f32 %v2873, %v2937
      %v2939 = vpop.f32.mrf.mxu0
      %v2940 = vpop.f32.mrf.mxu0
      %v2941 = vadd.f32 %v2876, %v2940
      %v2942 = vpop.f32.mrf.mxu0
      %2943 = vdwg.mxu0
      %2944 = vmatprep.subr.bf16.mxu0 0
      %2945 = vmatpush1.bf16.msra.mxu0 0
      %2946 = vmatprep.subr.bf16.mxu0 0
      %2947 = vmatpush1.bf16.msra.mxu0 0
      %2948 = vmatprep.subr.bf16.mxu0 0
      %2949 = vmatpush1.bf16.msra.mxu0 0
      %2950 = vmatprep.subr.bf16.mxu0 0
      %2951 = vmatpush1.bf16.msra.mxu0 0
      %2952 = vmatprep.subr.bf16.mxu0 0
      %2953 = vmatpush1.bf16.msra.mxu0 %v2765
      %2954 = vmatprep.subr.bf16.mxu0 0
      %2955 = vmatpush1.bf16.msra.mxu0 %v2764
      %2956 = vmatprep.subr.bf16.mxu0 0
      %2957 = vmatpush1.bf16.msra.mxu0 %v2763
      %2958 = vmatprep.subr.bf16.mxu0 0
      %2959 = vmatpush1.bf16.msra.mxu0 %v2762
      %2960 = vmatprep.subr.bf16.mxu0 0
      %2961 = vmatpush2.bf16.msra.mxu0 0
      %2962 = vmatprep.subr.bf16.mxu0 0
      %2963 = vmatpush2.bf16.msra.mxu0 0
      %2964 = vmatprep.subr.bf16.mxu0 0
      %2965 = vmatpush2.bf16.msra.mxu0 0
      %2966 = vmatprep.subr.bf16.mxu0 0
      %2967 = vmatpush2.bf16.msra.mxu0 0
      %2968 = vmatprep.subr.bf16.mxu0 0
      %2969 = vmatpush2.bf16.msra.mxu0 0
      %2970 = vmatprep.subr.bf16.mxu0 0
      %2971 = vmatpush2.bf16.msra.mxu0 0
      %2972 = vmatprep.subr.bf16.mxu0 0
      %2973 = vmatpush2.bf16.msra.mxu0 0
      %2974 = vmatprep.subr.bf16.mxu0 0
      %2975 = vmatpush2.bf16.msra.mxu0 0
      %2976 = vmatprep.mubr.bf16.mxu0 0
      %2977 = vmatmul.mubr.bf16.gmra.mxu0 %v2803
      %v2978 = vpop.f32.mrf.mxu0
      %v2979 = vadd.f32 %v2914, %v2978
      %v2980 = vpop.f32.mrf.mxu0
      %v2981 = vpop.f32.mrf.mxu0
      %v2982 = vadd.f32 %v2917, %v2981
      %v2983 = vpop.f32.mrf.mxu0
      %2984 = vmatprep.mubr.bf16.mxu0 0
      %2985 = vmatmul.mubr.bf16.gmra.mxu0 %v2806
      %v2986 = vpop.f32.mrf.mxu0
      %v2987 = vadd.f32 %v2922, %v2986
      %v2988 = vpop.f32.mrf.mxu0
      %v2989 = vpop.f32.mrf.mxu0
      %v2990 = vadd.f32 %v2925, %v2989
      %v2991 = vpop.f32.mrf.mxu0
      %2992 = vmatprep.mubr.bf16.mxu0 0
      %2993 = vmatmul.mubr.bf16.gmra.mxu0 %v2809
      %v2994 = vpop.f32.mrf.mxu0
      %v2995 = vadd.f32 %v2930, %v2994
      %v2996 = vpop.f32.mrf.mxu0
      %v2997 = vpop.f32.mrf.mxu0
      %v2998 = vadd.f32 %v2933, %v2997
      %v2999 = vpop.f32.mrf.mxu0
      %3000 = vmatprep.mubr.bf16.mxu0 0
      %3001 = vmatmul.mubr.bf16.gmra.mxu0 %v2812
      %v3002 = vpop.f32.mrf.mxu0
      %v3003 = vadd.f32 %v2938, %v3002
      %v3004 = vpop.f32.mrf.mxu0
      %v3005 = vpop.f32.mrf.mxu0
      %v3006 = vadd.f32 %v2941, %v3005
      %v3007 = vpop.f32.mrf.mxu0
      %3008 = vdwg.mxu0
      %v3009 = vadd.f32 %v2365, %v2979
      %v3010 = vadd.f32 %v2366, %v2982
      %v3011 = vadd.f32 %v2367, %v2987
      %v3012 = vadd.f32 %v2368, %v2990
      %v3013 = vadd.f32 %v2369, %v2995
      %v3014 = vadd.f32 %v2370, %v2998
      %v3015 = vadd.f32 %v2371, %v3003
      %v3016 = vadd.f32 %v2372, %v3006
      %v3017 = vsel %vm1037, %v797, 0.0
      %v3018 = vsel %vm1038, %v798, 0.0
      %v3019 = vsel %vm1039, %v799, 0.0
      %v3020 = vsel %vm1040, %v800, 0.0
      %v3021 = vsel %vm1041, %v801, 0.0
      %v3022 = vsel %vm1042, %v802, 0.0
      %v3023 = vsel %vm1043, %v803, 0.0
      %v3024 = vsel %vm1044, %v804, 0.0
      %v3025 = vsel %vm1045, %v805, 0.0
      %v3026 = vsel %vm1046, %v806, 0.0
      %v3027 = vsel %vm1047, %v807, 0.0
      %v3028 = vsel %vm1048, %v808, 0.0
      %v3029 = vsel %vm1049, %v809, 0.0
      %v3030 = vsel %vm1050, %v810, 0.0
      %v3031 = vsel %vm1051, %v811, 0.0
      %v3032 = vsel %vm1052, %v812, 0.0
      %v3033 = vsel %vm1053, %v813, 0.0
      %v3034 = vsel %vm1054, %v814, 0.0
      %v3035 = vsel %vm1055, %v815, 0.0
      %v3036 = vsel %vm1056, %v816, 0.0
      %v3037 = vsel %vm1057, %v817, 0.0
      %v3038 = vsel %vm1058, %v818, 0.0
      %v3039 = vsel %vm1059, %v819, 0.0
      %v3040 = vsel %vm1060, %v820, 0.0
      %v3041 = vsel %vm1061, %v821, 0.0
      %v3042 = vsel %vm1062, %v822, 0.0
      %v3043 = vsel %vm1063, %v823, 0.0
      %v3044 = vsel %vm1064, %v824, 0.0
      %v3045 = vsel %vm1065, %v825, 0.0
      %v3046 = vsel %vm1066, %v826, 0.0
      %v3047 = vsel %vm1067, %v827, 0.0
      %v3048 = vsel %vm1068, %v828, 0.0
      %v3049 = vsel %vm1069, %v829, 0.0
      %v3050 = vsel %vm1070, %v830, 0.0
      %v3051 = vsel %vm1071, %v831, 0.0
      %v3052 = vsel %vm1072, %v832, 0.0
      %v3053 = vsel %vm1073, %v833, 0.0
      %v3054 = vsel %vm1074, %v834, 0.0
      %v3055 = vsel %vm1075, %v835, 0.0
      %v3056 = vsel %vm1076, %v836, 0.0
      %v3057 = vsel %vm997, %v677, %v3017
      %v3058 = vsel %vm998, %v678, %v3018
      %v3059 = vsel %vm999, %v679, %v3019
      %v3060 = vsel %vm1000, %v680, %v3020
      %v3061 = vsel %vm1001, %v681, %v3021
      %v3062 = vsel %vm1002, %v682, %v3022
      %v3063 = vsel %vm1003, %v683, %v3023
      %v3064 = vsel %vm1004, %v684, %v3024
      %v3065 = vsel %vm1005, %v685, %v3025
      %v3066 = vsel %vm1006, %v686, %v3026
      %v3067 = vsel %vm1007, %v687, %v3027
      %v3068 = vsel %vm1008, %v688, %v3028
      %v3069 = vsel %vm1009, %v689, %v3029
      %v3070 = vsel %vm1010, %v690, %v3030
      %v3071 = vsel %vm1011, %v691, %v3031
      %v3072 = vsel %vm1012, %v692, %v3032
      %v3073 = vsel %vm1013, %v693, %v3033
      %v3074 = vsel %vm1014, %v694, %v3034
      %v3075 = vsel %vm1015, %v695, %v3035
      %v3076 = vsel %vm1016, %v696, %v3036
      %v3077 = vsel %vm1017, %v697, %v3037
      %v3078 = vsel %vm1018, %v698, %v3038
      %v3079 = vsel %vm1019, %v699, %v3039
      %v3080 = vsel %vm1020, %v700, %v3040
      %v3081 = vsel %vm1021, %v701, %v3041
      %v3082 = vsel %vm1022, %v702, %v3042
      %v3083 = vsel %vm1023, %v703, %v3043
      %v3084 = vsel %vm1024, %v704, %v3044
      %v3085 = vsel %vm1025, %v705, %v3045
      %v3086 = vsel %vm1026, %v706, %v3046
      %v3087 = vsel %vm1027, %v707, %v3047
      %v3088 = vsel %vm1028, %v708, %v3048
      %v3089 = vsel %vm1029, %v709, %v3049
      %v3090 = vsel %vm1030, %v710, %v3050
      %v3091 = vsel %vm1031, %v711, %v3051
      %v3092 = vsel %vm1032, %v712, %v3052
      %v3093 = vsel %vm1033, %v713, %v3053
      %v3094 = vsel %vm1034, %v714, %v3054
      %v3095 = vsel %vm1035, %v715, %v3055
      %v3096 = vsel %vm1036, %v716, %v3056
      %v3097 = vsel %vm957, %v517, %v3057
      %v3098 = vsel %vm958, %v518, %v3058
      %v3099 = vsel %vm959, %v519, %v3059
      %v3100 = vsel %vm960, %v520, %v3060
      %v3101 = vsel %vm961, %v521, %v3061
      %v3102 = vsel %vm962, %v522, %v3062
      %v3103 = vsel %vm963, %v523, %v3063
      %v3104 = vsel %vm964, %v524, %v3064
      %v3105 = vsel %vm965, %v525, %v3065
      %v3106 = vsel %vm966, %v526, %v3066
      %v3107 = vsel %vm967, %v527, %v3067
      %v3108 = vsel %vm968, %v528, %v3068
      %v3109 = vsel %vm969, %v529, %v3069
      %v3110 = vsel %vm970, %v530, %v3070
      %v3111 = vsel %vm971, %v531, %v3071
      %v3112 = vsel %vm972, %v532, %v3072
      %v3113 = vsel %vm973, %v533, %v3073
      %v3114 = vsel %vm974, %v534, %v3074
      %v3115 = vsel %vm975, %v535, %v3075
      %v3116 = vsel %vm976, %v536, %v3076
      %v3117 = vsel %vm977, %v537, %v3077
      %v3118 = vsel %vm978, %v538, %v3078
      %v3119 = vsel %vm979, %v539, %v3079
      %v3120 = vsel %vm980, %v540, %v3080
      %v3121 = vsel %vm981, %v541, %v3081
      %v3122 = vsel %vm982, %v542, %v3082
      %v3123 = vsel %vm983, %v543, %v3083
      %v3124 = vsel %vm984, %v544, %v3084
      %v3125 = vsel %vm985, %v545, %v3085
      %v3126 = vsel %vm986, %v546, %v3086
      %v3127 = vsel %vm987, %v547, %v3087
      %v3128 = vsel %vm988, %v548, %v3088
      %v3129 = vsel %vm989, %v549, %v3089
      %v3130 = vsel %vm990, %v550, %v3090
      %v3131 = vsel %vm991, %v551, %v3091
      %v3132 = vsel %vm992, %v552, %v3092
      %v3133 = vsel %vm993, %v553, %v3093
      %v3134 = vsel %vm994, %v554, %v3094
      %v3135 = vsel %vm995, %v555, %v3095
      %v3136 = vsel %vm996, %v556, %v3096
      %v3137 = vpack.c.bf16 %v3102, %v3097
      %v3138 = vpack.c.bf16 %v3103, %v3098
      %v3139 = vpack.c.bf16 %v3104, %v3099
      %v3140 = vpack.c.bf16 %v3105, %v3100
      %v3141 = vpack.c.bf16 %v3106, %v3101
      %v3142 = vpack.c.bf16 %v3112, %v3107
      %v3143 = vpack.c.bf16 %v3113, %v3108
      %v3144 = vpack.c.bf16 %v3114, %v3109
      %v3145 = vpack.c.bf16 %v3115, %v3110
      %v3146 = vpack.c.bf16 %v3116, %v3111
      %v3147 = vpack.c.bf16 %v3122, %v3117
      %v3148 = vpack.c.bf16 %v3123, %v3118
      %v3149 = vpack.c.bf16 %v3124, %v3119
      %v3150 = vpack.c.bf16 %v3125, %v3120
      %v3151 = vpack.c.bf16 %v3126, %v3121
      %v3152 = vpack.c.bf16 %v3132, %v3127
      %v3153 = vpack.c.bf16 %v3133, %v3128
      %v3154 = vpack.c.bf16 %v3134, %v3129
      %v3155 = vpack.c.bf16 %v3135, %v3130
      %v3156 = vpack.c.bf16 %v3136, %v3131
      %s3157 = scalar_lea.vmem %s214, 864
      %v3158 = vld [vmem:[%s3157] sm:$0xf]
      %v3159 = vld [vmem:[%s3157 + $0x4] sm:$0xf]
      %v3160 = vld [vmem:[%s3157 + $0x8] sm:$0xf]
      %v3161 = vld [vmem:[%s3157 + $0xc] sm:$0xf]
      %v3162 = vld [vmem:[%s3157 + $0x10] sm:$0xf]
      %v3163 = vld [vmem:[%s3157 + $0x14] sm:$0xf]
      %v3164 = vld [vmem:[%s3157 + $0x18] sm:$0xf]
      %v3165 = vld [vmem:[%s3157 + $0x1c] sm:$0xf]
      %v3166 = vld [vmem:[%s3157 + $0x20] sm:$0xf]
      %v3167 = vld [vmem:[%s3157 + $0x24] sm:$0xf]
      %v3168 = vld [vmem:[%s3157 + $0x28] sm:$0xf]
      %v3169 = vld [vmem:[%s3157 + $0x2c] sm:$0xf]
      %v3170 = vld [vmem:[%s3157 + $0x30] sm:$0xf]
      %v3171 = vld [vmem:[%s3157 + $0x34] sm:$0xf]
      %v3172 = vld [vmem:[%s3157 + $0x38] sm:$0xf]
      %v3173 = vld [vmem:[%s3157 + $0x3c] sm:$0xf]
      %v3174 = vld [vmem:[%s3157 + $0x40] sm:$0xf]
      %v3175 = vld [vmem:[%s3157 + $0x44] sm:$0xf]
      %v3176 = vld [vmem:[%s3157 + $0x48] sm:$0xf]
      %v3177 = vld [vmem:[%s3157 + $0x4c] sm:$0xf]
      %v3178 = vld [vmem:[%s3157 + $0x50] sm:$0xf]
      %v3179 = vld [vmem:[%s3157 + $0x54] sm:$0xf]
      %v3180 = vld [vmem:[%s3157 + $0x58] sm:$0xf]
      %v3181 = vld [vmem:[%s3157 + $0x5c] sm:$0xf]
      %v3182 = vld [vmem:[%s3157 + $0x60] sm:$0xf]
      %v3183 = vld [vmem:[%s3157 + $0x64] sm:$0xf]
      %v3184 = vld [vmem:[%s3157 + $0x68] sm:$0xf]
      %v3185 = vld [vmem:[%s3157 + $0x6c] sm:$0xf]
      %v3186 = vld [vmem:[%s3157 + $0x70] sm:$0xf]
      %v3187 = vld [vmem:[%s3157 + $0x74] sm:$0xf]
      %v3188 = vld [vmem:[%s3157 + $0x78] sm:$0xf]
      %v3189 = vld [vmem:[%s3157 + $0x7c] sm:$0xf]
      %v3190 = vld [vmem:[%s3157 + $0x80] sm:$0xf]
      %v3191 = vld [vmem:[%s3157 + $0x84] sm:$0xf]
      %v3192 = vld [vmem:[%s3157 + $0x88] sm:$0xf]
      %v3193 = vld [vmem:[%s3157 + $0x8c] sm:$0xf]
      %v3194 = vld [vmem:[%s3157 + $0x90] sm:$0xf]
      %v3195 = vld [vmem:[%s3157 + $0x94] sm:$0xf]
      %v3196 = vld [vmem:[%s3157 + $0x98] sm:$0xf]
      %v3197 = vld [vmem:[%s3157 + $0x9c] sm:$0xf]
      %v3198 = vld [vmem:[%s3157 + $0xa0] sm:$0xf]
      %v3199 = vld [vmem:[%s3157 + $0xa4] sm:$0xf]
      %v3200 = vld [vmem:[%s3157 + $0xa8] sm:$0xf]
      %v3201 = vld [vmem:[%s3157 + $0xac] sm:$0xf]
      %v3202 = vld [vmem:[%s3157 + $0xb0] sm:$0xf]
      %v3203 = vld [vmem:[%s3157 + $0xb4] sm:$0xf]
      %v3204 = vld [vmem:[%s3157 + $0xb8] sm:$0xf]
      %v3205 = vld [vmem:[%s3157 + $0xbc] sm:$0xf]
      %v3206 = vld [vmem:[%s3157 + $0xc0] sm:$0xf]
      %v3207 = vld [vmem:[%s3157 + $0xc4] sm:$0xf]
      %v3208 = vld [vmem:[%s3157 + $0xc8] sm:$0xf]
      %v3209 = vld [vmem:[%s3157 + $0xcc] sm:$0xf]
      %v3210 = vld [vmem:[%s3157 + $0xd0] sm:$0xf]
      %v3211 = vld [vmem:[%s3157 + $0xd4] sm:$0xf]
      %v3212 = vld [vmem:[%s3157 + $0xd8] sm:$0xf]
      %v3213 = vld [vmem:[%s3157 + $0xdc] sm:$0xf]
      %v3214 = vld [vmem:[%s3157 + $0xe0] sm:$0xf]
      %v3215 = vld [vmem:[%s3157 + $0xe4] sm:$0xf]
      %v3216 = vld [vmem:[%s3157 + $0xe8] sm:$0xf]
      %v3217 = vld [vmem:[%s3157 + $0xec] sm:$0xf]
      %v3218 = vld [vmem:[%s3157 + $0xf0] sm:$0xf]
      %v3219 = vld [vmem:[%s3157 + $0xf4] sm:$0xf]
      %v3220 = vld [vmem:[%s3157 + $0xf8] sm:$0xf]
      %v3221 = vld [vmem:[%s3157 + $0xfc] sm:$0xf]
      %v3222 = vld [vmem:[%s3157 + $0x100] sm:$0xf]
      %v3223 = vld [vmem:[%s3157 + $0x104] sm:$0xf]
      %v3224 = vld [vmem:[%s3157 + $0x108] sm:$0xf]
      %v3225 = vld [vmem:[%s3157 + $0x10c] sm:$0xf]
      %v3226 = vld [vmem:[%s3157 + $0x110] sm:$0xf]
      %v3227 = vld [vmem:[%s3157 + $0x114] sm:$0xf]
      %v3228 = vld [vmem:[%s3157 + $0x118] sm:$0xf]
      %v3229 = vld [vmem:[%s3157 + $0x11c] sm:$0xf]
      %v3302 = vunpack.c.l.b16 %v3158
      %v3303 = vunpack.c.l.b16 %v3159
      %v3304 = vunpack.c.l.b16 %v3160
      %v3305 = vunpack.c.l.b16 %v3161
      %v3306 = vunpack.c.l.b16 %v3162
      %v3307 = vunpack.c.l.b16 %v3163
      %v3308 = vunpack.c.l.b16 %v3164
      %v3309 = vunpack.c.l.b16 %v3165
      %v3310 = vunpack.c.l.b16 %v3166
      %v3311 = vunpack.c.l.b16 %v3167
      %v3312 = vunpack.c.l.b16 %v3168
      %v3313 = vunpack.c.l.b16 %v3169
      %v3314 = vunpack.c.l.b16 %v3170
      %v3315 = vunpack.c.l.b16 %v3171
      %v3316 = vunpack.c.l.b16 %v3172
      %v3317 = vunpack.c.l.b16 %v3173
      %v3318 = vunpack.c.l.b16 %v3174
      %v3319 = vunpack.c.l.b16 %v3175
      %v3320 = vunpack.c.l.b16 %v3176
      %v3321 = vunpack.c.l.b16 %v3177
      %v3322 = vunpack.c.l.b16 %v3178
      %v3323 = vunpack.c.l.b16 %v3179
      %v3324 = vunpack.c.l.b16 %v3180
      %v3325 = vunpack.c.l.b16 %v3181
      %v3326 = vunpack.c.l.b16 %v3182
      %v3327 = vunpack.c.l.b16 %v3183
      %v3328 = vunpack.c.l.b16 %v3184
      %v3329 = vunpack.c.l.b16 %v3185
      %v3330 = vunpack.c.l.b16 %v3186
      %v3331 = vunpack.c.l.b16 %v3187
      %v3332 = vunpack.c.l.b16 %v3188
      %v3333 = vunpack.c.l.b16 %v3189
      %v3334 = vunpack.c.l.b16 %v3190
      %v3335 = vunpack.c.l.b16 %v3191
      %v3336 = vunpack.c.l.b16 %v3192
      %v3337 = vunpack.c.l.b16 %v3193
      %v3338 = vunpack.c.l.b16 %v3194
      %v3339 = vunpack.c.l.b16 %v3195
      %v3340 = vunpack.c.l.b16 %v3196
      %v3341 = vunpack.c.l.b16 %v3197
      %v3342 = vunpack.c.l.b16 %v3198
      %v3343 = vunpack.c.l.b16 %v3199
      %v3344 = vunpack.c.l.b16 %v3200
      %v3345 = vunpack.c.l.b16 %v3201
      %v3346 = vunpack.c.l.b16 %v3202
      %v3347 = vunpack.c.l.b16 %v3203
      %v3348 = vunpack.c.l.b16 %v3204
      %v3349 = vunpack.c.l.b16 %v3205
      %v3350 = vunpack.c.l.b16 %v3206
      %v3351 = vunpack.c.l.b16 %v3207
      %v3352 = vunpack.c.l.b16 %v3208
      %v3353 = vunpack.c.l.b16 %v3209
      %v3354 = vunpack.c.l.b16 %v3210
      %v3355 = vunpack.c.l.b16 %v3211
      %v3356 = vunpack.c.l.b16 %v3212
      %v3357 = vunpack.c.l.b16 %v3213
      %v3358 = vunpack.c.l.b16 %v3214
      %v3359 = vunpack.c.l.b16 %v3215
      %v3360 = vunpack.c.l.b16 %v3216
      %v3361 = vunpack.c.l.b16 %v3217
      %v3362 = vunpack.c.l.b16 %v3218
      %v3363 = vunpack.c.l.b16 %v3219
      %v3364 = vunpack.c.l.b16 %v3220
      %v3365 = vunpack.c.l.b16 %v3221
      %v3366 = vunpack.c.l.b16 %v3222
      %v3367 = vunpack.c.l.b16 %v3223
      %v3368 = vunpack.c.l.b16 %v3224
      %v3369 = vunpack.c.l.b16 %v3225
      %v3370 = vunpack.c.l.b16 %v3226
      %v3371 = vunpack.c.l.b16 %v3227
      %v3372 = vunpack.c.l.b16 %v3228
      %v3373 = vunpack.c.l.b16 %v3229
      %v3374 = vpack.c.b16 %v3303, %v3302
      %v3375 = vpack.c.b16 %v3305, %v3304
      %v3376 = vpack.c.b16 %v3307, %v3306
      %v3377 = vpack.c.b16 %v3309, %v3308
      %v3378 = vpack.c.b16 %v3311, %v3310
      %v3379 = vpack.c.b16 %v3313, %v3312
      %v3380 = vpack.c.b16 %v3315, %v3314
      %v3381 = vpack.c.b16 %v3317, %v3316
      %v3382 = vpack.c.b16 %v3319, %v3318
      %v3383 = vpack.c.b16 %v3321, %v3320
      %v3384 = vpack.c.b16 %v3323, %v3322
      %v3385 = vpack.c.b16 %v3325, %v3324
      %v3386 = vpack.c.b16 %v3327, %v3326
      %v3387 = vpack.c.b16 %v3329, %v3328
      %v3388 = vpack.c.b16 %v3331, %v3330
      %v3389 = vpack.c.b16 %v3333, %v3332
      %v3390 = vpack.c.b16 %v3335, %v3334
      %v3391 = vpack.c.b16 %v3337, %v3336
      %v3392 = vpack.c.b16 %v3339, %v3338
      %v3393 = vpack.c.b16 %v3341, %v3340
      %v3394 = vpack.c.b16 %v3343, %v3342
      %v3395 = vpack.c.b16 %v3345, %v3344
      %v3396 = vpack.c.b16 %v3347, %v3346
      %v3397 = vpack.c.b16 %v3349, %v3348
      %v3398 = vpack.c.b16 %v3351, %v3350
      %v3399 = vpack.c.b16 %v3353, %v3352
      %v3400 = vpack.c.b16 %v3355, %v3354
      %v3401 = vpack.c.b16 %v3357, %v3356
      %v3402 = vpack.c.b16 %v3359, %v3358
      %v3403 = vpack.c.b16 %v3361, %v3360
      %v3404 = vpack.c.b16 %v3363, %v3362
      %v3405 = vpack.c.b16 %v3365, %v3364
      %v3406 = vpack.c.b16 %v3367, %v3366
      %v3407 = vpack.c.b16 %v3369, %v3368
      %v3408 = vpack.c.b16 %v3371, %v3370
      %v3409 = vpack.c.b16 %v3373, %v3372
      %v3447 = vsel %vm1513, %v3141, 0
      %v3450 = vsel %vm1513, %v3146, 0
      %v3453 = vsel %vm1513, %v3151, 0
      %v3456 = vsel %vm1513, %v3156, 0
      %3458 = vmatprep.subr.bf16.mxu0 0
      %3459 = vmatpush1.bf16.msra.mxu0 %v3381
      %3460 = vmatprep.subr.bf16.mxu0 0
      %3461 = vmatpush1.bf16.msra.mxu0 %v3380
      %3462 = vmatprep.subr.bf16.mxu0 0
      %3463 = vmatpush1.bf16.msra.mxu0 %v3379
      %3464 = vmatprep.subr.bf16.mxu0 0
      %3465 = vmatpush1.bf16.msra.mxu0 %v3378
      %3466 = vmatprep.subr.bf16.mxu0 0
      %3467 = vmatpush1.bf16.msra.mxu0 %v3377
      %3468 = vmatprep.subr.bf16.mxu0 0
      %3469 = vmatpush1.bf16.msra.mxu0 %v3376
      %3470 = vmatprep.subr.bf16.mxu0 0
      %3471 = vmatpush1.bf16.msra.mxu0 %v3375
      %3472 = vmatprep.subr.bf16.mxu0 0
      %3473 = vmatpush1.bf16.msra.mxu0 %v3374
      %3474 = vmatprep.subr.bf16.mxu0 0
      %3475 = vmatpush2.bf16.msra.mxu0 %v3389
      %3476 = vmatprep.subr.bf16.mxu0 0
      %3477 = vmatpush2.bf16.msra.mxu0 %v3388
      %3478 = vmatprep.subr.bf16.mxu0 0
      %3479 = vmatpush2.bf16.msra.mxu0 %v3387
      %3480 = vmatprep.subr.bf16.mxu0 0
      %3481 = vmatpush2.bf16.msra.mxu0 %v3386
      %3482 = vmatprep.subr.bf16.mxu0 0
      %3483 = vmatpush2.bf16.msra.mxu0 %v3385
      %3484 = vmatprep.subr.bf16.mxu0 0
      %3485 = vmatpush2.bf16.msra.mxu0 %v3384
      %3486 = vmatprep.subr.bf16.mxu0 0
      %3487 = vmatpush2.bf16.msra.mxu0 %v3383
      %3488 = vmatprep.subr.bf16.mxu0 0
      %3489 = vmatpush2.bf16.msra.mxu0 %v3382
      %3490 = vmatprep.mubr.bf16.mxu0 %v3138
      %3491 = vmatmul.mubr.bf16.gmra.mxu0 %v3137
      %v3492 = vpop.f32.mrf.mxu0
      %v3493 = vadd.f32 0.0, %v3492
      %v3494 = vpop.f32.mrf.mxu0
      %v3495 = vpop.f32.mrf.mxu0
      %v3496 = vadd.f32 0.0, %v3495
      %v3497 = vpop.f32.mrf.mxu0
      %3498 = vmatprep.mubr.bf16.mxu0 %v3143
      %3499 = vmatmul.mubr.bf16.gmra.mxu0 %v3142
      %v3500 = vpop.f32.mrf.mxu0
      %v3501 = vadd.f32 0.0, %v3500
      %v3502 = vpop.f32.mrf.mxu0
      %v3503 = vpop.f32.mrf.mxu0
      %v3504 = vadd.f32 0.0, %v3503
      %v3505 = vpop.f32.mrf.mxu0
      %3506 = vmatprep.mubr.bf16.mxu0 %v3148
      %3507 = vmatmul.mubr.bf16.gmra.mxu0 %v3147
      %v3508 = vpop.f32.mrf.mxu0
      %v3509 = vadd.f32 0.0, %v3508
      %v3510 = vpop.f32.mrf.mxu0
      %v3511 = vpop.f32.mrf.mxu0
      %v3512 = vadd.f32 0.0, %v3511
      %v3513 = vpop.f32.mrf.mxu0
      %3514 = vmatprep.mubr.bf16.mxu0 %v3153
      %3515 = vmatmul.mubr.bf16.gmra.mxu0 %v3152
      %v3516 = vpop.f32.mrf.mxu0
      %v3517 = vadd.f32 0.0, %v3516
      %v3518 = vpop.f32.mrf.mxu0
      %v3519 = vpop.f32.mrf.mxu0
      %v3520 = vadd.f32 0.0, %v3519
      %v3521 = vpop.f32.mrf.mxu0
      %3522 = vdwg.mxu0
      %3523 = vmatprep.subr.bf16.mxu0 0
      %3524 = vmatpush1.bf16.msra.mxu0 %v3397
      %3525 = vmatprep.subr.bf16.mxu0 0
      %3526 = vmatpush1.bf16.msra.mxu0 %v3396
      %3527 = vmatprep.subr.bf16.mxu0 0
      %3528 = vmatpush1.bf16.msra.mxu0 %v3395
      %3529 = vmatprep.subr.bf16.mxu0 0
      %3530 = vmatpush1.bf16.msra.mxu0 %v3394
      %3531 = vmatprep.subr.bf16.mxu0 0
      %3532 = vmatpush1.bf16.msra.mxu0 %v3393
      %3533 = vmatprep.subr.bf16.mxu0 0
      %3534 = vmatpush1.bf16.msra.mxu0 %v3392
      %3535 = vmatprep.subr.bf16.mxu0 0
      %3536 = vmatpush1.bf16.msra.mxu0 %v3391
      %3537 = vmatprep.subr.bf16.mxu0 0
      %3538 = vmatpush1.bf16.msra.mxu0 %v3390
      %3539 = vmatprep.subr.bf16.mxu0 0
      %3540 = vmatpush2.bf16.msra.mxu0 %v3405
      %3541 = vmatprep.subr.bf16.mxu0 0
      %3542 = vmatpush2.bf16.msra.mxu0 %v3404
      %3543 = vmatprep.subr.bf16.mxu0 0
      %3544 = vmatpush2.bf16.msra.mxu0 %v3403
      %3545 = vmatprep.subr.bf16.mxu0 0
      %3546 = vmatpush2.bf16.msra.mxu0 %v3402
      %3547 = vmatprep.subr.bf16.mxu0 0
      %3548 = vmatpush2.bf16.msra.mxu0 %v3401
      %3549 = vmatprep.subr.bf16.mxu0 0
      %3550 = vmatpush2.bf16.msra.mxu0 %v3400
      %3551 = vmatprep.subr.bf16.mxu0 0
      %3552 = vmatpush2.bf16.msra.mxu0 %v3399
      %3553 = vmatprep.subr.bf16.mxu0 0
      %3554 = vmatpush2.bf16.msra.mxu0 %v3398
      %3555 = vmatprep.mubr.bf16.mxu0 %v3140
      %3556 = vmatmul.mubr.bf16.gmra.mxu0 %v3139
      %v3557 = vpop.f32.mrf.mxu0
      %v3558 = vadd.f32 %v3493, %v3557
      %v3559 = vpop.f32.mrf.mxu0
      %v3560 = vpop.f32.mrf.mxu0
      %v3561 = vadd.f32 %v3496, %v3560
      %v3562 = vpop.f32.mrf.mxu0
      %3563 = vmatprep.mubr.bf16.mxu0 %v3145
      %3564 = vmatmul.mubr.bf16.gmra.mxu0 %v3144
      %v3565 = vpop.f32.mrf.mxu0
      %v3566 = vadd.f32 %v3501, %v3565
      %v3567 = vpop.f32.mrf.mxu0
      %v3568 = vpop.f32.mrf.mxu0
      %v3569 = vadd.f32 %v3504, %v3568
      %v3570 = vpop.f32.mrf.mxu0
      %3571 = vmatprep.mubr.bf16.mxu0 %v3150
      %3572 = vmatmul.mubr.bf16.gmra.mxu0 %v3149
      %v3573 = vpop.f32.mrf.mxu0
      %v3574 = vadd.f32 %v3509, %v3573
      %v3575 = vpop.f32.mrf.mxu0
      %v3576 = vpop.f32.mrf.mxu0
      %v3577 = vadd.f32 %v3512, %v3576
      %v3578 = vpop.f32.mrf.mxu0
      %3579 = vmatprep.mubr.bf16.mxu0 %v3155
      %3580 = vmatmul.mubr.bf16.gmra.mxu0 %v3154
      %v3581 = vpop.f32.mrf.mxu0
      %v3582 = vadd.f32 %v3517, %v3581
      %v3583 = vpop.f32.mrf.mxu0
      %v3584 = vpop.f32.mrf.mxu0
      %v3585 = vadd.f32 %v3520, %v3584
      %v3586 = vpop.f32.mrf.mxu0
      %3587 = vdwg.mxu0
      %3588 = vmatprep.subr.bf16.mxu0 0
      %3589 = vmatpush1.bf16.msra.mxu0 0
      %3590 = vmatprep.subr.bf16.mxu0 0
      %3591 = vmatpush1.bf16.msra.mxu0 0
      %3592 = vmatprep.subr.bf16.mxu0 0
      %3593 = vmatpush1.bf16.msra.mxu0 0
      %3594 = vmatprep.subr.bf16.mxu0 0
      %3595 = vmatpush1.bf16.msra.mxu0 0
      %3596 = vmatprep.subr.bf16.mxu0 0
      %3597 = vmatpush1.bf16.msra.mxu0 %v3409
      %3598 = vmatprep.subr.bf16.mxu0 0
      %3599 = vmatpush1.bf16.msra.mxu0 %v3408
      %3600 = vmatprep.subr.bf16.mxu0 0
      %3601 = vmatpush1.bf16.msra.mxu0 %v3407
      %3602 = vmatprep.subr.bf16.mxu0 0
      %3603 = vmatpush1.bf16.msra.mxu0 %v3406
      %3604 = vmatprep.subr.bf16.mxu0 0
      %3605 = vmatpush2.bf16.msra.mxu0 0
      %3606 = vmatprep.subr.bf16.mxu0 0
      %3607 = vmatpush2.bf16.msra.mxu0 0
      %3608 = vmatprep.subr.bf16.mxu0 0
      %3609 = vmatpush2.bf16.msra.mxu0 0
      %3610 = vmatprep.subr.bf16.mxu0 0
      %3611 = vmatpush2.bf16.msra.mxu0 0
      %3612 = vmatprep.subr.bf16.mxu0 0
      %3613 = vmatpush2.bf16.msra.mxu0 0
      %3614 = vmatprep.subr.bf16.mxu0 0
      %3615 = vmatpush2.bf16.msra.mxu0 0
      %3616 = vmatprep.subr.bf16.mxu0 0
      %3617 = vmatpush2.bf16.msra.mxu0 0
      %3618 = vmatprep.subr.bf16.mxu0 0
      %3619 = vmatpush2.bf16.msra.mxu0 0
      %3620 = vmatprep.mubr.bf16.mxu0 0
      %3621 = vmatmul.mubr.bf16.gmra.mxu0 %v3447
      %v3622 = vpop.f32.mrf.mxu0
      %v3623 = vadd.f32 %v3558, %v3622
      %v3624 = vpop.f32.mrf.mxu0
      %v3625 = vpop.f32.mrf.mxu0
      %v3626 = vadd.f32 %v3561, %v3625
      %v3627 = vpop.f32.mrf.mxu0
      %3628 = vmatprep.mubr.bf16.mxu0 0
      %3629 = vmatmul.mubr.bf16.gmra.mxu0 %v3450
      %v3630 = vpop.f32.mrf.mxu0
      %v3631 = vadd.f32 %v3566, %v3630
      %v3632 = vpop.f32.mrf.mxu0
      %v3633 = vpop.f32.mrf.mxu0
      %v3634 = vadd.f32 %v3569, %v3633
      %v3635 = vpop.f32.mrf.mxu0
      %3636 = vmatprep.mubr.bf16.mxu0 0
      %3637 = vmatmul.mubr.bf16.gmra.mxu0 %v3453
      %v3638 = vpop.f32.mrf.mxu0
      %v3639 = vadd.f32 %v3574, %v3638
      %v3640 = vpop.f32.mrf.mxu0
      %v3641 = vpop.f32.mrf.mxu0
      %v3642 = vadd.f32 %v3577, %v3641
      %v3643 = vpop.f32.mrf.mxu0
      %3644 = vmatprep.mubr.bf16.mxu0 0
      %3645 = vmatmul.mubr.bf16.gmra.mxu0 %v3456
      %v3646 = vpop.f32.mrf.mxu0
      %v3647 = vadd.f32 %v3582, %v3646
      %v3648 = vpop.f32.mrf.mxu0
      %v3649 = vpop.f32.mrf.mxu0
      %v3650 = vadd.f32 %v3585, %v3649
      %v3651 = vpop.f32.mrf.mxu0
      %3652 = vdwg.mxu0
      %v3653 = vadd.f32 %v3009, %v3623
      %v3654 = vadd.f32 %v3010, %v3626
      %v3655 = vadd.f32 %v3011, %v3631
      %v3656 = vadd.f32 %v3012, %v3634
      %v3657 = vadd.f32 %v3013, %v3639
      %v3658 = vadd.f32 %v3014, %v3642
      %v3659 = vadd.f32 %v3015, %v3647
      %v3660 = vadd.f32 %v3016, %v3650
      %3661 = vst [vmem:[#allocation2] sm:$0xff] %v3653
      %3662 = vst [vmem:[#allocation2 + $0x8] sm:$0xff] %v3654
      %3663 = vst [vmem:[#allocation2 + $0x10] sm:$0xff] %v3655
      %3664 = vst [vmem:[#allocation2 + $0x18] sm:$0xff] %v3656
      %3665 = vst [vmem:[#allocation2 + $0x20] sm:$0xff] %v3657
      %3666 = vst [vmem:[#allocation2 + $0x28] sm:$0xff] %v3658
      %3667 = vst [vmem:[#allocation2 + $0x30] sm:$0xff] %v3659
      %3668 = vst [vmem:[#allocation2 + $0x38] sm:$0xff] %v3660
      // Predicated region
      $region33: #{resnet18_kan_forward.6} parent=27 // pred_check
        %p3669 = pneg %p225
      $region34: #{resnet18_kan_forward.6} parent=27 // pred_check_branch
        %3671 = sbr.rel (%p3669) target = $region36
      $region35: #{resnet18_kan_forward.6} parent=27 // pred_region
        %v3672 = vld [vmem:[#allocation2] sm:$0xff]
        %v3673 = vld [vmem:[#allocation2 + $0x8] sm:$0xff]
        %v3674 = vld [vmem:[#allocation2 + $0x10] sm:$0xff]
        %v3675 = vld [vmem:[#allocation2 + $0x18] sm:$0xff]
        %v3676 = vld [vmem:[#allocation2 + $0x20] sm:$0xff]
        %v3677 = vld [vmem:[#allocation2 + $0x28] sm:$0xff]
        %v3678 = vld [vmem:[#allocation2 + $0x30] sm:$0xff]
        %v3679 = vld [vmem:[#allocation2 + $0x38] sm:$0xff]
        %3680 = vst [vmem:[%s222] sm:$0xff] %v3672
        %3681 = vst [vmem:[%s222 + $0x8] sm:$0xff] %v3673
        %3682 = vst [vmem:[%s222 + $0x10] sm:$0xff] %v3674
        %3683 = vst [vmem:[%s222 + $0x18] sm:$0xff] %v3675
        %3684 = vst [vmem:[%s222 + $0x20] sm:$0xff] %v3676
        %3685 = vst [vmem:[%s222 + $0x28] sm:$0xff] %v3677
        %3686 = vst [vmem:[%s222 + $0x30] sm:$0xff] %v3678
        %3687 = vst [vmem:[%s222 + $0x38] sm:$0xff] %v3679
      $region36: #{resnet18_kan_forward.6} parent=27 // pred_fallthru
        _
      %s3688 = smul.u32 8, %s18
      %p3689 = scmp.lt.s32.totalorder %s3688, 15
      %s3690 = scalar_select %p3689, %s3688, 15
      %p3691 = scmp.lt.s32.totalorder %s19, 0
      %s3692 = scalar_select %p3691, %s19, 0
      %s3693 = sadd.s32 %s3692, %s3690
      %s3694 = smul.addr %s3693, 8
      %s3695 = scalar_lea.vmem %s2, %s3694
      // Predicated region
      $region37: #{resnet18_kan_forward.6} parent=27 // pred_check
        %p3696 = pneg %p108
      $region38: #{resnet18_kan_forward.6} parent=27 // pred_check_branch
        %3698 = sbr.rel (%p3696) target = $region40
      $region39: #{resnet18_kan_forward.6} parent=27 // pred_region
        %s3699 = smul.u32 8, %s18
      $region40: #{resnet18_kan_forward.6} parent=27 // pred_fallthru
        _
    $region28: #{resnet18_kan_forward.6} parent=5 // pred_fallthru
      _
    %p3700 = scmp.le.s32.totalorder 2, %s8
    // Predicated region
    $region41: #{resnet18_kan_forward.6} parent=5 // pred_check
      %p3701 = pneg %p3700
    $region42: #{resnet18_kan_forward.6} parent=5 // pred_check_branch
      %3703 = sbr.rel (%p3701) target = $region44
    $region43: #{resnet18_kan_forward.6} parent=5 // pred_region
      %s3704 = ssub.s32 %s8, 2
      // Predicated region
      $region45: #{resnet18_kan_forward.6} parent=43 // pred_check
        %p3705 = pneg %p114
      $region46: #{resnet18_kan_forward.6} parent=43 // pred_check_branch
        %3707 = sbr.rel (%p3705) target = $region48
      $region47: #{resnet18_kan_forward.6} parent=43 // pred_region
        %s3708 = smul.u32 8, %s21
        %p3709 = scmp.lt.s32.totalorder %s3708, 15
        %s3710 = scalar_select %p3709, %s3708, 15
        %p3711 = scmp.lt.s32.totalorder %s22, 0
        %s3712 = scalar_select %p3711, %s22, 0
        %s3713 = sadd.s32 %s3712, %s3710
        %s3714 = smul.addr %s3713, 8
        %s3715 = scalar_lea.vmem %s2, %s3714
      $region48: #{resnet18_kan_forward.6} parent=43 // pred_fallthru
        _
    $region44: #{resnet18_kan_forward.6} parent=5 // pred_fallthru
      _
  $region6: #{resnet18_kan_forward.6} parent=0 // loop_footer
    %s12 = sadd.s32 1, %s8
  $region7: #{resnet18_kan_forward.6} parent=0 // loop_footer_branch
    %7 = sbr.rel target = $region3
  $region8: #{resnet18_kan_forward.6} parent=0 // loop_exit
    _

</llo_original>
